<compile_context>
chip_gen: v5e
topology: v5e:2x2
jax: 0.10.0
libtpu: 0.0.40
codegen_flags: <defaults>
</compile_context>

<pallas_src>
import functools

import jax
import jax.numpy as jnp
from jax import lax
from jax.experimental import pallas as pl
from jax.experimental.pallas import tpu as pltpu

# Module constants (from bigram.py)
BLOCK_SIZE = 256                    # max sequence length (causal mask buffer)
N_EMBED = 384
NUM_HEADS = 6
HEAD_SIZE = N_EMBED // NUM_HEADS    # 64
# TODO(synk): nn.Dropout(p=0.2) is identity in eval mode; implemented as identity here.


def _mha_fused_kernel(x_ref, wqkv_ref, wp_ref, bp_ref, o_ref, att_ref, *, bb, seq_len):
    """One grid step = `bb` batch rows of fused causal MHA + output projection.

    x_ref   : (bb, T, C)        VMEM activations
    wqkv_ref: (C, 3*H*hs)       VMEM fused, scale-folded, pre-cast QKV weight
    wp_ref  : (C, C)            VMEM output projection (pre-transposed), same dtype
    bp_ref  : (1, C)            VMEM f32 bias
    o_ref   : (bb, T, C)        VMEM output
    att_ref : (bb*T, C)         VMEM scratch slab of concatenated head outputs
    """
    T = seq_len
    C = N_EMBED
    Hhs = NUM_HEADS * HEAD_SIZE                      # 384
    mxu = wqkv_ref.dtype                             # bf16 by default (pre-cast)

    x = x_ref[...].reshape(bb * T, C)
    if x.dtype != mxu:
        x = x.astype(mxu)

    # One wide QKV projection for all bb rows: (bb*T, 384) @ (384, 1152).
    # The C**-0.5 softmax scale is already folded into the Q columns.
    qkv = jnp.dot(x, wqkv_ref[...], preferred_element_type=mxu)      # (bb*T, 3*Hhs)

    # Causal mask, hoisted out of the row/head loops (diag unmasked -> -inf safe).
    row = lax.broadcasted_iota(jnp.int32, (T, T), 0)
    col = lax.broadcasted_iota(jnp.int32, (T, T), 1)
    causal = col <= row

    qk_dn = (((1,), (1,)), ((), ()))                 # contract last dims, no batch

    for r in range(bb):                              # static unroll over batch rows
        qkv_r = qkv[r * T:(r + 1) * T, :]
        for h in range(NUM_HEADS):                   # static unroll, H = 6
            q = qkv_r[:, h * HEAD_SIZE:(h + 1) * HEAD_SIZE]                    # (T, hs)
            k = qkv_r[:, Hhs + h * HEAD_SIZE:Hhs + (h + 1) * HEAD_SIZE]        # (T, hs)
            v = qkv_r[:, 2 * Hhs + h * HEAD_SIZE:2 * Hhs + (h + 1) * HEAD_SIZE]

            # q @ k^T without materializing k.T; f32 accumulate on the MXU.
            wei = lax.dot_general(q, k, qk_dn, preferred_element_type=jnp.float32)
            wei = jnp.where(causal, wei, -jnp.inf)

            # Softmax statistics in f32; normalization deferred past e@v so the
            # multiply touches the (T, hs) output instead of the (T, T) scores.
            m = jnp.max(wei, axis=-1, keepdims=True)
            e32 = jnp.exp(wei - m)
            s = jnp.sum(e32, axis=-1, keepdims=True)
            ov = jnp.dot(e32.astype(mxu), v, preferred_element_type=jnp.float32)
            out_h = ov * pl.reciprocal(s, approx=True)                         # (T, hs)

            att_ref[r * T:(r + 1) * T,
                    h * HEAD_SIZE:(h + 1) * HEAD_SIZE] = out_h.astype(att_ref.dtype)

    # Lane-dense (bb*T, 384) slab -> single output projection + bias, full-width store.
    o = jnp.dot(att_ref[...], wp_ref[...], preferred_element_type=jnp.float32)
    o = o + bp_ref[...]
    o_ref[...] = o.reshape(bb, T, C).astype(o_ref.dtype)


def fuse_qkv_weights(wq, wk, wv, *, dtype=jnp.bfloat16):
    """(H, C, hs) x3 -> (C, 3*H*hs) with column layout [Q heads | K | V].

    One-time parameter transform: folds the module's softmax scale (C**-0.5,
    C = n_embed, exactly as the PyTorch reference computes it) into the Q
    columns and casts the fused weight to the MXU operand dtype (bf16 default).
    """
    H, C, hs = wq.shape
    scale = jnp.float32(C) ** jnp.float32(-0.5)
    to2d = lambda w: jnp.transpose(w, (1, 0, 2)).reshape(C, H * hs)
    fused = jnp.concatenate([to2d(wq) * scale, to2d(wk), to2d(wv)], axis=-1)
    return fused.astype(dtype)


def multi_head_attention(x, wqkv, wp, bp, *, batch_block=None):
    """Fused multi-head causal self-attention + output projection.

    x    : (B, T, C) activations (any float dtype; cast to wqkv.dtype in-kernel)
    wqkv : (C, 3*H*hs) from fuse_qkv_weights (scale folded, pre-cast)
    wp   : (C, C) output-projection weight, pre-transposed, same dtype as wqkv
    bp   : (C,)  output-projection bias
    """
    B, T, C = x.shape
    assert C == N_EMBED and T <= BLOCK_SIZE and T % 8 == 0
    assert wqkv.shape == (C, 3 * NUM_HEADS * HEAD_SIZE)
    assert wp.shape == (C, C) and wp.dtype == wqkv.dtype

    if batch_block is None:   # largest divisor of B that is <= 8
        batch_block = max(d for d in range(1, min(B, 8) + 1) if B % d == 0)
    bb = batch_block
    assert B % bb == 0

    kernel = functools.partial(_mha_fused_kernel, bb=bb, seq_len=T)

    H, hs = NUM_HEADS, HEAD_SIZE
    flops = B * (2 * T * C * (3 * C)          # QKV projection
                 + H * 2 * (2 * T * T * hs)   # QK^T and e@V per head
                 + 2 * T * C * C)             # output projection
    out_bytes = B * T * C * jnp.dtype(x.dtype).itemsize
    bytes_accessed = int(x.size * x.dtype.itemsize
                         + wqkv.size * wqkv.dtype.itemsize
                         + wp.size * wp.dtype.itemsize
                         + bp.size * bp.dtype.itemsize
                         + out_bytes)
    cost = pl.CostEstimate(flops=int(flops),
                           transcendentals=int(B * H * T * T),
                           bytes_accessed=bytes_accessed)

    return pl.pallas_call(
        kernel,
        out_shape=jax.ShapeDtypeStruct((B, T, C), x.dtype),
        grid_spec=pltpu.PrefetchScalarGridSpec(
            num_scalar_prefetch=0,
            grid=(B // bb,),
            in_specs=[
                pl.BlockSpec((bb, T, C), lambda b: (b, 0, 0)),
                pl.BlockSpec((C, 3 * N_EMBED), lambda b: (0, 0)),
                pl.BlockSpec((N_EMBED, N_EMBED), lambda b: (0, 0)),
                pl.BlockSpec((1, N_EMBED), lambda b: (0, 0)),
            ],
            out_specs=pl.BlockSpec((bb, T, C), lambda b: (b, 0, 0)),
            scratch_shapes=[pltpu.VMEM((bb * T, N_EMBED), wqkv.dtype)],
        ),
        compiler_params=pltpu.CompilerParams(
            # batch-block axis is independent -> megacore sharding on v7x.
            dimension_semantics=("parallel",)),
        cost_estimate=cost,
    )(x, wqkv, wp, bp.astype(jnp.float32).reshape(1, N_EMBED))


def _reference(x, wq, wk, wv, wp, bp):
    """Pure-JAX reference mirroring the PyTorch forward (eval mode)."""
    B, T, C = x.shape
    outs = []
    for h in range(wq.shape[0]):
        q = x @ wq[h]
        k = x @ wk[h]
        v = x @ wv[h]
        wei = (q @ jnp.swapaxes(k, -2, -1)) * (C ** -0.5)
        mask = jnp.tril(jnp.ones((T, T), dtype=bool))
        wei = jnp.where(mask, wei, -jnp.inf)
        wei = jax.nn.softmax(wei, axis=-1)
        outs.append(wei @ v)
    cat = jnp.concatenate(outs, axis=-1)
    return cat @ wp + bp


if __name__ == "__main__":
    B, T = 2, 128          # small seq length, T <= block_size (256)
    key = jax.random.PRNGKey(0)
    kx, kq, kk, kv, kp, kb = jax.random.split(key, 6)

    x = jax.random.normal(kx, (B, T, N_EMBED), dtype=jnp.float32)
    # deterministic parameter init (pre-transposed vs. torch's (out, in) layout)
    wq = 0.02 * jax.random.normal(kq, (NUM_HEADS, N_EMBED, HEAD_SIZE), jnp.float32)
    wk = 0.02 * jax.random.normal(kk, (NUM_HEADS, N_EMBED, HEAD_SIZE), jnp.float32)
    wv = 0.02 * jax.random.normal(kv, (NUM_HEADS, N_EMBED, HEAD_SIZE), jnp.float32)
    wp = 0.02 * jax.random.normal(kp, (N_EMBED, N_EMBED), jnp.float32)
    bp = 0.02 * jax.random.normal(kb, (N_EMBED,), jnp.float32)

    ref = _reference(x, wq, wk, wv, wp, bp)

    # 1) f32 MXU path: tight correctness check (only the approx EUP reciprocal
    #    in the softmax denominator differs from the pure-JAX reference).
    out_f32 = multi_head_attention(
        x, fuse_qkv_weights(wq, wk, wv, dtype=jnp.float32),
        wp.astype(jnp.float32), bp)
    out_f32 = jax.block_until_ready(out_f32)
    assert out_f32.shape == (B, T, N_EMBED)
    assert jnp.allclose(out_f32, ref, atol=2e-3, rtol=2e-3), "f32 path mismatch"

    # 2) Default fast path: bf16 MXU operands (weights pre-cast once, scale
    #    folded into Q columns); softmax statistics / accumulation stay f32.
    out_bf16 = multi_head_attention(
        x, fuse_qkv_weights(wq, wk, wv),            # bf16 by default
        wp.astype(jnp.bfloat16), bp)
    out_bf16 = jax.block_until_ready(out_bf16)
    assert out_bf16.shape == (B, T, N_EMBED)
    # bf16 operand rounding gives ~1e-3..1e-2 relative error on this data.
    assert jnp.allclose(out_bf16, ref, atol=2e-2, rtol=2e-2), "bf16 path mismatch"

    print("KERNEL_OK")
</pallas_src>

<mosaic_0001>
module attributes {stable_mosaic.version = 11 : i64} {
  func.func @_mha_fused_kernel(%arg0: i32, %arg1: memref<2x128x384xf32, #tpu.memory_space<vmem>>, %arg2: memref<384x1152xf32, #tpu.memory_space<vmem>>, %arg3: memref<384x384xf32, #tpu.memory_space<vmem>>, %arg4: memref<1x384xf32, #tpu.memory_space<vmem>>, %arg5: memref<2x128x384xf32, #tpu.memory_space<vmem>>, %arg6: memref<256x384xf32, #tpu.memory_space<vmem>>) attributes {dimension_semantics = [#tpu.dimension_semantics<parallel>], iteration_bounds = array<i64: 1>, scalar_prefetch = 0 : i64, scratch_operands = 1 : i64, tpu.core_type = #tpu.core_type<tc>, window_params = [{transform_indices = @transform_0, window_bounds = array<i64: 2, 128, 384>}, {pipeline_mode = #tpu.pipeline_mode<synchronous>, transform_indices = @transform_1, window_bounds = array<i64: 384, 1152>}, {pipeline_mode = #tpu.pipeline_mode<synchronous>, transform_indices = @transform_2, window_bounds = array<i64: 384, 384>}, {pipeline_mode = #tpu.pipeline_mode<synchronous>, transform_indices = @transform_3, window_bounds = array<i64: 1, 384>}, {transform_indices = @transform_4, window_bounds = array<i64: 2, 128, 384>}]} {
    %c0 = arith.constant 0 : index
    %c0_0 = arith.constant 0 : index
    %c0_1 = arith.constant 0 : index
    %0 = vector.load %arg1[%c0, %c0_0, %c0_1] : memref<2x128x384xf32, #tpu.memory_space<vmem>>, vector<2x128x384xf32>
    %1 = vector.shape_cast %0 : vector<2x128x384xf32> to vector<256x384xf32>
    %c0_2 = arith.constant 0 : index
    %c0_3 = arith.constant 0 : index
    %2 = vector.load %arg2[%c0_2, %c0_3] : memref<384x1152xf32, #tpu.memory_space<vmem>>, vector<384x1152xf32>
    %cst = arith.constant dense<0.000000e+00> : vector<256x1152xf32>
    %3 = tpu.matmul %1, %2, %cst {dimension_numbers = #tpu.dot_dimension_numbers<[1], [0], [0], [1], [0, 0, 1, 1], [], []>} : vector<256x384xf32>, vector<384x1152xf32>, vector<256x1152xf32> -> vector<256x1152xf32>
    %4 = tpu.iota {dimensions = array<i32: 0>} : vector<128x128xi32>
    %5 = tpu.iota {dimensions = array<i32: 1>} : vector<128x128xi32>
    %6 = arith.cmpi sle, %5, %4 : vector<128x128xi32>
    %7 = vector.extract_strided_slice %3 {offsets = [0, 0], sizes = [128, 1152], strides = [1, 1]} : vector<256x1152xf32> to vector<128x1152xf32>
    %8 = vector.extract_strided_slice %7 {offsets = [0, 0], sizes = [128, 64], strides = [1, 1]} : vector<128x1152xf32> to vector<128x64xf32>
    %9 = vector.extract_strided_slice %7 {offsets = [0, 384], sizes = [128, 64], strides = [1, 1]} : vector<128x1152xf32> to vector<128x64xf32>
    %10 = vector.extract_strided_slice %7 {offsets = [0, 768], sizes = [128, 64], strides = [1, 1]} : vector<128x1152xf32> to vector<128x64xf32>
    %cst_4 = arith.constant dense<0.000000e+00> : vector<128x128xf32>
    %11 = tpu.matmul %8, %9, %cst_4 {dimension_numbers = #tpu.dot_dimension_numbers<[1], [1], [0], [0], [0, 0, 1, 0], [], []>} : vector<128x64xf32>, vector<128x64xf32>, vector<128x128xf32> -> vector<128x128xf32>
    %cst_5 = arith.constant 0xFF800000 : f32
    %12 = vector.broadcast %cst_5 : f32 to vector<128x128xf32>
    %13 = arith.select %6, %11, %12 : vector<128x128xi1>, vector<128x128xf32>
    %cst_6 = arith.constant dense<0xFF800000> : vector<128xf32>
    %14 = vector.multi_reduction <maximumf>, %13, %cst_6 [1] : vector<128x128xf32> to vector<128xf32>
    %15 = vector.shape_cast %14 : vector<128xf32> to vector<128x1xf32>
    %16 = vector.broadcast %15 : vector<128x1xf32> to vector<128x128xf32>
    %17 = arith.subf %13, %16 : vector<128x128xf32>
    %18 = math.exp %17 : vector<128x128xf32>
    %cst_7 = arith.constant dense<0.000000e+00> : vector<128xf32>
    %19 = vector.multi_reduction <add>, %18, %cst_7 [1] : vector<128x128xf32> to vector<128xf32>
    %20 = vector.shape_cast %19 : vector<128xf32> to vector<128x1xf32>
    %cst_8 = arith.constant dense<0.000000e+00> : vector<128x64xf32>
    %21 = tpu.matmul %18, %10, %cst_8 {dimension_numbers = #tpu.dot_dimension_numbers<[1], [0], [0], [1], [0, 0, 1, 1], [], []>} : vector<128x128xf32>, vector<128x64xf32>, vector<128x64xf32> -> vector<128x64xf32>
    %22 = tpu.reciprocal %20 {approx = true} : vector<128x1xf32> -> vector<128x1xf32>
    %23 = vector.broadcast %22 : vector<128x1xf32> to vector<128x64xf32>
    %24 = arith.mulf %21, %23 : vector<128x64xf32>
    %c0_9 = arith.constant 0 : index
    %c0_10 = arith.constant 0 : index
    %25 = vector.load %arg6[%c0_9, %c0_10] : memref<256x384xf32, #tpu.memory_space<vmem>>, vector<128x64xf32>
    tpu.vector_store %arg6[%c0_9, %c0_10], %24 {strides = array<i32>} : memref<256x384xf32, #tpu.memory_space<vmem>>, vector<128x64xf32>,
    %26 = vector.extract_strided_slice %7 {offsets = [0, 64], sizes = [128, 64], strides = [1, 1]} : vector<128x1152xf32> to vector<128x64xf32>
    %27 = vector.extract_strided_slice %7 {offsets = [0, 448], sizes = [128, 64], strides = [1, 1]} : vector<128x1152xf32> to vector<128x64xf32>
    %28 = vector.extract_strided_slice %7 {offsets = [0, 832], sizes = [128, 64], strides = [1, 1]} : vector<128x1152xf32> to vector<128x64xf32>
    %cst_11 = arith.constant dense<0.000000e+00> : vector<128x128xf32>
    %29 = tpu.matmul %26, %27, %cst_11 {dimension_numbers = #tpu.dot_dimension_numbers<[1], [1], [0], [0], [0, 0, 1, 0], [], []>} : vector<128x64xf32>, vector<128x64xf32>, vector<128x128xf32> -> vector<128x128xf32>
    %cst_12 = arith.constant 0xFF800000 : f32
    %30 = vector.broadcast %cst_12 : f32 to vector<128x128xf32>
    %31 = arith.select %6, %29, %30 : vector<128x128xi1>, vector<128x128xf32>
    %cst_13 = arith.constant dense<0xFF800000> : vector<128xf32>
    %32 = vector.multi_reduction <maximumf>, %31, %cst_13 [1] : vector<128x128xf32> to vector<128xf32>
    %33 = vector.shape_cast %32 : vector<128xf32> to vector<128x1xf32>
    %34 = vector.broadcast %33 : vector<128x1xf32> to vector<128x128xf32>
    %35 = arith.subf %31, %34 : vector<128x128xf32>
    %36 = math.exp %35 : vector<128x128xf32>
    %cst_14 = arith.constant dense<0.000000e+00> : vector<128xf32>
    %37 = vector.multi_reduction <add>, %36, %cst_14 [1] : vector<128x128xf32> to vector<128xf32>
    %38 = vector.shape_cast %37 : vector<128xf32> to vector<128x1xf32>
    %cst_15 = arith.constant dense<0.000000e+00> : vector<128x64xf32>
    %39 = tpu.matmul %36, %28, %cst_15 {dimension_numbers = #tpu.dot_dimension_numbers<[1], [0], [0], [1], [0, 0, 1, 1], [], []>} : vector<128x128xf32>, vector<128x64xf32>, vector<128x64xf32> -> vector<128x64xf32>
    %40 = tpu.reciprocal %38 {approx = true} : vector<128x1xf32> -> vector<128x1xf32>
    %41 = vector.broadcast %40 : vector<128x1xf32> to vector<128x64xf32>
    %42 = arith.mulf %39, %41 : vector<128x64xf32>
    %c0_16 = arith.constant 0 : index
    %c64 = arith.constant 64 : index
    %43 = vector.load %arg6[%c0_16, %c64] : memref<256x384xf32, #tpu.memory_space<vmem>>, vector<128x64xf32>
    tpu.vector_store %arg6[%c0_16, %c64], %42 {strides = array<i32>} : memref<256x384xf32, #tpu.memory_space<vmem>>, vector<128x64xf32>,
    %44 = vector.extract_strided_slice %7 {offsets = [0, 128], sizes = [128, 64], strides = [1, 1]} : vector<128x1152xf32> to vector<128x64xf32>
    %45 = vector.extract_strided_slice %7 {offsets = [0, 512], sizes = [128, 64], strides = [1, 1]} : vector<128x1152xf32> to vector<128x64xf32>
    %46 = vector.extract_strided_slice %7 {offsets = [0, 896], sizes = [128, 64], strides = [1, 1]} : vector<128x1152xf32> to vector<128x64xf32>
    %cst_17 = arith.constant dense<0.000000e+00> : vector<128x128xf32>
    %47 = tpu.matmul %44, %45, %cst_17 {dimension_numbers = #tpu.dot_dimension_numbers<[1], [1], [0], [0], [0, 0, 1, 0], [], []>} : vector<128x64xf32>, vector<128x64xf32>, vector<128x128xf32> -> vector<128x128xf32>
    %cst_18 = arith.constant 0xFF800000 : f32
    %48 = vector.broadcast %cst_18 : f32 to vector<128x128xf32>
    %49 = arith.select %6, %47, %48 : vector<128x128xi1>, vector<128x128xf32>
    %cst_19 = arith.constant dense<0xFF800000> : vector<128xf32>
    %50 = vector.multi_reduction <maximumf>, %49, %cst_19 [1] : vector<128x128xf32> to vector<128xf32>
    %51 = vector.shape_cast %50 : vector<128xf32> to vector<128x1xf32>
    %52 = vector.broadcast %51 : vector<128x1xf32> to vector<128x128xf32>
    %53 = arith.subf %49, %52 : vector<128x128xf32>
    %54 = math.exp %53 : vector<128x128xf32>
    %cst_20 = arith.constant dense<0.000000e+00> : vector<128xf32>
    %55 = vector.multi_reduction <add>, %54, %cst_20 [1] : vector<128x128xf32> to vector<128xf32>
    %56 = vector.shape_cast %55 : vector<128xf32> to vector<128x1xf32>
    %cst_21 = arith.constant dense<0.000000e+00> : vector<128x64xf32>
    %57 = tpu.matmul %54, %46, %cst_21 {dimension_numbers = #tpu.dot_dimension_numbers<[1], [0], [0], [1], [0, 0, 1, 1], [], []>} : vector<128x128xf32>, vector<128x64xf32>, vector<128x64xf32> -> vector<128x64xf32>
    %58 = tpu.reciprocal %56 {approx = true} : vector<128x1xf32> -> vector<128x1xf32>
    %59 = vector.broadcast %58 : vector<128x1xf32> to vector<128x64xf32>
    %60 = arith.mulf %57, %59 : vector<128x64xf32>
    %c0_22 = arith.constant 0 : index
    %c128 = arith.constant 128 : index
    %61 = vector.load %arg6[%c0_22, %c128] : memref<256x384xf32, #tpu.memory_space<vmem>>, vector<128x64xf32>
    tpu.vector_store %arg6[%c0_22, %c128], %60 {strides = array<i32>} : memref<256x384xf32, #tpu.memory_space<vmem>>, vector<128x64xf32>,
    %62 = vector.extract_strided_slice %7 {offsets = [0, 192], sizes = [128, 64], strides = [1, 1]} : vector<128x1152xf32> to vector<128x64xf32>
    %63 = vector.extract_strided_slice %7 {offsets = [0, 576], sizes = [128, 64], strides = [1, 1]} : vector<128x1152xf32> to vector<128x64xf32>
    %64 = vector.extract_strided_slice %7 {offsets = [0, 960], sizes = [128, 64], strides = [1, 1]} : vector<128x1152xf32> to vector<128x64xf32>
    %cst_23 = arith.constant dense<0.000000e+00> : vector<128x128xf32>
    %65 = tpu.matmul %62, %63, %cst_23 {dimension_numbers = #tpu.dot_dimension_numbers<[1], [1], [0], [0], [0, 0, 1, 0], [], []>} : vector<128x64xf32>, vector<128x64xf32>, vector<128x128xf32> -> vector<128x128xf32>
    %cst_24 = arith.constant 0xFF800000 : f32
    %66 = vector.broadcast %cst_24 : f32 to vector<128x128xf32>
    %67 = arith.select %6, %65, %66 : vector<128x128xi1>, vector<128x128xf32>
    %cst_25 = arith.constant dense<0xFF800000> : vector<128xf32>
    %68 = vector.multi_reduction <maximumf>, %67, %cst_25 [1] : vector<128x128xf32> to vector<128xf32>
    %69 = vector.shape_cast %68 : vector<128xf32> to vector<128x1xf32>
    %70 = vector.broadcast %69 : vector<128x1xf32> to vector<128x128xf32>
    %71 = arith.subf %67, %70 : vector<128x128xf32>
    %72 = math.exp %71 : vector<128x128xf32>
    %cst_26 = arith.constant dense<0.000000e+00> : vector<128xf32>
    %73 = vector.multi_reduction <add>, %72, %cst_26 [1] : vector<128x128xf32> to vector<128xf32>
    %74 = vector.shape_cast %73 : vector<128xf32> to vector<128x1xf32>
    %cst_27 = arith.constant dense<0.000000e+00> : vector<128x64xf32>
    %75 = tpu.matmul %72, %64, %cst_27 {dimension_numbers = #tpu.dot_dimension_numbers<[1], [0], [0], [1], [0, 0, 1, 1], [], []>} : vector<128x128xf32>, vector<128x64xf32>, vector<128x64xf32> -> vector<128x64xf32>
    %76 = tpu.reciprocal %74 {approx = true} : vector<128x1xf32> -> vector<128x1xf32>
    %77 = vector.broadcast %76 : vector<128x1xf32> to vector<128x64xf32>
    %78 = arith.mulf %75, %77 : vector<128x64xf32>
    %c0_28 = arith.constant 0 : index
    %c192 = arith.constant 192 : index
    %79 = vector.load %arg6[%c0_28, %c192] : memref<256x384xf32, #tpu.memory_space<vmem>>, vector<128x64xf32>
    tpu.vector_store %arg6[%c0_28, %c192], %78 {strides = array<i32>} : memref<256x384xf32, #tpu.memory_space<vmem>>, vector<128x64xf32>,
    %80 = vector.extract_strided_slice %7 {offsets = [0, 256], sizes = [128, 64], strides = [1, 1]} : vector<128x1152xf32> to vector<128x64xf32>
    %81 = vector.extract_strided_slice %7 {offsets = [0, 640], sizes = [128, 64], strides = [1, 1]} : vector<128x1152xf32> to vector<128x64xf32>
    %82 = vector.extract_strided_slice %7 {offsets = [0, 1024], sizes = [128, 64], strides = [1, 1]} : vector<128x1152xf32> to vector<128x64xf32>
    %cst_29 = arith.constant dense<0.000000e+00> : vector<128x128xf32>
    %83 = tpu.matmul %80, %81, %cst_29 {dimension_numbers = #tpu.dot_dimension_numbers<[1], [1], [0], [0], [0, 0, 1, 0], [], []>} : vector<128x64xf32>, vector<128x64xf32>, vector<128x128xf32> -> vector<128x128xf32>
    %cst_30 = arith.constant 0xFF800000 : f32
    %84 = vector.broadcast %cst_30 : f32 to vector<128x128xf32>
    %85 = arith.select %6, %83, %84 : vector<128x128xi1>, vector<128x128xf32>
    %cst_31 = arith.constant dense<0xFF800000> : vector<128xf32>
    %86 = vector.multi_reduction <maximumf>, %85, %cst_31 [1] : vector<128x128xf32> to vector<128xf32>
    %87 = vector.shape_cast %86 : vector<128xf32> to vector<128x1xf32>
    %88 = vector.broadcast %87 : vector<128x1xf32> to vector<128x128xf32>
    %89 = arith.subf %85, %88 : vector<128x128xf32>
    %90 = math.exp %89 : vector<128x128xf32>
    %cst_32 = arith.constant dense<0.000000e+00> : vector<128xf32>
    %91 = vector.multi_reduction <add>, %90, %cst_32 [1] : vector<128x128xf32> to vector<128xf32>
    %92 = vector.shape_cast %91 : vector<128xf32> to vector<128x1xf32>
    %cst_33 = arith.constant dense<0.000000e+00> : vector<128x64xf32>
    %93 = tpu.matmul %90, %82, %cst_33 {dimension_numbers = #tpu.dot_dimension_numbers<[1], [0], [0], [1], [0, 0, 1, 1], [], []>} : vector<128x128xf32>, vector<128x64xf32>, vector<128x64xf32> -> vector<128x64xf32>
    %94 = tpu.reciprocal %92 {approx = true} : vector<128x1xf32> -> vector<128x1xf32>
    %95 = vector.broadcast %94 : vector<128x1xf32> to vector<128x64xf32>
    %96 = arith.mulf %93, %95 : vector<128x64xf32>
    %c0_34 = arith.constant 0 : index
    %c256 = arith.constant 256 : index
    %97 = vector.load %arg6[%c0_34, %c256] : memref<256x384xf32, #tpu.memory_space<vmem>>, vector<128x64xf32>
    tpu.vector_store %arg6[%c0_34, %c256], %96 {strides = array<i32>} : memref<256x384xf32, #tpu.memory_space<vmem>>, vector<128x64xf32>,
    %98 = vector.extract_strided_slice %7 {offsets = [0, 320], sizes = [128, 64], strides = [1, 1]} : vector<128x1152xf32> to vector<128x64xf32>
    %99 = vector.extract_strided_slice %7 {offsets = [0, 704], sizes = [128, 64], strides = [1, 1]} : vector<128x1152xf32> to vector<128x64xf32>
    %100 = vector.extract_strided_slice %7 {offsets = [0, 1088], sizes = [128, 64], strides = [1, 1]} : vector<128x1152xf32> to vector<128x64xf32>
    %cst_35 = arith.constant dense<0.000000e+00> : vector<128x128xf32>
    %101 = tpu.matmul %98, %99, %cst_35 {dimension_numbers = #tpu.dot_dimension_numbers<[1], [1], [0], [0], [0, 0, 1, 0], [], []>} : vector<128x64xf32>, vector<128x64xf32>, vector<128x128xf32> -> vector<128x128xf32>
    %cst_36 = arith.constant 0xFF800000 : f32
    %102 = vector.broadcast %cst_36 : f32 to vector<128x128xf32>
    %103 = arith.select %6, %101, %102 : vector<128x128xi1>, vector<128x128xf32>
    %cst_37 = arith.constant dense<0xFF800000> : vector<128xf32>
    %104 = vector.multi_reduction <maximumf>, %103, %cst_37 [1] : vector<128x128xf32> to vector<128xf32>
    %105 = vector.shape_cast %104 : vector<128xf32> to vector<128x1xf32>
    %106 = vector.broadcast %105 : vector<128x1xf32> to vector<128x128xf32>
    %107 = arith.subf %103, %106 : vector<128x128xf32>
    %108 = math.exp %107 : vector<128x128xf32>
    %cst_38 = arith.constant dense<0.000000e+00> : vector<128xf32>
    %109 = vector.multi_reduction <add>, %108, %cst_38 [1] : vector<128x128xf32> to vector<128xf32>
    %110 = vector.shape_cast %109 : vector<128xf32> to vector<128x1xf32>
    %cst_39 = arith.constant dense<0.000000e+00> : vector<128x64xf32>
    %111 = tpu.matmul %108, %100, %cst_39 {dimension_numbers = #tpu.dot_dimension_numbers<[1], [0], [0], [1], [0, 0, 1, 1], [], []>} : vector<128x128xf32>, vector<128x64xf32>, vector<128x64xf32> -> vector<128x64xf32>
    %112 = tpu.reciprocal %110 {approx = true} : vector<128x1xf32> -> vector<128x1xf32>
    %113 = vector.broadcast %112 : vector<128x1xf32> to vector<128x64xf32>
    %114 = arith.mulf %111, %113 : vector<128x64xf32>
    %c0_40 = arith.constant 0 : index
    %c320 = arith.constant 320 : index
    %115 = vector.load %arg6[%c0_40, %c320] : memref<256x384xf32, #tpu.memory_space<vmem>>, vector<128x64xf32>
    tpu.vector_store %arg6[%c0_40, %c320], %114 {strides = array<i32>} : memref<256x384xf32, #tpu.memory_space<vmem>>, vector<128x64xf32>,
    %116 = vector.extract_strided_slice %3 {offsets = [128, 0], sizes = [128, 1152], strides = [1, 1]} : vector<256x1152xf32> to vector<128x1152xf32>
    %117 = vector.extract_strided_slice %116 {offsets = [0, 0], sizes = [128, 64], strides = [1, 1]} : vector<128x1152xf32> to vector<128x64xf32>
    %118 = vector.extract_strided_slice %116 {offsets = [0, 384], sizes = [128, 64], strides = [1, 1]} : vector<128x1152xf32> to vector<128x64xf32>
    %119 = vector.extract_strided_slice %116 {offsets = [0, 768], sizes = [128, 64], strides = [1, 1]} : vector<128x1152xf32> to vector<128x64xf32>
    %cst_41 = arith.constant dense<0.000000e+00> : vector<128x128xf32>
    %120 = tpu.matmul %117, %118, %cst_41 {dimension_numbers = #tpu.dot_dimension_numbers<[1], [1], [0], [0], [0, 0, 1, 0], [], []>} : vector<128x64xf32>, vector<128x64xf32>, vector<128x128xf32> -> vector<128x128xf32>
    %cst_42 = arith.constant 0xFF800000 : f32
    %121 = vector.broadcast %cst_42 : f32 to vector<128x128xf32>
    %122 = arith.select %6, %120, %121 : vector<128x128xi1>, vector<128x128xf32>
    %cst_43 = arith.constant dense<0xFF800000> : vector<128xf32>
    %123 = vector.multi_reduction <maximumf>, %122, %cst_43 [1] : vector<128x128xf32> to vector<128xf32>
    %124 = vector.shape_cast %123 : vector<128xf32> to vector<128x1xf32>
    %125 = vector.broadcast %124 : vector<128x1xf32> to vector<128x128xf32>
    %126 = arith.subf %122, %125 : vector<128x128xf32>
    %127 = math.exp %126 : vector<128x128xf32>
    %cst_44 = arith.constant dense<0.000000e+00> : vector<128xf32>
    %128 = vector.multi_reduction <add>, %127, %cst_44 [1] : vector<128x128xf32> to vector<128xf32>
    %129 = vector.shape_cast %128 : vector<128xf32> to vector<128x1xf32>
    %cst_45 = arith.constant dense<0.000000e+00> : vector<128x64xf32>
    %130 = tpu.matmul %127, %119, %cst_45 {dimension_numbers = #tpu.dot_dimension_numbers<[1], [0], [0], [1], [0, 0, 1, 1], [], []>} : vector<128x128xf32>, vector<128x64xf32>, vector<128x64xf32> -> vector<128x64xf32>
    %131 = tpu.reciprocal %129 {approx = true} : vector<128x1xf32> -> vector<128x1xf32>
    %132 = vector.broadcast %131 : vector<128x1xf32> to vector<128x64xf32>
    %133 = arith.mulf %130, %132 : vector<128x64xf32>
    %c128_46 = arith.constant 128 : index
    %c0_47 = arith.constant 0 : index
    %134 = vector.load %arg6[%c128_46, %c0_47] : memref<256x384xf32, #tpu.memory_space<vmem>>, vector<128x64xf32>
    tpu.vector_store %arg6[%c128_46, %c0_47], %133 {strides = array<i32>} : memref<256x384xf32, #tpu.memory_space<vmem>>, vector<128x64xf32>,
    %135 = vector.extract_strided_slice %116 {offsets = [0, 64], sizes = [128, 64], strides = [1, 1]} : vector<128x1152xf32> to vector<128x64xf32>
    %136 = vector.extract_strided_slice %116 {offsets = [0, 448], sizes = [128, 64], strides = [1, 1]} : vector<128x1152xf32> to vector<128x64xf32>
    %137 = vector.extract_strided_slice %116 {offsets = [0, 832], sizes = [128, 64], strides = [1, 1]} : vector<128x1152xf32> to vector<128x64xf32>
    %cst_48 = arith.constant dense<0.000000e+00> : vector<128x128xf32>
    %138 = tpu.matmul %135, %136, %cst_48 {dimension_numbers = #tpu.dot_dimension_numbers<[1], [1], [0], [0], [0, 0, 1, 0], [], []>} : vector<128x64xf32>, vector<128x64xf32>, vector<128x128xf32> -> vector<128x128xf32>
    %cst_49 = arith.constant 0xFF800000 : f32
    %139 = vector.broadcast %cst_49 : f32 to vector<128x128xf32>
    %140 = arith.select %6, %138, %139 : vector<128x128xi1>, vector<128x128xf32>
    %cst_50 = arith.constant dense<0xFF800000> : vector<128xf32>
    %141 = vector.multi_reduction <maximumf>, %140, %cst_50 [1] : vector<128x128xf32> to vector<128xf32>
    %142 = vector.shape_cast %141 : vector<128xf32> to vector<128x1xf32>
    %143 = vector.broadcast %142 : vector<128x1xf32> to vector<128x128xf32>
    %144 = arith.subf %140, %143 : vector<128x128xf32>
    %145 = math.exp %144 : vector<128x128xf32>
    %cst_51 = arith.constant dense<0.000000e+00> : vector<128xf32>
    %146 = vector.multi_reduction <add>, %145, %cst_51 [1] : vector<128x128xf32> to vector<128xf32>
    %147 = vector.shape_cast %146 : vector<128xf32> to vector<128x1xf32>
    %cst_52 = arith.constant dense<0.000000e+00> : vector<128x64xf32>
    %148 = tpu.matmul %145, %137, %cst_52 {dimension_numbers = #tpu.dot_dimension_numbers<[1], [0], [0], [1], [0, 0, 1, 1], [], []>} : vector<128x128xf32>, vector<128x64xf32>, vector<128x64xf32> -> vector<128x64xf32>
    %149 = tpu.reciprocal %147 {approx = true} : vector<128x1xf32> -> vector<128x1xf32>
    %150 = vector.broadcast %149 : vector<128x1xf32> to vector<128x64xf32>
    %151 = arith.mulf %148, %150 : vector<128x64xf32>
    %c128_53 = arith.constant 128 : index
    %c64_54 = arith.constant 64 : index
    %152 = vector.load %arg6[%c128_53, %c64_54] : memref<256x384xf32, #tpu.memory_space<vmem>>, vector<128x64xf32>
    tpu.vector_store %arg6[%c128_53, %c64_54], %151 {strides = array<i32>} : memref<256x384xf32, #tpu.memory_space<vmem>>, vector<128x64xf32>,
    %153 = vector.extract_strided_slice %116 {offsets = [0, 128], sizes = [128, 64], strides = [1, 1]} : vector<128x1152xf32> to vector<128x64xf32>
    %154 = vector.extract_strided_slice %116 {offsets = [0, 512], sizes = [128, 64], strides = [1, 1]} : vector<128x1152xf32> to vector<128x64xf32>
    %155 = vector.extract_strided_slice %116 {offsets = [0, 896], sizes = [128, 64], strides = [1, 1]} : vector<128x1152xf32> to vector<128x64xf32>
    %cst_55 = arith.constant dense<0.000000e+00> : vector<128x128xf32>
    %156 = tpu.matmul %153, %154, %cst_55 {dimension_numbers = #tpu.dot_dimension_numbers<[1], [1], [0], [0], [0, 0, 1, 0], [], []>} : vector<128x64xf32>, vector<128x64xf32>, vector<128x128xf32> -> vector<128x128xf32>
    %cst_56 = arith.constant 0xFF800000 : f32
    %157 = vector.broadcast %cst_56 : f32 to vector<128x128xf32>
    %158 = arith.select %6, %156, %157 : vector<128x128xi1>, vector<128x128xf32>
    %cst_57 = arith.constant dense<0xFF800000> : vector<128xf32>
    %159 = vector.multi_reduction <maximumf>, %158, %cst_57 [1] : vector<128x128xf32> to vector<128xf32>
    %160 = vector.shape_cast %159 : vector<128xf32> to vector<128x1xf32>
    %161 = vector.broadcast %160 : vector<128x1xf32> to vector<128x128xf32>
    %162 = arith.subf %158, %161 : vector<128x128xf32>
    %163 = math.exp %162 : vector<128x128xf32>
    %cst_58 = arith.constant dense<0.000000e+00> : vector<128xf32>
    %164 = vector.multi_reduction <add>, %163, %cst_58 [1] : vector<128x128xf32> to vector<128xf32>
    %165 = vector.shape_cast %164 : vector<128xf32> to vector<128x1xf32>
    %cst_59 = arith.constant dense<0.000000e+00> : vector<128x64xf32>
    %166 = tpu.matmul %163, %155, %cst_59 {dimension_numbers = #tpu.dot_dimension_numbers<[1], [0], [0], [1], [0, 0, 1, 1], [], []>} : vector<128x128xf32>, vector<128x64xf32>, vector<128x64xf32> -> vector<128x64xf32>
    %167 = tpu.reciprocal %165 {approx = true} : vector<128x1xf32> -> vector<128x1xf32>
    %168 = vector.broadcast %167 : vector<128x1xf32> to vector<128x64xf32>
    %169 = arith.mulf %166, %168 : vector<128x64xf32>
    %c128_60 = arith.constant 128 : index
    %c128_61 = arith.constant 128 : index
    %170 = vector.load %arg6[%c128_60, %c128_61] : memref<256x384xf32, #tpu.memory_space<vmem>>, vector<128x64xf32>
    tpu.vector_store %arg6[%c128_60, %c128_61], %169 {strides = array<i32>} : memref<256x384xf32, #tpu.memory_space<vmem>>, vector<128x64xf32>,
    %171 = vector.extract_strided_slice %116 {offsets = [0, 192], sizes = [128, 64], strides = [1, 1]} : vector<128x1152xf32> to vector<128x64xf32>
    %172 = vector.extract_strided_slice %116 {offsets = [0, 576], sizes = [128, 64], strides = [1, 1]} : vector<128x1152xf32> to vector<128x64xf32>
    %173 = vector.extract_strided_slice %116 {offsets = [0, 960], sizes = [128, 64], strides = [1, 1]} : vector<128x1152xf32> to vector<128x64xf32>
    %cst_62 = arith.constant dense<0.000000e+00> : vector<128x128xf32>
    %174 = tpu.matmul %171, %172, %cst_62 {dimension_numbers = #tpu.dot_dimension_numbers<[1], [1], [0], [0], [0, 0, 1, 0], [], []>} : vector<128x64xf32>, vector<128x64xf32>, vector<128x128xf32> -> vector<128x128xf32>
    %cst_63 = arith.constant 0xFF800000 : f32
    %175 = vector.broadcast %cst_63 : f32 to vector<128x128xf32>
    %176 = arith.select %6, %174, %175 : vector<128x128xi1>, vector<128x128xf32>
    %cst_64 = arith.constant dense<0xFF800000> : vector<128xf32>
    %177 = vector.multi_reduction <maximumf>, %176, %cst_64 [1] : vector<128x128xf32> to vector<128xf32>
    %178 = vector.shape_cast %177 : vector<128xf32> to vector<128x1xf32>
    %179 = vector.broadcast %178 : vector<128x1xf32> to vector<128x128xf32>
    %180 = arith.subf %176, %179 : vector<128x128xf32>
    %181 = math.exp %180 : vector<128x128xf32>
    %cst_65 = arith.constant dense<0.000000e+00> : vector<128xf32>
    %182 = vector.multi_reduction <add>, %181, %cst_65 [1] : vector<128x128xf32> to vector<128xf32>
    %183 = vector.shape_cast %182 : vector<128xf32> to vector<128x1xf32>
    %cst_66 = arith.constant dense<0.000000e+00> : vector<128x64xf32>
    %184 = tpu.matmul %181, %173, %cst_66 {dimension_numbers = #tpu.dot_dimension_numbers<[1], [0], [0], [1], [0, 0, 1, 1], [], []>} : vector<128x128xf32>, vector<128x64xf32>, vector<128x64xf32> -> vector<128x64xf32>
    %185 = tpu.reciprocal %183 {approx = true} : vector<128x1xf32> -> vector<128x1xf32>
    %186 = vector.broadcast %185 : vector<128x1xf32> to vector<128x64xf32>
    %187 = arith.mulf %184, %186 : vector<128x64xf32>
    %c128_67 = arith.constant 128 : index
    %c192_68 = arith.constant 192 : index
    %188 = vector.load %arg6[%c128_67, %c192_68] : memref<256x384xf32, #tpu.memory_space<vmem>>, vector<128x64xf32>
    tpu.vector_store %arg6[%c128_67, %c192_68], %187 {strides = array<i32>} : memref<256x384xf32, #tpu.memory_space<vmem>>, vector<128x64xf32>,
    %189 = vector.extract_strided_slice %116 {offsets = [0, 256], sizes = [128, 64], strides = [1, 1]} : vector<128x1152xf32> to vector<128x64xf32>
    %190 = vector.extract_strided_slice %116 {offsets = [0, 640], sizes = [128, 64], strides = [1, 1]} : vector<128x1152xf32> to vector<128x64xf32>
    %191 = vector.extract_strided_slice %116 {offsets = [0, 1024], sizes = [128, 64], strides = [1, 1]} : vector<128x1152xf32> to vector<128x64xf32>
    %cst_69 = arith.constant dense<0.000000e+00> : vector<128x128xf32>
    %192 = tpu.matmul %189, %190, %cst_69 {dimension_numbers = #tpu.dot_dimension_numbers<[1], [1], [0], [0], [0, 0, 1, 0], [], []>} : vector<128x64xf32>, vector<128x64xf32>, vector<128x128xf32> -> vector<128x128xf32>
    %cst_70 = arith.constant 0xFF800000 : f32
    %193 = vector.broadcast %cst_70 : f32 to vector<128x128xf32>
    %194 = arith.select %6, %192, %193 : vector<128x128xi1>, vector<128x128xf32>
    %cst_71 = arith.constant dense<0xFF800000> : vector<128xf32>
    %195 = vector.multi_reduction <maximumf>, %194, %cst_71 [1] : vector<128x128xf32> to vector<128xf32>
    %196 = vector.shape_cast %195 : vector<128xf32> to vector<128x1xf32>
    %197 = vector.broadcast %196 : vector<128x1xf32> to vector<128x128xf32>
    %198 = arith.subf %194, %197 : vector<128x128xf32>
    %199 = math.exp %198 : vector<128x128xf32>
    %cst_72 = arith.constant dense<0.000000e+00> : vector<128xf32>
    %200 = vector.multi_reduction <add>, %199, %cst_72 [1] : vector<128x128xf32> to vector<128xf32>
    %201 = vector.shape_cast %200 : vector<128xf32> to vector<128x1xf32>
    %cst_73 = arith.constant dense<0.000000e+00> : vector<128x64xf32>
    %202 = tpu.matmul %199, %191, %cst_73 {dimension_numbers = #tpu.dot_dimension_numbers<[1], [0], [0], [1], [0, 0, 1, 1], [], []>} : vector<128x128xf32>, vector<128x64xf32>, vector<128x64xf32> -> vector<128x64xf32>
    %203 = tpu.reciprocal %201 {approx = true} : vector<128x1xf32> -> vector<128x1xf32>
    %204 = vector.broadcast %203 : vector<128x1xf32> to vector<128x64xf32>
    %205 = arith.mulf %202, %204 : vector<128x64xf32>
    %c128_74 = arith.constant 128 : index
    %c256_75 = arith.constant 256 : index
    %206 = vector.load %arg6[%c128_74, %c256_75] : memref<256x384xf32, #tpu.memory_space<vmem>>, vector<128x64xf32>
    tpu.vector_store %arg6[%c128_74, %c256_75], %205 {strides = array<i32>} : memref<256x384xf32, #tpu.memory_space<vmem>>, vector<128x64xf32>,
    %207 = vector.extract_strided_slice %116 {offsets = [0, 320], sizes = [128, 64], strides = [1, 1]} : vector<128x1152xf32> to vector<128x64xf32>
    %208 = vector.extract_strided_slice %116 {offsets = [0, 704], sizes = [128, 64], strides = [1, 1]} : vector<128x1152xf32> to vector<128x64xf32>
    %209 = vector.extract_strided_slice %116 {offsets = [0, 1088], sizes = [128, 64], strides = [1, 1]} : vector<128x1152xf32> to vector<128x64xf32>
    %cst_76 = arith.constant dense<0.000000e+00> : vector<128x128xf32>
    %210 = tpu.matmul %207, %208, %cst_76 {dimension_numbers = #tpu.dot_dimension_numbers<[1], [1], [0], [0], [0, 0, 1, 0], [], []>} : vector<128x64xf32>, vector<128x64xf32>, vector<128x128xf32> -> vector<128x128xf32>
    %cst_77 = arith.constant 0xFF800000 : f32
    %211 = vector.broadcast %cst_77 : f32 to vector<128x128xf32>
    %212 = arith.select %6, %210, %211 : vector<128x128xi1>, vector<128x128xf32>
    %cst_78 = arith.constant dense<0xFF800000> : vector<128xf32>
    %213 = vector.multi_reduction <maximumf>, %212, %cst_78 [1] : vector<128x128xf32> to vector<128xf32>
    %214 = vector.shape_cast %213 : vector<128xf32> to vector<128x1xf32>
    %215 = vector.broadcast %214 : vector<128x1xf32> to vector<128x128xf32>
    %216 = arith.subf %212, %215 : vector<128x128xf32>
    %217 = math.exp %216 : vector<128x128xf32>
    %cst_79 = arith.constant dense<0.000000e+00> : vector<128xf32>
    %218 = vector.multi_reduction <add>, %217, %cst_79 [1] : vector<128x128xf32> to vector<128xf32>
    %219 = vector.shape_cast %218 : vector<128xf32> to vector<128x1xf32>
    %cst_80 = arith.constant dense<0.000000e+00> : vector<128x64xf32>
    %220 = tpu.matmul %217, %209, %cst_80 {dimension_numbers = #tpu.dot_dimension_numbers<[1], [0], [0], [1], [0, 0, 1, 1], [], []>} : vector<128x128xf32>, vector<128x64xf32>, vector<128x64xf32> -> vector<128x64xf32>
    %221 = tpu.reciprocal %219 {approx = true} : vector<128x1xf32> -> vector<128x1xf32>
    %222 = vector.broadcast %221 : vector<128x1xf32> to vector<128x64xf32>
    %223 = arith.mulf %220, %222 : vector<128x64xf32>
    %c128_81 = arith.constant 128 : index
    %c320_82 = arith.constant 320 : index
    %224 = vector.load %arg6[%c128_81, %c320_82] : memref<256x384xf32, #tpu.memory_space<vmem>>, vector<128x64xf32>
    tpu.vector_store %arg6[%c128_81, %c320_82], %223 {strides = array<i32>} : memref<256x384xf32, #tpu.memory_space<vmem>>, vector<128x64xf32>,
    %c0_83 = arith.constant 0 : index
    %c0_84 = arith.constant 0 : index
    %225 = vector.load %arg6[%c0_83, %c0_84] : memref<256x384xf32, #tpu.memory_space<vmem>>, vector<256x384xf32>
    %c0_85 = arith.constant 0 : index
    %c0_86 = arith.constant 0 : index
    %226 = vector.load %arg3[%c0_85, %c0_86] : memref<384x384xf32, #tpu.memory_space<vmem>>, vector<384x384xf32>
    %cst_87 = arith.constant dense<0.000000e+00> : vector<256x384xf32>
    %227 = tpu.matmul %225, %226, %cst_87 {dimension_numbers = #tpu.dot_dimension_numbers<[1], [0], [0], [1], [0, 0, 1, 1], [], []>} : vector<256x384xf32>, vector<384x384xf32>, vector<256x384xf32> -> vector<256x384xf32>
    %c0_88 = arith.constant 0 : index
    %c0_89 = arith.constant 0 : index
    %228 = vector.load %arg4[%c0_88, %c0_89] : memref<1x384xf32, #tpu.memory_space<vmem>>, vector<1x384xf32>
    %229 = vector.broadcast %228 : vector<1x384xf32> to vector<256x384xf32>
    %230 = arith.addf %227, %229 : vector<256x384xf32>
    %231 = vector.shape_cast %230 : vector<256x384xf32> to vector<2x128x384xf32>
    %c0_90 = arith.constant 0 : index
    %c0_91 = arith.constant 0 : index
    %c0_92 = arith.constant 0 : index
    %232 = vector.load %arg5[%c0_90, %c0_91, %c0_92] : memref<2x128x384xf32, #tpu.memory_space<vmem>>, vector<2x128x384xf32>
    tpu.vector_store %arg5[%c0_90, %c0_91, %c0_92], %231 {strides = array<i32>} : memref<2x128x384xf32, #tpu.memory_space<vmem>>, vector<2x128x384xf32>,
    return
  }
  func.func @transform_0(%arg0: i32) -> (i32, i32, i32) {
    %c0_i32 = arith.constant 0 : i32
    %c0_i32_0 = arith.constant 0 : i32
    %c0_i32_1 = arith.constant 0 : i32
    return %arg0, %c0_i32, %c0_i32_0 : i32, i32, i32
  }
  func.func @transform_1(%arg0: i32) -> (i32, i32) {
    %c0_i32 = arith.constant 0 : i32
    %c0_i32_0 = arith.constant 0 : i32
    %c0_i32_1 = arith.constant 0 : i32
    return %c0_i32, %c0_i32_0 : i32, i32
  }
  func.func @transform_2(%arg0: i32) -> (i32, i32) {
    %c0_i32 = arith.constant 0 : i32
    %c0_i32_0 = arith.constant 0 : i32
    %c0_i32_1 = arith.constant 0 : i32
    return %c0_i32, %c0_i32_0 : i32, i32
  }
  func.func @transform_3(%arg0: i32) -> (i32, i32) {
    %c0_i32 = arith.constant 0 : i32
    %c0_i32_0 = arith.constant 0 : i32
    %c0_i32_1 = arith.constant 0 : i32
    return %c0_i32, %c0_i32_0 : i32, i32
  }
  func.func @transform_4(%arg0: i32) -> (i32, i32, i32) {
    %c0_i32 = arith.constant 0 : i32
    %c0_i32_0 = arith.constant 0 : i32
    %c0_i32_1 = arith.constant 0 : i32
    return %arg0, %c0_i32, %c0_i32_0 : i32, i32, i32
  }
}

</mosaic_0001>

<llo_original>
// kernel: tpu_custom_call.1
$region0: #{tpu_custom_call.1}
  #allocation0 [shape = 'u32[]', space=smem, size = 0x4, offset = 0x4, fixed_abs, tag = 'smem constant byte address 0x4 - core index']
  #allocation1 [shape = 'u32[72,128]{1,0:T(1,128)}', space=vmem, size = 0x9000, scoped, tag = 'internal scratch']
  #allocation2 [shape = 'f32[256,384]{1,0:T(8,128)}', space=vmem, size = 0x60000, scoped, tag = 'scratch operand']
  %s0 = inlined_call_operand.hbm [shape: f32[2,128,384], index: 0, kind: input, shape index: {}]
  %s1 = inlined_call_operand.hbm [shape: f32[384,1152], index: 1, kind: input, shape index: {}]
  %s2 = inlined_call_operand.hbm [shape: f32[384,384], index: 2, kind: input, shape index: {}]
  %s3 = inlined_call_operand.hbm [shape: f32[1,384], index: 3, kind: input, shape index: {}]
  %s4 = inlined_call_operand.hbm [shape: f32[2,128,384], index: 4, kind: output, shape index: {}]
  %s5 = sld [smem:[#allocation0]]
  $region42: #{tpu_custom_call.1} parent=0
    _
  %s7 = ssub.s32 1, %s5
  %s8 = scalar_select 0, %s7, %s5
  $region1: #{tpu_custom_call.1} parent=0
    #allocation3 [shape = 'u8[393216]{0}', space=vmem, size = 0x60000, scoped, tag = 'input window, operand 0, single buffered']
    #allocation4 [shape = 's32[1]{0}', space=sflag, size = 0x4, scoped, tag = 'scoped memory for tpu_custom_call.1']
    #allocation5 [shape = 's32[1]{0}', space=sflag, size = 0x4, scoped, tag = 'scoped memory for tpu_custom_call.1']
    #allocation6 [shape = 'u8[1769472]{0}', space=vmem, size = 0x1b0000, scoped, tag = 'input window, operand 1, single buffered']
    #allocation7 [shape = 's32[1]{0}', space=sflag, size = 0x4, scoped, tag = 'scoped memory for tpu_custom_call.1']
    #allocation8 [shape = 'u8[589824]{0}', space=vmem, size = 0x90000, scoped, tag = 'input window, operand 2, single buffered']
    #allocation9 [shape = 'u8[1536]{0}', space=vmem, size = 0x800, scoped, tag = 'input window, operand 3, single buffered']
    #allocation10 [shape = 's32[1]{0}', space=sflag, size = 0x4, scoped, tag = 'scoped memory for tpu_custom_call.1']
    #allocation11 [shape = 'u8[393216]{0}', space=vmem, size = 0x60000, scoped, tag = 'output window, operand 0, single buffered']
    %9 = vsyncpa [#allocation4], 0
    %10 = vsyncpa [#allocation7], 0
    %11 = vsyncpa [#allocation10], 0
    %12 = vsyncpa [#allocation5], 0
    // Predicated region
    $region2: #{tpu_custom_call.1} parent=1 // pred_check
      _
    $region3: #{tpu_custom_call.1} parent=1 // pred_check_branch
      %14 = sbr.rel (0) target = $region5
    $region4: #{tpu_custom_call.1} parent=1 // pred_region
      %16 = vsyncadd [#allocation4], 0
      %s17 = sshll.u32 %s0, 4
      %s18 = int_to_ptr.hbm [resolvable:$true] %s17
      %s19 = sshll.u32 [#allocation3], 4
      %s20 = int_to_ptr.vmem [resolvable:$true] %s19
      %25 = dma.hbm_to_vmem [thread:$0]  %s18, 12288, %s20, [#allocation4], 384, 384, 24
    $region5: #{tpu_custom_call.1} parent=1 // pred_fallthru
      _
    // Predicated region
    $region6: #{tpu_custom_call.1} parent=1 // pred_check
      _
    $region7: #{tpu_custom_call.1} parent=1 // pred_check_branch
      %27 = sbr.rel (0) target = $region9
    $region8: #{tpu_custom_call.1} parent=1 // pred_region
      %29 = vsyncadd [#allocation7], 0
      %s30 = sshll.u32 %s1, 4
      %s31 = int_to_ptr.hbm [resolvable:$true] %s30
      %s32 = sshll.u32 [#allocation6], 4
      %s33 = int_to_ptr.vmem [resolvable:$true] %s32
      %38 = dma.hbm_to_vmem [thread:$0]  %s31, 55296, %s33, [#allocation7], 1152, 1152, 72
    $region9: #{tpu_custom_call.1} parent=1 // pred_fallthru
      _
    // Predicated region
    $region10: #{tpu_custom_call.1} parent=1 // pred_check
      _
    $region11: #{tpu_custom_call.1} parent=1 // pred_check_branch
      %40 = sbr.rel (0) target = $region13
    $region12: #{tpu_custom_call.1} parent=1 // pred_region
      %42 = vsyncadd [#allocation7], 0
      %s43 = sshll.u32 %s2, 4
      %s44 = int_to_ptr.hbm [resolvable:$true] %s43
      %s45 = sshll.u32 [#allocation8], 4
      %s46 = int_to_ptr.vmem [resolvable:$true] %s45
      %51 = dma.hbm_to_vmem [thread:$0]  %s44, 18432, %s46, [#allocation7], 384, 384, 24
    $region13: #{tpu_custom_call.1} parent=1 // pred_fallthru
      _
    // Predicated region
    $region14: #{tpu_custom_call.1} parent=1 // pred_check
      _
    $region15: #{tpu_custom_call.1} parent=1 // pred_check_branch
      %53 = sbr.rel (0) target = $region17
    $region16: #{tpu_custom_call.1} parent=1 // pred_region
      %55 = vsyncadd [#allocation10], 0
      %s57 = sshll.u32 %s3, 4
      %s58 = int_to_ptr.hbm [resolvable:$true] %s57
      %s59 = sshll.u32 [#allocation9], 4
      %s60 = int_to_ptr.vmem [resolvable:$true] %s59
      %62 = dma.hbm_to_vmem [thread:$0]  %s58, 48, %s60, [#allocation10]
    $region17: #{tpu_custom_call.1} parent=1 // pred_fallthru
      _
    // Predicated region
    $region18: #{tpu_custom_call.1} parent=1 // pred_check
      _
    $region19: #{tpu_custom_call.1} parent=1 // pred_check_branch
      %64 = sbr.rel (0) target = $region21
    $region20: #{tpu_custom_call.1} parent=1 // pred_region
      %66 = dma.done [#allocation4], 12288
    $region21: #{tpu_custom_call.1} parent=1 // pred_fallthru
      _
    // Predicated region
    $region22: #{tpu_custom_call.1} parent=1 // pred_check
      _
    $region23: #{tpu_custom_call.1} parent=1 // pred_check_branch
      %68 = sbr.rel (0) target = $region25
    $region24: #{tpu_custom_call.1} parent=1 // pred_region
      %70 = dma.done [#allocation7], 55296
    $region25: #{tpu_custom_call.1} parent=1 // pred_fallthru
      _
    // Predicated region
    $region26: #{tpu_custom_call.1} parent=1 // pred_check
      _
    $region27: #{tpu_custom_call.1} parent=1 // pred_check_branch
      %72 = sbr.rel (0) target = $region29
    $region28: #{tpu_custom_call.1} parent=1 // pred_region
      %74 = dma.done [#allocation7], 18432
    $region29: #{tpu_custom_call.1} parent=1 // pred_fallthru
      _
    // Predicated region
    $region30: #{tpu_custom_call.1} parent=1 // pred_check
      _
    $region31: #{tpu_custom_call.1} parent=1 // pred_check_branch
      %76 = sbr.rel (0) target = $region33
    $region32: #{tpu_custom_call.1} parent=1 // pred_region
      %78 = dma.done [#allocation10], 48
    $region33: #{tpu_custom_call.1} parent=1 // pred_fallthru
      _
    %v79 = vld [vmem:[#allocation3] sm:$0xff]
    %v80 = vld [vmem:[#allocation3 + $0x8] sm:$0xff]
    %v81 = vld [vmem:[#allocation3 + $0x10] sm:$0xff]
    %v82 = vld [vmem:[#allocation3 + $0x18] sm:$0xff]
    %v83 = vld [vmem:[#allocation3 + $0x20] sm:$0xff]
    %v84 = vld [vmem:[#allocation3 + $0x28] sm:$0xff]
    %v85 = vld [vmem:[#allocation3 + $0x30] sm:$0xff]
    %v86 = vld [vmem:[#allocation3 + $0x38] sm:$0xff]
    %v87 = vld [vmem:[#allocation3 + $0x40] sm:$0xff]
    %v88 = vld [vmem:[#allocation3 + $0x48] sm:$0xff]
    %v89 = vld [vmem:[#allocation3 + $0x50] sm:$0xff]
    %v90 = vld [vmem:[#allocation3 + $0x58] sm:$0xff]
    %v91 = vld [vmem:[#allocation3 + $0x60] sm:$0xff]
    %v92 = vld [vmem:[#allocation3 + $0x68] sm:$0xff]
    %v93 = vld [vmem:[#allocation3 + $0x70] sm:$0xff]
    %v94 = vld [vmem:[#allocation3 + $0x78] sm:$0xff]
    %v95 = vld [vmem:[#allocation3 + $0x80] sm:$0xff]
    %v96 = vld [vmem:[#allocation3 + $0x88] sm:$0xff]
    %v97 = vld [vmem:[#allocation3 + $0x90] sm:$0xff]
    %v98 = vld [vmem:[#allocation3 + $0x98] sm:$0xff]
    %v99 = vld [vmem:[#allocation3 + $0xa0] sm:$0xff]
    %v100 = vld [vmem:[#allocation3 + $0xa8] sm:$0xff]
    %v101 = vld [vmem:[#allocation3 + $0xb0] sm:$0xff]
    %v102 = vld [vmem:[#allocation3 + $0xb8] sm:$0xff]
    %v103 = vld [vmem:[#allocation3 + $0xc0] sm:$0xff]
    %v104 = vld [vmem:[#allocation3 + $0xc8] sm:$0xff]
    %v105 = vld [vmem:[#allocation3 + $0xd0] sm:$0xff]
    %v106 = vld [vmem:[#allocation3 + $0xd8] sm:$0xff]
    %v107 = vld [vmem:[#allocation3 + $0xe0] sm:$0xff]
    %v108 = vld [vmem:[#allocation3 + $0xe8] sm:$0xff]
    %v109 = vld [vmem:[#allocation3 + $0xf0] sm:$0xff]
    %v110 = vld [vmem:[#allocation3 + $0xf8] sm:$0xff]
    %v111 = vld [vmem:[#allocation3 + $0x100] sm:$0xff]
    %v112 = vld [vmem:[#allocation3 + $0x108] sm:$0xff]
    %v113 = vld [vmem:[#allocation3 + $0x110] sm:$0xff]
    %v114 = vld [vmem:[#allocation3 + $0x118] sm:$0xff]
    %v115 = vld [vmem:[#allocation3 + $0x120] sm:$0xff]
    %v116 = vld [vmem:[#allocation3 + $0x128] sm:$0xff]
    %v117 = vld [vmem:[#allocation3 + $0x130] sm:$0xff]
    %v118 = vld [vmem:[#allocation3 + $0x138] sm:$0xff]
    %v119 = vld [vmem:[#allocation3 + $0x140] sm:$0xff]
    %v120 = vld [vmem:[#allocation3 + $0x148] sm:$0xff]
    %v121 = vld [vmem:[#allocation3 + $0x150] sm:$0xff]
    %v122 = vld [vmem:[#allocation3 + $0x158] sm:$0xff]
    %v123 = vld [vmem:[#allocation3 + $0x160] sm:$0xff]
    %v124 = vld [vmem:[#allocation3 + $0x168] sm:$0xff]
    %v125 = vld [vmem:[#allocation3 + $0x170] sm:$0xff]
    %v126 = vld [vmem:[#allocation3 + $0x178] sm:$0xff]
    %v127 = vld [vmem:[#allocation3 + $0x180] sm:$0xff]
    %v128 = vld [vmem:[#allocation3 + $0x188] sm:$0xff]
    %v129 = vld [vmem:[#allocation3 + $0x190] sm:$0xff]
    %v130 = vld [vmem:[#allocation3 + $0x198] sm:$0xff]
    %v131 = vld [vmem:[#allocation3 + $0x1a0] sm:$0xff]
    %v132 = vld [vmem:[#allocation3 + $0x1a8] sm:$0xff]
    %v133 = vld [vmem:[#allocation3 + $0x1b0] sm:$0xff]
    %v134 = vld [vmem:[#allocation3 + $0x1b8] sm:$0xff]
    %v135 = vld [vmem:[#allocation3 + $0x1c0] sm:$0xff]
    %v136 = vld [vmem:[#allocation3 + $0x1c8] sm:$0xff]
    %v137 = vld [vmem:[#allocation3 + $0x1d0] sm:$0xff]
    %v138 = vld [vmem:[#allocation3 + $0x1d8] sm:$0xff]
    %v139 = vld [vmem:[#allocation3 + $0x1e0] sm:$0xff]
    %v140 = vld [vmem:[#allocation3 + $0x1e8] sm:$0xff]
    %v141 = vld [vmem:[#allocation3 + $0x1f0] sm:$0xff]
    %v142 = vld [vmem:[#allocation3 + $0x1f8] sm:$0xff]
    %v143 = vld [vmem:[#allocation3 + $0x200] sm:$0xff]
    %v144 = vld [vmem:[#allocation3 + $0x208] sm:$0xff]
    %v145 = vld [vmem:[#allocation3 + $0x210] sm:$0xff]
    %v146 = vld [vmem:[#allocation3 + $0x218] sm:$0xff]
    %v147 = vld [vmem:[#allocation3 + $0x220] sm:$0xff]
    %v148 = vld [vmem:[#allocation3 + $0x228] sm:$0xff]
    %v149 = vld [vmem:[#allocation3 + $0x230] sm:$0xff]
    %v150 = vld [vmem:[#allocation3 + $0x238] sm:$0xff]
    %v151 = vld [vmem:[#allocation3 + $0x240] sm:$0xff]
    %v152 = vld [vmem:[#allocation3 + $0x248] sm:$0xff]
    %v153 = vld [vmem:[#allocation3 + $0x250] sm:$0xff]
    %v154 = vld [vmem:[#allocation3 + $0x258] sm:$0xff]
    %v155 = vld [vmem:[#allocation3 + $0x260] sm:$0xff]
    %v156 = vld [vmem:[#allocation3 + $0x268] sm:$0xff]
    %v157 = vld [vmem:[#allocation3 + $0x270] sm:$0xff]
    %v158 = vld [vmem:[#allocation3 + $0x278] sm:$0xff]
    %v159 = vld [vmem:[#allocation3 + $0x280] sm:$0xff]
    %v160 = vld [vmem:[#allocation3 + $0x288] sm:$0xff]
    %v161 = vld [vmem:[#allocation3 + $0x290] sm:$0xff]
    %v162 = vld [vmem:[#allocation3 + $0x298] sm:$0xff]
    %v163 = vld [vmem:[#allocation3 + $0x2a0] sm:$0xff]
    %v164 = vld [vmem:[#allocation3 + $0x2a8] sm:$0xff]
    %v165 = vld [vmem:[#allocation3 + $0x2b0] sm:$0xff]
    %v166 = vld [vmem:[#allocation3 + $0x2b8] sm:$0xff]
    %v167 = vld [vmem:[#allocation3 + $0x2c0] sm:$0xff]
    %v168 = vld [vmem:[#allocation3 + $0x2c8] sm:$0xff]
    %v169 = vld [vmem:[#allocation3 + $0x2d0] sm:$0xff]
    %v170 = vld [vmem:[#allocation3 + $0x2d8] sm:$0xff]
    %v171 = vld [vmem:[#allocation3 + $0x2e0] sm:$0xff]
    %v172 = vld [vmem:[#allocation3 + $0x2e8] sm:$0xff]
    %v173 = vld [vmem:[#allocation3 + $0x2f0] sm:$0xff]
    %v174 = vld [vmem:[#allocation3 + $0x2f8] sm:$0xff]
    %v175 = vld [vmem:[#allocation6] sm:$0xff]
    %v176 = vld [vmem:[#allocation6 + $0x8] sm:$0xff]
    %v177 = vld [vmem:[#allocation6 + $0x10] sm:$0xff]
    %v178 = vld [vmem:[#allocation6 + $0x18] sm:$0xff]
    %v179 = vld [vmem:[#allocation6 + $0x20] sm:$0xff]
    %v180 = vld [vmem:[#allocation6 + $0x28] sm:$0xff]
    %v181 = vld [vmem:[#allocation6 + $0x30] sm:$0xff]
    %v182 = vld [vmem:[#allocation6 + $0x38] sm:$0xff]
    %v183 = vld [vmem:[#allocation6 + $0x40] sm:$0xff]
    %v184 = vld [vmem:[#allocation6 + $0x48] sm:$0xff]
    %v185 = vld [vmem:[#allocation6 + $0x50] sm:$0xff]
    %v186 = vld [vmem:[#allocation6 + $0x58] sm:$0xff]
    %v187 = vld [vmem:[#allocation6 + $0x60] sm:$0xff]
    %v188 = vld [vmem:[#allocation6 + $0x68] sm:$0xff]
    %v189 = vld [vmem:[#allocation6 + $0x70] sm:$0xff]
    %v190 = vld [vmem:[#allocation6 + $0x78] sm:$0xff]
    %v191 = vld [vmem:[#allocation6 + $0x80] sm:$0xff]
    %v192 = vld [vmem:[#allocation6 + $0x88] sm:$0xff]
    %v193 = vld [vmem:[#allocation6 + $0x90] sm:$0xff]
    %v194 = vld [vmem:[#allocation6 + $0x98] sm:$0xff]
    %v195 = vld [vmem:[#allocation6 + $0xa0] sm:$0xff]
    %v196 = vld [vmem:[#allocation6 + $0xa8] sm:$0xff]
    %v197 = vld [vmem:[#allocation6 + $0xb0] sm:$0xff]
    %v198 = vld [vmem:[#allocation6 + $0xb8] sm:$0xff]
    %v199 = vld [vmem:[#allocation6 + $0xc0] sm:$0xff]
    %v200 = vld [vmem:[#allocation6 + $0xc8] sm:$0xff]
    %v201 = vld [vmem:[#allocation6 + $0xd0] sm:$0xff]
    %v202 = vld [vmem:[#allocation6 + $0xd8] sm:$0xff]
    %v203 = vld [vmem:[#allocation6 + $0xe0] sm:$0xff]
    %v204 = vld [vmem:[#allocation6 + $0xe8] sm:$0xff]
    %v205 = vld [vmem:[#allocation6 + $0xf0] sm:$0xff]
    %v206 = vld [vmem:[#allocation6 + $0xf8] sm:$0xff]
    %v207 = vld [vmem:[#allocation6 + $0x100] sm:$0xff]
    %v208 = vld [vmem:[#allocation6 + $0x108] sm:$0xff]
    %v209 = vld [vmem:[#allocation6 + $0x110] sm:$0xff]
    %v210 = vld [vmem:[#allocation6 + $0x118] sm:$0xff]
    %v211 = vld [vmem:[#allocation6 + $0x120] sm:$0xff]
    %v212 = vld [vmem:[#allocation6 + $0x128] sm:$0xff]
    %v213 = vld [vmem:[#allocation6 + $0x130] sm:$0xff]
    %v214 = vld [vmem:[#allocation6 + $0x138] sm:$0xff]
    %v215 = vld [vmem:[#allocation6 + $0x140] sm:$0xff]
    %v216 = vld [vmem:[#allocation6 + $0x148] sm:$0xff]
    %v217 = vld [vmem:[#allocation6 + $0x150] sm:$0xff]
    %v218 = vld [vmem:[#allocation6 + $0x158] sm:$0xff]
    %v219 = vld [vmem:[#allocation6 + $0x160] sm:$0xff]
    %v220 = vld [vmem:[#allocation6 + $0x168] sm:$0xff]
    %v221 = vld [vmem:[#allocation6 + $0x170] sm:$0xff]
    %v222 = vld [vmem:[#allocation6 + $0x178] sm:$0xff]
    %v223 = vld [vmem:[#allocation6 + $0x180] sm:$0xff]
    %v224 = vld [vmem:[#allocation6 + $0x188] sm:$0xff]
    %v225 = vld [vmem:[#allocation6 + $0x190] sm:$0xff]
    %v226 = vld [vmem:[#allocation6 + $0x198] sm:$0xff]
    %v227 = vld [vmem:[#allocation6 + $0x1a0] sm:$0xff]
    %v228 = vld [vmem:[#allocation6 + $0x1a8] sm:$0xff]
    %v229 = vld [vmem:[#allocation6 + $0x1b0] sm:$0xff]
    %v230 = vld [vmem:[#allocation6 + $0x1b8] sm:$0xff]
    %v231 = vld [vmem:[#allocation6 + $0x1c0] sm:$0xff]
    %v232 = vld [vmem:[#allocation6 + $0x1c8] sm:$0xff]
    %v233 = vld [vmem:[#allocation6 + $0x1d0] sm:$0xff]
    %v234 = vld [vmem:[#allocation6 + $0x1d8] sm:$0xff]
    %v235 = vld [vmem:[#allocation6 + $0x1e0] sm:$0xff]
    %v236 = vld [vmem:[#allocation6 + $0x1e8] sm:$0xff]
    %v237 = vld [vmem:[#allocation6 + $0x1f0] sm:$0xff]
    %v238 = vld [vmem:[#allocation6 + $0x1f8] sm:$0xff]
    %v239 = vld [vmem:[#allocation6 + $0x200] sm:$0xff]
    %v240 = vld [vmem:[#allocation6 + $0x208] sm:$0xff]
    %v241 = vld [vmem:[#allocation6 + $0x210] sm:$0xff]
    %v242 = vld [vmem:[#allocation6 + $0x218] sm:$0xff]
    %v243 = vld [vmem:[#allocation6 + $0x220] sm:$0xff]
    %v244 = vld [vmem:[#allocation6 + $0x228] sm:$0xff]
    %v245 = vld [vmem:[#allocation6 + $0x230] sm:$0xff]
    %v246 = vld [vmem:[#allocation6 + $0x238] sm:$0xff]
    %v247 = vld [vmem:[#allocation6 + $0x240] sm:$0xff]
    %v248 = vld [vmem:[#allocation6 + $0x248] sm:$0xff]
    %v249 = vld [vmem:[#allocation6 + $0x250] sm:$0xff]
    %v250 = vld [vmem:[#allocation6 + $0x258] sm:$0xff]
    %v251 = vld [vmem:[#allocation6 + $0x260] sm:$0xff]
    %v252 = vld [vmem:[#allocation6 + $0x268] sm:$0xff]
    %v253 = vld [vmem:[#allocation6 + $0x270] sm:$0xff]
    %v254 = vld [vmem:[#allocation6 + $0x278] sm:$0xff]
    %v255 = vld [vmem:[#allocation6 + $0x280] sm:$0xff]
    %v256 = vld [vmem:[#allocation6 + $0x288] sm:$0xff]
    %v257 = vld [vmem:[#allocation6 + $0x290] sm:$0xff]
    %v258 = vld [vmem:[#allocation6 + $0x298] sm:$0xff]
    %v259 = vld [vmem:[#allocation6 + $0x2a0] sm:$0xff]
    %v260 = vld [vmem:[#allocation6 + $0x2a8] sm:$0xff]
    %v261 = vld [vmem:[#allocation6 + $0x2b0] sm:$0xff]
    %v262 = vld [vmem:[#allocation6 + $0x2b8] sm:$0xff]
    %v263 = vld [vmem:[#allocation6 + $0x2c0] sm:$0xff]
    %v264 = vld [vmem:[#allocation6 + $0x2c8] sm:$0xff]
    %v265 = vld [vmem:[#allocation6 + $0x2d0] sm:$0xff]
    %v266 = vld [vmem:[#allocation6 + $0x2d8] sm:$0xff]
    %v267 = vld [vmem:[#allocation6 + $0x2e0] sm:$0xff]
    %v268 = vld [vmem:[#allocation6 + $0x2e8] sm:$0xff]
    %v269 = vld [vmem:[#allocation6 + $0x2f0] sm:$0xff]
    %v270 = vld [vmem:[#allocation6 + $0x2f8] sm:$0xff]
    %v271 = vld [vmem:[#allocation6 + $0x300] sm:$0xff]
    %v272 = vld [vmem:[#allocation6 + $0x308] sm:$0xff]
    %v273 = vld [vmem:[#allocation6 + $0x310] sm:$0xff]
    %v274 = vld [vmem:[#allocation6 + $0x318] sm:$0xff]
    %v275 = vld [vmem:[#allocation6 + $0x320] sm:$0xff]
    %v276 = vld [vmem:[#allocation6 + $0x328] sm:$0xff]
    %v277 = vld [vmem:[#allocation6 + $0x330] sm:$0xff]
    %v278 = vld [vmem:[#allocation6 + $0x338] sm:$0xff]
    %v279 = vld [vmem:[#allocation6 + $0x340] sm:$0xff]
    %v280 = vld [vmem:[#allocation6 + $0x348] sm:$0xff]
    %v281 = vld [vmem:[#allocation6 + $0x350] sm:$0xff]
    %v282 = vld [vmem:[#allocation6 + $0x358] sm:$0xff]
    %v283 = vld [vmem:[#allocation6 + $0x360] sm:$0xff]
    %v284 = vld [vmem:[#allocation6 + $0x368] sm:$0xff]
    %v285 = vld [vmem:[#allocation6 + $0x370] sm:$0xff]
    %v286 = vld [vmem:[#allocation6 + $0x378] sm:$0xff]
    %v287 = vld [vmem:[#allocation6 + $0x380] sm:$0xff]
    %v288 = vld [vmem:[#allocation6 + $0x388] sm:$0xff]
    %v289 = vld [vmem:[#allocation6 + $0x390] sm:$0xff]
    %v290 = vld [vmem:[#allocation6 + $0x398] sm:$0xff]
    %v291 = vld [vmem:[#allocation6 + $0x3a0] sm:$0xff]
    %v292 = vld [vmem:[#allocation6 + $0x3a8] sm:$0xff]
    %v293 = vld [vmem:[#allocation6 + $0x3b0] sm:$0xff]
    %v294 = vld [vmem:[#allocation6 + $0x3b8] sm:$0xff]
    %v295 = vld [vmem:[#allocation6 + $0x3c0] sm:$0xff]
    %v296 = vld [vmem:[#allocation6 + $0x3c8] sm:$0xff]
    %v297 = vld [vmem:[#allocation6 + $0x3d0] sm:$0xff]
    %v298 = vld [vmem:[#allocation6 + $0x3d8] sm:$0xff]
    %v299 = vld [vmem:[#allocation6 + $0x3e0] sm:$0xff]
    %v300 = vld [vmem:[#allocation6 + $0x3e8] sm:$0xff]
    %v301 = vld [vmem:[#allocation6 + $0x3f0] sm:$0xff]
    %v302 = vld [vmem:[#allocation6 + $0x3f8] sm:$0xff]
    %v303 = vld [vmem:[#allocation6 + $0x400] sm:$0xff]
    %v304 = vld [vmem:[#allocation6 + $0x408] sm:$0xff]
    %v305 = vld [vmem:[#allocation6 + $0x410] sm:$0xff]
    %v306 = vld [vmem:[#allocation6 + $0x418] sm:$0xff]
    %v307 = vld [vmem:[#allocation6 + $0x420] sm:$0xff]
    %v308 = vld [vmem:[#allocation6 + $0x428] sm:$0xff]
    %v309 = vld [vmem:[#allocation6 + $0x430] sm:$0xff]
    %v310 = vld [vmem:[#allocation6 + $0x438] sm:$0xff]
    %v311 = vld [vmem:[#allocation6 + $0x440] sm:$0xff]
    %v312 = vld [vmem:[#allocation6 + $0x448] sm:$0xff]
    %v313 = vld [vmem:[#allocation6 + $0x450] sm:$0xff]
    %v314 = vld [vmem:[#allocation6 + $0x458] sm:$0xff]
    %v315 = vld [vmem:[#allocation6 + $0x460] sm:$0xff]
    %v316 = vld [vmem:[#allocation6 + $0x468] sm:$0xff]
    %v317 = vld [vmem:[#allocation6 + $0x470] sm:$0xff]
    %v318 = vld [vmem:[#allocation6 + $0x478] sm:$0xff]
    %v319 = vld [vmem:[#allocation6 + $0x480] sm:$0xff]
    %v320 = vld [vmem:[#allocation6 + $0x488] sm:$0xff]
    %v321 = vld [vmem:[#allocation6 + $0x490] sm:$0xff]
    %v322 = vld [vmem:[#allocation6 + $0x498] sm:$0xff]
    %v323 = vld [vmem:[#allocation6 + $0x4a0] sm:$0xff]
    %v324 = vld [vmem:[#allocation6 + $0x4a8] sm:$0xff]
    %v325 = vld [vmem:[#allocation6 + $0x4b0] sm:$0xff]
    %v326 = vld [vmem:[#allocation6 + $0x4b8] sm:$0xff]
    %v327 = vld [vmem:[#allocation6 + $0x4c0] sm:$0xff]
    %v328 = vld [vmem:[#allocation6 + $0x4c8] sm:$0xff]
    %v329 = vld [vmem:[#allocation6 + $0x4d0] sm:$0xff]
    %v330 = vld [vmem:[#allocation6 + $0x4d8] sm:$0xff]
    %v331 = vld [vmem:[#allocation6 + $0x4e0] sm:$0xff]
    %v332 = vld [vmem:[#allocation6 + $0x4e8] sm:$0xff]
    %v333 = vld [vmem:[#allocation6 + $0x4f0] sm:$0xff]
    %v334 = vld [vmem:[#allocation6 + $0x4f8] sm:$0xff]
    %v335 = vld [vmem:[#allocation6 + $0x500] sm:$0xff]
    %v336 = vld [vmem:[#allocation6 + $0x508] sm:$0xff]
    %v337 = vld [vmem:[#allocation6 + $0x510] sm:$0xff]
    %v338 = vld [vmem:[#allocation6 + $0x518] sm:$0xff]
    %v339 = vld [vmem:[#allocation6 + $0x520] sm:$0xff]
    %v340 = vld [vmem:[#allocation6 + $0x528] sm:$0xff]
    %v341 = vld [vmem:[#allocation6 + $0x530] sm:$0xff]
    %v342 = vld [vmem:[#allocation6 + $0x538] sm:$0xff]
    %v343 = vld [vmem:[#allocation6 + $0x540] sm:$0xff]
    %v344 = vld [vmem:[#allocation6 + $0x548] sm:$0xff]
    %v345 = vld [vmem:[#allocation6 + $0x550] sm:$0xff]
    %v346 = vld [vmem:[#allocation6 + $0x558] sm:$0xff]
    %v347 = vld [vmem:[#allocation6 + $0x560] sm:$0xff]
    %v348 = vld [vmem:[#allocation6 + $0x568] sm:$0xff]
    %v349 = vld [vmem:[#allocation6 + $0x570] sm:$0xff]
    %v350 = vld [vmem:[#allocation6 + $0x578] sm:$0xff]
    %v351 = vld [vmem:[#allocation6 + $0x580] sm:$0xff]
    %v352 = vld [vmem:[#allocation6 + $0x588] sm:$0xff]
    %v353 = vld [vmem:[#allocation6 + $0x590] sm:$0xff]
    %v354 = vld [vmem:[#allocation6 + $0x598] sm:$0xff]
    %v355 = vld [vmem:[#allocation6 + $0x5a0] sm:$0xff]
    %v356 = vld [vmem:[#allocation6 + $0x5a8] sm:$0xff]
    %v357 = vld [vmem:[#allocation6 + $0x5b0] sm:$0xff]
    %v358 = vld [vmem:[#allocation6 + $0x5b8] sm:$0xff]
    %v359 = vld [vmem:[#allocation6 + $0x5c0] sm:$0xff]
    %v360 = vld [vmem:[#allocation6 + $0x5c8] sm:$0xff]
    %v361 = vld [vmem:[#allocation6 + $0x5d0] sm:$0xff]
    %v362 = vld [vmem:[#allocation6 + $0x5d8] sm:$0xff]
    %v363 = vld [vmem:[#allocation6 + $0x5e0] sm:$0xff]
    %v364 = vld [vmem:[#allocation6 + $0x5e8] sm:$0xff]
    %v365 = vld [vmem:[#allocation6 + $0x5f0] sm:$0xff]
    %v366 = vld [vmem:[#allocation6 + $0x5f8] sm:$0xff]
    %v367 = vld [vmem:[#allocation6 + $0x600] sm:$0xff]
    %v368 = vld [vmem:[#allocation6 + $0x608] sm:$0xff]
    %v369 = vld [vmem:[#allocation6 + $0x610] sm:$0xff]
    %v370 = vld [vmem:[#allocation6 + $0x618] sm:$0xff]
    %v371 = vld [vmem:[#allocation6 + $0x620] sm:$0xff]
    %v372 = vld [vmem:[#allocation6 + $0x628] sm:$0xff]
    %v373 = vld [vmem:[#allocation6 + $0x630] sm:$0xff]
    %v374 = vld [vmem:[#allocation6 + $0x638] sm:$0xff]
    %v375 = vld [vmem:[#allocation6 + $0x640] sm:$0xff]
    %v376 = vld [vmem:[#allocation6 + $0x648] sm:$0xff]
    %v377 = vld [vmem:[#allocation6 + $0x650] sm:$0xff]
    %v378 = vld [vmem:[#allocation6 + $0x658] sm:$0xff]
    %v379 = vld [vmem:[#allocation6 + $0x660] sm:$0xff]
    %v380 = vld [vmem:[#allocation6 + $0x668] sm:$0xff]
    %v381 = vld [vmem:[#allocation6 + $0x670] sm:$0xff]
    %v382 = vld [vmem:[#allocation6 + $0x678] sm:$0xff]
    %v383 = vld [vmem:[#allocation6 + $0x680] sm:$0xff]
    %v384 = vld [vmem:[#allocation6 + $0x688] sm:$0xff]
    %v385 = vld [vmem:[#allocation6 + $0x690] sm:$0xff]
    %v386 = vld [vmem:[#allocation6 + $0x698] sm:$0xff]
    %v387 = vld [vmem:[#allocation6 + $0x6a0] sm:$0xff]
    %v388 = vld [vmem:[#allocation6 + $0x6a8] sm:$0xff]
    %v389 = vld [vmem:[#allocation6 + $0x6b0] sm:$0xff]
    %v390 = vld [vmem:[#allocation6 + $0x6b8] sm:$0xff]
    %v391 = vld [vmem:[#allocation6 + $0x6c0] sm:$0xff]
    %v392 = vld [vmem:[#allocation6 + $0x6c8] sm:$0xff]
    %v393 = vld [vmem:[#allocation6 + $0x6d0] sm:$0xff]
    %v394 = vld [vmem:[#allocation6 + $0x6d8] sm:$0xff]
    %v395 = vld [vmem:[#allocation6 + $0x6e0] sm:$0xff]
    %v396 = vld [vmem:[#allocation6 + $0x6e8] sm:$0xff]
    %v397 = vld [vmem:[#allocation6 + $0x6f0] sm:$0xff]
    %v398 = vld [vmem:[#allocation6 + $0x6f8] sm:$0xff]
    %v399 = vld [vmem:[#allocation6 + $0x700] sm:$0xff]
    %v400 = vld [vmem:[#allocation6 + $0x708] sm:$0xff]
    %v401 = vld [vmem:[#allocation6 + $0x710] sm:$0xff]
    %v402 = vld [vmem:[#allocation6 + $0x718] sm:$0xff]
    %v403 = vld [vmem:[#allocation6 + $0x720] sm:$0xff]
    %v404 = vld [vmem:[#allocation6 + $0x728] sm:$0xff]
    %v405 = vld [vmem:[#allocation6 + $0x730] sm:$0xff]
    %v406 = vld [vmem:[#allocation6 + $0x738] sm:$0xff]
    %v407 = vld [vmem:[#allocation6 + $0x740] sm:$0xff]
    %v408 = vld [vmem:[#allocation6 + $0x748] sm:$0xff]
    %v409 = vld [vmem:[#allocation6 + $0x750] sm:$0xff]
    %v410 = vld [vmem:[#allocation6 + $0x758] sm:$0xff]
    %v411 = vld [vmem:[#allocation6 + $0x760] sm:$0xff]
    %v412 = vld [vmem:[#allocation6 + $0x768] sm:$0xff]
    %v413 = vld [vmem:[#allocation6 + $0x770] sm:$0xff]
    %v414 = vld [vmem:[#allocation6 + $0x778] sm:$0xff]
    %v415 = vld [vmem:[#allocation6 + $0x780] sm:$0xff]
    %v416 = vld [vmem:[#allocation6 + $0x788] sm:$0xff]
    %v417 = vld [vmem:[#allocation6 + $0x790] sm:$0xff]
    %v418 = vld [vmem:[#allocation6 + $0x798] sm:$0xff]
    %v419 = vld [vmem:[#allocation6 + $0x7a0] sm:$0xff]
    %v420 = vld [vmem:[#allocation6 + $0x7a8] sm:$0xff]
    %v421 = vld [vmem:[#allocation6 + $0x7b0] sm:$0xff]
    %v422 = vld [vmem:[#allocation6 + $0x7b8] sm:$0xff]
    %v423 = vld [vmem:[#allocation6 + $0x7c0] sm:$0xff]
    %v424 = vld [vmem:[#allocation6 + $0x7c8] sm:$0xff]
    %v425 = vld [vmem:[#allocation6 + $0x7d0] sm:$0xff]
    %v426 = vld [vmem:[#allocation6 + $0x7d8] sm:$0xff]
    %v427 = vld [vmem:[#allocation6 + $0x7e0] sm:$0xff]
    %v428 = vld [vmem:[#allocation6 + $0x7e8] sm:$0xff]
    %v429 = vld [vmem:[#allocation6 + $0x7f0] sm:$0xff]
    %v430 = vld [vmem:[#allocation6 + $0x7f8] sm:$0xff]
    %v431 = vld [vmem:[#allocation6 + $0x800] sm:$0xff]
    %v432 = vld [vmem:[#allocation6 + $0x808] sm:$0xff]
    %v433 = vld [vmem:[#allocation6 + $0x810] sm:$0xff]
    %v434 = vld [vmem:[#allocation6 + $0x818] sm:$0xff]
    %v435 = vld [vmem:[#allocation6 + $0x820] sm:$0xff]
    %v436 = vld [vmem:[#allocation6 + $0x828] sm:$0xff]
    %v437 = vld [vmem:[#allocation6 + $0x830] sm:$0xff]
    %v438 = vld [vmem:[#allocation6 + $0x838] sm:$0xff]
    %v439 = vld [vmem:[#allocation6 + $0x840] sm:$0xff]
    %v440 = vld [vmem:[#allocation6 + $0x848] sm:$0xff]
    %v441 = vld [vmem:[#allocation6 + $0x850] sm:$0xff]
    %v442 = vld [vmem:[#allocation6 + $0x858] sm:$0xff]
    %v443 = vld [vmem:[#allocation6 + $0x860] sm:$0xff]
    %v444 = vld [vmem:[#allocation6 + $0x868] sm:$0xff]
    %v445 = vld [vmem:[#allocation6 + $0x870] sm:$0xff]
    %v446 = vld [vmem:[#allocation6 + $0x878] sm:$0xff]
    %v447 = vld [vmem:[#allocation6 + $0x880] sm:$0xff]
    %v448 = vld [vmem:[#allocation6 + $0x888] sm:$0xff]
    %v449 = vld [vmem:[#allocation6 + $0x890] sm:$0xff]
    %v450 = vld [vmem:[#allocation6 + $0x898] sm:$0xff]
    %v451 = vld [vmem:[#allocation6 + $0x8a0] sm:$0xff]
    %v452 = vld [vmem:[#allocation6 + $0x8a8] sm:$0xff]
    %v453 = vld [vmem:[#allocation6 + $0x8b0] sm:$0xff]
    %v454 = vld [vmem:[#allocation6 + $0x8b8] sm:$0xff]
    %v455 = vld [vmem:[#allocation6 + $0x8c0] sm:$0xff]
    %v456 = vld [vmem:[#allocation6 + $0x8c8] sm:$0xff]
    %v457 = vld [vmem:[#allocation6 + $0x8d0] sm:$0xff]
    %v458 = vld [vmem:[#allocation6 + $0x8d8] sm:$0xff]
    %v459 = vld [vmem:[#allocation6 + $0x8e0] sm:$0xff]
    %v460 = vld [vmem:[#allocation6 + $0x8e8] sm:$0xff]
    %v461 = vld [vmem:[#allocation6 + $0x8f0] sm:$0xff]
    %v462 = vld [vmem:[#allocation6 + $0x8f8] sm:$0xff]
    %v463 = vld [vmem:[#allocation6 + $0x900] sm:$0xff]
    %v464 = vld [vmem:[#allocation6 + $0x908] sm:$0xff]
    %v465 = vld [vmem:[#allocation6 + $0x910] sm:$0xff]
    %v466 = vld [vmem:[#allocation6 + $0x918] sm:$0xff]
    %v467 = vld [vmem:[#allocation6 + $0x920] sm:$0xff]
    %v468 = vld [vmem:[#allocation6 + $0x928] sm:$0xff]
    %v469 = vld [vmem:[#allocation6 + $0x930] sm:$0xff]
    %v470 = vld [vmem:[#allocation6 + $0x938] sm:$0xff]
    %v471 = vld [vmem:[#allocation6 + $0x940] sm:$0xff]
    %v472 = vld [vmem:[#allocation6 + $0x948] sm:$0xff]
    %v473 = vld [vmem:[#allocation6 + $0x950] sm:$0xff]
    %v474 = vld [vmem:[#allocation6 + $0x958] sm:$0xff]
    %v475 = vld [vmem:[#allocation6 + $0x960] sm:$0xff]
    %v476 = vld [vmem:[#allocation6 + $0x968] sm:$0xff]
    %v477 = vld [vmem:[#allocation6 + $0x970] sm:$0xff]
    %v478 = vld [vmem:[#allocation6 + $0x978] sm:$0xff]
    %v479 = vld [vmem:[#allocation6 + $0x980] sm:$0xff]
    %v480 = vld [vmem:[#allocation6 + $0x988] sm:$0xff]
    %v481 = vld [vmem:[#allocation6 + $0x990] sm:$0xff]
    %v482 = vld [vmem:[#allocation6 + $0x998] sm:$0xff]
    %v483 = vld [vmem:[#allocation6 + $0x9a0] sm:$0xff]
    %v484 = vld [vmem:[#allocation6 + $0x9a8] sm:$0xff]
    %v485 = vld [vmem:[#allocation6 + $0x9b0] sm:$0xff]
    %v486 = vld [vmem:[#allocation6 + $0x9b8] sm:$0xff]
    %v487 = vld [vmem:[#allocation6 + $0x9c0] sm:$0xff]
    %v488 = vld [vmem:[#allocation6 + $0x9c8] sm:$0xff]
    %v489 = vld [vmem:[#allocation6 + $0x9d0] sm:$0xff]
    %v490 = vld [vmem:[#allocation6 + $0x9d8] sm:$0xff]
    %v491 = vld [vmem:[#allocation6 + $0x9e0] sm:$0xff]
    %v492 = vld [vmem:[#allocation6 + $0x9e8] sm:$0xff]
    %v493 = vld [vmem:[#allocation6 + $0x9f0] sm:$0xff]
    %v494 = vld [vmem:[#allocation6 + $0x9f8] sm:$0xff]
    %v495 = vld [vmem:[#allocation6 + $0xa00] sm:$0xff]
    %v496 = vld [vmem:[#allocation6 + $0xa08] sm:$0xff]
    %v497 = vld [vmem:[#allocation6 + $0xa10] sm:$0xff]
    %v498 = vld [vmem:[#allocation6 + $0xa18] sm:$0xff]
    %v499 = vld [vmem:[#allocation6 + $0xa20] sm:$0xff]
    %v500 = vld [vmem:[#allocation6 + $0xa28] sm:$0xff]
    %v501 = vld [vmem:[#allocation6 + $0xa30] sm:$0xff]
    %v502 = vld [vmem:[#allocation6 + $0xa38] sm:$0xff]
    %v503 = vld [vmem:[#allocation6 + $0xa40] sm:$0xff]
    %v504 = vld [vmem:[#allocation6 + $0xa48] sm:$0xff]
    %v505 = vld [vmem:[#allocation6 + $0xa50] sm:$0xff]
    %v506 = vld [vmem:[#allocation6 + $0xa58] sm:$0xff]
    %v507 = vld [vmem:[#allocation6 + $0xa60] sm:$0xff]
    %v508 = vld [vmem:[#allocation6 + $0xa68] sm:$0xff]
    %v509 = vld [vmem:[#allocation6 + $0xa70] sm:$0xff]
    %v510 = vld [vmem:[#allocation6 + $0xa78] sm:$0xff]
    %v511 = vld [vmem:[#allocation6 + $0xa80] sm:$0xff]
    %v512 = vld [vmem:[#allocation6 + $0xa88] sm:$0xff]
    %v513 = vld [vmem:[#allocation6 + $0xa90] sm:$0xff]
    %v514 = vld [vmem:[#allocation6 + $0xa98] sm:$0xff]
    %v515 = vld [vmem:[#allocation6 + $0xaa0] sm:$0xff]
    %v516 = vld [vmem:[#allocation6 + $0xaa8] sm:$0xff]
    %v517 = vld [vmem:[#allocation6 + $0xab0] sm:$0xff]
    %v518 = vld [vmem:[#allocation6 + $0xab8] sm:$0xff]
    %v519 = vld [vmem:[#allocation6 + $0xac0] sm:$0xff]
    %v520 = vld [vmem:[#allocation6 + $0xac8] sm:$0xff]
    %v521 = vld [vmem:[#allocation6 + $0xad0] sm:$0xff]
    %v522 = vld [vmem:[#allocation6 + $0xad8] sm:$0xff]
    %v523 = vld [vmem:[#allocation6 + $0xae0] sm:$0xff]
    %v524 = vld [vmem:[#allocation6 + $0xae8] sm:$0xff]
    %v525 = vld [vmem:[#allocation6 + $0xaf0] sm:$0xff]
    %v526 = vld [vmem:[#allocation6 + $0xaf8] sm:$0xff]
    %v527 = vld [vmem:[#allocation6 + $0xb00] sm:$0xff]
    %v528 = vld [vmem:[#allocation6 + $0xb08] sm:$0xff]
    %v529 = vld [vmem:[#allocation6 + $0xb10] sm:$0xff]
    %v530 = vld [vmem:[#allocation6 + $0xb18] sm:$0xff]
    %v531 = vld [vmem:[#allocation6 + $0xb20] sm:$0xff]
    %v532 = vld [vmem:[#allocation6 + $0xb28] sm:$0xff]
    %v533 = vld [vmem:[#allocation6 + $0xb30] sm:$0xff]
    %v534 = vld [vmem:[#allocation6 + $0xb38] sm:$0xff]
    %v535 = vld [vmem:[#allocation6 + $0xb40] sm:$0xff]
    %v536 = vld [vmem:[#allocation6 + $0xb48] sm:$0xff]
    %v537 = vld [vmem:[#allocation6 + $0xb50] sm:$0xff]
    %v538 = vld [vmem:[#allocation6 + $0xb58] sm:$0xff]
    %v539 = vld [vmem:[#allocation6 + $0xb60] sm:$0xff]
    %v540 = vld [vmem:[#allocation6 + $0xb68] sm:$0xff]
    %v541 = vld [vmem:[#allocation6 + $0xb70] sm:$0xff]
    %v542 = vld [vmem:[#allocation6 + $0xb78] sm:$0xff]
    %v543 = vld [vmem:[#allocation6 + $0xb80] sm:$0xff]
    %v544 = vld [vmem:[#allocation6 + $0xb88] sm:$0xff]
    %v545 = vld [vmem:[#allocation6 + $0xb90] sm:$0xff]
    %v546 = vld [vmem:[#allocation6 + $0xb98] sm:$0xff]
    %v547 = vld [vmem:[#allocation6 + $0xba0] sm:$0xff]
    %v548 = vld [vmem:[#allocation6 + $0xba8] sm:$0xff]
    %v549 = vld [vmem:[#allocation6 + $0xbb0] sm:$0xff]
    %v550 = vld [vmem:[#allocation6 + $0xbb8] sm:$0xff]
    %v551 = vld [vmem:[#allocation6 + $0xbc0] sm:$0xff]
    %v552 = vld [vmem:[#allocation6 + $0xbc8] sm:$0xff]
    %v553 = vld [vmem:[#allocation6 + $0xbd0] sm:$0xff]
    %v554 = vld [vmem:[#allocation6 + $0xbd8] sm:$0xff]
    %v555 = vld [vmem:[#allocation6 + $0xbe0] sm:$0xff]
    %v556 = vld [vmem:[#allocation6 + $0xbe8] sm:$0xff]
    %v557 = vld [vmem:[#allocation6 + $0xbf0] sm:$0xff]
    %v558 = vld [vmem:[#allocation6 + $0xbf8] sm:$0xff]
    %v559 = vld [vmem:[#allocation6 + $0xc00] sm:$0xff]
    %v560 = vld [vmem:[#allocation6 + $0xc08] sm:$0xff]
    %v561 = vld [vmem:[#allocation6 + $0xc10] sm:$0xff]
    %v562 = vld [vmem:[#allocation6 + $0xc18] sm:$0xff]
    %v563 = vld [vmem:[#allocation6 + $0xc20] sm:$0xff]
    %v564 = vld [vmem:[#allocation6 + $0xc28] sm:$0xff]
    %v565 = vld [vmem:[#allocation6 + $0xc30] sm:$0xff]
    %v566 = vld [vmem:[#allocation6 + $0xc38] sm:$0xff]
    %v567 = vld [vmem:[#allocation6 + $0xc40] sm:$0xff]
    %v568 = vld [vmem:[#allocation6 + $0xc48] sm:$0xff]
    %v569 = vld [vmem:[#allocation6 + $0xc50] sm:$0xff]
    %v570 = vld [vmem:[#allocation6 + $0xc58] sm:$0xff]
    %v571 = vld [vmem:[#allocation6 + $0xc60] sm:$0xff]
    %v572 = vld [vmem:[#allocation6 + $0xc68] sm:$0xff]
    %v573 = vld [vmem:[#allocation6 + $0xc70] sm:$0xff]
    %v574 = vld [vmem:[#allocation6 + $0xc78] sm:$0xff]
    %v575 = vld [vmem:[#allocation6 + $0xc80] sm:$0xff]
    %v576 = vld [vmem:[#allocation6 + $0xc88] sm:$0xff]
    %v577 = vld [vmem:[#allocation6 + $0xc90] sm:$0xff]
    %v578 = vld [vmem:[#allocation6 + $0xc98] sm:$0xff]
    %v579 = vld [vmem:[#allocation6 + $0xca0] sm:$0xff]
    %v580 = vld [vmem:[#allocation6 + $0xca8] sm:$0xff]
    %v581 = vld [vmem:[#allocation6 + $0xcb0] sm:$0xff]
    %v582 = vld [vmem:[#allocation6 + $0xcb8] sm:$0xff]
    %v583 = vld [vmem:[#allocation6 + $0xcc0] sm:$0xff]
    %v584 = vld [vmem:[#allocation6 + $0xcc8] sm:$0xff]
    %v585 = vld [vmem:[#allocation6 + $0xcd0] sm:$0xff]
    %v586 = vld [vmem:[#allocation6 + $0xcd8] sm:$0xff]
    %v587 = vld [vmem:[#allocation6 + $0xce0] sm:$0xff]
    %v588 = vld [vmem:[#allocation6 + $0xce8] sm:$0xff]
    %v589 = vld [vmem:[#allocation6 + $0xcf0] sm:$0xff]
    %v590 = vld [vmem:[#allocation6 + $0xcf8] sm:$0xff]
    %v591 = vld [vmem:[#allocation6 + $0xd00] sm:$0xff]
    %v592 = vld [vmem:[#allocation6 + $0xd08] sm:$0xff]
    %v593 = vld [vmem:[#allocation6 + $0xd10] sm:$0xff]
    %v594 = vld [vmem:[#allocation6 + $0xd18] sm:$0xff]
    %v595 = vld [vmem:[#allocation6 + $0xd20] sm:$0xff]
    %v596 = vld [vmem:[#allocation6 + $0xd28] sm:$0xff]
    %v597 = vld [vmem:[#allocation6 + $0xd30] sm:$0xff]
    %v598 = vld [vmem:[#allocation6 + $0xd38] sm:$0xff]
    %v599 = vld [vmem:[#allocation6 + $0xd40] sm:$0xff]
    %v600 = vld [vmem:[#allocation6 + $0xd48] sm:$0xff]
    %v601 = vld [vmem:[#allocation6 + $0xd50] sm:$0xff]
    %v602 = vld [vmem:[#allocation6 + $0xd58] sm:$0xff]
    %v603 = vld [vmem:[#allocation6 + $0xd60] sm:$0xff]
    %v604 = vld [vmem:[#allocation6 + $0xd68] sm:$0xff]
    %v605 = vld [vmem:[#allocation6 + $0xd70] sm:$0xff]
    %v606 = vld [vmem:[#allocation6 + $0xd78] sm:$0xff]
    %607 = vmatpush.msra.mxu0 %v310
    %608 = vmatpush.msra.mxu0 %v301
    %609 = vmatpush.msra.mxu0 %v292
    %610 = vmatpush.msra.mxu0 %v283
    %611 = vmatpush.msra.mxu0 %v274
    %612 = vmatpush.msra.mxu0 %v265
    %613 = vmatpush.msra.mxu0 %v256
    %614 = vmatpush.msra.mxu0 %v247
    %615 = vmatpush.msra.mxu0 %v238
    %616 = vmatpush.msra.mxu0 %v229
    %617 = vmatpush.msra.mxu0 %v220
    %618 = vmatpush.msra.mxu0 %v211
    %619 = vmatpush.msra.mxu0 %v202
    %620 = vmatpush.msra.mxu0 %v193
    %621 = vmatpush.msra.mxu0 %v184
    %622 = vmatpush.msra.mxu0 %v175
    %623 = vmatmul.f32.gmra.mxu0 %v79
    %v624 = vpop.f32.mrf.mxu0
    %v625 = vadd.f32 0.0, %v624
    %626 = vmatmul.f32.gmra.mxu0 %v82
    %v627 = vpop.f32.mrf.mxu0
    %v628 = vadd.f32 0.0, %v627
    %629 = vmatmul.f32.gmra.mxu0 %v85
    %v630 = vpop.f32.mrf.mxu0
    %v631 = vadd.f32 0.0, %v630
    %632 = vmatmul.f32.gmra.mxu0 %v88
    %v633 = vpop.f32.mrf.mxu0
    %v634 = vadd.f32 0.0, %v633
    %635 = vmatmul.f32.gmra.mxu0 %v91
    %v636 = vpop.f32.mrf.mxu0
    %v637 = vadd.f32 0.0, %v636
    %638 = vmatmul.f32.gmra.mxu0 %v94
    %v639 = vpop.f32.mrf.mxu0
    %v640 = vadd.f32 0.0, %v639
    %641 = vmatmul.f32.gmra.mxu0 %v97
    %v642 = vpop.f32.mrf.mxu0
    %v643 = vadd.f32 0.0, %v642
    %644 = vmatmul.f32.gmra.mxu0 %v100
    %v645 = vpop.f32.mrf.mxu0
    %v646 = vadd.f32 0.0, %v645
    %647 = vmatmul.f32.gmra.mxu0 %v103
    %v648 = vpop.f32.mrf.mxu0
    %v649 = vadd.f32 0.0, %v648
    %650 = vmatmul.f32.gmra.mxu0 %v106
    %v651 = vpop.f32.mrf.mxu0
    %v652 = vadd.f32 0.0, %v651
    %653 = vmatmul.f32.gmra.mxu0 %v109
    %v654 = vpop.f32.mrf.mxu0
    %v655 = vadd.f32 0.0, %v654
    %656 = vmatmul.f32.gmra.mxu0 %v112
    %v657 = vpop.f32.mrf.mxu0
    %v658 = vadd.f32 0.0, %v657
    %659 = vmatmul.f32.gmra.mxu0 %v115
    %v660 = vpop.f32.mrf.mxu0
    %v661 = vadd.f32 0.0, %v660
    %662 = vmatmul.f32.gmra.mxu0 %v118
    %v663 = vpop.f32.mrf.mxu0
    %v664 = vadd.f32 0.0, %v663
    %665 = vmatmul.f32.gmra.mxu0 %v121
    %v666 = vpop.f32.mrf.mxu0
    %v667 = vadd.f32 0.0, %v666
    %668 = vmatmul.f32.gmra.mxu0 %v124
    %v669 = vpop.f32.mrf.mxu0
    %v670 = vadd.f32 0.0, %v669
    %671 = vmatmul.f32.gmra.mxu0 %v127
    %v672 = vpop.f32.mrf.mxu0
    %v673 = vadd.f32 0.0, %v672
    %674 = vmatmul.f32.gmra.mxu0 %v130
    %v675 = vpop.f32.mrf.mxu0
    %v676 = vadd.f32 0.0, %v675
    %677 = vmatmul.f32.gmra.mxu0 %v133
    %v678 = vpop.f32.mrf.mxu0
    %v679 = vadd.f32 0.0, %v678
    %680 = vmatmul.f32.gmra.mxu0 %v136
    %v681 = vpop.f32.mrf.mxu0
    %v682 = vadd.f32 0.0, %v681
    %683 = vmatmul.f32.gmra.mxu0 %v139
    %v684 = vpop.f32.mrf.mxu0
    %v685 = vadd.f32 0.0, %v684
    %686 = vmatmul.f32.gmra.mxu0 %v142
    %v687 = vpop.f32.mrf.mxu0
    %v688 = vadd.f32 0.0, %v687
    %689 = vmatmul.f32.gmra.mxu0 %v145
    %v690 = vpop.f32.mrf.mxu0
    %v691 = vadd.f32 0.0, %v690
    %692 = vmatmul.f32.gmra.mxu0 %v148
    %v693 = vpop.f32.mrf.mxu0
    %v694 = vadd.f32 0.0, %v693
    %695 = vmatmul.f32.gmra.mxu0 %v151
    %v696 = vpop.f32.mrf.mxu0
    %v697 = vadd.f32 0.0, %v696
    %698 = vmatmul.f32.gmra.mxu0 %v154
    %v699 = vpop.f32.mrf.mxu0
    %v700 = vadd.f32 0.0, %v699
    %701 = vmatmul.f32.gmra.mxu0 %v157
    %v702 = vpop.f32.mrf.mxu0
    %v703 = vadd.f32 0.0, %v702
    %704 = vmatmul.f32.gmra.mxu0 %v160
    %v705 = vpop.f32.mrf.mxu0
    %v706 = vadd.f32 0.0, %v705
    %707 = vmatmul.f32.gmra.mxu0 %v163
    %v708 = vpop.f32.mrf.mxu0
    %v709 = vadd.f32 0.0, %v708
    %710 = vmatmul.f32.gmra.mxu0 %v166
    %v711 = vpop.f32.mrf.mxu0
    %v712 = vadd.f32 0.0, %v711
    %713 = vmatmul.f32.gmra.mxu0 %v169
    %v714 = vpop.f32.mrf.mxu0
    %v715 = vadd.f32 0.0, %v714
    %716 = vmatmul.f32.gmra.mxu0 %v172
    %v717 = vpop.f32.mrf.mxu0
    %v718 = vadd.f32 0.0, %v717
    %719 = vdwg.mxu0
    %720 = vmatpush.msra.mxu0 %v454
    %721 = vmatpush.msra.mxu0 %v445
    %722 = vmatpush.msra.mxu0 %v436
    %723 = vmatpush.msra.mxu0 %v427
    %724 = vmatpush.msra.mxu0 %v418
    %725 = vmatpush.msra.mxu0 %v409
    %726 = vmatpush.msra.mxu0 %v400
    %727 = vmatpush.msra.mxu0 %v391
    %728 = vmatpush.msra.mxu0 %v382
    %729 = vmatpush.msra.mxu0 %v373
    %730 = vmatpush.msra.mxu0 %v364
    %731 = vmatpush.msra.mxu0 %v355
    %732 = vmatpush.msra.mxu0 %v346
    %733 = vmatpush.msra.mxu0 %v337
    %734 = vmatpush.msra.mxu0 %v328
    %735 = vmatpush.msra.mxu0 %v319
    %736 = vmatmul.f32.gmra.mxu0 %v80
    %v737 = vpop.f32.mrf.mxu0
    %v738 = vadd.f32 %v625, %v737
    %739 = vmatmul.f32.gmra.mxu0 %v83
    %v740 = vpop.f32.mrf.mxu0
    %v741 = vadd.f32 %v628, %v740
    %742 = vmatmul.f32.gmra.mxu0 %v86
    %v743 = vpop.f32.mrf.mxu0
    %v744 = vadd.f32 %v631, %v743
    %745 = vmatmul.f32.gmra.mxu0 %v89
    %v746 = vpop.f32.mrf.mxu0
    %v747 = vadd.f32 %v634, %v746
    %748 = vmatmul.f32.gmra.mxu0 %v92
    %v749 = vpop.f32.mrf.mxu0
    %v750 = vadd.f32 %v637, %v749
    %751 = vmatmul.f32.gmra.mxu0 %v95
    %v752 = vpop.f32.mrf.mxu0
    %v753 = vadd.f32 %v640, %v752
    %754 = vmatmul.f32.gmra.mxu0 %v98
    %v755 = vpop.f32.mrf.mxu0
    %v756 = vadd.f32 %v643, %v755
    %757 = vmatmul.f32.gmra.mxu0 %v101
    %v758 = vpop.f32.mrf.mxu0
    %v759 = vadd.f32 %v646, %v758
    %760 = vmatmul.f32.gmra.mxu0 %v104
    %v761 = vpop.f32.mrf.mxu0
    %v762 = vadd.f32 %v649, %v761
    %763 = vmatmul.f32.gmra.mxu0 %v107
    %v764 = vpop.f32.mrf.mxu0
    %v765 = vadd.f32 %v652, %v764
    %766 = vmatmul.f32.gmra.mxu0 %v110
    %v767 = vpop.f32.mrf.mxu0
    %v768 = vadd.f32 %v655, %v767
    %769 = vmatmul.f32.gmra.mxu0 %v113
    %v770 = vpop.f32.mrf.mxu0
    %v771 = vadd.f32 %v658, %v770
    %772 = vmatmul.f32.gmra.mxu0 %v116
    %v773 = vpop.f32.mrf.mxu0
    %v774 = vadd.f32 %v661, %v773
    %775 = vmatmul.f32.gmra.mxu0 %v119
    %v776 = vpop.f32.mrf.mxu0
    %v777 = vadd.f32 %v664, %v776
    %778 = vmatmul.f32.gmra.mxu0 %v122
    %v779 = vpop.f32.mrf.mxu0
    %v780 = vadd.f32 %v667, %v779
    %781 = vmatmul.f32.gmra.mxu0 %v125
    %v782 = vpop.f32.mrf.mxu0
    %v783 = vadd.f32 %v670, %v782
    %784 = vmatmul.f32.gmra.mxu0 %v128
    %v785 = vpop.f32.mrf.mxu0
    %v786 = vadd.f32 %v673, %v785
    %787 = vmatmul.f32.gmra.mxu0 %v131
    %v788 = vpop.f32.mrf.mxu0
    %v789 = vadd.f32 %v676, %v788
    %790 = vmatmul.f32.gmra.mxu0 %v134
    %v791 = vpop.f32.mrf.mxu0
    %v792 = vadd.f32 %v679, %v791
    %793 = vmatmul.f32.gmra.mxu0 %v137
    %v794 = vpop.f32.mrf.mxu0
    %v795 = vadd.f32 %v682, %v794
    %796 = vmatmul.f32.gmra.mxu0 %v140
    %v797 = vpop.f32.mrf.mxu0
    %v798 = vadd.f32 %v685, %v797
    %799 = vmatmul.f32.gmra.mxu0 %v143
    %v800 = vpop.f32.mrf.mxu0
    %v801 = vadd.f32 %v688, %v800
    %802 = vmatmul.f32.gmra.mxu0 %v146
    %v803 = vpop.f32.mrf.mxu0
    %v804 = vadd.f32 %v691, %v803
    %805 = vmatmul.f32.gmra.mxu0 %v149
    %v806 = vpop.f32.mrf.mxu0
    %v807 = vadd.f32 %v694, %v806
    %808 = vmatmul.f32.gmra.mxu0 %v152
    %v809 = vpop.f32.mrf.mxu0
    %v810 = vadd.f32 %v697, %v809
    %811 = vmatmul.f32.gmra.mxu0 %v155
    %v812 = vpop.f32.mrf.mxu0
    %v813 = vadd.f32 %v700, %v812
    %814 = vmatmul.f32.gmra.mxu0 %v158
    %v815 = vpop.f32.mrf.mxu0
    %v816 = vadd.f32 %v703, %v815
    %817 = vmatmul.f32.gmra.mxu0 %v161
    %v818 = vpop.f32.mrf.mxu0
    %v819 = vadd.f32 %v706, %v818
    %820 = vmatmul.f32.gmra.mxu0 %v164
    %v821 = vpop.f32.mrf.mxu0
    %v822 = vadd.f32 %v709, %v821
    %823 = vmatmul.f32.gmra.mxu0 %v167
    %v824 = vpop.f32.mrf.mxu0
    %v825 = vadd.f32 %v712, %v824
    %826 = vmatmul.f32.gmra.mxu0 %v170
    %v827 = vpop.f32.mrf.mxu0
    %v828 = vadd.f32 %v715, %v827
    %829 = vmatmul.f32.gmra.mxu0 %v173
    %v830 = vpop.f32.mrf.mxu0
    %v831 = vadd.f32 %v718, %v830
    %832 = vdwg.mxu0
    %833 = vmatpush.msra.mxu0 %v598
    %834 = vmatpush.msra.mxu0 %v589
    %835 = vmatpush.msra.mxu0 %v580
    %836 = vmatpush.msra.mxu0 %v571
    %837 = vmatpush.msra.mxu0 %v562
    %838 = vmatpush.msra.mxu0 %v553
    %839 = vmatpush.msra.mxu0 %v544
    %840 = vmatpush.msra.mxu0 %v535
    %841 = vmatpush.msra.mxu0 %v526
    %842 = vmatpush.msra.mxu0 %v517
    %843 = vmatpush.msra.mxu0 %v508
    %844 = vmatpush.msra.mxu0 %v499
    %845 = vmatpush.msra.mxu0 %v490
    %846 = vmatpush.msra.mxu0 %v481
    %847 = vmatpush.msra.mxu0 %v472
    %848 = vmatpush.msra.mxu0 %v463
    %849 = vmatmul.f32.gmra.mxu0 %v81
    %v850 = vpop.f32.mrf.mxu0
    %v851 = vadd.f32 %v738, %v850
    %852 = vmatmul.f32.gmra.mxu0 %v84
    %v853 = vpop.f32.mrf.mxu0
    %v854 = vadd.f32 %v741, %v853
    %855 = vmatmul.f32.gmra.mxu0 %v87
    %v856 = vpop.f32.mrf.mxu0
    %v857 = vadd.f32 %v744, %v856
    %858 = vmatmul.f32.gmra.mxu0 %v90
    %v859 = vpop.f32.mrf.mxu0
    %v860 = vadd.f32 %v747, %v859
    %861 = vmatmul.f32.gmra.mxu0 %v93
    %v862 = vpop.f32.mrf.mxu0
    %v863 = vadd.f32 %v750, %v862
    %864 = vmatmul.f32.gmra.mxu0 %v96
    %v865 = vpop.f32.mrf.mxu0
    %v866 = vadd.f32 %v753, %v865
    %867 = vmatmul.f32.gmra.mxu0 %v99
    %v868 = vpop.f32.mrf.mxu0
    %v869 = vadd.f32 %v756, %v868
    %870 = vmatmul.f32.gmra.mxu0 %v102
    %v871 = vpop.f32.mrf.mxu0
    %v872 = vadd.f32 %v759, %v871
    %873 = vmatmul.f32.gmra.mxu0 %v105
    %v874 = vpop.f32.mrf.mxu0
    %v875 = vadd.f32 %v762, %v874
    %876 = vmatmul.f32.gmra.mxu0 %v108
    %v877 = vpop.f32.mrf.mxu0
    %v878 = vadd.f32 %v765, %v877
    %879 = vmatmul.f32.gmra.mxu0 %v111
    %v880 = vpop.f32.mrf.mxu0
    %v881 = vadd.f32 %v768, %v880
    %882 = vmatmul.f32.gmra.mxu0 %v114
    %v883 = vpop.f32.mrf.mxu0
    %v884 = vadd.f32 %v771, %v883
    %885 = vmatmul.f32.gmra.mxu0 %v117
    %v886 = vpop.f32.mrf.mxu0
    %v887 = vadd.f32 %v774, %v886
    %888 = vmatmul.f32.gmra.mxu0 %v120
    %v889 = vpop.f32.mrf.mxu0
    %v890 = vadd.f32 %v777, %v889
    %891 = vmatmul.f32.gmra.mxu0 %v123
    %v892 = vpop.f32.mrf.mxu0
    %v893 = vadd.f32 %v780, %v892
    %894 = vmatmul.f32.gmra.mxu0 %v126
    %v895 = vpop.f32.mrf.mxu0
    %v896 = vadd.f32 %v783, %v895
    %897 = vmatmul.f32.gmra.mxu0 %v129
    %v898 = vpop.f32.mrf.mxu0
    %v899 = vadd.f32 %v786, %v898
    %900 = vmatmul.f32.gmra.mxu0 %v132
    %v901 = vpop.f32.mrf.mxu0
    %v902 = vadd.f32 %v789, %v901
    %903 = vmatmul.f32.gmra.mxu0 %v135
    %v904 = vpop.f32.mrf.mxu0
    %v905 = vadd.f32 %v792, %v904
    %906 = vmatmul.f32.gmra.mxu0 %v138
    %v907 = vpop.f32.mrf.mxu0
    %v908 = vadd.f32 %v795, %v907
    %909 = vmatmul.f32.gmra.mxu0 %v141
    %v910 = vpop.f32.mrf.mxu0
    %v911 = vadd.f32 %v798, %v910
    %912 = vmatmul.f32.gmra.mxu0 %v144
    %v913 = vpop.f32.mrf.mxu0
    %v914 = vadd.f32 %v801, %v913
    %915 = vmatmul.f32.gmra.mxu0 %v147
    %v916 = vpop.f32.mrf.mxu0
    %v917 = vadd.f32 %v804, %v916
    %918 = vmatmul.f32.gmra.mxu0 %v150
    %v919 = vpop.f32.mrf.mxu0
    %v920 = vadd.f32 %v807, %v919
    %921 = vmatmul.f32.gmra.mxu0 %v153
    %v922 = vpop.f32.mrf.mxu0
    %v923 = vadd.f32 %v810, %v922
    %924 = vmatmul.f32.gmra.mxu0 %v156
    %v925 = vpop.f32.mrf.mxu0
    %v926 = vadd.f32 %v813, %v925
    %927 = vmatmul.f32.gmra.mxu0 %v159
    %v928 = vpop.f32.mrf.mxu0
    %v929 = vadd.f32 %v816, %v928
    %930 = vmatmul.f32.gmra.mxu0 %v162
    %v931 = vpop.f32.mrf.mxu0
    %v932 = vadd.f32 %v819, %v931
    %933 = vmatmul.f32.gmra.mxu0 %v165
    %v934 = vpop.f32.mrf.mxu0
    %v935 = vadd.f32 %v822, %v934
    %936 = vmatmul.f32.gmra.mxu0 %v168
    %v937 = vpop.f32.mrf.mxu0
    %v938 = vadd.f32 %v825, %v937
    %939 = vmatmul.f32.gmra.mxu0 %v171
    %v940 = vpop.f32.mrf.mxu0
    %v941 = vadd.f32 %v828, %v940
    %942 = vmatmul.f32.gmra.mxu0 %v174
    %v943 = vpop.f32.mrf.mxu0
    %v944 = vadd.f32 %v831, %v943
    %945 = vdwg.mxu0
    %946 = vmatpush.msra.mxu0 %v311
    %947 = vmatpush.msra.mxu0 %v302
    %948 = vmatpush.msra.mxu0 %v293
    %949 = vmatpush.msra.mxu0 %v284
    %950 = vmatpush.msra.mxu0 %v275
    %951 = vmatpush.msra.mxu0 %v266
    %952 = vmatpush.msra.mxu0 %v257
    %953 = vmatpush.msra.mxu0 %v248
    %954 = vmatpush.msra.mxu0 %v239
    %955 = vmatpush.msra.mxu0 %v230
    %956 = vmatpush.msra.mxu0 %v221
    %957 = vmatpush.msra.mxu0 %v212
    %958 = vmatpush.msra.mxu0 %v203
    %959 = vmatpush.msra.mxu0 %v194
    %960 = vmatpush.msra.mxu0 %v185
    %961 = vmatpush.msra.mxu0 %v176
    %962 = vmatmul.f32.gmra.mxu0 %v79
    %v963 = vpop.f32.mrf.mxu0
    %v964 = vadd.f32 0.0, %v963
    %965 = vmatmul.f32.gmra.mxu0 %v82
    %v966 = vpop.f32.mrf.mxu0
    %v967 = vadd.f32 0.0, %v966
    %968 = vmatmul.f32.gmra.mxu0 %v85
    %v969 = vpop.f32.mrf.mxu0
    %v970 = vadd.f32 0.0, %v969
    %971 = vmatmul.f32.gmra.mxu0 %v88
    %v972 = vpop.f32.mrf.mxu0
    %v973 = vadd.f32 0.0, %v972
    %974 = vmatmul.f32.gmra.mxu0 %v91
    %v975 = vpop.f32.mrf.mxu0
    %v976 = vadd.f32 0.0, %v975
    %977 = vmatmul.f32.gmra.mxu0 %v94
    %v978 = vpop.f32.mrf.mxu0
    %v979 = vadd.f32 0.0, %v978
    %980 = vmatmul.f32.gmra.mxu0 %v97
    %v981 = vpop.f32.mrf.mxu0
    %v982 = vadd.f32 0.0, %v981
    %983 = vmatmul.f32.gmra.mxu0 %v100
    %v984 = vpop.f32.mrf.mxu0
    %v985 = vadd.f32 0.0, %v984
    %986 = vmatmul.f32.gmra.mxu0 %v103
    %v987 = vpop.f32.mrf.mxu0
    %v988 = vadd.f32 0.0, %v987
    %989 = vmatmul.f32.gmra.mxu0 %v106
    %v990 = vpop.f32.mrf.mxu0
    %v991 = vadd.f32 0.0, %v990
    %992 = vmatmul.f32.gmra.mxu0 %v109
    %v993 = vpop.f32.mrf.mxu0
    %v994 = vadd.f32 0.0, %v993
    %995 = vmatmul.f32.gmra.mxu0 %v112
    %v996 = vpop.f32.mrf.mxu0
    %v997 = vadd.f32 0.0, %v996
    %998 = vmatmul.f32.gmra.mxu0 %v115
    %v999 = vpop.f32.mrf.mxu0
    %v1000 = vadd.f32 0.0, %v999
    %1001 = vmatmul.f32.gmra.mxu0 %v118
    %v1002 = vpop.f32.mrf.mxu0
    %v1003 = vadd.f32 0.0, %v1002
    %1004 = vmatmul.f32.gmra.mxu0 %v121
    %v1005 = vpop.f32.mrf.mxu0
    %v1006 = vadd.f32 0.0, %v1005
    %1007 = vmatmul.f32.gmra.mxu0 %v124
    %v1008 = vpop.f32.mrf.mxu0
    %v1009 = vadd.f32 0.0, %v1008
    %1010 = vmatmul.f32.gmra.mxu0 %v127
    %v1011 = vpop.f32.mrf.mxu0
    %v1012 = vadd.f32 0.0, %v1011
    %1013 = vmatmul.f32.gmra.mxu0 %v130
    %v1014 = vpop.f32.mrf.mxu0
    %v1015 = vadd.f32 0.0, %v1014
    %1016 = vmatmul.f32.gmra.mxu0 %v133
    %v1017 = vpop.f32.mrf.mxu0
    %v1018 = vadd.f32 0.0, %v1017
    %1019 = vmatmul.f32.gmra.mxu0 %v136
    %v1020 = vpop.f32.mrf.mxu0
    %v1021 = vadd.f32 0.0, %v1020
    %1022 = vmatmul.f32.gmra.mxu0 %v139
    %v1023 = vpop.f32.mrf.mxu0
    %v1024 = vadd.f32 0.0, %v1023
    %1025 = vmatmul.f32.gmra.mxu0 %v142
    %v1026 = vpop.f32.mrf.mxu0
    %v1027 = vadd.f32 0.0, %v1026
    %1028 = vmatmul.f32.gmra.mxu0 %v145
    %v1029 = vpop.f32.mrf.mxu0
    %v1030 = vadd.f32 0.0, %v1029
    %1031 = vmatmul.f32.gmra.mxu0 %v148
    %v1032 = vpop.f32.mrf.mxu0
    %v1033 = vadd.f32 0.0, %v1032
    %1034 = vmatmul.f32.gmra.mxu0 %v151
    %v1035 = vpop.f32.mrf.mxu0
    %v1036 = vadd.f32 0.0, %v1035
    %1037 = vmatmul.f32.gmra.mxu0 %v154
    %v1038 = vpop.f32.mrf.mxu0
    %v1039 = vadd.f32 0.0, %v1038
    %1040 = vmatmul.f32.gmra.mxu0 %v157
    %v1041 = vpop.f32.mrf.mxu0
    %v1042 = vadd.f32 0.0, %v1041
    %1043 = vmatmul.f32.gmra.mxu0 %v160
    %v1044 = vpop.f32.mrf.mxu0
    %v1045 = vadd.f32 0.0, %v1044
    %1046 = vmatmul.f32.gmra.mxu0 %v163
    %v1047 = vpop.f32.mrf.mxu0
    %v1048 = vadd.f32 0.0, %v1047
    %1049 = vmatmul.f32.gmra.mxu0 %v166
    %v1050 = vpop.f32.mrf.mxu0
    %v1051 = vadd.f32 0.0, %v1050
    %1052 = vmatmul.f32.gmra.mxu0 %v169
    %v1053 = vpop.f32.mrf.mxu0
    %v1054 = vadd.f32 0.0, %v1053
    %1055 = vmatmul.f32.gmra.mxu0 %v172
    %v1056 = vpop.f32.mrf.mxu0
    %v1057 = vadd.f32 0.0, %v1056
    %1058 = vdwg.mxu0
    %1059 = vmatpush.msra.mxu0 %v455
    %1060 = vmatpush.msra.mxu0 %v446
    %1061 = vmatpush.msra.mxu0 %v437
    %1062 = vmatpush.msra.mxu0 %v428
    %1063 = vmatpush.msra.mxu0 %v419
    %1064 = vmatpush.msra.mxu0 %v410
    %1065 = vmatpush.msra.mxu0 %v401
    %1066 = vmatpush.msra.mxu0 %v392
    %1067 = vmatpush.msra.mxu0 %v383
    %1068 = vmatpush.msra.mxu0 %v374
    %1069 = vmatpush.msra.mxu0 %v365
    %1070 = vmatpush.msra.mxu0 %v356
    %1071 = vmatpush.msra.mxu0 %v347
    %1072 = vmatpush.msra.mxu0 %v338
    %1073 = vmatpush.msra.mxu0 %v329
    %1074 = vmatpush.msra.mxu0 %v320
    %1075 = vmatmul.f32.gmra.mxu0 %v80
    %v1076 = vpop.f32.mrf.mxu0
    %v1077 = vadd.f32 %v964, %v1076
    %1078 = vmatmul.f32.gmra.mxu0 %v83
    %v1079 = vpop.f32.mrf.mxu0
    %v1080 = vadd.f32 %v967, %v1079
    %1081 = vmatmul.f32.gmra.mxu0 %v86
    %v1082 = vpop.f32.mrf.mxu0
    %v1083 = vadd.f32 %v970, %v1082
    %1084 = vmatmul.f32.gmra.mxu0 %v89
    %v1085 = vpop.f32.mrf.mxu0
    %v1086 = vadd.f32 %v973, %v1085
    %1087 = vmatmul.f32.gmra.mxu0 %v92
    %v1088 = vpop.f32.mrf.mxu0
    %v1089 = vadd.f32 %v976, %v1088
    %1090 = vmatmul.f32.gmra.mxu0 %v95
    %v1091 = vpop.f32.mrf.mxu0
    %v1092 = vadd.f32 %v979, %v1091
    %1093 = vmatmul.f32.gmra.mxu0 %v98
    %v1094 = vpop.f32.mrf.mxu0
    %v1095 = vadd.f32 %v982, %v1094
    %1096 = vmatmul.f32.gmra.mxu0 %v101
    %v1097 = vpop.f32.mrf.mxu0
    %v1098 = vadd.f32 %v985, %v1097
    %1099 = vmatmul.f32.gmra.mxu0 %v104
    %v1100 = vpop.f32.mrf.mxu0
    %v1101 = vadd.f32 %v988, %v1100
    %1102 = vmatmul.f32.gmra.mxu0 %v107
    %v1103 = vpop.f32.mrf.mxu0
    %v1104 = vadd.f32 %v991, %v1103
    %1105 = vmatmul.f32.gmra.mxu0 %v110
    %v1106 = vpop.f32.mrf.mxu0
    %v1107 = vadd.f32 %v994, %v1106
    %1108 = vmatmul.f32.gmra.mxu0 %v113
    %v1109 = vpop.f32.mrf.mxu0
    %v1110 = vadd.f32 %v997, %v1109
    %1111 = vmatmul.f32.gmra.mxu0 %v116
    %v1112 = vpop.f32.mrf.mxu0
    %v1113 = vadd.f32 %v1000, %v1112
    %1114 = vmatmul.f32.gmra.mxu0 %v119
    %v1115 = vpop.f32.mrf.mxu0
    %v1116 = vadd.f32 %v1003, %v1115
    %1117 = vmatmul.f32.gmra.mxu0 %v122
    %v1118 = vpop.f32.mrf.mxu0
    %v1119 = vadd.f32 %v1006, %v1118
    %1120 = vmatmul.f32.gmra.mxu0 %v125
    %v1121 = vpop.f32.mrf.mxu0
    %v1122 = vadd.f32 %v1009, %v1121
    %1123 = vmatmul.f32.gmra.mxu0 %v128
    %v1124 = vpop.f32.mrf.mxu0
    %v1125 = vadd.f32 %v1012, %v1124
    %1126 = vmatmul.f32.gmra.mxu0 %v131
    %v1127 = vpop.f32.mrf.mxu0
    %v1128 = vadd.f32 %v1015, %v1127
    %1129 = vmatmul.f32.gmra.mxu0 %v134
    %v1130 = vpop.f32.mrf.mxu0
    %v1131 = vadd.f32 %v1018, %v1130
    %1132 = vmatmul.f32.gmra.mxu0 %v137
    %v1133 = vpop.f32.mrf.mxu0
    %v1134 = vadd.f32 %v1021, %v1133
    %1135 = vmatmul.f32.gmra.mxu0 %v140
    %v1136 = vpop.f32.mrf.mxu0
    %v1137 = vadd.f32 %v1024, %v1136
    %1138 = vmatmul.f32.gmra.mxu0 %v143
    %v1139 = vpop.f32.mrf.mxu0
    %v1140 = vadd.f32 %v1027, %v1139
    %1141 = vmatmul.f32.gmra.mxu0 %v146
    %v1142 = vpop.f32.mrf.mxu0
    %v1143 = vadd.f32 %v1030, %v1142
    %1144 = vmatmul.f32.gmra.mxu0 %v149
    %v1145 = vpop.f32.mrf.mxu0
    %v1146 = vadd.f32 %v1033, %v1145
    %1147 = vmatmul.f32.gmra.mxu0 %v152
    %v1148 = vpop.f32.mrf.mxu0
    %v1149 = vadd.f32 %v1036, %v1148
    %1150 = vmatmul.f32.gmra.mxu0 %v155
    %v1151 = vpop.f32.mrf.mxu0
    %v1152 = vadd.f32 %v1039, %v1151
    %1153 = vmatmul.f32.gmra.mxu0 %v158
    %v1154 = vpop.f32.mrf.mxu0
    %v1155 = vadd.f32 %v1042, %v1154
    %1156 = vmatmul.f32.gmra.mxu0 %v161
    %v1157 = vpop.f32.mrf.mxu0
    %v1158 = vadd.f32 %v1045, %v1157
    %1159 = vmatmul.f32.gmra.mxu0 %v164
    %v1160 = vpop.f32.mrf.mxu0
    %v1161 = vadd.f32 %v1048, %v1160
    %1162 = vmatmul.f32.gmra.mxu0 %v167
    %v1163 = vpop.f32.mrf.mxu0
    %v1164 = vadd.f32 %v1051, %v1163
    %1165 = vmatmul.f32.gmra.mxu0 %v170
    %v1166 = vpop.f32.mrf.mxu0
    %v1167 = vadd.f32 %v1054, %v1166
    %1168 = vmatmul.f32.gmra.mxu0 %v173
    %v1169 = vpop.f32.mrf.mxu0
    %v1170 = vadd.f32 %v1057, %v1169
    %1171 = vdwg.mxu0
    %1172 = vmatpush.msra.mxu0 %v599
    %1173 = vmatpush.msra.mxu0 %v590
    %1174 = vmatpush.msra.mxu0 %v581
    %1175 = vmatpush.msra.mxu0 %v572
    %1176 = vmatpush.msra.mxu0 %v563
    %1177 = vmatpush.msra.mxu0 %v554
    %1178 = vmatpush.msra.mxu0 %v545
    %1179 = vmatpush.msra.mxu0 %v536
    %1180 = vmatpush.msra.mxu0 %v527
    %1181 = vmatpush.msra.mxu0 %v518
    %1182 = vmatpush.msra.mxu0 %v509
    %1183 = vmatpush.msra.mxu0 %v500
    %1184 = vmatpush.msra.mxu0 %v491
    %1185 = vmatpush.msra.mxu0 %v482
    %1186 = vmatpush.msra.mxu0 %v473
    %1187 = vmatpush.msra.mxu0 %v464
    %1188 = vmatmul.f32.gmra.mxu0 %v81
    %v1189 = vpop.f32.mrf.mxu0
    %v1190 = vadd.f32 %v1077, %v1189
    %1191 = vmatmul.f32.gmra.mxu0 %v84
    %v1192 = vpop.f32.mrf.mxu0
    %v1193 = vadd.f32 %v1080, %v1192
    %1194 = vmatmul.f32.gmra.mxu0 %v87
    %v1195 = vpop.f32.mrf.mxu0
    %v1196 = vadd.f32 %v1083, %v1195
    %1197 = vmatmul.f32.gmra.mxu0 %v90
    %v1198 = vpop.f32.mrf.mxu0
    %v1199 = vadd.f32 %v1086, %v1198
    %1200 = vmatmul.f32.gmra.mxu0 %v93
    %v1201 = vpop.f32.mrf.mxu0
    %v1202 = vadd.f32 %v1089, %v1201
    %1203 = vmatmul.f32.gmra.mxu0 %v96
    %v1204 = vpop.f32.mrf.mxu0
    %v1205 = vadd.f32 %v1092, %v1204
    %1206 = vmatmul.f32.gmra.mxu0 %v99
    %v1207 = vpop.f32.mrf.mxu0
    %v1208 = vadd.f32 %v1095, %v1207
    %1209 = vmatmul.f32.gmra.mxu0 %v102
    %v1210 = vpop.f32.mrf.mxu0
    %v1211 = vadd.f32 %v1098, %v1210
    %1212 = vmatmul.f32.gmra.mxu0 %v105
    %v1213 = vpop.f32.mrf.mxu0
    %v1214 = vadd.f32 %v1101, %v1213
    %1215 = vmatmul.f32.gmra.mxu0 %v108
    %v1216 = vpop.f32.mrf.mxu0
    %v1217 = vadd.f32 %v1104, %v1216
    %1218 = vmatmul.f32.gmra.mxu0 %v111
    %v1219 = vpop.f32.mrf.mxu0
    %v1220 = vadd.f32 %v1107, %v1219
    %1221 = vmatmul.f32.gmra.mxu0 %v114
    %v1222 = vpop.f32.mrf.mxu0
    %v1223 = vadd.f32 %v1110, %v1222
    %1224 = vmatmul.f32.gmra.mxu0 %v117
    %v1225 = vpop.f32.mrf.mxu0
    %v1226 = vadd.f32 %v1113, %v1225
    %1227 = vmatmul.f32.gmra.mxu0 %v120
    %v1228 = vpop.f32.mrf.mxu0
    %v1229 = vadd.f32 %v1116, %v1228
    %1230 = vmatmul.f32.gmra.mxu0 %v123
    %v1231 = vpop.f32.mrf.mxu0
    %v1232 = vadd.f32 %v1119, %v1231
    %1233 = vmatmul.f32.gmra.mxu0 %v126
    %v1234 = vpop.f32.mrf.mxu0
    %v1235 = vadd.f32 %v1122, %v1234
    %1236 = vmatmul.f32.gmra.mxu0 %v129
    %v1237 = vpop.f32.mrf.mxu0
    %v1238 = vadd.f32 %v1125, %v1237
    %1239 = vmatmul.f32.gmra.mxu0 %v132
    %v1240 = vpop.f32.mrf.mxu0
    %v1241 = vadd.f32 %v1128, %v1240
    %1242 = vmatmul.f32.gmra.mxu0 %v135
    %v1243 = vpop.f32.mrf.mxu0
    %v1244 = vadd.f32 %v1131, %v1243
    %1245 = vmatmul.f32.gmra.mxu0 %v138
    %v1246 = vpop.f32.mrf.mxu0
    %v1247 = vadd.f32 %v1134, %v1246
    %1248 = vmatmul.f32.gmra.mxu0 %v141
    %v1249 = vpop.f32.mrf.mxu0
    %v1250 = vadd.f32 %v1137, %v1249
    %1251 = vmatmul.f32.gmra.mxu0 %v144
    %v1252 = vpop.f32.mrf.mxu0
    %v1253 = vadd.f32 %v1140, %v1252
    %1254 = vmatmul.f32.gmra.mxu0 %v147
    %v1255 = vpop.f32.mrf.mxu0
    %v1256 = vadd.f32 %v1143, %v1255
    %1257 = vmatmul.f32.gmra.mxu0 %v150
    %v1258 = vpop.f32.mrf.mxu0
    %v1259 = vadd.f32 %v1146, %v1258
    %1260 = vmatmul.f32.gmra.mxu0 %v153
    %v1261 = vpop.f32.mrf.mxu0
    %v1262 = vadd.f32 %v1149, %v1261
    %1263 = vmatmul.f32.gmra.mxu0 %v156
    %v1264 = vpop.f32.mrf.mxu0
    %v1265 = vadd.f32 %v1152, %v1264
    %1266 = vmatmul.f32.gmra.mxu0 %v159
    %v1267 = vpop.f32.mrf.mxu0
    %v1268 = vadd.f32 %v1155, %v1267
    %1269 = vmatmul.f32.gmra.mxu0 %v162
    %v1270 = vpop.f32.mrf.mxu0
    %v1271 = vadd.f32 %v1158, %v1270
    %1272 = vmatmul.f32.gmra.mxu0 %v165
    %v1273 = vpop.f32.mrf.mxu0
    %v1274 = vadd.f32 %v1161, %v1273
    %1275 = vmatmul.f32.gmra.mxu0 %v168
    %v1276 = vpop.f32.mrf.mxu0
    %v1277 = vadd.f32 %v1164, %v1276
    %1278 = vmatmul.f32.gmra.mxu0 %v171
    %v1279 = vpop.f32.mrf.mxu0
    %v1280 = vadd.f32 %v1167, %v1279
    %1281 = vmatmul.f32.gmra.mxu0 %v174
    %v1282 = vpop.f32.mrf.mxu0
    %v1283 = vadd.f32 %v1170, %v1282
    %1284 = vdwg.mxu0
    %1285 = vmatpush.msra.mxu0 %v312
    %1286 = vmatpush.msra.mxu0 %v303
    %1287 = vmatpush.msra.mxu0 %v294
    %1288 = vmatpush.msra.mxu0 %v285
    %1289 = vmatpush.msra.mxu0 %v276
    %1290 = vmatpush.msra.mxu0 %v267
    %1291 = vmatpush.msra.mxu0 %v258
    %1292 = vmatpush.msra.mxu0 %v249
    %1293 = vmatpush.msra.mxu0 %v240
    %1294 = vmatpush.msra.mxu0 %v231
    %1295 = vmatpush.msra.mxu0 %v222
    %1296 = vmatpush.msra.mxu0 %v213
    %1297 = vmatpush.msra.mxu0 %v204
    %1298 = vmatpush.msra.mxu0 %v195
    %1299 = vmatpush.msra.mxu0 %v186
    %1300 = vmatpush.msra.mxu0 %v177
    %1301 = vmatmul.f32.gmra.mxu0 %v79
    %v1302 = vpop.f32.mrf.mxu0
    %v1303 = vadd.f32 0.0, %v1302
    %1304 = vmatmul.f32.gmra.mxu0 %v82
    %v1305 = vpop.f32.mrf.mxu0
    %v1306 = vadd.f32 0.0, %v1305
    %1307 = vmatmul.f32.gmra.mxu0 %v85
    %v1308 = vpop.f32.mrf.mxu0
    %v1309 = vadd.f32 0.0, %v1308
    %1310 = vmatmul.f32.gmra.mxu0 %v88
    %v1311 = vpop.f32.mrf.mxu0
    %v1312 = vadd.f32 0.0, %v1311
    %1313 = vmatmul.f32.gmra.mxu0 %v91
    %v1314 = vpop.f32.mrf.mxu0
    %v1315 = vadd.f32 0.0, %v1314
    %1316 = vmatmul.f32.gmra.mxu0 %v94
    %v1317 = vpop.f32.mrf.mxu0
    %v1318 = vadd.f32 0.0, %v1317
    %1319 = vmatmul.f32.gmra.mxu0 %v97
    %v1320 = vpop.f32.mrf.mxu0
    %v1321 = vadd.f32 0.0, %v1320
    %1322 = vmatmul.f32.gmra.mxu0 %v100
    %v1323 = vpop.f32.mrf.mxu0
    %v1324 = vadd.f32 0.0, %v1323
    %1325 = vmatmul.f32.gmra.mxu0 %v103
    %v1326 = vpop.f32.mrf.mxu0
    %v1327 = vadd.f32 0.0, %v1326
    %1328 = vmatmul.f32.gmra.mxu0 %v106
    %v1329 = vpop.f32.mrf.mxu0
    %v1330 = vadd.f32 0.0, %v1329
    %1331 = vmatmul.f32.gmra.mxu0 %v109
    %v1332 = vpop.f32.mrf.mxu0
    %v1333 = vadd.f32 0.0, %v1332
    %1334 = vmatmul.f32.gmra.mxu0 %v112
    %v1335 = vpop.f32.mrf.mxu0
    %v1336 = vadd.f32 0.0, %v1335
    %1337 = vmatmul.f32.gmra.mxu0 %v115
    %v1338 = vpop.f32.mrf.mxu0
    %v1339 = vadd.f32 0.0, %v1338
    %1340 = vmatmul.f32.gmra.mxu0 %v118
    %v1341 = vpop.f32.mrf.mxu0
    %v1342 = vadd.f32 0.0, %v1341
    %1343 = vmatmul.f32.gmra.mxu0 %v121
    %v1344 = vpop.f32.mrf.mxu0
    %v1345 = vadd.f32 0.0, %v1344
    %1346 = vmatmul.f32.gmra.mxu0 %v124
    %v1347 = vpop.f32.mrf.mxu0
    %v1348 = vadd.f32 0.0, %v1347
    %1349 = vmatmul.f32.gmra.mxu0 %v127
    %v1350 = vpop.f32.mrf.mxu0
    %v1351 = vadd.f32 0.0, %v1350
    %1352 = vmatmul.f32.gmra.mxu0 %v130
    %v1353 = vpop.f32.mrf.mxu0
    %v1354 = vadd.f32 0.0, %v1353
    %1355 = vmatmul.f32.gmra.mxu0 %v133
    %v1356 = vpop.f32.mrf.mxu0
    %v1357 = vadd.f32 0.0, %v1356
    %1358 = vmatmul.f32.gmra.mxu0 %v136
    %v1359 = vpop.f32.mrf.mxu0
    %v1360 = vadd.f32 0.0, %v1359
    %1361 = vmatmul.f32.gmra.mxu0 %v139
    %v1362 = vpop.f32.mrf.mxu0
    %v1363 = vadd.f32 0.0, %v1362
    %1364 = vmatmul.f32.gmra.mxu0 %v142
    %v1365 = vpop.f32.mrf.mxu0
    %v1366 = vadd.f32 0.0, %v1365
    %1367 = vmatmul.f32.gmra.mxu0 %v145
    %v1368 = vpop.f32.mrf.mxu0
    %v1369 = vadd.f32 0.0, %v1368
    %1370 = vmatmul.f32.gmra.mxu0 %v148
    %v1371 = vpop.f32.mrf.mxu0
    %v1372 = vadd.f32 0.0, %v1371
    %1373 = vmatmul.f32.gmra.mxu0 %v151
    %v1374 = vpop.f32.mrf.mxu0
    %v1375 = vadd.f32 0.0, %v1374
    %1376 = vmatmul.f32.gmra.mxu0 %v154
    %v1377 = vpop.f32.mrf.mxu0
    %v1378 = vadd.f32 0.0, %v1377
    %1379 = vmatmul.f32.gmra.mxu0 %v157
    %v1380 = vpop.f32.mrf.mxu0
    %v1381 = vadd.f32 0.0, %v1380
    %1382 = vmatmul.f32.gmra.mxu0 %v160
    %v1383 = vpop.f32.mrf.mxu0
    %v1384 = vadd.f32 0.0, %v1383
    %1385 = vmatmul.f32.gmra.mxu0 %v163
    %v1386 = vpop.f32.mrf.mxu0
    %v1387 = vadd.f32 0.0, %v1386
    %1388 = vmatmul.f32.gmra.mxu0 %v166
    %v1389 = vpop.f32.mrf.mxu0
    %v1390 = vadd.f32 0.0, %v1389
    %1391 = vmatmul.f32.gmra.mxu0 %v169
    %v1392 = vpop.f32.mrf.mxu0
    %v1393 = vadd.f32 0.0, %v1392
    %1394 = vmatmul.f32.gmra.mxu0 %v172
    %v1395 = vpop.f32.mrf.mxu0
    %v1396 = vadd.f32 0.0, %v1395
    %1397 = vdwg.mxu0
    %1398 = vmatpush.msra.mxu0 %v456
    %1399 = vmatpush.msra.mxu0 %v447
    %1400 = vmatpush.msra.mxu0 %v438
    %1401 = vmatpush.msra.mxu0 %v429
    %1402 = vmatpush.msra.mxu0 %v420
    %1403 = vmatpush.msra.mxu0 %v411
    %1404 = vmatpush.msra.mxu0 %v402
    %1405 = vmatpush.msra.mxu0 %v393
    %1406 = vmatpush.msra.mxu0 %v384
    %1407 = vmatpush.msra.mxu0 %v375
    %1408 = vmatpush.msra.mxu0 %v366
    %1409 = vmatpush.msra.mxu0 %v357
    %1410 = vmatpush.msra.mxu0 %v348
    %1411 = vmatpush.msra.mxu0 %v339
    %1412 = vmatpush.msra.mxu0 %v330
    %1413 = vmatpush.msra.mxu0 %v321
    %1414 = vmatmul.f32.gmra.mxu0 %v80
    %v1415 = vpop.f32.mrf.mxu0
    %v1416 = vadd.f32 %v1303, %v1415
    %1417 = vmatmul.f32.gmra.mxu0 %v83
    %v1418 = vpop.f32.mrf.mxu0
    %v1419 = vadd.f32 %v1306, %v1418
    %1420 = vmatmul.f32.gmra.mxu0 %v86
    %v1421 = vpop.f32.mrf.mxu0
    %v1422 = vadd.f32 %v1309, %v1421
    %1423 = vmatmul.f32.gmra.mxu0 %v89
    %v1424 = vpop.f32.mrf.mxu0
    %v1425 = vadd.f32 %v1312, %v1424
    %1426 = vmatmul.f32.gmra.mxu0 %v92
    %v1427 = vpop.f32.mrf.mxu0
    %v1428 = vadd.f32 %v1315, %v1427
    %1429 = vmatmul.f32.gmra.mxu0 %v95
    %v1430 = vpop.f32.mrf.mxu0
    %v1431 = vadd.f32 %v1318, %v1430
    %1432 = vmatmul.f32.gmra.mxu0 %v98
    %v1433 = vpop.f32.mrf.mxu0
    %v1434 = vadd.f32 %v1321, %v1433
    %1435 = vmatmul.f32.gmra.mxu0 %v101
    %v1436 = vpop.f32.mrf.mxu0
    %v1437 = vadd.f32 %v1324, %v1436
    %1438 = vmatmul.f32.gmra.mxu0 %v104
    %v1439 = vpop.f32.mrf.mxu0
    %v1440 = vadd.f32 %v1327, %v1439
    %1441 = vmatmul.f32.gmra.mxu0 %v107
    %v1442 = vpop.f32.mrf.mxu0
    %v1443 = vadd.f32 %v1330, %v1442
    %1444 = vmatmul.f32.gmra.mxu0 %v110
    %v1445 = vpop.f32.mrf.mxu0
    %v1446 = vadd.f32 %v1333, %v1445
    %1447 = vmatmul.f32.gmra.mxu0 %v113
    %v1448 = vpop.f32.mrf.mxu0
    %v1449 = vadd.f32 %v1336, %v1448
    %1450 = vmatmul.f32.gmra.mxu0 %v116
    %v1451 = vpop.f32.mrf.mxu0
    %v1452 = vadd.f32 %v1339, %v1451
    %1453 = vmatmul.f32.gmra.mxu0 %v119
    %v1454 = vpop.f32.mrf.mxu0
    %v1455 = vadd.f32 %v1342, %v1454
    %1456 = vmatmul.f32.gmra.mxu0 %v122
    %v1457 = vpop.f32.mrf.mxu0
    %v1458 = vadd.f32 %v1345, %v1457
    %1459 = vmatmul.f32.gmra.mxu0 %v125
    %v1460 = vpop.f32.mrf.mxu0
    %v1461 = vadd.f32 %v1348, %v1460
    %1462 = vmatmul.f32.gmra.mxu0 %v128
    %v1463 = vpop.f32.mrf.mxu0
    %v1464 = vadd.f32 %v1351, %v1463
    %1465 = vmatmul.f32.gmra.mxu0 %v131
    %v1466 = vpop.f32.mrf.mxu0
    %v1467 = vadd.f32 %v1354, %v1466
    %1468 = vmatmul.f32.gmra.mxu0 %v134
    %v1469 = vpop.f32.mrf.mxu0
    %v1470 = vadd.f32 %v1357, %v1469
    %1471 = vmatmul.f32.gmra.mxu0 %v137
    %v1472 = vpop.f32.mrf.mxu0
    %v1473 = vadd.f32 %v1360, %v1472
    %1474 = vmatmul.f32.gmra.mxu0 %v140
    %v1475 = vpop.f32.mrf.mxu0
    %v1476 = vadd.f32 %v1363, %v1475
    %1477 = vmatmul.f32.gmra.mxu0 %v143
    %v1478 = vpop.f32.mrf.mxu0
    %v1479 = vadd.f32 %v1366, %v1478
    %1480 = vmatmul.f32.gmra.mxu0 %v146
    %v1481 = vpop.f32.mrf.mxu0
    %v1482 = vadd.f32 %v1369, %v1481
    %1483 = vmatmul.f32.gmra.mxu0 %v149
    %v1484 = vpop.f32.mrf.mxu0
    %v1485 = vadd.f32 %v1372, %v1484
    %1486 = vmatmul.f32.gmra.mxu0 %v152
    %v1487 = vpop.f32.mrf.mxu0
    %v1488 = vadd.f32 %v1375, %v1487
    %1489 = vmatmul.f32.gmra.mxu0 %v155
    %v1490 = vpop.f32.mrf.mxu0
    %v1491 = vadd.f32 %v1378, %v1490
    %1492 = vmatmul.f32.gmra.mxu0 %v158
    %v1493 = vpop.f32.mrf.mxu0
    %v1494 = vadd.f32 %v1381, %v1493
    %1495 = vmatmul.f32.gmra.mxu0 %v161
    %v1496 = vpop.f32.mrf.mxu0
    %v1497 = vadd.f32 %v1384, %v1496
    %1498 = vmatmul.f32.gmra.mxu0 %v164
    %v1499 = vpop.f32.mrf.mxu0
    %v1500 = vadd.f32 %v1387, %v1499
    %1501 = vmatmul.f32.gmra.mxu0 %v167
    %v1502 = vpop.f32.mrf.mxu0
    %v1503 = vadd.f32 %v1390, %v1502
    %1504 = vmatmul.f32.gmra.mxu0 %v170
    %v1505 = vpop.f32.mrf.mxu0
    %v1506 = vadd.f32 %v1393, %v1505
    %1507 = vmatmul.f32.gmra.mxu0 %v173
    %v1508 = vpop.f32.mrf.mxu0
    %v1509 = vadd.f32 %v1396, %v1508
    %1510 = vdwg.mxu0
    %1511 = vmatpush.msra.mxu0 %v600
    %1512 = vmatpush.msra.mxu0 %v591
    %1513 = vmatpush.msra.mxu0 %v582
    %1514 = vmatpush.msra.mxu0 %v573
    %1515 = vmatpush.msra.mxu0 %v564
    %1516 = vmatpush.msra.mxu0 %v555
    %1517 = vmatpush.msra.mxu0 %v546
    %1518 = vmatpush.msra.mxu0 %v537
    %1519 = vmatpush.msra.mxu0 %v528
    %1520 = vmatpush.msra.mxu0 %v519
    %1521 = vmatpush.msra.mxu0 %v510
    %1522 = vmatpush.msra.mxu0 %v501
    %1523 = vmatpush.msra.mxu0 %v492
    %1524 = vmatpush.msra.mxu0 %v483
    %1525 = vmatpush.msra.mxu0 %v474
    %1526 = vmatpush.msra.mxu0 %v465
    %1527 = vmatmul.f32.gmra.mxu0 %v81
    %v1528 = vpop.f32.mrf.mxu0
    %v1529 = vadd.f32 %v1416, %v1528
    %1530 = vmatmul.f32.gmra.mxu0 %v84
    %v1531 = vpop.f32.mrf.mxu0
    %v1532 = vadd.f32 %v1419, %v1531
    %1533 = vmatmul.f32.gmra.mxu0 %v87
    %v1534 = vpop.f32.mrf.mxu0
    %v1535 = vadd.f32 %v1422, %v1534
    %1536 = vmatmul.f32.gmra.mxu0 %v90
    %v1537 = vpop.f32.mrf.mxu0
    %v1538 = vadd.f32 %v1425, %v1537
    %1539 = vmatmul.f32.gmra.mxu0 %v93
    %v1540 = vpop.f32.mrf.mxu0
    %v1541 = vadd.f32 %v1428, %v1540
    %1542 = vmatmul.f32.gmra.mxu0 %v96
    %v1543 = vpop.f32.mrf.mxu0
    %v1544 = vadd.f32 %v1431, %v1543
    %1545 = vmatmul.f32.gmra.mxu0 %v99
    %v1546 = vpop.f32.mrf.mxu0
    %v1547 = vadd.f32 %v1434, %v1546
    %1548 = vmatmul.f32.gmra.mxu0 %v102
    %v1549 = vpop.f32.mrf.mxu0
    %v1550 = vadd.f32 %v1437, %v1549
    %1551 = vmatmul.f32.gmra.mxu0 %v105
    %v1552 = vpop.f32.mrf.mxu0
    %v1553 = vadd.f32 %v1440, %v1552
    %1554 = vmatmul.f32.gmra.mxu0 %v108
    %v1555 = vpop.f32.mrf.mxu0
    %v1556 = vadd.f32 %v1443, %v1555
    %1557 = vmatmul.f32.gmra.mxu0 %v111
    %v1558 = vpop.f32.mrf.mxu0
    %v1559 = vadd.f32 %v1446, %v1558
    %1560 = vmatmul.f32.gmra.mxu0 %v114
    %v1561 = vpop.f32.mrf.mxu0
    %v1562 = vadd.f32 %v1449, %v1561
    %1563 = vmatmul.f32.gmra.mxu0 %v117
    %v1564 = vpop.f32.mrf.mxu0
    %v1565 = vadd.f32 %v1452, %v1564
    %1566 = vmatmul.f32.gmra.mxu0 %v120
    %v1567 = vpop.f32.mrf.mxu0
    %v1568 = vadd.f32 %v1455, %v1567
    %1569 = vmatmul.f32.gmra.mxu0 %v123
    %v1570 = vpop.f32.mrf.mxu0
    %v1571 = vadd.f32 %v1458, %v1570
    %1572 = vmatmul.f32.gmra.mxu0 %v126
    %v1573 = vpop.f32.mrf.mxu0
    %v1574 = vadd.f32 %v1461, %v1573
    %1575 = vmatmul.f32.gmra.mxu0 %v129
    %v1576 = vpop.f32.mrf.mxu0
    %v1577 = vadd.f32 %v1464, %v1576
    %1578 = vmatmul.f32.gmra.mxu0 %v132
    %v1579 = vpop.f32.mrf.mxu0
    %v1580 = vadd.f32 %v1467, %v1579
    %1581 = vmatmul.f32.gmra.mxu0 %v135
    %v1582 = vpop.f32.mrf.mxu0
    %v1583 = vadd.f32 %v1470, %v1582
    %1584 = vmatmul.f32.gmra.mxu0 %v138
    %v1585 = vpop.f32.mrf.mxu0
    %v1586 = vadd.f32 %v1473, %v1585
    %1587 = vmatmul.f32.gmra.mxu0 %v141
    %v1588 = vpop.f32.mrf.mxu0
    %v1589 = vadd.f32 %v1476, %v1588
    %1590 = vmatmul.f32.gmra.mxu0 %v144
    %v1591 = vpop.f32.mrf.mxu0
    %v1592 = vadd.f32 %v1479, %v1591
    %1593 = vmatmul.f32.gmra.mxu0 %v147
    %v1594 = vpop.f32.mrf.mxu0
    %v1595 = vadd.f32 %v1482, %v1594
    %1596 = vmatmul.f32.gmra.mxu0 %v150
    %v1597 = vpop.f32.mrf.mxu0
    %v1598 = vadd.f32 %v1485, %v1597
    %1599 = vmatmul.f32.gmra.mxu0 %v153
    %v1600 = vpop.f32.mrf.mxu0
    %v1601 = vadd.f32 %v1488, %v1600
    %1602 = vmatmul.f32.gmra.mxu0 %v156
    %v1603 = vpop.f32.mrf.mxu0
    %v1604 = vadd.f32 %v1491, %v1603
    %1605 = vmatmul.f32.gmra.mxu0 %v159
    %v1606 = vpop.f32.mrf.mxu0
    %v1607 = vadd.f32 %v1494, %v1606
    %1608 = vmatmul.f32.gmra.mxu0 %v162
    %v1609 = vpop.f32.mrf.mxu0
    %v1610 = vadd.f32 %v1497, %v1609
    %1611 = vmatmul.f32.gmra.mxu0 %v165
    %v1612 = vpop.f32.mrf.mxu0
    %v1613 = vadd.f32 %v1500, %v1612
    %1614 = vmatmul.f32.gmra.mxu0 %v168
    %v1615 = vpop.f32.mrf.mxu0
    %v1616 = vadd.f32 %v1503, %v1615
    %1617 = vmatmul.f32.gmra.mxu0 %v171
    %v1618 = vpop.f32.mrf.mxu0
    %v1619 = vadd.f32 %v1506, %v1618
    %1620 = vmatmul.f32.gmra.mxu0 %v174
    %v1621 = vpop.f32.mrf.mxu0
    %v1622 = vadd.f32 %v1509, %v1621
    %1623 = vdwg.mxu0
    %1624 = vmatpush.msra.mxu0 %v313
    %1625 = vmatpush.msra.mxu0 %v304
    %1626 = vmatpush.msra.mxu0 %v295
    %1627 = vmatpush.msra.mxu0 %v286
    %1628 = vmatpush.msra.mxu0 %v277
    %1629 = vmatpush.msra.mxu0 %v268
    %1630 = vmatpush.msra.mxu0 %v259
    %1631 = vmatpush.msra.mxu0 %v250
    %1632 = vmatpush.msra.mxu0 %v241
    %1633 = vmatpush.msra.mxu0 %v232
    %1634 = vmatpush.msra.mxu0 %v223
    %1635 = vmatpush.msra.mxu0 %v214
    %1636 = vmatpush.msra.mxu0 %v205
    %1637 = vmatpush.msra.mxu0 %v196
    %1638 = vmatpush.msra.mxu0 %v187
    %1639 = vmatpush.msra.mxu0 %v178
    %1640 = vmatmul.f32.gmra.mxu0 %v79
    %v1641 = vpop.f32.mrf.mxu0
    %v1642 = vadd.f32 0.0, %v1641
    %1643 = vmatmul.f32.gmra.mxu0 %v82
    %v1644 = vpop.f32.mrf.mxu0
    %v1645 = vadd.f32 0.0, %v1644
    %1646 = vmatmul.f32.gmra.mxu0 %v85
    %v1647 = vpop.f32.mrf.mxu0
    %v1648 = vadd.f32 0.0, %v1647
    %1649 = vmatmul.f32.gmra.mxu0 %v88
    %v1650 = vpop.f32.mrf.mxu0
    %v1651 = vadd.f32 0.0, %v1650
    %1652 = vmatmul.f32.gmra.mxu0 %v91
    %v1653 = vpop.f32.mrf.mxu0
    %v1654 = vadd.f32 0.0, %v1653
    %1655 = vmatmul.f32.gmra.mxu0 %v94
    %v1656 = vpop.f32.mrf.mxu0
    %v1657 = vadd.f32 0.0, %v1656
    %1658 = vmatmul.f32.gmra.mxu0 %v97
    %v1659 = vpop.f32.mrf.mxu0
    %v1660 = vadd.f32 0.0, %v1659
    %1661 = vmatmul.f32.gmra.mxu0 %v100
    %v1662 = vpop.f32.mrf.mxu0
    %v1663 = vadd.f32 0.0, %v1662
    %1664 = vmatmul.f32.gmra.mxu0 %v103
    %v1665 = vpop.f32.mrf.mxu0
    %v1666 = vadd.f32 0.0, %v1665
    %1667 = vmatmul.f32.gmra.mxu0 %v106
    %v1668 = vpop.f32.mrf.mxu0
    %v1669 = vadd.f32 0.0, %v1668
    %1670 = vmatmul.f32.gmra.mxu0 %v109
    %v1671 = vpop.f32.mrf.mxu0
    %v1672 = vadd.f32 0.0, %v1671
    %1673 = vmatmul.f32.gmra.mxu0 %v112
    %v1674 = vpop.f32.mrf.mxu0
    %v1675 = vadd.f32 0.0, %v1674
    %1676 = vmatmul.f32.gmra.mxu0 %v115
    %v1677 = vpop.f32.mrf.mxu0
    %v1678 = vadd.f32 0.0, %v1677
    %1679 = vmatmul.f32.gmra.mxu0 %v118
    %v1680 = vpop.f32.mrf.mxu0
    %v1681 = vadd.f32 0.0, %v1680
    %1682 = vmatmul.f32.gmra.mxu0 %v121
    %v1683 = vpop.f32.mrf.mxu0
    %v1684 = vadd.f32 0.0, %v1683
    %1685 = vmatmul.f32.gmra.mxu0 %v124
    %v1686 = vpop.f32.mrf.mxu0
    %v1687 = vadd.f32 0.0, %v1686
    %1688 = vmatmul.f32.gmra.mxu0 %v127
    %v1689 = vpop.f32.mrf.mxu0
    %v1690 = vadd.f32 0.0, %v1689
    %1691 = vmatmul.f32.gmra.mxu0 %v130
    %v1692 = vpop.f32.mrf.mxu0
    %v1693 = vadd.f32 0.0, %v1692
    %1694 = vmatmul.f32.gmra.mxu0 %v133
    %v1695 = vpop.f32.mrf.mxu0
    %v1696 = vadd.f32 0.0, %v1695
    %1697 = vmatmul.f32.gmra.mxu0 %v136
    %v1698 = vpop.f32.mrf.mxu0
    %v1699 = vadd.f32 0.0, %v1698
    %1700 = vmatmul.f32.gmra.mxu0 %v139
    %v1701 = vpop.f32.mrf.mxu0
    %v1702 = vadd.f32 0.0, %v1701
    %1703 = vmatmul.f32.gmra.mxu0 %v142
    %v1704 = vpop.f32.mrf.mxu0
    %v1705 = vadd.f32 0.0, %v1704
    %1706 = vmatmul.f32.gmra.mxu0 %v145
    %v1707 = vpop.f32.mrf.mxu0
    %v1708 = vadd.f32 0.0, %v1707
    %1709 = vmatmul.f32.gmra.mxu0 %v148
    %v1710 = vpop.f32.mrf.mxu0
    %v1711 = vadd.f32 0.0, %v1710
    %1712 = vmatmul.f32.gmra.mxu0 %v151
    %v1713 = vpop.f32.mrf.mxu0
    %v1714 = vadd.f32 0.0, %v1713
    %1715 = vmatmul.f32.gmra.mxu0 %v154
    %v1716 = vpop.f32.mrf.mxu0
    %v1717 = vadd.f32 0.0, %v1716
    %1718 = vmatmul.f32.gmra.mxu0 %v157
    %v1719 = vpop.f32.mrf.mxu0
    %v1720 = vadd.f32 0.0, %v1719
    %1721 = vmatmul.f32.gmra.mxu0 %v160
    %v1722 = vpop.f32.mrf.mxu0
    %v1723 = vadd.f32 0.0, %v1722
    %1724 = vmatmul.f32.gmra.mxu0 %v163
    %v1725 = vpop.f32.mrf.mxu0
    %v1726 = vadd.f32 0.0, %v1725
    %1727 = vmatmul.f32.gmra.mxu0 %v166
    %v1728 = vpop.f32.mrf.mxu0
    %v1729 = vadd.f32 0.0, %v1728
    %1730 = vmatmul.f32.gmra.mxu0 %v169
    %v1731 = vpop.f32.mrf.mxu0
    %v1732 = vadd.f32 0.0, %v1731
    %1733 = vmatmul.f32.gmra.mxu0 %v172
    %v1734 = vpop.f32.mrf.mxu0
    %v1735 = vadd.f32 0.0, %v1734
    %1736 = vdwg.mxu0
    %1737 = vmatpush.msra.mxu0 %v457
    %1738 = vmatpush.msra.mxu0 %v448
    %1739 = vmatpush.msra.mxu0 %v439
    %1740 = vmatpush.msra.mxu0 %v430
    %1741 = vmatpush.msra.mxu0 %v421
    %1742 = vmatpush.msra.mxu0 %v412
    %1743 = vmatpush.msra.mxu0 %v403
    %1744 = vmatpush.msra.mxu0 %v394
    %1745 = vmatpush.msra.mxu0 %v385
    %1746 = vmatpush.msra.mxu0 %v376
    %1747 = vmatpush.msra.mxu0 %v367
    %1748 = vmatpush.msra.mxu0 %v358
    %1749 = vmatpush.msra.mxu0 %v349
    %1750 = vmatpush.msra.mxu0 %v340
    %1751 = vmatpush.msra.mxu0 %v331
    %1752 = vmatpush.msra.mxu0 %v322
    %1753 = vmatmul.f32.gmra.mxu0 %v80
    %v1754 = vpop.f32.mrf.mxu0
    %v1755 = vadd.f32 %v1642, %v1754
    %1756 = vmatmul.f32.gmra.mxu0 %v83
    %v1757 = vpop.f32.mrf.mxu0
    %v1758 = vadd.f32 %v1645, %v1757
    %1759 = vmatmul.f32.gmra.mxu0 %v86
    %v1760 = vpop.f32.mrf.mxu0
    %v1761 = vadd.f32 %v1648, %v1760
    %1762 = vmatmul.f32.gmra.mxu0 %v89
    %v1763 = vpop.f32.mrf.mxu0
    %v1764 = vadd.f32 %v1651, %v1763
    %1765 = vmatmul.f32.gmra.mxu0 %v92
    %v1766 = vpop.f32.mrf.mxu0
    %v1767 = vadd.f32 %v1654, %v1766
    %1768 = vmatmul.f32.gmra.mxu0 %v95
    %v1769 = vpop.f32.mrf.mxu0
    %v1770 = vadd.f32 %v1657, %v1769
    %1771 = vmatmul.f32.gmra.mxu0 %v98
    %v1772 = vpop.f32.mrf.mxu0
    %v1773 = vadd.f32 %v1660, %v1772
    %1774 = vmatmul.f32.gmra.mxu0 %v101
    %v1775 = vpop.f32.mrf.mxu0
    %v1776 = vadd.f32 %v1663, %v1775
    %1777 = vmatmul.f32.gmra.mxu0 %v104
    %v1778 = vpop.f32.mrf.mxu0
    %v1779 = vadd.f32 %v1666, %v1778
    %1780 = vmatmul.f32.gmra.mxu0 %v107
    %v1781 = vpop.f32.mrf.mxu0
    %v1782 = vadd.f32 %v1669, %v1781
    %1783 = vmatmul.f32.gmra.mxu0 %v110
    %v1784 = vpop.f32.mrf.mxu0
    %v1785 = vadd.f32 %v1672, %v1784
    %1786 = vmatmul.f32.gmra.mxu0 %v113
    %v1787 = vpop.f32.mrf.mxu0
    %v1788 = vadd.f32 %v1675, %v1787
    %1789 = vmatmul.f32.gmra.mxu0 %v116
    %v1790 = vpop.f32.mrf.mxu0
    %v1791 = vadd.f32 %v1678, %v1790
    %1792 = vmatmul.f32.gmra.mxu0 %v119
    %v1793 = vpop.f32.mrf.mxu0
    %v1794 = vadd.f32 %v1681, %v1793
    %1795 = vmatmul.f32.gmra.mxu0 %v122
    %v1796 = vpop.f32.mrf.mxu0
    %v1797 = vadd.f32 %v1684, %v1796
    %1798 = vmatmul.f32.gmra.mxu0 %v125
    %v1799 = vpop.f32.mrf.mxu0
    %v1800 = vadd.f32 %v1687, %v1799
    %1801 = vmatmul.f32.gmra.mxu0 %v128
    %v1802 = vpop.f32.mrf.mxu0
    %v1803 = vadd.f32 %v1690, %v1802
    %1804 = vmatmul.f32.gmra.mxu0 %v131
    %v1805 = vpop.f32.mrf.mxu0
    %v1806 = vadd.f32 %v1693, %v1805
    %1807 = vmatmul.f32.gmra.mxu0 %v134
    %v1808 = vpop.f32.mrf.mxu0
    %v1809 = vadd.f32 %v1696, %v1808
    %1810 = vmatmul.f32.gmra.mxu0 %v137
    %v1811 = vpop.f32.mrf.mxu0
    %v1812 = vadd.f32 %v1699, %v1811
    %1813 = vmatmul.f32.gmra.mxu0 %v140
    %v1814 = vpop.f32.mrf.mxu0
    %v1815 = vadd.f32 %v1702, %v1814
    %1816 = vmatmul.f32.gmra.mxu0 %v143
    %v1817 = vpop.f32.mrf.mxu0
    %v1818 = vadd.f32 %v1705, %v1817
    %1819 = vmatmul.f32.gmra.mxu0 %v146
    %v1820 = vpop.f32.mrf.mxu0
    %v1821 = vadd.f32 %v1708, %v1820
    %1822 = vmatmul.f32.gmra.mxu0 %v149
    %v1823 = vpop.f32.mrf.mxu0
    %v1824 = vadd.f32 %v1711, %v1823
    %1825 = vmatmul.f32.gmra.mxu0 %v152
    %v1826 = vpop.f32.mrf.mxu0
    %v1827 = vadd.f32 %v1714, %v1826
    %1828 = vmatmul.f32.gmra.mxu0 %v155
    %v1829 = vpop.f32.mrf.mxu0
    %v1830 = vadd.f32 %v1717, %v1829
    %1831 = vmatmul.f32.gmra.mxu0 %v158
    %v1832 = vpop.f32.mrf.mxu0
    %v1833 = vadd.f32 %v1720, %v1832
    %1834 = vmatmul.f32.gmra.mxu0 %v161
    %v1835 = vpop.f32.mrf.mxu0
    %v1836 = vadd.f32 %v1723, %v1835
    %1837 = vmatmul.f32.gmra.mxu0 %v164
    %v1838 = vpop.f32.mrf.mxu0
    %v1839 = vadd.f32 %v1726, %v1838
    %1840 = vmatmul.f32.gmra.mxu0 %v167
    %v1841 = vpop.f32.mrf.mxu0
    %v1842 = vadd.f32 %v1729, %v1841
    %1843 = vmatmul.f32.gmra.mxu0 %v170
    %v1844 = vpop.f32.mrf.mxu0
    %v1845 = vadd.f32 %v1732, %v1844
    %1846 = vmatmul.f32.gmra.mxu0 %v173
    %v1847 = vpop.f32.mrf.mxu0
    %v1848 = vadd.f32 %v1735, %v1847
    %1849 = vdwg.mxu0
    %1850 = vmatpush.msra.mxu0 %v601
    %1851 = vmatpush.msra.mxu0 %v592
    %1852 = vmatpush.msra.mxu0 %v583
    %1853 = vmatpush.msra.mxu0 %v574
    %1854 = vmatpush.msra.mxu0 %v565
    %1855 = vmatpush.msra.mxu0 %v556
    %1856 = vmatpush.msra.mxu0 %v547
    %1857 = vmatpush.msra.mxu0 %v538
    %1858 = vmatpush.msra.mxu0 %v529
    %1859 = vmatpush.msra.mxu0 %v520
    %1860 = vmatpush.msra.mxu0 %v511
    %1861 = vmatpush.msra.mxu0 %v502
    %1862 = vmatpush.msra.mxu0 %v493
    %1863 = vmatpush.msra.mxu0 %v484
    %1864 = vmatpush.msra.mxu0 %v475
    %1865 = vmatpush.msra.mxu0 %v466
    %1866 = vmatmul.f32.gmra.mxu0 %v81
    %v1867 = vpop.f32.mrf.mxu0
    %v1868 = vadd.f32 %v1755, %v1867
    %1869 = vmatmul.f32.gmra.mxu0 %v84
    %v1870 = vpop.f32.mrf.mxu0
    %v1871 = vadd.f32 %v1758, %v1870
    %1872 = vmatmul.f32.gmra.mxu0 %v87
    %v1873 = vpop.f32.mrf.mxu0
    %v1874 = vadd.f32 %v1761, %v1873
    %1875 = vmatmul.f32.gmra.mxu0 %v90
    %v1876 = vpop.f32.mrf.mxu0
    %v1877 = vadd.f32 %v1764, %v1876
    %1878 = vmatmul.f32.gmra.mxu0 %v93
    %v1879 = vpop.f32.mrf.mxu0
    %v1880 = vadd.f32 %v1767, %v1879
    %1881 = vmatmul.f32.gmra.mxu0 %v96
    %v1882 = vpop.f32.mrf.mxu0
    %v1883 = vadd.f32 %v1770, %v1882
    %1884 = vmatmul.f32.gmra.mxu0 %v99
    %v1885 = vpop.f32.mrf.mxu0
    %v1886 = vadd.f32 %v1773, %v1885
    %1887 = vmatmul.f32.gmra.mxu0 %v102
    %v1888 = vpop.f32.mrf.mxu0
    %v1889 = vadd.f32 %v1776, %v1888
    %1890 = vmatmul.f32.gmra.mxu0 %v105
    %v1891 = vpop.f32.mrf.mxu0
    %v1892 = vadd.f32 %v1779, %v1891
    %1893 = vmatmul.f32.gmra.mxu0 %v108
    %v1894 = vpop.f32.mrf.mxu0
    %v1895 = vadd.f32 %v1782, %v1894
    %1896 = vmatmul.f32.gmra.mxu0 %v111
    %v1897 = vpop.f32.mrf.mxu0
    %v1898 = vadd.f32 %v1785, %v1897
    %1899 = vmatmul.f32.gmra.mxu0 %v114
    %v1900 = vpop.f32.mrf.mxu0
    %v1901 = vadd.f32 %v1788, %v1900
    %1902 = vmatmul.f32.gmra.mxu0 %v117
    %v1903 = vpop.f32.mrf.mxu0
    %v1904 = vadd.f32 %v1791, %v1903
    %1905 = vmatmul.f32.gmra.mxu0 %v120
    %v1906 = vpop.f32.mrf.mxu0
    %v1907 = vadd.f32 %v1794, %v1906
    %1908 = vmatmul.f32.gmra.mxu0 %v123
    %v1909 = vpop.f32.mrf.mxu0
    %v1910 = vadd.f32 %v1797, %v1909
    %1911 = vmatmul.f32.gmra.mxu0 %v126
    %v1912 = vpop.f32.mrf.mxu0
    %v1913 = vadd.f32 %v1800, %v1912
    %1914 = vmatmul.f32.gmra.mxu0 %v129
    %v1915 = vpop.f32.mrf.mxu0
    %v1916 = vadd.f32 %v1803, %v1915
    %1917 = vmatmul.f32.gmra.mxu0 %v132
    %v1918 = vpop.f32.mrf.mxu0
    %v1919 = vadd.f32 %v1806, %v1918
    %1920 = vmatmul.f32.gmra.mxu0 %v135
    %v1921 = vpop.f32.mrf.mxu0
    %v1922 = vadd.f32 %v1809, %v1921
    %1923 = vmatmul.f32.gmra.mxu0 %v138
    %v1924 = vpop.f32.mrf.mxu0
    %v1925 = vadd.f32 %v1812, %v1924
    %1926 = vmatmul.f32.gmra.mxu0 %v141
    %v1927 = vpop.f32.mrf.mxu0
    %v1928 = vadd.f32 %v1815, %v1927
    %1929 = vmatmul.f32.gmra.mxu0 %v144
    %v1930 = vpop.f32.mrf.mxu0
    %v1931 = vadd.f32 %v1818, %v1930
    %1932 = vmatmul.f32.gmra.mxu0 %v147
    %v1933 = vpop.f32.mrf.mxu0
    %v1934 = vadd.f32 %v1821, %v1933
    %1935 = vmatmul.f32.gmra.mxu0 %v150
    %v1936 = vpop.f32.mrf.mxu0
    %v1937 = vadd.f32 %v1824, %v1936
    %1938 = vmatmul.f32.gmra.mxu0 %v153
    %v1939 = vpop.f32.mrf.mxu0
    %v1940 = vadd.f32 %v1827, %v1939
    %1941 = vmatmul.f32.gmra.mxu0 %v156
    %v1942 = vpop.f32.mrf.mxu0
    %v1943 = vadd.f32 %v1830, %v1942
    %1944 = vmatmul.f32.gmra.mxu0 %v159
    %v1945 = vpop.f32.mrf.mxu0
    %v1946 = vadd.f32 %v1833, %v1945
    %1947 = vmatmul.f32.gmra.mxu0 %v162
    %v1948 = vpop.f32.mrf.mxu0
    %v1949 = vadd.f32 %v1836, %v1948
    %1950 = vmatmul.f32.gmra.mxu0 %v165
    %v1951 = vpop.f32.mrf.mxu0
    %v1952 = vadd.f32 %v1839, %v1951
    %1953 = vmatmul.f32.gmra.mxu0 %v168
    %v1954 = vpop.f32.mrf.mxu0
    %v1955 = vadd.f32 %v1842, %v1954
    %1956 = vmatmul.f32.gmra.mxu0 %v171
    %v1957 = vpop.f32.mrf.mxu0
    %v1958 = vadd.f32 %v1845, %v1957
    %1959 = vmatmul.f32.gmra.mxu0 %v174
    %v1960 = vpop.f32.mrf.mxu0
    %v1961 = vadd.f32 %v1848, %v1960
    %1962 = vdwg.mxu0
    %1963 = vmatpush.msra.mxu0 %v314
    %1964 = vmatpush.msra.mxu0 %v305
    %1965 = vmatpush.msra.mxu0 %v296
    %1966 = vmatpush.msra.mxu0 %v287
    %1967 = vmatpush.msra.mxu0 %v278
    %1968 = vmatpush.msra.mxu0 %v269
    %1969 = vmatpush.msra.mxu0 %v260
    %1970 = vmatpush.msra.mxu0 %v251
    %1971 = vmatpush.msra.mxu0 %v242
    %1972 = vmatpush.msra.mxu0 %v233
    %1973 = vmatpush.msra.mxu0 %v224
    %1974 = vmatpush.msra.mxu0 %v215
    %1975 = vmatpush.msra.mxu0 %v206
    %1976 = vmatpush.msra.mxu0 %v197
    %1977 = vmatpush.msra.mxu0 %v188
    %1978 = vmatpush.msra.mxu0 %v179
    %1979 = vmatmul.f32.gmra.mxu0 %v79
    %v1980 = vpop.f32.mrf.mxu0
    %v1981 = vadd.f32 0.0, %v1980
    %1982 = vmatmul.f32.gmra.mxu0 %v82
    %v1983 = vpop.f32.mrf.mxu0
    %v1984 = vadd.f32 0.0, %v1983
    %1985 = vmatmul.f32.gmra.mxu0 %v85
    %v1986 = vpop.f32.mrf.mxu0
    %v1987 = vadd.f32 0.0, %v1986
    %1988 = vmatmul.f32.gmra.mxu0 %v88
    %v1989 = vpop.f32.mrf.mxu0
    %v1990 = vadd.f32 0.0, %v1989
    %1991 = vmatmul.f32.gmra.mxu0 %v91
    %v1992 = vpop.f32.mrf.mxu0
    %v1993 = vadd.f32 0.0, %v1992
    %1994 = vmatmul.f32.gmra.mxu0 %v94
    %v1995 = vpop.f32.mrf.mxu0
    %v1996 = vadd.f32 0.0, %v1995
    %1997 = vmatmul.f32.gmra.mxu0 %v97
    %v1998 = vpop.f32.mrf.mxu0
    %v1999 = vadd.f32 0.0, %v1998
    %2000 = vmatmul.f32.gmra.mxu0 %v100
    %v2001 = vpop.f32.mrf.mxu0
    %v2002 = vadd.f32 0.0, %v2001
    %2003 = vmatmul.f32.gmra.mxu0 %v103
    %v2004 = vpop.f32.mrf.mxu0
    %v2005 = vadd.f32 0.0, %v2004
    %2006 = vmatmul.f32.gmra.mxu0 %v106
    %v2007 = vpop.f32.mrf.mxu0
    %v2008 = vadd.f32 0.0, %v2007
    %2009 = vmatmul.f32.gmra.mxu0 %v109
    %v2010 = vpop.f32.mrf.mxu0
    %v2011 = vadd.f32 0.0, %v2010
    %2012 = vmatmul.f32.gmra.mxu0 %v112
    %v2013 = vpop.f32.mrf.mxu0
    %v2014 = vadd.f32 0.0, %v2013
    %2015 = vmatmul.f32.gmra.mxu0 %v115
    %v2016 = vpop.f32.mrf.mxu0
    %v2017 = vadd.f32 0.0, %v2016
    %2018 = vmatmul.f32.gmra.mxu0 %v118
    %v2019 = vpop.f32.mrf.mxu0
    %v2020 = vadd.f32 0.0, %v2019
    %2021 = vmatmul.f32.gmra.mxu0 %v121
    %v2022 = vpop.f32.mrf.mxu0
    %v2023 = vadd.f32 0.0, %v2022
    %2024 = vmatmul.f32.gmra.mxu0 %v124
    %v2025 = vpop.f32.mrf.mxu0
    %v2026 = vadd.f32 0.0, %v2025
    %2027 = vmatmul.f32.gmra.mxu0 %v127
    %v2028 = vpop.f32.mrf.mxu0
    %v2029 = vadd.f32 0.0, %v2028
    %2030 = vmatmul.f32.gmra.mxu0 %v130
    %v2031 = vpop.f32.mrf.mxu0
    %v2032 = vadd.f32 0.0, %v2031
    %2033 = vmatmul.f32.gmra.mxu0 %v133
    %v2034 = vpop.f32.mrf.mxu0
    %v2035 = vadd.f32 0.0, %v2034
    %2036 = vmatmul.f32.gmra.mxu0 %v136
    %v2037 = vpop.f32.mrf.mxu0
    %v2038 = vadd.f32 0.0, %v2037
    %2039 = vmatmul.f32.gmra.mxu0 %v139
    %v2040 = vpop.f32.mrf.mxu0
    %v2041 = vadd.f32 0.0, %v2040
    %2042 = vmatmul.f32.gmra.mxu0 %v142
    %v2043 = vpop.f32.mrf.mxu0
    %v2044 = vadd.f32 0.0, %v2043
    %2045 = vmatmul.f32.gmra.mxu0 %v145
    %v2046 = vpop.f32.mrf.mxu0
    %v2047 = vadd.f32 0.0, %v2046
    %2048 = vmatmul.f32.gmra.mxu0 %v148
    %v2049 = vpop.f32.mrf.mxu0
    %v2050 = vadd.f32 0.0, %v2049
    %2051 = vmatmul.f32.gmra.mxu0 %v151
    %v2052 = vpop.f32.mrf.mxu0
    %v2053 = vadd.f32 0.0, %v2052
    %2054 = vmatmul.f32.gmra.mxu0 %v154
    %v2055 = vpop.f32.mrf.mxu0
    %v2056 = vadd.f32 0.0, %v2055
    %2057 = vmatmul.f32.gmra.mxu0 %v157
    %v2058 = vpop.f32.mrf.mxu0
    %v2059 = vadd.f32 0.0, %v2058
    %2060 = vmatmul.f32.gmra.mxu0 %v160
    %v2061 = vpop.f32.mrf.mxu0
    %v2062 = vadd.f32 0.0, %v2061
    %2063 = vmatmul.f32.gmra.mxu0 %v163
    %v2064 = vpop.f32.mrf.mxu0
    %v2065 = vadd.f32 0.0, %v2064
    %2066 = vmatmul.f32.gmra.mxu0 %v166
    %v2067 = vpop.f32.mrf.mxu0
    %v2068 = vadd.f32 0.0, %v2067
    %2069 = vmatmul.f32.gmra.mxu0 %v169
    %v2070 = vpop.f32.mrf.mxu0
    %v2071 = vadd.f32 0.0, %v2070
    %2072 = vmatmul.f32.gmra.mxu0 %v172
    %v2073 = vpop.f32.mrf.mxu0
    %v2074 = vadd.f32 0.0, %v2073
    %2075 = vdwg.mxu0
    %2076 = vmatpush.msra.mxu0 %v458
    %2077 = vmatpush.msra.mxu0 %v449
    %2078 = vmatpush.msra.mxu0 %v440
    %2079 = vmatpush.msra.mxu0 %v431
    %2080 = vmatpush.msra.mxu0 %v422
    %2081 = vmatpush.msra.mxu0 %v413
    %2082 = vmatpush.msra.mxu0 %v404
    %2083 = vmatpush.msra.mxu0 %v395
    %2084 = vmatpush.msra.mxu0 %v386
    %2085 = vmatpush.msra.mxu0 %v377
    %2086 = vmatpush.msra.mxu0 %v368
    %2087 = vmatpush.msra.mxu0 %v359
    %2088 = vmatpush.msra.mxu0 %v350
    %2089 = vmatpush.msra.mxu0 %v341
    %2090 = vmatpush.msra.mxu0 %v332
    %2091 = vmatpush.msra.mxu0 %v323
    %2092 = vmatmul.f32.gmra.mxu0 %v80
    %v2093 = vpop.f32.mrf.mxu0
    %v2094 = vadd.f32 %v1981, %v2093
    %2095 = vmatmul.f32.gmra.mxu0 %v83
    %v2096 = vpop.f32.mrf.mxu0
    %v2097 = vadd.f32 %v1984, %v2096
    %2098 = vmatmul.f32.gmra.mxu0 %v86
    %v2099 = vpop.f32.mrf.mxu0
    %v2100 = vadd.f32 %v1987, %v2099
    %2101 = vmatmul.f32.gmra.mxu0 %v89
    %v2102 = vpop.f32.mrf.mxu0
    %v2103 = vadd.f32 %v1990, %v2102
    %2104 = vmatmul.f32.gmra.mxu0 %v92
    %v2105 = vpop.f32.mrf.mxu0
    %v2106 = vadd.f32 %v1993, %v2105
    %2107 = vmatmul.f32.gmra.mxu0 %v95
    %v2108 = vpop.f32.mrf.mxu0
    %v2109 = vadd.f32 %v1996, %v2108
    %2110 = vmatmul.f32.gmra.mxu0 %v98
    %v2111 = vpop.f32.mrf.mxu0
    %v2112 = vadd.f32 %v1999, %v2111
    %2113 = vmatmul.f32.gmra.mxu0 %v101
    %v2114 = vpop.f32.mrf.mxu0
    %v2115 = vadd.f32 %v2002, %v2114
    %2116 = vmatmul.f32.gmra.mxu0 %v104
    %v2117 = vpop.f32.mrf.mxu0
    %v2118 = vadd.f32 %v2005, %v2117
    %2119 = vmatmul.f32.gmra.mxu0 %v107
    %v2120 = vpop.f32.mrf.mxu0
    %v2121 = vadd.f32 %v2008, %v2120
    %2122 = vmatmul.f32.gmra.mxu0 %v110
    %v2123 = vpop.f32.mrf.mxu0
    %v2124 = vadd.f32 %v2011, %v2123
    %2125 = vmatmul.f32.gmra.mxu0 %v113
    %v2126 = vpop.f32.mrf.mxu0
    %v2127 = vadd.f32 %v2014, %v2126
    %2128 = vmatmul.f32.gmra.mxu0 %v116
    %v2129 = vpop.f32.mrf.mxu0
    %v2130 = vadd.f32 %v2017, %v2129
    %2131 = vmatmul.f32.gmra.mxu0 %v119
    %v2132 = vpop.f32.mrf.mxu0
    %v2133 = vadd.f32 %v2020, %v2132
    %2134 = vmatmul.f32.gmra.mxu0 %v122
    %v2135 = vpop.f32.mrf.mxu0
    %v2136 = vadd.f32 %v2023, %v2135
    %2137 = vmatmul.f32.gmra.mxu0 %v125
    %v2138 = vpop.f32.mrf.mxu0
    %v2139 = vadd.f32 %v2026, %v2138
    %2140 = vmatmul.f32.gmra.mxu0 %v128
    %v2141 = vpop.f32.mrf.mxu0
    %v2142 = vadd.f32 %v2029, %v2141
    %2143 = vmatmul.f32.gmra.mxu0 %v131
    %v2144 = vpop.f32.mrf.mxu0
    %v2145 = vadd.f32 %v2032, %v2144
    %2146 = vmatmul.f32.gmra.mxu0 %v134
    %v2147 = vpop.f32.mrf.mxu0
    %v2148 = vadd.f32 %v2035, %v2147
    %2149 = vmatmul.f32.gmra.mxu0 %v137
    %v2150 = vpop.f32.mrf.mxu0
    %v2151 = vadd.f32 %v2038, %v2150
    %2152 = vmatmul.f32.gmra.mxu0 %v140
    %v2153 = vpop.f32.mrf.mxu0
    %v2154 = vadd.f32 %v2041, %v2153
    %2155 = vmatmul.f32.gmra.mxu0 %v143
    %v2156 = vpop.f32.mrf.mxu0
    %v2157 = vadd.f32 %v2044, %v2156
    %2158 = vmatmul.f32.gmra.mxu0 %v146
    %v2159 = vpop.f32.mrf.mxu0
    %v2160 = vadd.f32 %v2047, %v2159
    %2161 = vmatmul.f32.gmra.mxu0 %v149
    %v2162 = vpop.f32.mrf.mxu0
    %v2163 = vadd.f32 %v2050, %v2162
    %2164 = vmatmul.f32.gmra.mxu0 %v152
    %v2165 = vpop.f32.mrf.mxu0
    %v2166 = vadd.f32 %v2053, %v2165
    %2167 = vmatmul.f32.gmra.mxu0 %v155
    %v2168 = vpop.f32.mrf.mxu0
    %v2169 = vadd.f32 %v2056, %v2168
    %2170 = vmatmul.f32.gmra.mxu0 %v158
    %v2171 = vpop.f32.mrf.mxu0
    %v2172 = vadd.f32 %v2059, %v2171
    %2173 = vmatmul.f32.gmra.mxu0 %v161
    %v2174 = vpop.f32.mrf.mxu0
    %v2175 = vadd.f32 %v2062, %v2174
    %2176 = vmatmul.f32.gmra.mxu0 %v164
    %v2177 = vpop.f32.mrf.mxu0
    %v2178 = vadd.f32 %v2065, %v2177
    %2179 = vmatmul.f32.gmra.mxu0 %v167
    %v2180 = vpop.f32.mrf.mxu0
    %v2181 = vadd.f32 %v2068, %v2180
    %2182 = vmatmul.f32.gmra.mxu0 %v170
    %v2183 = vpop.f32.mrf.mxu0
    %v2184 = vadd.f32 %v2071, %v2183
    %2185 = vmatmul.f32.gmra.mxu0 %v173
    %v2186 = vpop.f32.mrf.mxu0
    %v2187 = vadd.f32 %v2074, %v2186
    %2188 = vdwg.mxu0
    %2189 = vmatpush.msra.mxu0 %v602
    %2190 = vmatpush.msra.mxu0 %v593
    %2191 = vmatpush.msra.mxu0 %v584
    %2192 = vmatpush.msra.mxu0 %v575
    %2193 = vmatpush.msra.mxu0 %v566
    %2194 = vmatpush.msra.mxu0 %v557
    %2195 = vmatpush.msra.mxu0 %v548
    %2196 = vmatpush.msra.mxu0 %v539
    %2197 = vmatpush.msra.mxu0 %v530
    %2198 = vmatpush.msra.mxu0 %v521
    %2199 = vmatpush.msra.mxu0 %v512
    %2200 = vmatpush.msra.mxu0 %v503
    %2201 = vmatpush.msra.mxu0 %v494
    %2202 = vmatpush.msra.mxu0 %v485
    %2203 = vmatpush.msra.mxu0 %v476
    %2204 = vmatpush.msra.mxu0 %v467
    %2205 = vmatmul.f32.gmra.mxu0 %v81
    %v2206 = vpop.f32.mrf.mxu0
    %v2207 = vadd.f32 %v2094, %v2206
    %2208 = vmatmul.f32.gmra.mxu0 %v84
    %v2209 = vpop.f32.mrf.mxu0
    %v2210 = vadd.f32 %v2097, %v2209
    %2211 = vmatmul.f32.gmra.mxu0 %v87
    %v2212 = vpop.f32.mrf.mxu0
    %v2213 = vadd.f32 %v2100, %v2212
    %2214 = vmatmul.f32.gmra.mxu0 %v90
    %v2215 = vpop.f32.mrf.mxu0
    %v2216 = vadd.f32 %v2103, %v2215
    %2217 = vmatmul.f32.gmra.mxu0 %v93
    %v2218 = vpop.f32.mrf.mxu0
    %v2219 = vadd.f32 %v2106, %v2218
    %2220 = vmatmul.f32.gmra.mxu0 %v96
    %v2221 = vpop.f32.mrf.mxu0
    %v2222 = vadd.f32 %v2109, %v2221
    %2223 = vmatmul.f32.gmra.mxu0 %v99
    %v2224 = vpop.f32.mrf.mxu0
    %v2225 = vadd.f32 %v2112, %v2224
    %2226 = vmatmul.f32.gmra.mxu0 %v102
    %v2227 = vpop.f32.mrf.mxu0
    %v2228 = vadd.f32 %v2115, %v2227
    %2229 = vmatmul.f32.gmra.mxu0 %v105
    %v2230 = vpop.f32.mrf.mxu0
    %v2231 = vadd.f32 %v2118, %v2230
    %2232 = vmatmul.f32.gmra.mxu0 %v108
    %v2233 = vpop.f32.mrf.mxu0
    %v2234 = vadd.f32 %v2121, %v2233
    %2235 = vmatmul.f32.gmra.mxu0 %v111
    %v2236 = vpop.f32.mrf.mxu0
    %v2237 = vadd.f32 %v2124, %v2236
    %2238 = vmatmul.f32.gmra.mxu0 %v114
    %v2239 = vpop.f32.mrf.mxu0
    %v2240 = vadd.f32 %v2127, %v2239
    %2241 = vmatmul.f32.gmra.mxu0 %v117
    %v2242 = vpop.f32.mrf.mxu0
    %v2243 = vadd.f32 %v2130, %v2242
    %2244 = vmatmul.f32.gmra.mxu0 %v120
    %v2245 = vpop.f32.mrf.mxu0
    %v2246 = vadd.f32 %v2133, %v2245
    %2247 = vmatmul.f32.gmra.mxu0 %v123
    %v2248 = vpop.f32.mrf.mxu0
    %v2249 = vadd.f32 %v2136, %v2248
    %2250 = vmatmul.f32.gmra.mxu0 %v126
    %v2251 = vpop.f32.mrf.mxu0
    %v2252 = vadd.f32 %v2139, %v2251
    %2253 = vmatmul.f32.gmra.mxu0 %v129
    %v2254 = vpop.f32.mrf.mxu0
    %v2255 = vadd.f32 %v2142, %v2254
    %2256 = vmatmul.f32.gmra.mxu0 %v132
    %v2257 = vpop.f32.mrf.mxu0
    %v2258 = vadd.f32 %v2145, %v2257
    %2259 = vmatmul.f32.gmra.mxu0 %v135
    %v2260 = vpop.f32.mrf.mxu0
    %v2261 = vadd.f32 %v2148, %v2260
    %2262 = vmatmul.f32.gmra.mxu0 %v138
    %v2263 = vpop.f32.mrf.mxu0
    %v2264 = vadd.f32 %v2151, %v2263
    %2265 = vmatmul.f32.gmra.mxu0 %v141
    %v2266 = vpop.f32.mrf.mxu0
    %v2267 = vadd.f32 %v2154, %v2266
    %2268 = vmatmul.f32.gmra.mxu0 %v144
    %v2269 = vpop.f32.mrf.mxu0
    %v2270 = vadd.f32 %v2157, %v2269
    %2271 = vmatmul.f32.gmra.mxu0 %v147
    %v2272 = vpop.f32.mrf.mxu0
    %v2273 = vadd.f32 %v2160, %v2272
    %2274 = vmatmul.f32.gmra.mxu0 %v150
    %v2275 = vpop.f32.mrf.mxu0
    %v2276 = vadd.f32 %v2163, %v2275
    %2277 = vmatmul.f32.gmra.mxu0 %v153
    %v2278 = vpop.f32.mrf.mxu0
    %v2279 = vadd.f32 %v2166, %v2278
    %2280 = vmatmul.f32.gmra.mxu0 %v156
    %v2281 = vpop.f32.mrf.mxu0
    %v2282 = vadd.f32 %v2169, %v2281
    %2283 = vmatmul.f32.gmra.mxu0 %v159
    %v2284 = vpop.f32.mrf.mxu0
    %v2285 = vadd.f32 %v2172, %v2284
    %2286 = vmatmul.f32.gmra.mxu0 %v162
    %v2287 = vpop.f32.mrf.mxu0
    %v2288 = vadd.f32 %v2175, %v2287
    %2289 = vmatmul.f32.gmra.mxu0 %v165
    %v2290 = vpop.f32.mrf.mxu0
    %v2291 = vadd.f32 %v2178, %v2290
    %2292 = vmatmul.f32.gmra.mxu0 %v168
    %v2293 = vpop.f32.mrf.mxu0
    %v2294 = vadd.f32 %v2181, %v2293
    %2295 = vmatmul.f32.gmra.mxu0 %v171
    %v2296 = vpop.f32.mrf.mxu0
    %v2297 = vadd.f32 %v2184, %v2296
    %2298 = vmatmul.f32.gmra.mxu0 %v174
    %v2299 = vpop.f32.mrf.mxu0
    %v2300 = vadd.f32 %v2187, %v2299
    %2301 = vdwg.mxu0
    %2302 = vmatpush.msra.mxu0 %v315
    %2303 = vmatpush.msra.mxu0 %v306
    %2304 = vmatpush.msra.mxu0 %v297
    %2305 = vmatpush.msra.mxu0 %v288
    %2306 = vmatpush.msra.mxu0 %v279
    %2307 = vmatpush.msra.mxu0 %v270
    %2308 = vmatpush.msra.mxu0 %v261
    %2309 = vmatpush.msra.mxu0 %v252
    %2310 = vmatpush.msra.mxu0 %v243
    %2311 = vmatpush.msra.mxu0 %v234
    %2312 = vmatpush.msra.mxu0 %v225
    %2313 = vmatpush.msra.mxu0 %v216
    %2314 = vmatpush.msra.mxu0 %v207
    %2315 = vmatpush.msra.mxu0 %v198
    %2316 = vmatpush.msra.mxu0 %v189
    %2317 = vmatpush.msra.mxu0 %v180
    %2318 = vmatmul.f32.gmra.mxu0 %v79
    %v2319 = vpop.f32.mrf.mxu0
    %v2320 = vadd.f32 0.0, %v2319
    %2321 = vmatmul.f32.gmra.mxu0 %v82
    %v2322 = vpop.f32.mrf.mxu0
    %v2323 = vadd.f32 0.0, %v2322
    %2324 = vmatmul.f32.gmra.mxu0 %v85
    %v2325 = vpop.f32.mrf.mxu0
    %v2326 = vadd.f32 0.0, %v2325
    %2327 = vmatmul.f32.gmra.mxu0 %v88
    %v2328 = vpop.f32.mrf.mxu0
    %v2329 = vadd.f32 0.0, %v2328
    %2330 = vmatmul.f32.gmra.mxu0 %v91
    %v2331 = vpop.f32.mrf.mxu0
    %v2332 = vadd.f32 0.0, %v2331
    %2333 = vmatmul.f32.gmra.mxu0 %v94
    %v2334 = vpop.f32.mrf.mxu0
    %v2335 = vadd.f32 0.0, %v2334
    %2336 = vmatmul.f32.gmra.mxu0 %v97
    %v2337 = vpop.f32.mrf.mxu0
    %v2338 = vadd.f32 0.0, %v2337
    %2339 = vmatmul.f32.gmra.mxu0 %v100
    %v2340 = vpop.f32.mrf.mxu0
    %v2341 = vadd.f32 0.0, %v2340
    %2342 = vmatmul.f32.gmra.mxu0 %v103
    %v2343 = vpop.f32.mrf.mxu0
    %v2344 = vadd.f32 0.0, %v2343
    %2345 = vmatmul.f32.gmra.mxu0 %v106
    %v2346 = vpop.f32.mrf.mxu0
    %v2347 = vadd.f32 0.0, %v2346
    %2348 = vmatmul.f32.gmra.mxu0 %v109
    %v2349 = vpop.f32.mrf.mxu0
    %v2350 = vadd.f32 0.0, %v2349
    %2351 = vmatmul.f32.gmra.mxu0 %v112
    %v2352 = vpop.f32.mrf.mxu0
    %v2353 = vadd.f32 0.0, %v2352
    %2354 = vmatmul.f32.gmra.mxu0 %v115
    %v2355 = vpop.f32.mrf.mxu0
    %v2356 = vadd.f32 0.0, %v2355
    %2357 = vmatmul.f32.gmra.mxu0 %v118
    %v2358 = vpop.f32.mrf.mxu0
    %v2359 = vadd.f32 0.0, %v2358
    %2360 = vmatmul.f32.gmra.mxu0 %v121
    %v2361 = vpop.f32.mrf.mxu0
    %v2362 = vadd.f32 0.0, %v2361
    %2363 = vmatmul.f32.gmra.mxu0 %v124
    %v2364 = vpop.f32.mrf.mxu0
    %v2365 = vadd.f32 0.0, %v2364
    %2366 = vmatmul.f32.gmra.mxu0 %v127
    %v2367 = vpop.f32.mrf.mxu0
    %v2368 = vadd.f32 0.0, %v2367
    %2369 = vmatmul.f32.gmra.mxu0 %v130
    %v2370 = vpop.f32.mrf.mxu0
    %v2371 = vadd.f32 0.0, %v2370
    %2372 = vmatmul.f32.gmra.mxu0 %v133
    %v2373 = vpop.f32.mrf.mxu0
    %v2374 = vadd.f32 0.0, %v2373
    %2375 = vmatmul.f32.gmra.mxu0 %v136
    %v2376 = vpop.f32.mrf.mxu0
    %v2377 = vadd.f32 0.0, %v2376
    %2378 = vmatmul.f32.gmra.mxu0 %v139
    %v2379 = vpop.f32.mrf.mxu0
    %v2380 = vadd.f32 0.0, %v2379
    %2381 = vmatmul.f32.gmra.mxu0 %v142
    %v2382 = vpop.f32.mrf.mxu0
    %v2383 = vadd.f32 0.0, %v2382
    %2384 = vmatmul.f32.gmra.mxu0 %v145
    %v2385 = vpop.f32.mrf.mxu0
    %v2386 = vadd.f32 0.0, %v2385
    %2387 = vmatmul.f32.gmra.mxu0 %v148
    %v2388 = vpop.f32.mrf.mxu0
    %v2389 = vadd.f32 0.0, %v2388
    %2390 = vmatmul.f32.gmra.mxu0 %v151
    %v2391 = vpop.f32.mrf.mxu0
    %v2392 = vadd.f32 0.0, %v2391
    %2393 = vmatmul.f32.gmra.mxu0 %v154
    %v2394 = vpop.f32.mrf.mxu0
    %v2395 = vadd.f32 0.0, %v2394
    %2396 = vmatmul.f32.gmra.mxu0 %v157
    %v2397 = vpop.f32.mrf.mxu0
    %v2398 = vadd.f32 0.0, %v2397
    %2399 = vmatmul.f32.gmra.mxu0 %v160
    %v2400 = vpop.f32.mrf.mxu0
    %v2401 = vadd.f32 0.0, %v2400
    %2402 = vmatmul.f32.gmra.mxu0 %v163
    %v2403 = vpop.f32.mrf.mxu0
    %v2404 = vadd.f32 0.0, %v2403
    %2405 = vmatmul.f32.gmra.mxu0 %v166
    %v2406 = vpop.f32.mrf.mxu0
    %v2407 = vadd.f32 0.0, %v2406
    %2408 = vmatmul.f32.gmra.mxu0 %v169
    %v2409 = vpop.f32.mrf.mxu0
    %v2410 = vadd.f32 0.0, %v2409
    %2411 = vmatmul.f32.gmra.mxu0 %v172
    %v2412 = vpop.f32.mrf.mxu0
    %v2413 = vadd.f32 0.0, %v2412
    %2414 = vdwg.mxu0
    %2415 = vmatpush.msra.mxu0 %v459
    %2416 = vmatpush.msra.mxu0 %v450
    %2417 = vmatpush.msra.mxu0 %v441
    %2418 = vmatpush.msra.mxu0 %v432
    %2419 = vmatpush.msra.mxu0 %v423
    %2420 = vmatpush.msra.mxu0 %v414
    %2421 = vmatpush.msra.mxu0 %v405
    %2422 = vmatpush.msra.mxu0 %v396
    %2423 = vmatpush.msra.mxu0 %v387
    %2424 = vmatpush.msra.mxu0 %v378
    %2425 = vmatpush.msra.mxu0 %v369
    %2426 = vmatpush.msra.mxu0 %v360
    %2427 = vmatpush.msra.mxu0 %v351
    %2428 = vmatpush.msra.mxu0 %v342
    %2429 = vmatpush.msra.mxu0 %v333
    %2430 = vmatpush.msra.mxu0 %v324
    %2431 = vmatmul.f32.gmra.mxu0 %v80
    %v2432 = vpop.f32.mrf.mxu0
    %v2433 = vadd.f32 %v2320, %v2432
    %2434 = vmatmul.f32.gmra.mxu0 %v83
    %v2435 = vpop.f32.mrf.mxu0
    %v2436 = vadd.f32 %v2323, %v2435
    %2437 = vmatmul.f32.gmra.mxu0 %v86
    %v2438 = vpop.f32.mrf.mxu0
    %v2439 = vadd.f32 %v2326, %v2438
    %2440 = vmatmul.f32.gmra.mxu0 %v89
    %v2441 = vpop.f32.mrf.mxu0
    %v2442 = vadd.f32 %v2329, %v2441
    %2443 = vmatmul.f32.gmra.mxu0 %v92
    %v2444 = vpop.f32.mrf.mxu0
    %v2445 = vadd.f32 %v2332, %v2444
    %2446 = vmatmul.f32.gmra.mxu0 %v95
    %v2447 = vpop.f32.mrf.mxu0
    %v2448 = vadd.f32 %v2335, %v2447
    %2449 = vmatmul.f32.gmra.mxu0 %v98
    %v2450 = vpop.f32.mrf.mxu0
    %v2451 = vadd.f32 %v2338, %v2450
    %2452 = vmatmul.f32.gmra.mxu0 %v101
    %v2453 = vpop.f32.mrf.mxu0
    %v2454 = vadd.f32 %v2341, %v2453
    %2455 = vmatmul.f32.gmra.mxu0 %v104
    %v2456 = vpop.f32.mrf.mxu0
    %v2457 = vadd.f32 %v2344, %v2456
    %2458 = vmatmul.f32.gmra.mxu0 %v107
    %v2459 = vpop.f32.mrf.mxu0
    %v2460 = vadd.f32 %v2347, %v2459
    %2461 = vmatmul.f32.gmra.mxu0 %v110
    %v2462 = vpop.f32.mrf.mxu0
    %v2463 = vadd.f32 %v2350, %v2462
    %2464 = vmatmul.f32.gmra.mxu0 %v113
    %v2465 = vpop.f32.mrf.mxu0
    %v2466 = vadd.f32 %v2353, %v2465
    %2467 = vmatmul.f32.gmra.mxu0 %v116
    %v2468 = vpop.f32.mrf.mxu0
    %v2469 = vadd.f32 %v2356, %v2468
    %2470 = vmatmul.f32.gmra.mxu0 %v119
    %v2471 = vpop.f32.mrf.mxu0
    %v2472 = vadd.f32 %v2359, %v2471
    %2473 = vmatmul.f32.gmra.mxu0 %v122
    %v2474 = vpop.f32.mrf.mxu0
    %v2475 = vadd.f32 %v2362, %v2474
    %2476 = vmatmul.f32.gmra.mxu0 %v125
    %v2477 = vpop.f32.mrf.mxu0
    %v2478 = vadd.f32 %v2365, %v2477
    %2479 = vmatmul.f32.gmra.mxu0 %v128
    %v2480 = vpop.f32.mrf.mxu0
    %v2481 = vadd.f32 %v2368, %v2480
    %2482 = vmatmul.f32.gmra.mxu0 %v131
    %v2483 = vpop.f32.mrf.mxu0
    %v2484 = vadd.f32 %v2371, %v2483
    %2485 = vmatmul.f32.gmra.mxu0 %v134
    %v2486 = vpop.f32.mrf.mxu0
    %v2487 = vadd.f32 %v2374, %v2486
    %2488 = vmatmul.f32.gmra.mxu0 %v137
    %v2489 = vpop.f32.mrf.mxu0
    %v2490 = vadd.f32 %v2377, %v2489
    %2491 = vmatmul.f32.gmra.mxu0 %v140
    %v2492 = vpop.f32.mrf.mxu0
    %v2493 = vadd.f32 %v2380, %v2492
    %2494 = vmatmul.f32.gmra.mxu0 %v143
    %v2495 = vpop.f32.mrf.mxu0
    %v2496 = vadd.f32 %v2383, %v2495
    %2497 = vmatmul.f32.gmra.mxu0 %v146
    %v2498 = vpop.f32.mrf.mxu0
    %v2499 = vadd.f32 %v2386, %v2498
    %2500 = vmatmul.f32.gmra.mxu0 %v149
    %v2501 = vpop.f32.mrf.mxu0
    %v2502 = vadd.f32 %v2389, %v2501
    %2503 = vmatmul.f32.gmra.mxu0 %v152
    %v2504 = vpop.f32.mrf.mxu0
    %v2505 = vadd.f32 %v2392, %v2504
    %2506 = vmatmul.f32.gmra.mxu0 %v155
    %v2507 = vpop.f32.mrf.mxu0
    %v2508 = vadd.f32 %v2395, %v2507
    %2509 = vmatmul.f32.gmra.mxu0 %v158
    %v2510 = vpop.f32.mrf.mxu0
    %v2511 = vadd.f32 %v2398, %v2510
    %2512 = vmatmul.f32.gmra.mxu0 %v161
    %v2513 = vpop.f32.mrf.mxu0
    %v2514 = vadd.f32 %v2401, %v2513
    %2515 = vmatmul.f32.gmra.mxu0 %v164
    %v2516 = vpop.f32.mrf.mxu0
    %v2517 = vadd.f32 %v2404, %v2516
    %2518 = vmatmul.f32.gmra.mxu0 %v167
    %v2519 = vpop.f32.mrf.mxu0
    %v2520 = vadd.f32 %v2407, %v2519
    %2521 = vmatmul.f32.gmra.mxu0 %v170
    %v2522 = vpop.f32.mrf.mxu0
    %v2523 = vadd.f32 %v2410, %v2522
    %2524 = vmatmul.f32.gmra.mxu0 %v173
    %v2525 = vpop.f32.mrf.mxu0
    %v2526 = vadd.f32 %v2413, %v2525
    %2527 = vdwg.mxu0
    %2528 = vmatpush.msra.mxu0 %v603
    %2529 = vmatpush.msra.mxu0 %v594
    %2530 = vmatpush.msra.mxu0 %v585
    %2531 = vmatpush.msra.mxu0 %v576
    %2532 = vmatpush.msra.mxu0 %v567
    %2533 = vmatpush.msra.mxu0 %v558
    %2534 = vmatpush.msra.mxu0 %v549
    %2535 = vmatpush.msra.mxu0 %v540
    %2536 = vmatpush.msra.mxu0 %v531
    %2537 = vmatpush.msra.mxu0 %v522
    %2538 = vmatpush.msra.mxu0 %v513
    %2539 = vmatpush.msra.mxu0 %v504
    %2540 = vmatpush.msra.mxu0 %v495
    %2541 = vmatpush.msra.mxu0 %v486
    %2542 = vmatpush.msra.mxu0 %v477
    %2543 = vmatpush.msra.mxu0 %v468
    %2544 = vmatmul.f32.gmra.mxu0 %v81
    %v2545 = vpop.f32.mrf.mxu0
    %v2546 = vadd.f32 %v2433, %v2545
    %2547 = vmatmul.f32.gmra.mxu0 %v84
    %v2548 = vpop.f32.mrf.mxu0
    %v2549 = vadd.f32 %v2436, %v2548
    %2550 = vmatmul.f32.gmra.mxu0 %v87
    %v2551 = vpop.f32.mrf.mxu0
    %v2552 = vadd.f32 %v2439, %v2551
    %2553 = vmatmul.f32.gmra.mxu0 %v90
    %v2554 = vpop.f32.mrf.mxu0
    %v2555 = vadd.f32 %v2442, %v2554
    %2556 = vmatmul.f32.gmra.mxu0 %v93
    %v2557 = vpop.f32.mrf.mxu0
    %v2558 = vadd.f32 %v2445, %v2557
    %2559 = vmatmul.f32.gmra.mxu0 %v96
    %v2560 = vpop.f32.mrf.mxu0
    %v2561 = vadd.f32 %v2448, %v2560
    %2562 = vmatmul.f32.gmra.mxu0 %v99
    %v2563 = vpop.f32.mrf.mxu0
    %v2564 = vadd.f32 %v2451, %v2563
    %2565 = vmatmul.f32.gmra.mxu0 %v102
    %v2566 = vpop.f32.mrf.mxu0
    %v2567 = vadd.f32 %v2454, %v2566
    %2568 = vmatmul.f32.gmra.mxu0 %v105
    %v2569 = vpop.f32.mrf.mxu0
    %v2570 = vadd.f32 %v2457, %v2569
    %2571 = vmatmul.f32.gmra.mxu0 %v108
    %v2572 = vpop.f32.mrf.mxu0
    %v2573 = vadd.f32 %v2460, %v2572
    %2574 = vmatmul.f32.gmra.mxu0 %v111
    %v2575 = vpop.f32.mrf.mxu0
    %v2576 = vadd.f32 %v2463, %v2575
    %2577 = vmatmul.f32.gmra.mxu0 %v114
    %v2578 = vpop.f32.mrf.mxu0
    %v2579 = vadd.f32 %v2466, %v2578
    %2580 = vmatmul.f32.gmra.mxu0 %v117
    %v2581 = vpop.f32.mrf.mxu0
    %v2582 = vadd.f32 %v2469, %v2581
    %2583 = vmatmul.f32.gmra.mxu0 %v120
    %v2584 = vpop.f32.mrf.mxu0
    %v2585 = vadd.f32 %v2472, %v2584
    %2586 = vmatmul.f32.gmra.mxu0 %v123
    %v2587 = vpop.f32.mrf.mxu0
    %v2588 = vadd.f32 %v2475, %v2587
    %2589 = vmatmul.f32.gmra.mxu0 %v126
    %v2590 = vpop.f32.mrf.mxu0
    %v2591 = vadd.f32 %v2478, %v2590
    %2592 = vmatmul.f32.gmra.mxu0 %v129
    %v2593 = vpop.f32.mrf.mxu0
    %v2594 = vadd.f32 %v2481, %v2593
    %2595 = vmatmul.f32.gmra.mxu0 %v132
    %v2596 = vpop.f32.mrf.mxu0
    %v2597 = vadd.f32 %v2484, %v2596
    %2598 = vmatmul.f32.gmra.mxu0 %v135
    %v2599 = vpop.f32.mrf.mxu0
    %v2600 = vadd.f32 %v2487, %v2599
    %2601 = vmatmul.f32.gmra.mxu0 %v138
    %v2602 = vpop.f32.mrf.mxu0
    %v2603 = vadd.f32 %v2490, %v2602
    %2604 = vmatmul.f32.gmra.mxu0 %v141
    %v2605 = vpop.f32.mrf.mxu0
    %v2606 = vadd.f32 %v2493, %v2605
    %2607 = vmatmul.f32.gmra.mxu0 %v144
    %v2608 = vpop.f32.mrf.mxu0
    %v2609 = vadd.f32 %v2496, %v2608
    %2610 = vmatmul.f32.gmra.mxu0 %v147
    %v2611 = vpop.f32.mrf.mxu0
    %v2612 = vadd.f32 %v2499, %v2611
    %2613 = vmatmul.f32.gmra.mxu0 %v150
    %v2614 = vpop.f32.mrf.mxu0
    %v2615 = vadd.f32 %v2502, %v2614
    %2616 = vmatmul.f32.gmra.mxu0 %v153
    %v2617 = vpop.f32.mrf.mxu0
    %v2618 = vadd.f32 %v2505, %v2617
    %2619 = vmatmul.f32.gmra.mxu0 %v156
    %v2620 = vpop.f32.mrf.mxu0
    %v2621 = vadd.f32 %v2508, %v2620
    %2622 = vmatmul.f32.gmra.mxu0 %v159
    %v2623 = vpop.f32.mrf.mxu0
    %v2624 = vadd.f32 %v2511, %v2623
    %2625 = vmatmul.f32.gmra.mxu0 %v162
    %v2626 = vpop.f32.mrf.mxu0
    %v2627 = vadd.f32 %v2514, %v2626
    %2628 = vmatmul.f32.gmra.mxu0 %v165
    %v2629 = vpop.f32.mrf.mxu0
    %v2630 = vadd.f32 %v2517, %v2629
    %2631 = vmatmul.f32.gmra.mxu0 %v168
    %v2632 = vpop.f32.mrf.mxu0
    %v2633 = vadd.f32 %v2520, %v2632
    %2634 = vmatmul.f32.gmra.mxu0 %v171
    %v2635 = vpop.f32.mrf.mxu0
    %v2636 = vadd.f32 %v2523, %v2635
    %2637 = vmatmul.f32.gmra.mxu0 %v174
    %v2638 = vpop.f32.mrf.mxu0
    %v2639 = vadd.f32 %v2526, %v2638
    %2640 = vdwg.mxu0
    %2641 = vmatpush.msra.mxu0 %v316
    %2642 = vmatpush.msra.mxu0 %v307
    %2643 = vmatpush.msra.mxu0 %v298
    %2644 = vmatpush.msra.mxu0 %v289
    %2645 = vmatpush.msra.mxu0 %v280
    %2646 = vmatpush.msra.mxu0 %v271
    %2647 = vmatpush.msra.mxu0 %v262
    %2648 = vmatpush.msra.mxu0 %v253
    %2649 = vmatpush.msra.mxu0 %v244
    %2650 = vmatpush.msra.mxu0 %v235
    %2651 = vmatpush.msra.mxu0 %v226
    %2652 = vmatpush.msra.mxu0 %v217
    %2653 = vmatpush.msra.mxu0 %v208
    %2654 = vmatpush.msra.mxu0 %v199
    %2655 = vmatpush.msra.mxu0 %v190
    %2656 = vmatpush.msra.mxu0 %v181
    %2657 = vmatmul.f32.gmra.mxu0 %v79
    %v2658 = vpop.f32.mrf.mxu0
    %v2659 = vadd.f32 0.0, %v2658
    %2660 = vmatmul.f32.gmra.mxu0 %v82
    %v2661 = vpop.f32.mrf.mxu0
    %v2662 = vadd.f32 0.0, %v2661
    %2663 = vmatmul.f32.gmra.mxu0 %v85
    %v2664 = vpop.f32.mrf.mxu0
    %v2665 = vadd.f32 0.0, %v2664
    %2666 = vmatmul.f32.gmra.mxu0 %v88
    %v2667 = vpop.f32.mrf.mxu0
    %v2668 = vadd.f32 0.0, %v2667
    %2669 = vmatmul.f32.gmra.mxu0 %v91
    %v2670 = vpop.f32.mrf.mxu0
    %v2671 = vadd.f32 0.0, %v2670
    %2672 = vmatmul.f32.gmra.mxu0 %v94
    %v2673 = vpop.f32.mrf.mxu0
    %v2674 = vadd.f32 0.0, %v2673
    %2675 = vmatmul.f32.gmra.mxu0 %v97
    %v2676 = vpop.f32.mrf.mxu0
    %v2677 = vadd.f32 0.0, %v2676
    %2678 = vmatmul.f32.gmra.mxu0 %v100
    %v2679 = vpop.f32.mrf.mxu0
    %v2680 = vadd.f32 0.0, %v2679
    %2681 = vmatmul.f32.gmra.mxu0 %v103
    %v2682 = vpop.f32.mrf.mxu0
    %v2683 = vadd.f32 0.0, %v2682
    %2684 = vmatmul.f32.gmra.mxu0 %v106
    %v2685 = vpop.f32.mrf.mxu0
    %v2686 = vadd.f32 0.0, %v2685
    %2687 = vmatmul.f32.gmra.mxu0 %v109
    %v2688 = vpop.f32.mrf.mxu0
    %v2689 = vadd.f32 0.0, %v2688
    %2690 = vmatmul.f32.gmra.mxu0 %v112
    %v2691 = vpop.f32.mrf.mxu0
    %v2692 = vadd.f32 0.0, %v2691
    %2693 = vmatmul.f32.gmra.mxu0 %v115
    %v2694 = vpop.f32.mrf.mxu0
    %v2695 = vadd.f32 0.0, %v2694
    %2696 = vmatmul.f32.gmra.mxu0 %v118
    %v2697 = vpop.f32.mrf.mxu0
    %v2698 = vadd.f32 0.0, %v2697
    %2699 = vmatmul.f32.gmra.mxu0 %v121
    %v2700 = vpop.f32.mrf.mxu0
    %v2701 = vadd.f32 0.0, %v2700
    %2702 = vmatmul.f32.gmra.mxu0 %v124
    %v2703 = vpop.f32.mrf.mxu0
    %v2704 = vadd.f32 0.0, %v2703
    %2705 = vmatmul.f32.gmra.mxu0 %v127
    %v2706 = vpop.f32.mrf.mxu0
    %v2707 = vadd.f32 0.0, %v2706
    %2708 = vmatmul.f32.gmra.mxu0 %v130
    %v2709 = vpop.f32.mrf.mxu0
    %v2710 = vadd.f32 0.0, %v2709
    %2711 = vmatmul.f32.gmra.mxu0 %v133
    %v2712 = vpop.f32.mrf.mxu0
    %v2713 = vadd.f32 0.0, %v2712
    %2714 = vmatmul.f32.gmra.mxu0 %v136
    %v2715 = vpop.f32.mrf.mxu0
    %v2716 = vadd.f32 0.0, %v2715
    %2717 = vmatmul.f32.gmra.mxu0 %v139
    %v2718 = vpop.f32.mrf.mxu0
    %v2719 = vadd.f32 0.0, %v2718
    %2720 = vmatmul.f32.gmra.mxu0 %v142
    %v2721 = vpop.f32.mrf.mxu0
    %v2722 = vadd.f32 0.0, %v2721
    %2723 = vmatmul.f32.gmra.mxu0 %v145
    %v2724 = vpop.f32.mrf.mxu0
    %v2725 = vadd.f32 0.0, %v2724
    %2726 = vmatmul.f32.gmra.mxu0 %v148
    %v2727 = vpop.f32.mrf.mxu0
    %v2728 = vadd.f32 0.0, %v2727
    %2729 = vmatmul.f32.gmra.mxu0 %v151
    %v2730 = vpop.f32.mrf.mxu0
    %v2731 = vadd.f32 0.0, %v2730
    %2732 = vmatmul.f32.gmra.mxu0 %v154
    %v2733 = vpop.f32.mrf.mxu0
    %v2734 = vadd.f32 0.0, %v2733
    %2735 = vmatmul.f32.gmra.mxu0 %v157
    %v2736 = vpop.f32.mrf.mxu0
    %v2737 = vadd.f32 0.0, %v2736
    %2738 = vmatmul.f32.gmra.mxu0 %v160
    %v2739 = vpop.f32.mrf.mxu0
    %v2740 = vadd.f32 0.0, %v2739
    %2741 = vmatmul.f32.gmra.mxu0 %v163
    %v2742 = vpop.f32.mrf.mxu0
    %v2743 = vadd.f32 0.0, %v2742
    %2744 = vmatmul.f32.gmra.mxu0 %v166
    %v2745 = vpop.f32.mrf.mxu0
    %v2746 = vadd.f32 0.0, %v2745
    %2747 = vmatmul.f32.gmra.mxu0 %v169
    %v2748 = vpop.f32.mrf.mxu0
    %v2749 = vadd.f32 0.0, %v2748
    %2750 = vmatmul.f32.gmra.mxu0 %v172
    %v2751 = vpop.f32.mrf.mxu0
    %v2752 = vadd.f32 0.0, %v2751
    %2753 = vdwg.mxu0
    %2754 = vmatpush.msra.mxu0 %v460
    %2755 = vmatpush.msra.mxu0 %v451
    %2756 = vmatpush.msra.mxu0 %v442
    %2757 = vmatpush.msra.mxu0 %v433
    %2758 = vmatpush.msra.mxu0 %v424
    %2759 = vmatpush.msra.mxu0 %v415
    %2760 = vmatpush.msra.mxu0 %v406
    %2761 = vmatpush.msra.mxu0 %v397
    %2762 = vmatpush.msra.mxu0 %v388
    %2763 = vmatpush.msra.mxu0 %v379
    %2764 = vmatpush.msra.mxu0 %v370
    %2765 = vmatpush.msra.mxu0 %v361
    %2766 = vmatpush.msra.mxu0 %v352
    %2767 = vmatpush.msra.mxu0 %v343
    %2768 = vmatpush.msra.mxu0 %v334
    %2769 = vmatpush.msra.mxu0 %v325
    %2770 = vmatmul.f32.gmra.mxu0 %v80
    %v2771 = vpop.f32.mrf.mxu0
    %v2772 = vadd.f32 %v2659, %v2771
    %2773 = vmatmul.f32.gmra.mxu0 %v83
    %v2774 = vpop.f32.mrf.mxu0
    %v2775 = vadd.f32 %v2662, %v2774
    %2776 = vmatmul.f32.gmra.mxu0 %v86
    %v2777 = vpop.f32.mrf.mxu0
    %v2778 = vadd.f32 %v2665, %v2777
    %2779 = vmatmul.f32.gmra.mxu0 %v89
    %v2780 = vpop.f32.mrf.mxu0
    %v2781 = vadd.f32 %v2668, %v2780
    %2782 = vmatmul.f32.gmra.mxu0 %v92
    %v2783 = vpop.f32.mrf.mxu0
    %v2784 = vadd.f32 %v2671, %v2783
    %2785 = vmatmul.f32.gmra.mxu0 %v95
    %v2786 = vpop.f32.mrf.mxu0
    %v2787 = vadd.f32 %v2674, %v2786
    %2788 = vmatmul.f32.gmra.mxu0 %v98
    %v2789 = vpop.f32.mrf.mxu0
    %v2790 = vadd.f32 %v2677, %v2789
    %2791 = vmatmul.f32.gmra.mxu0 %v101
    %v2792 = vpop.f32.mrf.mxu0
    %v2793 = vadd.f32 %v2680, %v2792
    %2794 = vmatmul.f32.gmra.mxu0 %v104
    %v2795 = vpop.f32.mrf.mxu0
    %v2796 = vadd.f32 %v2683, %v2795
    %2797 = vmatmul.f32.gmra.mxu0 %v107
    %v2798 = vpop.f32.mrf.mxu0
    %v2799 = vadd.f32 %v2686, %v2798
    %2800 = vmatmul.f32.gmra.mxu0 %v110
    %v2801 = vpop.f32.mrf.mxu0
    %v2802 = vadd.f32 %v2689, %v2801
    %2803 = vmatmul.f32.gmra.mxu0 %v113
    %v2804 = vpop.f32.mrf.mxu0
    %v2805 = vadd.f32 %v2692, %v2804
    %2806 = vmatmul.f32.gmra.mxu0 %v116
    %v2807 = vpop.f32.mrf.mxu0
    %v2808 = vadd.f32 %v2695, %v2807
    %2809 = vmatmul.f32.gmra.mxu0 %v119
    %v2810 = vpop.f32.mrf.mxu0
    %v2811 = vadd.f32 %v2698, %v2810
    %2812 = vmatmul.f32.gmra.mxu0 %v122
    %v2813 = vpop.f32.mrf.mxu0
    %v2814 = vadd.f32 %v2701, %v2813
    %2815 = vmatmul.f32.gmra.mxu0 %v125
    %v2816 = vpop.f32.mrf.mxu0
    %v2817 = vadd.f32 %v2704, %v2816
    %2818 = vmatmul.f32.gmra.mxu0 %v128
    %v2819 = vpop.f32.mrf.mxu0
    %v2820 = vadd.f32 %v2707, %v2819
    %2821 = vmatmul.f32.gmra.mxu0 %v131
    %v2822 = vpop.f32.mrf.mxu0
    %v2823 = vadd.f32 %v2710, %v2822
    %2824 = vmatmul.f32.gmra.mxu0 %v134
    %v2825 = vpop.f32.mrf.mxu0
    %v2826 = vadd.f32 %v2713, %v2825
    %2827 = vmatmul.f32.gmra.mxu0 %v137
    %v2828 = vpop.f32.mrf.mxu0
    %v2829 = vadd.f32 %v2716, %v2828
    %2830 = vmatmul.f32.gmra.mxu0 %v140
    %v2831 = vpop.f32.mrf.mxu0
    %v2832 = vadd.f32 %v2719, %v2831
    %2833 = vmatmul.f32.gmra.mxu0 %v143
    %v2834 = vpop.f32.mrf.mxu0
    %v2835 = vadd.f32 %v2722, %v2834
    %2836 = vmatmul.f32.gmra.mxu0 %v146
    %v2837 = vpop.f32.mrf.mxu0
    %v2838 = vadd.f32 %v2725, %v2837
    %2839 = vmatmul.f32.gmra.mxu0 %v149
    %v2840 = vpop.f32.mrf.mxu0
    %v2841 = vadd.f32 %v2728, %v2840
    %2842 = vmatmul.f32.gmra.mxu0 %v152
    %v2843 = vpop.f32.mrf.mxu0
    %v2844 = vadd.f32 %v2731, %v2843
    %2845 = vmatmul.f32.gmra.mxu0 %v155
    %v2846 = vpop.f32.mrf.mxu0
    %v2847 = vadd.f32 %v2734, %v2846
    %2848 = vmatmul.f32.gmra.mxu0 %v158
    %v2849 = vpop.f32.mrf.mxu0
    %v2850 = vadd.f32 %v2737, %v2849
    %2851 = vmatmul.f32.gmra.mxu0 %v161
    %v2852 = vpop.f32.mrf.mxu0
    %v2853 = vadd.f32 %v2740, %v2852
    %2854 = vmatmul.f32.gmra.mxu0 %v164
    %v2855 = vpop.f32.mrf.mxu0
    %v2856 = vadd.f32 %v2743, %v2855
    %2857 = vmatmul.f32.gmra.mxu0 %v167
    %v2858 = vpop.f32.mrf.mxu0
    %v2859 = vadd.f32 %v2746, %v2858
    %2860 = vmatmul.f32.gmra.mxu0 %v170
    %v2861 = vpop.f32.mrf.mxu0
    %v2862 = vadd.f32 %v2749, %v2861
    %2863 = vmatmul.f32.gmra.mxu0 %v173
    %v2864 = vpop.f32.mrf.mxu0
    %v2865 = vadd.f32 %v2752, %v2864
    %2866 = vdwg.mxu0
    %2867 = vmatpush.msra.mxu0 %v604
    %2868 = vmatpush.msra.mxu0 %v595
    %2869 = vmatpush.msra.mxu0 %v586
    %2870 = vmatpush.msra.mxu0 %v577
    %2871 = vmatpush.msra.mxu0 %v568
    %2872 = vmatpush.msra.mxu0 %v559
    %2873 = vmatpush.msra.mxu0 %v550
    %2874 = vmatpush.msra.mxu0 %v541
    %2875 = vmatpush.msra.mxu0 %v532
    %2876 = vmatpush.msra.mxu0 %v523
    %2877 = vmatpush.msra.mxu0 %v514
    %2878 = vmatpush.msra.mxu0 %v505
    %2879 = vmatpush.msra.mxu0 %v496
    %2880 = vmatpush.msra.mxu0 %v487
    %2881 = vmatpush.msra.mxu0 %v478
    %2882 = vmatpush.msra.mxu0 %v469
    %2883 = vmatmul.f32.gmra.mxu0 %v81
    %v2884 = vpop.f32.mrf.mxu0
    %v2885 = vadd.f32 %v2772, %v2884
    %2886 = vmatmul.f32.gmra.mxu0 %v84
    %v2887 = vpop.f32.mrf.mxu0
    %v2888 = vadd.f32 %v2775, %v2887
    %2889 = vmatmul.f32.gmra.mxu0 %v87
    %v2890 = vpop.f32.mrf.mxu0
    %v2891 = vadd.f32 %v2778, %v2890
    %2892 = vmatmul.f32.gmra.mxu0 %v90
    %v2893 = vpop.f32.mrf.mxu0
    %v2894 = vadd.f32 %v2781, %v2893
    %2895 = vmatmul.f32.gmra.mxu0 %v93
    %v2896 = vpop.f32.mrf.mxu0
    %v2897 = vadd.f32 %v2784, %v2896
    %2898 = vmatmul.f32.gmra.mxu0 %v96
    %v2899 = vpop.f32.mrf.mxu0
    %v2900 = vadd.f32 %v2787, %v2899
    %2901 = vmatmul.f32.gmra.mxu0 %v99
    %v2902 = vpop.f32.mrf.mxu0
    %v2903 = vadd.f32 %v2790, %v2902
    %2904 = vmatmul.f32.gmra.mxu0 %v102
    %v2905 = vpop.f32.mrf.mxu0
    %v2906 = vadd.f32 %v2793, %v2905
    %2907 = vmatmul.f32.gmra.mxu0 %v105
    %v2908 = vpop.f32.mrf.mxu0
    %v2909 = vadd.f32 %v2796, %v2908
    %2910 = vmatmul.f32.gmra.mxu0 %v108
    %v2911 = vpop.f32.mrf.mxu0
    %v2912 = vadd.f32 %v2799, %v2911
    %2913 = vmatmul.f32.gmra.mxu0 %v111
    %v2914 = vpop.f32.mrf.mxu0
    %v2915 = vadd.f32 %v2802, %v2914
    %2916 = vmatmul.f32.gmra.mxu0 %v114
    %v2917 = vpop.f32.mrf.mxu0
    %v2918 = vadd.f32 %v2805, %v2917
    %2919 = vmatmul.f32.gmra.mxu0 %v117
    %v2920 = vpop.f32.mrf.mxu0
    %v2921 = vadd.f32 %v2808, %v2920
    %2922 = vmatmul.f32.gmra.mxu0 %v120
    %v2923 = vpop.f32.mrf.mxu0
    %v2924 = vadd.f32 %v2811, %v2923
    %2925 = vmatmul.f32.gmra.mxu0 %v123
    %v2926 = vpop.f32.mrf.mxu0
    %v2927 = vadd.f32 %v2814, %v2926
    %2928 = vmatmul.f32.gmra.mxu0 %v126
    %v2929 = vpop.f32.mrf.mxu0
    %v2930 = vadd.f32 %v2817, %v2929
    %2931 = vmatmul.f32.gmra.mxu0 %v129
    %v2932 = vpop.f32.mrf.mxu0
    %v2933 = vadd.f32 %v2820, %v2932
    %2934 = vmatmul.f32.gmra.mxu0 %v132
    %v2935 = vpop.f32.mrf.mxu0
    %v2936 = vadd.f32 %v2823, %v2935
    %2937 = vmatmul.f32.gmra.mxu0 %v135
    %v2938 = vpop.f32.mrf.mxu0
    %v2939 = vadd.f32 %v2826, %v2938
    %2940 = vmatmul.f32.gmra.mxu0 %v138
    %v2941 = vpop.f32.mrf.mxu0
    %v2942 = vadd.f32 %v2829, %v2941
    %2943 = vmatmul.f32.gmra.mxu0 %v141
    %v2944 = vpop.f32.mrf.mxu0
    %v2945 = vadd.f32 %v2832, %v2944
    %2946 = vmatmul.f32.gmra.mxu0 %v144
    %v2947 = vpop.f32.mrf.mxu0
    %v2948 = vadd.f32 %v2835, %v2947
    %2949 = vmatmul.f32.gmra.mxu0 %v147
    %v2950 = vpop.f32.mrf.mxu0
    %v2951 = vadd.f32 %v2838, %v2950
    %2952 = vmatmul.f32.gmra.mxu0 %v150
    %v2953 = vpop.f32.mrf.mxu0
    %v2954 = vadd.f32 %v2841, %v2953
    %2955 = vmatmul.f32.gmra.mxu0 %v153
    %v2956 = vpop.f32.mrf.mxu0
    %v2957 = vadd.f32 %v2844, %v2956
    %2958 = vmatmul.f32.gmra.mxu0 %v156
    %v2959 = vpop.f32.mrf.mxu0
    %v2960 = vadd.f32 %v2847, %v2959
    %2961 = vmatmul.f32.gmra.mxu0 %v159
    %v2962 = vpop.f32.mrf.mxu0
    %v2963 = vadd.f32 %v2850, %v2962
    %2964 = vmatmul.f32.gmra.mxu0 %v162
    %v2965 = vpop.f32.mrf.mxu0
    %v2966 = vadd.f32 %v2853, %v2965
    %2967 = vmatmul.f32.gmra.mxu0 %v165
    %v2968 = vpop.f32.mrf.mxu0
    %v2969 = vadd.f32 %v2856, %v2968
    %2970 = vmatmul.f32.gmra.mxu0 %v168
    %v2971 = vpop.f32.mrf.mxu0
    %v2972 = vadd.f32 %v2859, %v2971
    %2973 = vmatmul.f32.gmra.mxu0 %v171
    %v2974 = vpop.f32.mrf.mxu0
    %v2975 = vadd.f32 %v2862, %v2974
    %2976 = vmatmul.f32.gmra.mxu0 %v174
    %v2977 = vpop.f32.mrf.mxu0
    %v2978 = vadd.f32 %v2865, %v2977
    %2979 = vdwg.mxu0
    %2980 = vmatpush.msra.mxu0 %v317
    %2981 = vmatpush.msra.mxu0 %v308
    %2982 = vmatpush.msra.mxu0 %v299
    %2983 = vmatpush.msra.mxu0 %v290
    %2984 = vmatpush.msra.mxu0 %v281
    %2985 = vmatpush.msra.mxu0 %v272
    %2986 = vmatpush.msra.mxu0 %v263
    %2987 = vmatpush.msra.mxu0 %v254
    %2988 = vmatpush.msra.mxu0 %v245
    %2989 = vmatpush.msra.mxu0 %v236
    %2990 = vmatpush.msra.mxu0 %v227
    %2991 = vmatpush.msra.mxu0 %v218
    %2992 = vmatpush.msra.mxu0 %v209
    %2993 = vmatpush.msra.mxu0 %v200
    %2994 = vmatpush.msra.mxu0 %v191
    %2995 = vmatpush.msra.mxu0 %v182
    %2996 = vmatmul.f32.gmra.mxu0 %v79
    %v2997 = vpop.f32.mrf.mxu0
    %v2998 = vadd.f32 0.0, %v2997
    %2999 = vmatmul.f32.gmra.mxu0 %v82
    %v3000 = vpop.f32.mrf.mxu0
    %v3001 = vadd.f32 0.0, %v3000
    %3002 = vmatmul.f32.gmra.mxu0 %v85
    %v3003 = vpop.f32.mrf.mxu0
    %v3004 = vadd.f32 0.0, %v3003
    %3005 = vmatmul.f32.gmra.mxu0 %v88
    %v3006 = vpop.f32.mrf.mxu0
    %v3007 = vadd.f32 0.0, %v3006
    %3008 = vmatmul.f32.gmra.mxu0 %v91
    %v3009 = vpop.f32.mrf.mxu0
    %v3010 = vadd.f32 0.0, %v3009
    %3011 = vmatmul.f32.gmra.mxu0 %v94
    %v3012 = vpop.f32.mrf.mxu0
    %v3013 = vadd.f32 0.0, %v3012
    %3014 = vmatmul.f32.gmra.mxu0 %v97
    %v3015 = vpop.f32.mrf.mxu0
    %v3016 = vadd.f32 0.0, %v3015
    %3017 = vmatmul.f32.gmra.mxu0 %v100
    %v3018 = vpop.f32.mrf.mxu0
    %v3019 = vadd.f32 0.0, %v3018
    %3020 = vmatmul.f32.gmra.mxu0 %v103
    %v3021 = vpop.f32.mrf.mxu0
    %v3022 = vadd.f32 0.0, %v3021
    %3023 = vmatmul.f32.gmra.mxu0 %v106
    %v3024 = vpop.f32.mrf.mxu0
    %v3025 = vadd.f32 0.0, %v3024
    %3026 = vmatmul.f32.gmra.mxu0 %v109
    %v3027 = vpop.f32.mrf.mxu0
    %v3028 = vadd.f32 0.0, %v3027
    %3029 = vmatmul.f32.gmra.mxu0 %v112
    %v3030 = vpop.f32.mrf.mxu0
    %v3031 = vadd.f32 0.0, %v3030
    %3032 = vmatmul.f32.gmra.mxu0 %v115
    %v3033 = vpop.f32.mrf.mxu0
    %v3034 = vadd.f32 0.0, %v3033
    %3035 = vmatmul.f32.gmra.mxu0 %v118
    %v3036 = vpop.f32.mrf.mxu0
    %v3037 = vadd.f32 0.0, %v3036
    %3038 = vmatmul.f32.gmra.mxu0 %v121
    %v3039 = vpop.f32.mrf.mxu0
    %v3040 = vadd.f32 0.0, %v3039
    %3041 = vmatmul.f32.gmra.mxu0 %v124
    %v3042 = vpop.f32.mrf.mxu0
    %v3043 = vadd.f32 0.0, %v3042
    %3044 = vmatmul.f32.gmra.mxu0 %v127
    %v3045 = vpop.f32.mrf.mxu0
    %v3046 = vadd.f32 0.0, %v3045
    %3047 = vmatmul.f32.gmra.mxu0 %v130
    %v3048 = vpop.f32.mrf.mxu0
    %v3049 = vadd.f32 0.0, %v3048
    %3050 = vmatmul.f32.gmra.mxu0 %v133
    %v3051 = vpop.f32.mrf.mxu0
    %v3052 = vadd.f32 0.0, %v3051
    %3053 = vmatmul.f32.gmra.mxu0 %v136
    %v3054 = vpop.f32.mrf.mxu0
    %v3055 = vadd.f32 0.0, %v3054
    %3056 = vmatmul.f32.gmra.mxu0 %v139
    %v3057 = vpop.f32.mrf.mxu0
    %v3058 = vadd.f32 0.0, %v3057
    %3059 = vmatmul.f32.gmra.mxu0 %v142
    %v3060 = vpop.f32.mrf.mxu0
    %v3061 = vadd.f32 0.0, %v3060
    %3062 = vmatmul.f32.gmra.mxu0 %v145
    %v3063 = vpop.f32.mrf.mxu0
    %v3064 = vadd.f32 0.0, %v3063
    %3065 = vmatmul.f32.gmra.mxu0 %v148
    %v3066 = vpop.f32.mrf.mxu0
    %v3067 = vadd.f32 0.0, %v3066
    %3068 = vmatmul.f32.gmra.mxu0 %v151
    %v3069 = vpop.f32.mrf.mxu0
    %v3070 = vadd.f32 0.0, %v3069
    %3071 = vmatmul.f32.gmra.mxu0 %v154
    %v3072 = vpop.f32.mrf.mxu0
    %v3073 = vadd.f32 0.0, %v3072
    %3074 = vmatmul.f32.gmra.mxu0 %v157
    %v3075 = vpop.f32.mrf.mxu0
    %v3076 = vadd.f32 0.0, %v3075
    %3077 = vmatmul.f32.gmra.mxu0 %v160
    %v3078 = vpop.f32.mrf.mxu0
    %v3079 = vadd.f32 0.0, %v3078
    %3080 = vmatmul.f32.gmra.mxu0 %v163
    %v3081 = vpop.f32.mrf.mxu0
    %v3082 = vadd.f32 0.0, %v3081
    %3083 = vmatmul.f32.gmra.mxu0 %v166
    %v3084 = vpop.f32.mrf.mxu0
    %v3085 = vadd.f32 0.0, %v3084
    %3086 = vmatmul.f32.gmra.mxu0 %v169
    %v3087 = vpop.f32.mrf.mxu0
    %v3088 = vadd.f32 0.0, %v3087
    %3089 = vmatmul.f32.gmra.mxu0 %v172
    %v3090 = vpop.f32.mrf.mxu0
    %v3091 = vadd.f32 0.0, %v3090
    %3092 = vdwg.mxu0
    %3093 = vmatpush.msra.mxu0 %v461
    %3094 = vmatpush.msra.mxu0 %v452
    %3095 = vmatpush.msra.mxu0 %v443
    %3096 = vmatpush.msra.mxu0 %v434
    %3097 = vmatpush.msra.mxu0 %v425
    %3098 = vmatpush.msra.mxu0 %v416
    %3099 = vmatpush.msra.mxu0 %v407
    %3100 = vmatpush.msra.mxu0 %v398
    %3101 = vmatpush.msra.mxu0 %v389
    %3102 = vmatpush.msra.mxu0 %v380
    %3103 = vmatpush.msra.mxu0 %v371
    %3104 = vmatpush.msra.mxu0 %v362
    %3105 = vmatpush.msra.mxu0 %v353
    %3106 = vmatpush.msra.mxu0 %v344
    %3107 = vmatpush.msra.mxu0 %v335
    %3108 = vmatpush.msra.mxu0 %v326
    %3109 = vmatmul.f32.gmra.mxu0 %v80
    %v3110 = vpop.f32.mrf.mxu0
    %v3111 = vadd.f32 %v2998, %v3110
    %3112 = vmatmul.f32.gmra.mxu0 %v83
    %v3113 = vpop.f32.mrf.mxu0
    %v3114 = vadd.f32 %v3001, %v3113
    %3115 = vmatmul.f32.gmra.mxu0 %v86
    %v3116 = vpop.f32.mrf.mxu0
    %v3117 = vadd.f32 %v3004, %v3116
    %3118 = vmatmul.f32.gmra.mxu0 %v89
    %v3119 = vpop.f32.mrf.mxu0
    %v3120 = vadd.f32 %v3007, %v3119
    %3121 = vmatmul.f32.gmra.mxu0 %v92
    %v3122 = vpop.f32.mrf.mxu0
    %v3123 = vadd.f32 %v3010, %v3122
    %3124 = vmatmul.f32.gmra.mxu0 %v95
    %v3125 = vpop.f32.mrf.mxu0
    %v3126 = vadd.f32 %v3013, %v3125
    %3127 = vmatmul.f32.gmra.mxu0 %v98
    %v3128 = vpop.f32.mrf.mxu0
    %v3129 = vadd.f32 %v3016, %v3128
    %3130 = vmatmul.f32.gmra.mxu0 %v101
    %v3131 = vpop.f32.mrf.mxu0
    %v3132 = vadd.f32 %v3019, %v3131
    %3133 = vmatmul.f32.gmra.mxu0 %v104
    %v3134 = vpop.f32.mrf.mxu0
    %v3135 = vadd.f32 %v3022, %v3134
    %3136 = vmatmul.f32.gmra.mxu0 %v107
    %v3137 = vpop.f32.mrf.mxu0
    %v3138 = vadd.f32 %v3025, %v3137
    %3139 = vmatmul.f32.gmra.mxu0 %v110
    %v3140 = vpop.f32.mrf.mxu0
    %v3141 = vadd.f32 %v3028, %v3140
    %3142 = vmatmul.f32.gmra.mxu0 %v113
    %v3143 = vpop.f32.mrf.mxu0
    %v3144 = vadd.f32 %v3031, %v3143
    %3145 = vmatmul.f32.gmra.mxu0 %v116
    %v3146 = vpop.f32.mrf.mxu0
    %v3147 = vadd.f32 %v3034, %v3146
    %3148 = vmatmul.f32.gmra.mxu0 %v119
    %v3149 = vpop.f32.mrf.mxu0
    %v3150 = vadd.f32 %v3037, %v3149
    %3151 = vmatmul.f32.gmra.mxu0 %v122
    %v3152 = vpop.f32.mrf.mxu0
    %v3153 = vadd.f32 %v3040, %v3152
    %3154 = vmatmul.f32.gmra.mxu0 %v125
    %v3155 = vpop.f32.mrf.mxu0
    %v3156 = vadd.f32 %v3043, %v3155
    %3157 = vmatmul.f32.gmra.mxu0 %v128
    %v3158 = vpop.f32.mrf.mxu0
    %v3159 = vadd.f32 %v3046, %v3158
    %3160 = vmatmul.f32.gmra.mxu0 %v131
    %v3161 = vpop.f32.mrf.mxu0
    %v3162 = vadd.f32 %v3049, %v3161
    %3163 = vmatmul.f32.gmra.mxu0 %v134
    %v3164 = vpop.f32.mrf.mxu0
    %v3165 = vadd.f32 %v3052, %v3164
    %3166 = vmatmul.f32.gmra.mxu0 %v137
    %v3167 = vpop.f32.mrf.mxu0
    %v3168 = vadd.f32 %v3055, %v3167
    %3169 = vmatmul.f32.gmra.mxu0 %v140
    %v3170 = vpop.f32.mrf.mxu0
    %v3171 = vadd.f32 %v3058, %v3170
    %3172 = vmatmul.f32.gmra.mxu0 %v143
    %v3173 = vpop.f32.mrf.mxu0
    %v3174 = vadd.f32 %v3061, %v3173
    %3175 = vmatmul.f32.gmra.mxu0 %v146
    %v3176 = vpop.f32.mrf.mxu0
    %v3177 = vadd.f32 %v3064, %v3176
    %3178 = vmatmul.f32.gmra.mxu0 %v149
    %v3179 = vpop.f32.mrf.mxu0
    %v3180 = vadd.f32 %v3067, %v3179
    %3181 = vmatmul.f32.gmra.mxu0 %v152
    %v3182 = vpop.f32.mrf.mxu0
    %v3183 = vadd.f32 %v3070, %v3182
    %3184 = vmatmul.f32.gmra.mxu0 %v155
    %v3185 = vpop.f32.mrf.mxu0
    %v3186 = vadd.f32 %v3073, %v3185
    %3187 = vmatmul.f32.gmra.mxu0 %v158
    %v3188 = vpop.f32.mrf.mxu0
    %v3189 = vadd.f32 %v3076, %v3188
    %3190 = vmatmul.f32.gmra.mxu0 %v161
    %v3191 = vpop.f32.mrf.mxu0
    %v3192 = vadd.f32 %v3079, %v3191
    %3193 = vmatmul.f32.gmra.mxu0 %v164
    %v3194 = vpop.f32.mrf.mxu0
    %v3195 = vadd.f32 %v3082, %v3194
    %3196 = vmatmul.f32.gmra.mxu0 %v167
    %v3197 = vpop.f32.mrf.mxu0
    %v3198 = vadd.f32 %v3085, %v3197
    %3199 = vmatmul.f32.gmra.mxu0 %v170
    %v3200 = vpop.f32.mrf.mxu0
    %v3201 = vadd.f32 %v3088, %v3200
    %3202 = vmatmul.f32.gmra.mxu0 %v173
    %v3203 = vpop.f32.mrf.mxu0
    %v3204 = vadd.f32 %v3091, %v3203
    %3205 = vdwg.mxu0
    %3206 = vmatpush.msra.mxu0 %v605
    %3207 = vmatpush.msra.mxu0 %v596
    %3208 = vmatpush.msra.mxu0 %v587
    %3209 = vmatpush.msra.mxu0 %v578
    %3210 = vmatpush.msra.mxu0 %v569
    %3211 = vmatpush.msra.mxu0 %v560
    %3212 = vmatpush.msra.mxu0 %v551
    %3213 = vmatpush.msra.mxu0 %v542
    %3214 = vmatpush.msra.mxu0 %v533
    %3215 = vmatpush.msra.mxu0 %v524
    %3216 = vmatpush.msra.mxu0 %v515
    %3217 = vmatpush.msra.mxu0 %v506
    %3218 = vmatpush.msra.mxu0 %v497
    %3219 = vmatpush.msra.mxu0 %v488
    %3220 = vmatpush.msra.mxu0 %v479
    %3221 = vmatpush.msra.mxu0 %v470
    %3222 = vmatmul.f32.gmra.mxu0 %v81
    %v3223 = vpop.f32.mrf.mxu0
    %v3224 = vadd.f32 %v3111, %v3223
    %3225 = vmatmul.f32.gmra.mxu0 %v84
    %v3226 = vpop.f32.mrf.mxu0
    %v3227 = vadd.f32 %v3114, %v3226
    %3228 = vmatmul.f32.gmra.mxu0 %v87
    %v3229 = vpop.f32.mrf.mxu0
    %v3230 = vadd.f32 %v3117, %v3229
    %3231 = vmatmul.f32.gmra.mxu0 %v90
    %v3232 = vpop.f32.mrf.mxu0
    %v3233 = vadd.f32 %v3120, %v3232
    %3234 = vmatmul.f32.gmra.mxu0 %v93
    %v3235 = vpop.f32.mrf.mxu0
    %v3236 = vadd.f32 %v3123, %v3235
    %3237 = vmatmul.f32.gmra.mxu0 %v96
    %v3238 = vpop.f32.mrf.mxu0
    %v3239 = vadd.f32 %v3126, %v3238
    %3240 = vmatmul.f32.gmra.mxu0 %v99
    %v3241 = vpop.f32.mrf.mxu0
    %v3242 = vadd.f32 %v3129, %v3241
    %3243 = vmatmul.f32.gmra.mxu0 %v102
    %v3244 = vpop.f32.mrf.mxu0
    %v3245 = vadd.f32 %v3132, %v3244
    %3246 = vmatmul.f32.gmra.mxu0 %v105
    %v3247 = vpop.f32.mrf.mxu0
    %v3248 = vadd.f32 %v3135, %v3247
    %3249 = vmatmul.f32.gmra.mxu0 %v108
    %v3250 = vpop.f32.mrf.mxu0
    %v3251 = vadd.f32 %v3138, %v3250
    %3252 = vmatmul.f32.gmra.mxu0 %v111
    %v3253 = vpop.f32.mrf.mxu0
    %v3254 = vadd.f32 %v3141, %v3253
    %3255 = vmatmul.f32.gmra.mxu0 %v114
    %v3256 = vpop.f32.mrf.mxu0
    %v3257 = vadd.f32 %v3144, %v3256
    %3258 = vmatmul.f32.gmra.mxu0 %v117
    %v3259 = vpop.f32.mrf.mxu0
    %v3260 = vadd.f32 %v3147, %v3259
    %3261 = vmatmul.f32.gmra.mxu0 %v120
    %v3262 = vpop.f32.mrf.mxu0
    %v3263 = vadd.f32 %v3150, %v3262
    %3264 = vmatmul.f32.gmra.mxu0 %v123
    %v3265 = vpop.f32.mrf.mxu0
    %v3266 = vadd.f32 %v3153, %v3265
    %3267 = vmatmul.f32.gmra.mxu0 %v126
    %v3268 = vpop.f32.mrf.mxu0
    %v3269 = vadd.f32 %v3156, %v3268
    %3270 = vmatmul.f32.gmra.mxu0 %v129
    %v3271 = vpop.f32.mrf.mxu0
    %v3272 = vadd.f32 %v3159, %v3271
    %3273 = vmatmul.f32.gmra.mxu0 %v132
    %v3274 = vpop.f32.mrf.mxu0
    %v3275 = vadd.f32 %v3162, %v3274
    %3276 = vmatmul.f32.gmra.mxu0 %v135
    %v3277 = vpop.f32.mrf.mxu0
    %v3278 = vadd.f32 %v3165, %v3277
    %3279 = vmatmul.f32.gmra.mxu0 %v138
    %v3280 = vpop.f32.mrf.mxu0
    %v3281 = vadd.f32 %v3168, %v3280
    %3282 = vmatmul.f32.gmra.mxu0 %v141
    %v3283 = vpop.f32.mrf.mxu0
    %v3284 = vadd.f32 %v3171, %v3283
    %3285 = vmatmul.f32.gmra.mxu0 %v144
    %v3286 = vpop.f32.mrf.mxu0
    %v3287 = vadd.f32 %v3174, %v3286
    %3288 = vmatmul.f32.gmra.mxu0 %v147
    %v3289 = vpop.f32.mrf.mxu0
    %v3290 = vadd.f32 %v3177, %v3289
    %3291 = vmatmul.f32.gmra.mxu0 %v150
    %v3292 = vpop.f32.mrf.mxu0
    %v3293 = vadd.f32 %v3180, %v3292
    %3294 = vmatmul.f32.gmra.mxu0 %v153
    %v3295 = vpop.f32.mrf.mxu0
    %v3296 = vadd.f32 %v3183, %v3295
    %3297 = vmatmul.f32.gmra.mxu0 %v156
    %v3298 = vpop.f32.mrf.mxu0
    %v3299 = vadd.f32 %v3186, %v3298
    %3300 = vmatmul.f32.gmra.mxu0 %v159
    %v3301 = vpop.f32.mrf.mxu0
    %v3302 = vadd.f32 %v3189, %v3301
    %3303 = vmatmul.f32.gmra.mxu0 %v162
    %v3304 = vpop.f32.mrf.mxu0
    %v3305 = vadd.f32 %v3192, %v3304
    %3306 = vmatmul.f32.gmra.mxu0 %v165
    %v3307 = vpop.f32.mrf.mxu0
    %v3308 = vadd.f32 %v3195, %v3307
    %3309 = vmatmul.f32.gmra.mxu0 %v168
    %v3310 = vpop.f32.mrf.mxu0
    %v3311 = vadd.f32 %v3198, %v3310
    %3312 = vmatmul.f32.gmra.mxu0 %v171
    %v3313 = vpop.f32.mrf.mxu0
    %v3314 = vadd.f32 %v3201, %v3313
    %3315 = vmatmul.f32.gmra.mxu0 %v174
    %v3316 = vpop.f32.mrf.mxu0
    %v3317 = vadd.f32 %v3204, %v3316
    %3318 = vdwg.mxu0
    %3319 = vmatpush.msra.mxu0 %v318
    %3320 = vmatpush.msra.mxu0 %v309
    %3321 = vmatpush.msra.mxu0 %v300
    %3322 = vmatpush.msra.mxu0 %v291
    %3323 = vmatpush.msra.mxu0 %v282
    %3324 = vmatpush.msra.mxu0 %v273
    %3325 = vmatpush.msra.mxu0 %v264
    %3326 = vmatpush.msra.mxu0 %v255
    %3327 = vmatpush.msra.mxu0 %v246
    %3328 = vmatpush.msra.mxu0 %v237
    %3329 = vmatpush.msra.mxu0 %v228
    %3330 = vmatpush.msra.mxu0 %v219
    %3331 = vmatpush.msra.mxu0 %v210
    %3332 = vmatpush.msra.mxu0 %v201
    %3333 = vmatpush.msra.mxu0 %v192
    %3334 = vmatpush.msra.mxu0 %v183
    %3335 = vmatmul.f32.gmra.mxu0 %v79
    %v3336 = vpop.f32.mrf.mxu0
    %v3337 = vadd.f32 0.0, %v3336
    %3338 = vmatmul.f32.gmra.mxu0 %v82
    %v3339 = vpop.f32.mrf.mxu0
    %v3340 = vadd.f32 0.0, %v3339
    %3341 = vmatmul.f32.gmra.mxu0 %v85
    %v3342 = vpop.f32.mrf.mxu0
    %v3343 = vadd.f32 0.0, %v3342
    %3344 = vmatmul.f32.gmra.mxu0 %v88
    %v3345 = vpop.f32.mrf.mxu0
    %v3346 = vadd.f32 0.0, %v3345
    %3347 = vmatmul.f32.gmra.mxu0 %v91
    %v3348 = vpop.f32.mrf.mxu0
    %v3349 = vadd.f32 0.0, %v3348
    %3350 = vmatmul.f32.gmra.mxu0 %v94
    %v3351 = vpop.f32.mrf.mxu0
    %v3352 = vadd.f32 0.0, %v3351
    %3353 = vmatmul.f32.gmra.mxu0 %v97
    %v3354 = vpop.f32.mrf.mxu0
    %v3355 = vadd.f32 0.0, %v3354
    %3356 = vmatmul.f32.gmra.mxu0 %v100
    %v3357 = vpop.f32.mrf.mxu0
    %v3358 = vadd.f32 0.0, %v3357
    %3359 = vmatmul.f32.gmra.mxu0 %v103
    %v3360 = vpop.f32.mrf.mxu0
    %v3361 = vadd.f32 0.0, %v3360
    %3362 = vmatmul.f32.gmra.mxu0 %v106
    %v3363 = vpop.f32.mrf.mxu0
    %v3364 = vadd.f32 0.0, %v3363
    %3365 = vmatmul.f32.gmra.mxu0 %v109
    %v3366 = vpop.f32.mrf.mxu0
    %v3367 = vadd.f32 0.0, %v3366
    %3368 = vmatmul.f32.gmra.mxu0 %v112
    %v3369 = vpop.f32.mrf.mxu0
    %v3370 = vadd.f32 0.0, %v3369
    %3371 = vmatmul.f32.gmra.mxu0 %v115
    %v3372 = vpop.f32.mrf.mxu0
    %v3373 = vadd.f32 0.0, %v3372
    %3374 = vmatmul.f32.gmra.mxu0 %v118
    %v3375 = vpop.f32.mrf.mxu0
    %v3376 = vadd.f32 0.0, %v3375
    %3377 = vmatmul.f32.gmra.mxu0 %v121
    %v3378 = vpop.f32.mrf.mxu0
    %v3379 = vadd.f32 0.0, %v3378
    %3380 = vmatmul.f32.gmra.mxu0 %v124
    %v3381 = vpop.f32.mrf.mxu0
    %v3382 = vadd.f32 0.0, %v3381
    %3383 = vmatmul.f32.gmra.mxu0 %v127
    %v3384 = vpop.f32.mrf.mxu0
    %v3385 = vadd.f32 0.0, %v3384
    %3386 = vmatmul.f32.gmra.mxu0 %v130
    %v3387 = vpop.f32.mrf.mxu0
    %v3388 = vadd.f32 0.0, %v3387
    %3389 = vmatmul.f32.gmra.mxu0 %v133
    %v3390 = vpop.f32.mrf.mxu0
    %v3391 = vadd.f32 0.0, %v3390
    %3392 = vmatmul.f32.gmra.mxu0 %v136
    %v3393 = vpop.f32.mrf.mxu0
    %v3394 = vadd.f32 0.0, %v3393
    %3395 = vmatmul.f32.gmra.mxu0 %v139
    %v3396 = vpop.f32.mrf.mxu0
    %v3397 = vadd.f32 0.0, %v3396
    %3398 = vmatmul.f32.gmra.mxu0 %v142
    %v3399 = vpop.f32.mrf.mxu0
    %v3400 = vadd.f32 0.0, %v3399
    %3401 = vmatmul.f32.gmra.mxu0 %v145
    %v3402 = vpop.f32.mrf.mxu0
    %v3403 = vadd.f32 0.0, %v3402
    %3404 = vmatmul.f32.gmra.mxu0 %v148
    %v3405 = vpop.f32.mrf.mxu0
    %v3406 = vadd.f32 0.0, %v3405
    %3407 = vmatmul.f32.gmra.mxu0 %v151
    %v3408 = vpop.f32.mrf.mxu0
    %v3409 = vadd.f32 0.0, %v3408
    %3410 = vmatmul.f32.gmra.mxu0 %v154
    %v3411 = vpop.f32.mrf.mxu0
    %v3412 = vadd.f32 0.0, %v3411
    %3413 = vmatmul.f32.gmra.mxu0 %v157
    %v3414 = vpop.f32.mrf.mxu0
    %v3415 = vadd.f32 0.0, %v3414
    %3416 = vmatmul.f32.gmra.mxu0 %v160
    %v3417 = vpop.f32.mrf.mxu0
    %v3418 = vadd.f32 0.0, %v3417
    %3419 = vmatmul.f32.gmra.mxu0 %v163
    %v3420 = vpop.f32.mrf.mxu0
    %v3421 = vadd.f32 0.0, %v3420
    %3422 = vmatmul.f32.gmra.mxu0 %v166
    %v3423 = vpop.f32.mrf.mxu0
    %v3424 = vadd.f32 0.0, %v3423
    %3425 = vmatmul.f32.gmra.mxu0 %v169
    %v3426 = vpop.f32.mrf.mxu0
    %v3427 = vadd.f32 0.0, %v3426
    %3428 = vmatmul.f32.gmra.mxu0 %v172
    %v3429 = vpop.f32.mrf.mxu0
    %v3430 = vadd.f32 0.0, %v3429
    %3431 = vdwg.mxu0
    %3432 = vmatpush.msra.mxu0 %v462
    %3433 = vmatpush.msra.mxu0 %v453
    %3434 = vmatpush.msra.mxu0 %v444
    %3435 = vmatpush.msra.mxu0 %v435
    %3436 = vmatpush.msra.mxu0 %v426
    %3437 = vmatpush.msra.mxu0 %v417
    %3438 = vmatpush.msra.mxu0 %v408
    %3439 = vmatpush.msra.mxu0 %v399
    %3440 = vmatpush.msra.mxu0 %v390
    %3441 = vmatpush.msra.mxu0 %v381
    %3442 = vmatpush.msra.mxu0 %v372
    %3443 = vmatpush.msra.mxu0 %v363
    %3444 = vmatpush.msra.mxu0 %v354
    %3445 = vmatpush.msra.mxu0 %v345
    %3446 = vmatpush.msra.mxu0 %v336
    %3447 = vmatpush.msra.mxu0 %v327
    %3448 = vmatmul.f32.gmra.mxu0 %v80
    %v3449 = vpop.f32.mrf.mxu0
    %v3450 = vadd.f32 %v3337, %v3449
    %3451 = vmatmul.f32.gmra.mxu0 %v83
    %v3452 = vpop.f32.mrf.mxu0
    %v3453 = vadd.f32 %v3340, %v3452
    %3454 = vmatmul.f32.gmra.mxu0 %v86
    %v3455 = vpop.f32.mrf.mxu0
    %v3456 = vadd.f32 %v3343, %v3455
    %3457 = vmatmul.f32.gmra.mxu0 %v89
    %v3458 = vpop.f32.mrf.mxu0
    %v3459 = vadd.f32 %v3346, %v3458
    %3460 = vmatmul.f32.gmra.mxu0 %v92
    %v3461 = vpop.f32.mrf.mxu0
    %v3462 = vadd.f32 %v3349, %v3461
    %3463 = vmatmul.f32.gmra.mxu0 %v95
    %v3464 = vpop.f32.mrf.mxu0
    %v3465 = vadd.f32 %v3352, %v3464
    %3466 = vmatmul.f32.gmra.mxu0 %v98
    %v3467 = vpop.f32.mrf.mxu0
    %v3468 = vadd.f32 %v3355, %v3467
    %3469 = vmatmul.f32.gmra.mxu0 %v101
    %v3470 = vpop.f32.mrf.mxu0
    %v3471 = vadd.f32 %v3358, %v3470
    %3472 = vmatmul.f32.gmra.mxu0 %v104
    %v3473 = vpop.f32.mrf.mxu0
    %v3474 = vadd.f32 %v3361, %v3473
    %3475 = vmatmul.f32.gmra.mxu0 %v107
    %v3476 = vpop.f32.mrf.mxu0
    %v3477 = vadd.f32 %v3364, %v3476
    %3478 = vmatmul.f32.gmra.mxu0 %v110
    %v3479 = vpop.f32.mrf.mxu0
    %v3480 = vadd.f32 %v3367, %v3479
    %3481 = vmatmul.f32.gmra.mxu0 %v113
    %v3482 = vpop.f32.mrf.mxu0
    %v3483 = vadd.f32 %v3370, %v3482
    %3484 = vmatmul.f32.gmra.mxu0 %v116
    %v3485 = vpop.f32.mrf.mxu0
    %v3486 = vadd.f32 %v3373, %v3485
    %3487 = vmatmul.f32.gmra.mxu0 %v119
    %v3488 = vpop.f32.mrf.mxu0
    %v3489 = vadd.f32 %v3376, %v3488
    %3490 = vmatmul.f32.gmra.mxu0 %v122
    %v3491 = vpop.f32.mrf.mxu0
    %v3492 = vadd.f32 %v3379, %v3491
    %3493 = vmatmul.f32.gmra.mxu0 %v125
    %v3494 = vpop.f32.mrf.mxu0
    %v3495 = vadd.f32 %v3382, %v3494
    %3496 = vmatmul.f32.gmra.mxu0 %v128
    %v3497 = vpop.f32.mrf.mxu0
    %v3498 = vadd.f32 %v3385, %v3497
    %3499 = vmatmul.f32.gmra.mxu0 %v131
    %v3500 = vpop.f32.mrf.mxu0
    %v3501 = vadd.f32 %v3388, %v3500
    %3502 = vmatmul.f32.gmra.mxu0 %v134
    %v3503 = vpop.f32.mrf.mxu0
    %v3504 = vadd.f32 %v3391, %v3503
    %3505 = vmatmul.f32.gmra.mxu0 %v137
    %v3506 = vpop.f32.mrf.mxu0
    %v3507 = vadd.f32 %v3394, %v3506
    %3508 = vmatmul.f32.gmra.mxu0 %v140
    %v3509 = vpop.f32.mrf.mxu0
    %v3510 = vadd.f32 %v3397, %v3509
    %3511 = vmatmul.f32.gmra.mxu0 %v143
    %v3512 = vpop.f32.mrf.mxu0
    %v3513 = vadd.f32 %v3400, %v3512
    %3514 = vmatmul.f32.gmra.mxu0 %v146
    %v3515 = vpop.f32.mrf.mxu0
    %v3516 = vadd.f32 %v3403, %v3515
    %3517 = vmatmul.f32.gmra.mxu0 %v149
    %v3518 = vpop.f32.mrf.mxu0
    %v3519 = vadd.f32 %v3406, %v3518
    %3520 = vmatmul.f32.gmra.mxu0 %v152
    %v3521 = vpop.f32.mrf.mxu0
    %v3522 = vadd.f32 %v3409, %v3521
    %3523 = vmatmul.f32.gmra.mxu0 %v155
    %v3524 = vpop.f32.mrf.mxu0
    %v3525 = vadd.f32 %v3412, %v3524
    %3526 = vmatmul.f32.gmra.mxu0 %v158
    %v3527 = vpop.f32.mrf.mxu0
    %v3528 = vadd.f32 %v3415, %v3527
    %3529 = vmatmul.f32.gmra.mxu0 %v161
    %v3530 = vpop.f32.mrf.mxu0
    %v3531 = vadd.f32 %v3418, %v3530
    %3532 = vmatmul.f32.gmra.mxu0 %v164
    %v3533 = vpop.f32.mrf.mxu0
    %v3534 = vadd.f32 %v3421, %v3533
    %3535 = vmatmul.f32.gmra.mxu0 %v167
    %v3536 = vpop.f32.mrf.mxu0
    %v3537 = vadd.f32 %v3424, %v3536
    %3538 = vmatmul.f32.gmra.mxu0 %v170
    %v3539 = vpop.f32.mrf.mxu0
    %v3540 = vadd.f32 %v3427, %v3539
    %3541 = vmatmul.f32.gmra.mxu0 %v173
    %v3542 = vpop.f32.mrf.mxu0
    %v3543 = vadd.f32 %v3430, %v3542
    %3544 = vdwg.mxu0
    %3545 = vmatpush.msra.mxu0 %v606
    %3546 = vmatpush.msra.mxu0 %v597
    %3547 = vmatpush.msra.mxu0 %v588
    %3548 = vmatpush.msra.mxu0 %v579
    %3549 = vmatpush.msra.mxu0 %v570
    %3550 = vmatpush.msra.mxu0 %v561
    %3551 = vmatpush.msra.mxu0 %v552
    %3552 = vmatpush.msra.mxu0 %v543
    %3553 = vmatpush.msra.mxu0 %v534
    %3554 = vmatpush.msra.mxu0 %v525
    %3555 = vmatpush.msra.mxu0 %v516
    %3556 = vmatpush.msra.mxu0 %v507
    %3557 = vmatpush.msra.mxu0 %v498
    %3558 = vmatpush.msra.mxu0 %v489
    %3559 = vmatpush.msra.mxu0 %v480
    %3560 = vmatpush.msra.mxu0 %v471
    %3561 = vmatmul.f32.gmra.mxu0 %v81
    %v3562 = vpop.f32.mrf.mxu0
    %v3563 = vadd.f32 %v3450, %v3562
    %3564 = vmatmul.f32.gmra.mxu0 %v84
    %v3565 = vpop.f32.mrf.mxu0
    %v3566 = vadd.f32 %v3453, %v3565
    %3567 = vmatmul.f32.gmra.mxu0 %v87
    %v3568 = vpop.f32.mrf.mxu0
    %v3569 = vadd.f32 %v3456, %v3568
    %3570 = vmatmul.f32.gmra.mxu0 %v90
    %v3571 = vpop.f32.mrf.mxu0
    %v3572 = vadd.f32 %v3459, %v3571
    %3573 = vmatmul.f32.gmra.mxu0 %v93
    %v3574 = vpop.f32.mrf.mxu0
    %v3575 = vadd.f32 %v3462, %v3574
    %3576 = vmatmul.f32.gmra.mxu0 %v96
    %v3577 = vpop.f32.mrf.mxu0
    %v3578 = vadd.f32 %v3465, %v3577
    %3579 = vmatmul.f32.gmra.mxu0 %v99
    %v3580 = vpop.f32.mrf.mxu0
    %v3581 = vadd.f32 %v3468, %v3580
    %3582 = vmatmul.f32.gmra.mxu0 %v102
    %v3583 = vpop.f32.mrf.mxu0
    %v3584 = vadd.f32 %v3471, %v3583
    %3585 = vmatmul.f32.gmra.mxu0 %v105
    %v3586 = vpop.f32.mrf.mxu0
    %v3587 = vadd.f32 %v3474, %v3586
    %3588 = vmatmul.f32.gmra.mxu0 %v108
    %v3589 = vpop.f32.mrf.mxu0
    %v3590 = vadd.f32 %v3477, %v3589
    %3591 = vmatmul.f32.gmra.mxu0 %v111
    %v3592 = vpop.f32.mrf.mxu0
    %v3593 = vadd.f32 %v3480, %v3592
    %3594 = vmatmul.f32.gmra.mxu0 %v114
    %v3595 = vpop.f32.mrf.mxu0
    %v3596 = vadd.f32 %v3483, %v3595
    %3597 = vmatmul.f32.gmra.mxu0 %v117
    %v3598 = vpop.f32.mrf.mxu0
    %v3599 = vadd.f32 %v3486, %v3598
    %3600 = vmatmul.f32.gmra.mxu0 %v120
    %v3601 = vpop.f32.mrf.mxu0
    %v3602 = vadd.f32 %v3489, %v3601
    %3603 = vmatmul.f32.gmra.mxu0 %v123
    %v3604 = vpop.f32.mrf.mxu0
    %v3605 = vadd.f32 %v3492, %v3604
    %3606 = vmatmul.f32.gmra.mxu0 %v126
    %v3607 = vpop.f32.mrf.mxu0
    %v3608 = vadd.f32 %v3495, %v3607
    %3609 = vmatmul.f32.gmra.mxu0 %v129
    %v3610 = vpop.f32.mrf.mxu0
    %v3611 = vadd.f32 %v3498, %v3610
    %3612 = vmatmul.f32.gmra.mxu0 %v132
    %v3613 = vpop.f32.mrf.mxu0
    %v3614 = vadd.f32 %v3501, %v3613
    %3615 = vmatmul.f32.gmra.mxu0 %v135
    %v3616 = vpop.f32.mrf.mxu0
    %v3617 = vadd.f32 %v3504, %v3616
    %3618 = vmatmul.f32.gmra.mxu0 %v138
    %v3619 = vpop.f32.mrf.mxu0
    %v3620 = vadd.f32 %v3507, %v3619
    %3621 = vmatmul.f32.gmra.mxu0 %v141
    %v3622 = vpop.f32.mrf.mxu0
    %v3623 = vadd.f32 %v3510, %v3622
    %3624 = vmatmul.f32.gmra.mxu0 %v144
    %v3625 = vpop.f32.mrf.mxu0
    %v3626 = vadd.f32 %v3513, %v3625
    %3627 = vmatmul.f32.gmra.mxu0 %v147
    %v3628 = vpop.f32.mrf.mxu0
    %v3629 = vadd.f32 %v3516, %v3628
    %3630 = vmatmul.f32.gmra.mxu0 %v150
    %v3631 = vpop.f32.mrf.mxu0
    %v3632 = vadd.f32 %v3519, %v3631
    %3633 = vmatmul.f32.gmra.mxu0 %v153
    %v3634 = vpop.f32.mrf.mxu0
    %v3635 = vadd.f32 %v3522, %v3634
    %3636 = vmatmul.f32.gmra.mxu0 %v156
    %v3637 = vpop.f32.mrf.mxu0
    %v3638 = vadd.f32 %v3525, %v3637
    %3639 = vmatmul.f32.gmra.mxu0 %v159
    %v3640 = vpop.f32.mrf.mxu0
    %v3641 = vadd.f32 %v3528, %v3640
    %3642 = vmatmul.f32.gmra.mxu0 %v162
    %v3643 = vpop.f32.mrf.mxu0
    %v3644 = vadd.f32 %v3531, %v3643
    %3645 = vmatmul.f32.gmra.mxu0 %v165
    %v3646 = vpop.f32.mrf.mxu0
    %v3647 = vadd.f32 %v3534, %v3646
    %3648 = vmatmul.f32.gmra.mxu0 %v168
    %v3649 = vpop.f32.mrf.mxu0
    %v3650 = vadd.f32 %v3537, %v3649
    %3651 = vmatmul.f32.gmra.mxu0 %v171
    %v3652 = vpop.f32.mrf.mxu0
    %v3653 = vadd.f32 %v3540, %v3652
    %3654 = vmatmul.f32.gmra.mxu0 %v174
    %v3655 = vpop.f32.mrf.mxu0
    %v3656 = vadd.f32 %v3543, %v3655
    %3657 = vdwg.mxu0
    %v3658 = vlaneseq
    %v3659 = vshrl.u32 %v3658, 7
    %v3660 = vadd.s32 %v3659, 8
    %v3661 = vadd.s32 %v3659, 16
    %v3662 = vadd.s32 %v3659, 24
    %v3663 = vadd.s32 %v3659, 32
    %v3664 = vadd.s32 %v3659, 40
    %v3665 = vadd.s32 %v3659, 48
    %v3666 = vadd.s32 %v3659, 56
    %v3667 = vadd.s32 %v3659, 64
    %v3668 = vadd.s32 %v3659, 72
    %v3669 = vadd.s32 %v3659, 80
    %v3670 = vadd.s32 %v3659, 88
    %v3671 = vadd.s32 %v3659, 96
    %v3672 = vadd.s32 %v3659, 104
    %v3673 = vadd.s32 %v3659, 112
    %v3674 = vadd.s32 %v3659, 120
    %v3675 = vlaneseq
    %v3676 = vand.u32 %v3675, 127
    %vm3677 = vcmp.le.s32.totalorder %v3676, %v3659
    %vm3678 = vcmp.le.s32.totalorder %v3676, %v3660
    %vm3679 = vcmp.le.s32.totalorder %v3676, %v3661
    %vm3680 = vcmp.le.s32.totalorder %v3676, %v3662
    %vm3681 = vcmp.le.s32.totalorder %v3676, %v3663
    %vm3682 = vcmp.le.s32.totalorder %v3676, %v3664
    %vm3683 = vcmp.le.s32.totalorder %v3676, %v3665
    %vm3684 = vcmp.le.s32.totalorder %v3676, %v3666
    %vm3685 = vcmp.le.s32.totalorder %v3676, %v3667
    %vm3686 = vcmp.le.s32.totalorder %v3676, %v3668
    %vm3687 = vcmp.le.s32.totalorder %v3676, %v3669
    %vm3688 = vcmp.le.s32.totalorder %v3676, %v3670
    %vm3689 = vcmp.le.s32.totalorder %v3676, %v3671
    %vm3690 = vcmp.le.s32.totalorder %v3676, %v3672
    %vm3691 = vcmp.le.s32.totalorder %v3676, %v3673
    %vm3692 = vcmp.le.s32.totalorder %v3676, %v3674
    %vm3693 = vcmask 523264
    %v3695 = vsel %vm3693, %v851, 0
    %v3698 = vsel %vm3693, %v854, 0
    %v3701 = vsel %vm3693, %v857, 0
    %v3704 = vsel %vm3693, %v860, 0
    %v3707 = vsel %vm3693, %v863, 0
    %v3710 = vsel %vm3693, %v866, 0
    %v3713 = vsel %vm3693, %v869, 0
    %v3716 = vsel %vm3693, %v872, 0
    %v3719 = vsel %vm3693, %v875, 0
    %v3722 = vsel %vm3693, %v878, 0
    %v3725 = vsel %vm3693, %v881, 0
    %v3728 = vsel %vm3693, %v884, 0
    %v3731 = vsel %vm3693, %v887, 0
    %v3734 = vsel %vm3693, %v890, 0
    %v3737 = vsel %vm3693, %v893, 0
    %v3740 = vsel %vm3693, %v896, 0
    %v3743 = vsel %vm3693, %v1868, 0
    %v3746 = vsel %vm3693, %v1871, 0
    %v3749 = vsel %vm3693, %v1874, 0
    %v3752 = vsel %vm3693, %v1877, 0
    %v3755 = vsel %vm3693, %v1880, 0
    %v3758 = vsel %vm3693, %v1883, 0
    %v3761 = vsel %vm3693, %v1886, 0
    %v3764 = vsel %vm3693, %v1889, 0
    %v3767 = vsel %vm3693, %v1892, 0
    %v3770 = vsel %vm3693, %v1895, 0
    %v3773 = vsel %vm3693, %v1898, 0
    %v3776 = vsel %vm3693, %v1901, 0
    %v3779 = vsel %vm3693, %v1904, 0
    %v3782 = vsel %vm3693, %v1907, 0
    %v3785 = vsel %vm3693, %v1910, 0
    %v3788 = vsel %vm3693, %v1913, 0
    %3790 = vmatpush.xpose.msra.mxu0 %v3788
    %3791 = vmatpush.xpose.msra.mxu0 %v3785
    %3792 = vmatpush.xpose.msra.mxu0 %v3782
    %3793 = vmatpush.xpose.msra.mxu0 %v3779
    %3794 = vmatpush.xpose.msra.mxu0 %v3776
    %3795 = vmatpush.xpose.msra.mxu0 %v3773
    %3796 = vmatpush.xpose.msra.mxu0 %v3770
    %3797 = vmatpush.xpose.msra.mxu0 %v3767
    %3798 = vmatpush.xpose.msra.mxu0 %v3764
    %3799 = vmatpush.xpose.msra.mxu0 %v3761
    %3800 = vmatpush.xpose.msra.mxu0 %v3758
    %3801 = vmatpush.xpose.msra.mxu0 %v3755
    %3802 = vmatpush.xpose.msra.mxu0 %v3752
    %3803 = vmatpush.xpose.msra.mxu0 %v3749
    %3804 = vmatpush.xpose.msra.mxu0 %v3746
    %3805 = vmatpush.xpose.msra.mxu0 %v3743
    %3806 = vmatmul.f32.gmra.mxu0 %v3695
    %v3807 = vpop.f32.mrf.mxu0
    %v3808 = vadd.f32 0.0, %v3807
    %3809 = vmatmul.f32.gmra.mxu0 %v3698
    %v3810 = vpop.f32.mrf.mxu0
    %v3811 = vadd.f32 0.0, %v3810
    %3812 = vmatmul.f32.gmra.mxu0 %v3701
    %v3813 = vpop.f32.mrf.mxu0
    %v3814 = vadd.f32 0.0, %v3813
    %3815 = vmatmul.f32.gmra.mxu0 %v3704
    %v3816 = vpop.f32.mrf.mxu0
    %v3817 = vadd.f32 0.0, %v3816
    %3818 = vmatmul.f32.gmra.mxu0 %v3707
    %v3819 = vpop.f32.mrf.mxu0
    %v3820 = vadd.f32 0.0, %v3819
    %3821 = vmatmul.f32.gmra.mxu0 %v3710
    %v3822 = vpop.f32.mrf.mxu0
    %v3823 = vadd.f32 0.0, %v3822
    %3824 = vmatmul.f32.gmra.mxu0 %v3713
    %v3825 = vpop.f32.mrf.mxu0
    %v3826 = vadd.f32 0.0, %v3825
    %3827 = vmatmul.f32.gmra.mxu0 %v3716
    %v3828 = vpop.f32.mrf.mxu0
    %v3829 = vadd.f32 0.0, %v3828
    %3830 = vmatmul.f32.gmra.mxu0 %v3719
    %v3831 = vpop.f32.mrf.mxu0
    %v3832 = vadd.f32 0.0, %v3831
    %3833 = vmatmul.f32.gmra.mxu0 %v3722
    %v3834 = vpop.f32.mrf.mxu0
    %v3835 = vadd.f32 0.0, %v3834
    %3836 = vmatmul.f32.gmra.mxu0 %v3725
    %v3837 = vpop.f32.mrf.mxu0
    %v3838 = vadd.f32 0.0, %v3837
    %3839 = vmatmul.f32.gmra.mxu0 %v3728
    %v3840 = vpop.f32.mrf.mxu0
    %v3841 = vadd.f32 0.0, %v3840
    %3842 = vmatmul.f32.gmra.mxu0 %v3731
    %v3843 = vpop.f32.mrf.mxu0
    %v3844 = vadd.f32 0.0, %v3843
    %3845 = vmatmul.f32.gmra.mxu0 %v3734
    %v3846 = vpop.f32.mrf.mxu0
    %v3847 = vadd.f32 0.0, %v3846
    %3848 = vmatmul.f32.gmra.mxu0 %v3737
    %v3849 = vpop.f32.mrf.mxu0
    %v3850 = vadd.f32 0.0, %v3849
    %3851 = vmatmul.f32.gmra.mxu0 %v3740
    %v3852 = vpop.f32.mrf.mxu0
    %v3853 = vadd.f32 0.0, %v3852
    %3854 = vdwg.mxu0
    %v3855 = vsel %vm3677, %v3808, -inf
    %v3856 = vsel %vm3678, %v3811, -inf
    %v3857 = vsel %vm3679, %v3814, -inf
    %v3858 = vsel %vm3680, %v3817, -inf
    %v3859 = vsel %vm3681, %v3820, -inf
    %v3860 = vsel %vm3682, %v3823, -inf
    %v3861 = vsel %vm3683, %v3826, -inf
    %v3862 = vsel %vm3684, %v3829, -inf
    %v3863 = vsel %vm3685, %v3832, -inf
    %v3864 = vsel %vm3686, %v3835, -inf
    %v3865 = vsel %vm3687, %v3838, -inf
    %v3866 = vsel %vm3688, %v3841, -inf
    %v3867 = vsel %vm3689, %v3844, -inf
    %v3868 = vsel %vm3690, %v3847, -inf
    %v3869 = vsel %vm3691, %v3850, -inf
    %v3870 = vsel %vm3692, %v3853, -inf
    %3871 = vmax.xlane.f32.xlu0 %v3855
    %v3872 = vpop.xlane.xlu0 %3871
    %3873 = vmax.xlane.f32.xlu0 %v3856
    %v3874 = vpop.xlane.xlu0 %3873
    %3875 = vmax.xlane.f32.xlu0 %v3857
    %v3876 = vpop.xlane.xlu0 %3875
    %3877 = vmax.xlane.f32.xlu0 %v3858
    %v3878 = vpop.xlane.xlu0 %3877
    %3879 = vmax.xlane.f32.xlu0 %v3859
    %v3880 = vpop.xlane.xlu0 %3879
    %3881 = vmax.xlane.f32.xlu0 %v3860
    %v3882 = vpop.xlane.xlu0 %3881
    %3883 = vmax.xlane.f32.xlu0 %v3861
    %v3884 = vpop.xlane.xlu0 %3883
    %3885 = vmax.xlane.f32.xlu0 %v3862
    %v3886 = vpop.xlane.xlu0 %3885
    %3887 = vmax.xlane.f32.xlu0 %v3863
    %v3888 = vpop.xlane.xlu0 %3887
    %3889 = vmax.xlane.f32.xlu0 %v3864
    %v3890 = vpop.xlane.xlu0 %3889
    %3891 = vmax.xlane.f32.xlu0 %v3865
    %v3892 = vpop.xlane.xlu0 %3891
    %3893 = vmax.xlane.f32.xlu0 %v3866
    %v3894 = vpop.xlane.xlu0 %3893
    %3895 = vmax.xlane.f32.xlu0 %v3867
    %v3896 = vpop.xlane.xlu0 %3895
    %3897 = vmax.xlane.f32.xlu0 %v3868
    %v3898 = vpop.xlane.xlu0 %3897
    %3899 = vmax.xlane.f32.xlu0 %v3869
    %v3900 = vpop.xlane.xlu0 %3899
    %3901 = vmax.xlane.f32.xlu0 %v3870
    %v3902 = vpop.xlane.xlu0 %3901
    %v3903 = vsub.f32 %v3855, %v3872
    %v3904 = vsub.f32 %v3856, %v3874
    %v3905 = vsub.f32 %v3857, %v3876
    %v3906 = vsub.f32 %v3858, %v3878
    %v3907 = vsub.f32 %v3859, %v3880
    %v3908 = vsub.f32 %v3860, %v3882
    %v3909 = vsub.f32 %v3861, %v3884
    %v3910 = vsub.f32 %v3862, %v3886
    %v3911 = vsub.f32 %v3863, %v3888
    %v3912 = vsub.f32 %v3864, %v3890
    %v3913 = vsub.f32 %v3865, %v3892
    %v3914 = vsub.f32 %v3866, %v3894
    %v3915 = vsub.f32 %v3867, %v3896
    %v3916 = vsub.f32 %v3868, %v3898
    %v3917 = vsub.f32 %v3869, %v3900
    %v3918 = vsub.f32 %v3870, %v3902
    %v3919 = vmul.f32 %v3903, 1.442695
    %v3920 = vpow.pop %v3919
    %v3921 = vmul.f32 %v3904, 1.442695
    %v3922 = vpow.pop %v3921
    %v3923 = vmul.f32 %v3905, 1.442695
    %v3924 = vpow.pop %v3923
    %v3925 = vmul.f32 %v3906, 1.442695
    %v3926 = vpow.pop %v3925
    %v3927 = vmul.f32 %v3907, 1.442695
    %v3928 = vpow.pop %v3927
    %v3929 = vmul.f32 %v3908, 1.442695
    %v3930 = vpow.pop %v3929
    %v3931 = vmul.f32 %v3909, 1.442695
    %v3932 = vpow.pop %v3931
    %v3933 = vmul.f32 %v3910, 1.442695
    %v3934 = vpow.pop %v3933
    %v3935 = vmul.f32 %v3911, 1.442695
    %v3936 = vpow.pop %v3935
    %v3937 = vmul.f32 %v3912, 1.442695
    %v3938 = vpow.pop %v3937
    %v3939 = vmul.f32 %v3913, 1.442695
    %v3940 = vpow.pop %v3939
    %v3941 = vmul.f32 %v3914, 1.442695
    %v3942 = vpow.pop %v3941
    %v3943 = vmul.f32 %v3915, 1.442695
    %v3944 = vpow.pop %v3943
    %v3945 = vmul.f32 %v3916, 1.442695
    %v3946 = vpow.pop %v3945
    %v3947 = vmul.f32 %v3917, 1.442695
    %v3948 = vpow.pop %v3947
    %v3949 = vmul.f32 %v3918, 1.442695
    %v3950 = vpow.pop %v3949
    %3951 = vadd.xlane.f32.xlu0 %v3920
    %v3952 = vpop.xlane.xlu0 %3951
    %3953 = vadd.xlane.f32.xlu0 %v3922
    %v3954 = vpop.xlane.xlu0 %3953
    %3955 = vadd.xlane.f32.xlu0 %v3924
    %v3956 = vpop.xlane.xlu0 %3955
    %3957 = vadd.xlane.f32.xlu0 %v3926
    %v3958 = vpop.xlane.xlu0 %3957
    %3959 = vadd.xlane.f32.xlu0 %v3928
    %v3960 = vpop.xlane.xlu0 %3959
    %3961 = vadd.xlane.f32.xlu0 %v3930
    %v3962 = vpop.xlane.xlu0 %3961
    %3963 = vadd.xlane.f32.xlu0 %v3932
    %v3964 = vpop.xlane.xlu0 %3963
    %3965 = vadd.xlane.f32.xlu0 %v3934
    %v3966 = vpop.xlane.xlu0 %3965
    %3967 = vadd.xlane.f32.xlu0 %v3936
    %v3968 = vpop.xlane.xlu0 %3967
    %3969 = vadd.xlane.f32.xlu0 %v3938
    %v3970 = vpop.xlane.xlu0 %3969
    %3971 = vadd.xlane.f32.xlu0 %v3940
    %v3972 = vpop.xlane.xlu0 %3971
    %3973 = vadd.xlane.f32.xlu0 %v3942
    %v3974 = vpop.xlane.xlu0 %3973
    %3975 = vadd.xlane.f32.xlu0 %v3944
    %v3976 = vpop.xlane.xlu0 %3975
    %3977 = vadd.xlane.f32.xlu0 %v3946
    %v3978 = vpop.xlane.xlu0 %3977
    %3979 = vadd.xlane.f32.xlu0 %v3948
    %v3980 = vpop.xlane.xlu0 %3979
    %3981 = vadd.xlane.f32.xlu0 %v3950
    %v3982 = vpop.xlane.xlu0 %3981
    %3983 = vmatpush.msra.mxu0 %v2930
    %3984 = vmatpush.msra.mxu0 %v2927
    %3985 = vmatpush.msra.mxu0 %v2924
    %3986 = vmatpush.msra.mxu0 %v2921
    %3987 = vmatpush.msra.mxu0 %v2918
    %3988 = vmatpush.msra.mxu0 %v2915
    %3989 = vmatpush.msra.mxu0 %v2912
    %3990 = vmatpush.msra.mxu0 %v2909
    %3991 = vmatpush.msra.mxu0 %v2906
    %3992 = vmatpush.msra.mxu0 %v2903
    %3993 = vmatpush.msra.mxu0 %v2900
    %3994 = vmatpush.msra.mxu0 %v2897
    %3995 = vmatpush.msra.mxu0 %v2894
    %3996 = vmatpush.msra.mxu0 %v2891
    %3997 = vmatpush.msra.mxu0 %v2888
    %3998 = vmatpush.msra.mxu0 %v2885
    %3999 = vmatmul.f32.gmra.mxu0 %v3920
    %v4000 = vpop.f32.mrf.mxu0
    %v4001 = vadd.f32 0.0, %v4000
    %4002 = vmatmul.f32.gmra.mxu0 %v3922
    %v4003 = vpop.f32.mrf.mxu0
    %v4004 = vadd.f32 0.0, %v4003
    %4005 = vmatmul.f32.gmra.mxu0 %v3924
    %v4006 = vpop.f32.mrf.mxu0
    %v4007 = vadd.f32 0.0, %v4006
    %4008 = vmatmul.f32.gmra.mxu0 %v3926
    %v4009 = vpop.f32.mrf.mxu0
    %v4010 = vadd.f32 0.0, %v4009
    %4011 = vmatmul.f32.gmra.mxu0 %v3928
    %v4012 = vpop.f32.mrf.mxu0
    %v4013 = vadd.f32 0.0, %v4012
    %4014 = vmatmul.f32.gmra.mxu0 %v3930
    %v4015 = vpop.f32.mrf.mxu0
    %v4016 = vadd.f32 0.0, %v4015
    %4017 = vmatmul.f32.gmra.mxu0 %v3932
    %v4018 = vpop.f32.mrf.mxu0
    %v4019 = vadd.f32 0.0, %v4018
    %4020 = vmatmul.f32.gmra.mxu0 %v3934
    %v4021 = vpop.f32.mrf.mxu0
    %v4022 = vadd.f32 0.0, %v4021
    %4023 = vmatmul.f32.gmra.mxu0 %v3936
    %v4024 = vpop.f32.mrf.mxu0
    %v4025 = vadd.f32 0.0, %v4024
    %4026 = vmatmul.f32.gmra.mxu0 %v3938
    %v4027 = vpop.f32.mrf.mxu0
    %v4028 = vadd.f32 0.0, %v4027
    %4029 = vmatmul.f32.gmra.mxu0 %v3940
    %v4030 = vpop.f32.mrf.mxu0
    %v4031 = vadd.f32 0.0, %v4030
    %4032 = vmatmul.f32.gmra.mxu0 %v3942
    %v4033 = vpop.f32.mrf.mxu0
    %v4034 = vadd.f32 0.0, %v4033
    %4035 = vmatmul.f32.gmra.mxu0 %v3944
    %v4036 = vpop.f32.mrf.mxu0
    %v4037 = vadd.f32 0.0, %v4036
    %4038 = vmatmul.f32.gmra.mxu0 %v3946
    %v4039 = vpop.f32.mrf.mxu0
    %v4040 = vadd.f32 0.0, %v4039
    %4041 = vmatmul.f32.gmra.mxu0 %v3948
    %v4042 = vpop.f32.mrf.mxu0
    %v4043 = vadd.f32 0.0, %v4042
    %4044 = vmatmul.f32.gmra.mxu0 %v3950
    %v4045 = vpop.f32.mrf.mxu0
    %v4046 = vadd.f32 0.0, %v4045
    %4047 = vdwg.mxu0
    %v4048 = vrcp.pop %v3952
    %v4049 = vrcp.pop %v3954
    %v4050 = vrcp.pop %v3956
    %v4051 = vrcp.pop %v3958
    %v4052 = vrcp.pop %v3960
    %v4053 = vrcp.pop %v3962
    %v4054 = vrcp.pop %v3964
    %v4055 = vrcp.pop %v3966
    %v4056 = vrcp.pop %v3968
    %v4057 = vrcp.pop %v3970
    %v4058 = vrcp.pop %v3972
    %v4059 = vrcp.pop %v3974
    %v4060 = vrcp.pop %v3976
    %v4061 = vrcp.pop %v3978
    %v4062 = vrcp.pop %v3980
    %v4063 = vrcp.pop %v3982
    %v4064 = vmul.f32 %v4001, %v4048
    %v4065 = vmul.f32 %v4004, %v4049
    %v4066 = vmul.f32 %v4007, %v4050
    %v4067 = vmul.f32 %v4010, %v4051
    %v4068 = vmul.f32 %v4013, %v4052
    %v4069 = vmul.f32 %v4016, %v4053
    %v4070 = vmul.f32 %v4019, %v4054
    %v4071 = vmul.f32 %v4022, %v4055
    %v4072 = vmul.f32 %v4025, %v4056
    %v4073 = vmul.f32 %v4028, %v4057
    %v4074 = vmul.f32 %v4031, %v4058
    %v4075 = vmul.f32 %v4034, %v4059
    %v4076 = vmul.f32 %v4037, %v4060
    %v4077 = vmul.f32 %v4040, %v4061
    %v4078 = vmul.f32 %v4043, %v4062
    %v4079 = vmul.f32 %v4046, %v4063
    %4080 = vst.msk [vmem:[#allocation2] sm:$0xff] %vm3693, %v4064
    %4081 = vst.msk [vmem:[#allocation2 + $0x18] sm:$0xff] %vm3693, %v4065
    %4082 = vst.msk [vmem:[#allocation2 + $0x30] sm:$0xff] %vm3693, %v4066
    %4083 = vst.msk [vmem:[#allocation2 + $0x48] sm:$0xff] %vm3693, %v4067
    %4084 = vst.msk [vmem:[#allocation2 + $0x60] sm:$0xff] %vm3693, %v4068
    %4085 = vst.msk [vmem:[#allocation2 + $0x78] sm:$0xff] %vm3693, %v4069
    %4086 = vst.msk [vmem:[#allocation2 + $0x90] sm:$0xff] %vm3693, %v4070
    %4087 = vst.msk [vmem:[#allocation2 + $0xa8] sm:$0xff] %vm3693, %v4071
    %4088 = vst.msk [vmem:[#allocation2 + $0xc0] sm:$0xff] %vm3693, %v4072
    %4089 = vst.msk [vmem:[#allocation2 + $0xd8] sm:$0xff] %vm3693, %v4073
    %4090 = vst.msk [vmem:[#allocation2 + $0xf0] sm:$0xff] %vm3693, %v4074
    %4091 = vst.msk [vmem:[#allocation2 + $0x108] sm:$0xff] %vm3693, %v4075
    %4092 = vst.msk [vmem:[#allocation2 + $0x120] sm:$0xff] %vm3693, %v4076
    %4093 = vst.msk [vmem:[#allocation2 + $0x138] sm:$0xff] %vm3693, %v4077
    %4094 = vst.msk [vmem:[#allocation2 + $0x150] sm:$0xff] %vm3693, %v4078
    %4095 = vst.msk [vmem:[#allocation2 + $0x168] sm:$0xff] %vm3693, %v4079
    %4096 = vrot.lane.b32.xlu0 %v851, 64
    %v4097 = vpop.permute.xlu0 %4096
    %4098 = vrot.lane.b32.xlu0 %v854, 64
    %v4099 = vpop.permute.xlu0 %4098
    %4100 = vrot.lane.b32.xlu0 %v857, 64
    %v4101 = vpop.permute.xlu0 %4100
    %4102 = vrot.lane.b32.xlu0 %v860, 64
    %v4103 = vpop.permute.xlu0 %4102
    %4104 = vrot.lane.b32.xlu0 %v863, 64
    %v4105 = vpop.permute.xlu0 %4104
    %4106 = vrot.lane.b32.xlu0 %v866, 64
    %v4107 = vpop.permute.xlu0 %4106
    %4108 = vrot.lane.b32.xlu0 %v869, 64
    %v4109 = vpop.permute.xlu0 %4108
    %4110 = vrot.lane.b32.xlu0 %v872, 64
    %v4111 = vpop.permute.xlu0 %4110
    %4112 = vrot.lane.b32.xlu0 %v875, 64
    %v4113 = vpop.permute.xlu0 %4112
    %4114 = vrot.lane.b32.xlu0 %v878, 64
    %v4115 = vpop.permute.xlu0 %4114
    %4116 = vrot.lane.b32.xlu0 %v881, 64
    %v4117 = vpop.permute.xlu0 %4116
    %4118 = vrot.lane.b32.xlu0 %v884, 64
    %v4119 = vpop.permute.xlu0 %4118
    %4120 = vrot.lane.b32.xlu0 %v887, 64
    %v4121 = vpop.permute.xlu0 %4120
    %4122 = vrot.lane.b32.xlu0 %v890, 64
    %v4123 = vpop.permute.xlu0 %4122
    %4124 = vrot.lane.b32.xlu0 %v893, 64
    %v4125 = vpop.permute.xlu0 %4124
    %4126 = vrot.lane.b32.xlu0 %v896, 64
    %v4127 = vpop.permute.xlu0 %4126
    %4128 = vrot.lane.b32.xlu0 %v1868, 64
    %v4129 = vpop.permute.xlu0 %4128
    %4130 = vrot.lane.b32.xlu0 %v1871, 64
    %v4131 = vpop.permute.xlu0 %4130
    %4132 = vrot.lane.b32.xlu0 %v1874, 64
    %v4133 = vpop.permute.xlu0 %4132
    %4134 = vrot.lane.b32.xlu0 %v1877, 64
    %v4135 = vpop.permute.xlu0 %4134
    %4136 = vrot.lane.b32.xlu0 %v1880, 64
    %v4137 = vpop.permute.xlu0 %4136
    %4138 = vrot.lane.b32.xlu0 %v1883, 64
    %v4139 = vpop.permute.xlu0 %4138
    %4140 = vrot.lane.b32.xlu0 %v1886, 64
    %v4141 = vpop.permute.xlu0 %4140
    %4142 = vrot.lane.b32.xlu0 %v1889, 64
    %v4143 = vpop.permute.xlu0 %4142
    %4144 = vrot.lane.b32.xlu0 %v1892, 64
    %v4145 = vpop.permute.xlu0 %4144
    %4146 = vrot.lane.b32.xlu0 %v1895, 64
    %v4147 = vpop.permute.xlu0 %4146
    %4148 = vrot.lane.b32.xlu0 %v1898, 64
    %v4149 = vpop.permute.xlu0 %4148
    %4150 = vrot.lane.b32.xlu0 %v1901, 64
    %v4151 = vpop.permute.xlu0 %4150
    %4152 = vrot.lane.b32.xlu0 %v1904, 64
    %v4153 = vpop.permute.xlu0 %4152
    %4154 = vrot.lane.b32.xlu0 %v1907, 64
    %v4155 = vpop.permute.xlu0 %4154
    %4156 = vrot.lane.b32.xlu0 %v1910, 64
    %v4157 = vpop.permute.xlu0 %4156
    %4158 = vrot.lane.b32.xlu0 %v1913, 64
    %v4159 = vpop.permute.xlu0 %4158
    %v4160 = vsel %vm3693, %v4097, 0
    %v4162 = vsel %vm3693, %v4099, 0
    %v4164 = vsel %vm3693, %v4101, 0
    %v4166 = vsel %vm3693, %v4103, 0
    %v4168 = vsel %vm3693, %v4105, 0
    %v4170 = vsel %vm3693, %v4107, 0
    %v4172 = vsel %vm3693, %v4109, 0
    %v4174 = vsel %vm3693, %v4111, 0
    %v4176 = vsel %vm3693, %v4113, 0
    %v4178 = vsel %vm3693, %v4115, 0
    %v4180 = vsel %vm3693, %v4117, 0
    %v4182 = vsel %vm3693, %v4119, 0
    %v4184 = vsel %vm3693, %v4121, 0
    %v4186 = vsel %vm3693, %v4123, 0
    %v4188 = vsel %vm3693, %v4125, 0
    %v4190 = vsel %vm3693, %v4127, 0
    %v4192 = vsel %vm3693, %v4129, 0
    %v4194 = vsel %vm3693, %v4131, 0
    %v4196 = vsel %vm3693, %v4133, 0
    %v4198 = vsel %vm3693, %v4135, 0
    %v4200 = vsel %vm3693, %v4137, 0
    %v4202 = vsel %vm3693, %v4139, 0
    %v4204 = vsel %vm3693, %v4141, 0
    %v4206 = vsel %vm3693, %v4143, 0
    %v4208 = vsel %vm3693, %v4145, 0
    %v4210 = vsel %vm3693, %v4147, 0
    %v4212 = vsel %vm3693, %v4149, 0
    %v4214 = vsel %vm3693, %v4151, 0
    %v4216 = vsel %vm3693, %v4153, 0
    %v4218 = vsel %vm3693, %v4155, 0
    %v4220 = vsel %vm3693, %v4157, 0
    %v4222 = vsel %vm3693, %v4159, 0
    %4224 = vmatpush.xpose.msra.mxu0 %v4222
    %4225 = vmatpush.xpose.msra.mxu0 %v4220
    %4226 = vmatpush.xpose.msra.mxu0 %v4218
    %4227 = vmatpush.xpose.msra.mxu0 %v4216
    %4228 = vmatpush.xpose.msra.mxu0 %v4214
    %4229 = vmatpush.xpose.msra.mxu0 %v4212
    %4230 = vmatpush.xpose.msra.mxu0 %v4210
    %4231 = vmatpush.xpose.msra.mxu0 %v4208
    %4232 = vmatpush.xpose.msra.mxu0 %v4206
    %4233 = vmatpush.xpose.msra.mxu0 %v4204
    %4234 = vmatpush.xpose.msra.mxu0 %v4202
    %4235 = vmatpush.xpose.msra.mxu0 %v4200
    %4236 = vmatpush.xpose.msra.mxu0 %v4198
    %4237 = vmatpush.xpose.msra.mxu0 %v4196
    %4238 = vmatpush.xpose.msra.mxu0 %v4194
    %4239 = vmatpush.xpose.msra.mxu0 %v4192
    %4240 = vmatmul.f32.gmra.mxu0 %v4160
    %v4241 = vpop.f32.mrf.mxu0
    %v4242 = vadd.f32 0.0, %v4241
    %4243 = vmatmul.f32.gmra.mxu0 %v4162
    %v4244 = vpop.f32.mrf.mxu0
    %v4245 = vadd.f32 0.0, %v4244
    %4246 = vmatmul.f32.gmra.mxu0 %v4164
    %v4247 = vpop.f32.mrf.mxu0
    %v4248 = vadd.f32 0.0, %v4247
    %4249 = vmatmul.f32.gmra.mxu0 %v4166
    %v4250 = vpop.f32.mrf.mxu0
    %v4251 = vadd.f32 0.0, %v4250
    %4252 = vmatmul.f32.gmra.mxu0 %v4168
    %v4253 = vpop.f32.mrf.mxu0
    %v4254 = vadd.f32 0.0, %v4253
    %4255 = vmatmul.f32.gmra.mxu0 %v4170
    %v4256 = vpop.f32.mrf.mxu0
    %v4257 = vadd.f32 0.0, %v4256
    %4258 = vmatmul.f32.gmra.mxu0 %v4172
    %v4259 = vpop.f32.mrf.mxu0
    %v4260 = vadd.f32 0.0, %v4259
    %4261 = vmatmul.f32.gmra.mxu0 %v4174
    %v4262 = vpop.f32.mrf.mxu0
    %v4263 = vadd.f32 0.0, %v4262
    %4264 = vmatmul.f32.gmra.mxu0 %v4176
    %v4265 = vpop.f32.mrf.mxu0
    %v4266 = vadd.f32 0.0, %v4265
    %4267 = vmatmul.f32.gmra.mxu0 %v4178
    %v4268 = vpop.f32.mrf.mxu0
    %v4269 = vadd.f32 0.0, %v4268
    %4270 = vmatmul.f32.gmra.mxu0 %v4180
    %v4271 = vpop.f32.mrf.mxu0
    %v4272 = vadd.f32 0.0, %v4271
    %4273 = vmatmul.f32.gmra.mxu0 %v4182
    %v4274 = vpop.f32.mrf.mxu0
    %v4275 = vadd.f32 0.0, %v4274
    %4276 = vmatmul.f32.gmra.mxu0 %v4184
    %v4277 = vpop.f32.mrf.mxu0
    %v4278 = vadd.f32 0.0, %v4277
    %4279 = vmatmul.f32.gmra.mxu0 %v4186
    %v4280 = vpop.f32.mrf.mxu0
    %v4281 = vadd.f32 0.0, %v4280
    %4282 = vmatmul.f32.gmra.mxu0 %v4188
    %v4283 = vpop.f32.mrf.mxu0
    %v4284 = vadd.f32 0.0, %v4283
    %4285 = vmatmul.f32.gmra.mxu0 %v4190
    %v4286 = vpop.f32.mrf.mxu0
    %v4287 = vadd.f32 0.0, %v4286
    %4288 = vdwg.mxu0
    %v4289 = vsel %vm3677, %v4242, -inf
    %v4290 = vsel %vm3678, %v4245, -inf
    %v4291 = vsel %vm3679, %v4248, -inf
    %v4292 = vsel %vm3680, %v4251, -inf
    %v4293 = vsel %vm3681, %v4254, -inf
    %v4294 = vsel %vm3682, %v4257, -inf
    %v4295 = vsel %vm3683, %v4260, -inf
    %v4296 = vsel %vm3684, %v4263, -inf
    %v4297 = vsel %vm3685, %v4266, -inf
    %v4298 = vsel %vm3686, %v4269, -inf
    %v4299 = vsel %vm3687, %v4272, -inf
    %v4300 = vsel %vm3688, %v4275, -inf
    %v4301 = vsel %vm3689, %v4278, -inf
    %v4302 = vsel %vm3690, %v4281, -inf
    %v4303 = vsel %vm3691, %v4284, -inf
    %v4304 = vsel %vm3692, %v4287, -inf
    %4305 = vmax.xlane.f32.xlu0 %v4289
    %v4306 = vpop.xlane.xlu0 %4305
    %4307 = vmax.xlane.f32.xlu0 %v4290
    %v4308 = vpop.xlane.xlu0 %4307
    %4309 = vmax.xlane.f32.xlu0 %v4291
    %v4310 = vpop.xlane.xlu0 %4309
    %4311 = vmax.xlane.f32.xlu0 %v4292
    %v4312 = vpop.xlane.xlu0 %4311
    %4313 = vmax.xlane.f32.xlu0 %v4293
    %v4314 = vpop.xlane.xlu0 %4313
    %4315 = vmax.xlane.f32.xlu0 %v4294
    %v4316 = vpop.xlane.xlu0 %4315
    %4317 = vmax.xlane.f32.xlu0 %v4295
    %v4318 = vpop.xlane.xlu0 %4317
    %4319 = vmax.xlane.f32.xlu0 %v4296
    %v4320 = vpop.xlane.xlu0 %4319
    %4321 = vmax.xlane.f32.xlu0 %v4297
    %v4322 = vpop.xlane.xlu0 %4321
    %4323 = vmax.xlane.f32.xlu0 %v4298
    %v4324 = vpop.xlane.xlu0 %4323
    %4325 = vmax.xlane.f32.xlu0 %v4299
    %v4326 = vpop.xlane.xlu0 %4325
    %4327 = vmax.xlane.f32.xlu0 %v4300
    %v4328 = vpop.xlane.xlu0 %4327
    %4329 = vmax.xlane.f32.xlu0 %v4301
    %v4330 = vpop.xlane.xlu0 %4329
    %4331 = vmax.xlane.f32.xlu0 %v4302
    %v4332 = vpop.xlane.xlu0 %4331
    %4333 = vmax.xlane.f32.xlu0 %v4303
    %v4334 = vpop.xlane.xlu0 %4333
    %4335 = vmax.xlane.f32.xlu0 %v4304
    %v4336 = vpop.xlane.xlu0 %4335
    %v4337 = vsub.f32 %v4289, %v4306
    %v4338 = vsub.f32 %v4290, %v4308
    %v4339 = vsub.f32 %v4291, %v4310
    %v4340 = vsub.f32 %v4292, %v4312
    %v4341 = vsub.f32 %v4293, %v4314
    %v4342 = vsub.f32 %v4294, %v4316
    %v4343 = vsub.f32 %v4295, %v4318
    %v4344 = vsub.f32 %v4296, %v4320
    %v4345 = vsub.f32 %v4297, %v4322
    %v4346 = vsub.f32 %v4298, %v4324
    %v4347 = vsub.f32 %v4299, %v4326
    %v4348 = vsub.f32 %v4300, %v4328
    %v4349 = vsub.f32 %v4301, %v4330
    %v4350 = vsub.f32 %v4302, %v4332
    %v4351 = vsub.f32 %v4303, %v4334
    %v4352 = vsub.f32 %v4304, %v4336
    %v4353 = vmul.f32 %v4337, 1.442695
    %v4354 = vpow.pop %v4353
    %v4355 = vmul.f32 %v4338, 1.442695
    %v4356 = vpow.pop %v4355
    %v4357 = vmul.f32 %v4339, 1.442695
    %v4358 = vpow.pop %v4357
    %v4359 = vmul.f32 %v4340, 1.442695
    %v4360 = vpow.pop %v4359
    %v4361 = vmul.f32 %v4341, 1.442695
    %v4362 = vpow.pop %v4361
    %v4363 = vmul.f32 %v4342, 1.442695
    %v4364 = vpow.pop %v4363
    %v4365 = vmul.f32 %v4343, 1.442695
    %v4366 = vpow.pop %v4365
    %v4367 = vmul.f32 %v4344, 1.442695
    %v4368 = vpow.pop %v4367
    %v4369 = vmul.f32 %v4345, 1.442695
    %v4370 = vpow.pop %v4369
    %v4371 = vmul.f32 %v4346, 1.442695
    %v4372 = vpow.pop %v4371
    %v4373 = vmul.f32 %v4347, 1.442695
    %v4374 = vpow.pop %v4373
    %v4375 = vmul.f32 %v4348, 1.442695
    %v4376 = vpow.pop %v4375
    %v4377 = vmul.f32 %v4349, 1.442695
    %v4378 = vpow.pop %v4377
    %v4379 = vmul.f32 %v4350, 1.442695
    %v4380 = vpow.pop %v4379
    %v4381 = vmul.f32 %v4351, 1.442695
    %v4382 = vpow.pop %v4381
    %v4383 = vmul.f32 %v4352, 1.442695
    %v4384 = vpow.pop %v4383
    %4385 = vadd.xlane.f32.xlu0 %v4354
    %v4386 = vpop.xlane.xlu0 %4385
    %4387 = vadd.xlane.f32.xlu0 %v4356
    %v4388 = vpop.xlane.xlu0 %4387
    %4389 = vadd.xlane.f32.xlu0 %v4358
    %v4390 = vpop.xlane.xlu0 %4389
    %4391 = vadd.xlane.f32.xlu0 %v4360
    %v4392 = vpop.xlane.xlu0 %4391
    %4393 = vadd.xlane.f32.xlu0 %v4362
    %v4394 = vpop.xlane.xlu0 %4393
    %4395 = vadd.xlane.f32.xlu0 %v4364
    %v4396 = vpop.xlane.xlu0 %4395
    %4397 = vadd.xlane.f32.xlu0 %v4366
    %v4398 = vpop.xlane.xlu0 %4397
    %4399 = vadd.xlane.f32.xlu0 %v4368
    %v4400 = vpop.xlane.xlu0 %4399
    %4401 = vadd.xlane.f32.xlu0 %v4370
    %v4402 = vpop.xlane.xlu0 %4401
    %4403 = vadd.xlane.f32.xlu0 %v4372
    %v4404 = vpop.xlane.xlu0 %4403
    %4405 = vadd.xlane.f32.xlu0 %v4374
    %v4406 = vpop.xlane.xlu0 %4405
    %4407 = vadd.xlane.f32.xlu0 %v4376
    %v4408 = vpop.xlane.xlu0 %4407
    %4409 = vadd.xlane.f32.xlu0 %v4378
    %v4410 = vpop.xlane.xlu0 %4409
    %4411 = vadd.xlane.f32.xlu0 %v4380
    %v4412 = vpop.xlane.xlu0 %4411
    %4413 = vadd.xlane.f32.xlu0 %v4382
    %v4414 = vpop.xlane.xlu0 %4413
    %4415 = vadd.xlane.f32.xlu0 %v4384
    %v4416 = vpop.xlane.xlu0 %4415
    %4433 = vrot.lane.b32.xlu0 %v2885, 64
    %v4434 = vpop.permute.xlu0 %4433
    %4435 = vrot.lane.b32.xlu0 %v2888, 64
    %v4436 = vpop.permute.xlu0 %4435
    %4437 = vrot.lane.b32.xlu0 %v2891, 64
    %v4438 = vpop.permute.xlu0 %4437
    %4439 = vrot.lane.b32.xlu0 %v2894, 64
    %v4440 = vpop.permute.xlu0 %4439
    %4441 = vrot.lane.b32.xlu0 %v2897, 64
    %v4442 = vpop.permute.xlu0 %4441
    %4443 = vrot.lane.b32.xlu0 %v2900, 64
    %v4444 = vpop.permute.xlu0 %4443
    %4445 = vrot.lane.b32.xlu0 %v2903, 64
    %v4446 = vpop.permute.xlu0 %4445
    %4447 = vrot.lane.b32.xlu0 %v2906, 64
    %v4448 = vpop.permute.xlu0 %4447
    %4449 = vrot.lane.b32.xlu0 %v2909, 64
    %v4450 = vpop.permute.xlu0 %4449
    %4451 = vrot.lane.b32.xlu0 %v2912, 64
    %v4452 = vpop.permute.xlu0 %4451
    %4453 = vrot.lane.b32.xlu0 %v2915, 64
    %v4454 = vpop.permute.xlu0 %4453
    %4455 = vrot.lane.b32.xlu0 %v2918, 64
    %v4456 = vpop.permute.xlu0 %4455
    %4457 = vrot.lane.b32.xlu0 %v2921, 64
    %v4458 = vpop.permute.xlu0 %4457
    %4459 = vrot.lane.b32.xlu0 %v2924, 64
    %v4460 = vpop.permute.xlu0 %4459
    %4461 = vrot.lane.b32.xlu0 %v2927, 64
    %v4462 = vpop.permute.xlu0 %4461
    %4463 = vrot.lane.b32.xlu0 %v2930, 64
    %v4464 = vpop.permute.xlu0 %4463
    %4481 = vmatpush.msra.mxu0 %v4464
    %4482 = vmatpush.msra.mxu0 %v4462
    %4483 = vmatpush.msra.mxu0 %v4460
    %4484 = vmatpush.msra.mxu0 %v4458
    %4485 = vmatpush.msra.mxu0 %v4456
    %4486 = vmatpush.msra.mxu0 %v4454
    %4487 = vmatpush.msra.mxu0 %v4452
    %4488 = vmatpush.msra.mxu0 %v4450
    %4489 = vmatpush.msra.mxu0 %v4448
    %4490 = vmatpush.msra.mxu0 %v4446
    %4491 = vmatpush.msra.mxu0 %v4444
    %4492 = vmatpush.msra.mxu0 %v4442
    %4493 = vmatpush.msra.mxu0 %v4440
    %4494 = vmatpush.msra.mxu0 %v4438
    %4495 = vmatpush.msra.mxu0 %v4436
    %4496 = vmatpush.msra.mxu0 %v4434
    %4497 = vmatmul.f32.gmra.mxu0 %v4354
    %v4498 = vpop.f32.mrf.mxu0
    %v4499 = vadd.f32 0.0, %v4498
    %4500 = vmatmul.f32.gmra.mxu0 %v4356
    %v4501 = vpop.f32.mrf.mxu0
    %v4502 = vadd.f32 0.0, %v4501
    %4503 = vmatmul.f32.gmra.mxu0 %v4358
    %v4504 = vpop.f32.mrf.mxu0
    %v4505 = vadd.f32 0.0, %v4504
    %4506 = vmatmul.f32.gmra.mxu0 %v4360
    %v4507 = vpop.f32.mrf.mxu0
    %v4508 = vadd.f32 0.0, %v4507
    %4509 = vmatmul.f32.gmra.mxu0 %v4362
    %v4510 = vpop.f32.mrf.mxu0
    %v4511 = vadd.f32 0.0, %v4510
    %4512 = vmatmul.f32.gmra.mxu0 %v4364
    %v4513 = vpop.f32.mrf.mxu0
    %v4514 = vadd.f32 0.0, %v4513
    %4515 = vmatmul.f32.gmra.mxu0 %v4366
    %v4516 = vpop.f32.mrf.mxu0
    %v4517 = vadd.f32 0.0, %v4516
    %4518 = vmatmul.f32.gmra.mxu0 %v4368
    %v4519 = vpop.f32.mrf.mxu0
    %v4520 = vadd.f32 0.0, %v4519
    %4521 = vmatmul.f32.gmra.mxu0 %v4370
    %v4522 = vpop.f32.mrf.mxu0
    %v4523 = vadd.f32 0.0, %v4522
    %4524 = vmatmul.f32.gmra.mxu0 %v4372
    %v4525 = vpop.f32.mrf.mxu0
    %v4526 = vadd.f32 0.0, %v4525
    %4527 = vmatmul.f32.gmra.mxu0 %v4374
    %v4528 = vpop.f32.mrf.mxu0
    %v4529 = vadd.f32 0.0, %v4528
    %4530 = vmatmul.f32.gmra.mxu0 %v4376
    %v4531 = vpop.f32.mrf.mxu0
    %v4532 = vadd.f32 0.0, %v4531
    %4533 = vmatmul.f32.gmra.mxu0 %v4378
    %v4534 = vpop.f32.mrf.mxu0
    %v4535 = vadd.f32 0.0, %v4534
    %4536 = vmatmul.f32.gmra.mxu0 %v4380
    %v4537 = vpop.f32.mrf.mxu0
    %v4538 = vadd.f32 0.0, %v4537
    %4539 = vmatmul.f32.gmra.mxu0 %v4382
    %v4540 = vpop.f32.mrf.mxu0
    %v4541 = vadd.f32 0.0, %v4540
    %4542 = vmatmul.f32.gmra.mxu0 %v4384
    %v4543 = vpop.f32.mrf.mxu0
    %v4544 = vadd.f32 0.0, %v4543
    %4545 = vdwg.mxu0
    %v4546 = vrcp.pop %v4386
    %v4547 = vrcp.pop %v4388
    %v4548 = vrcp.pop %v4390
    %v4549 = vrcp.pop %v4392
    %v4550 = vrcp.pop %v4394
    %v4551 = vrcp.pop %v4396
    %v4552 = vrcp.pop %v4398
    %v4553 = vrcp.pop %v4400
    %v4554 = vrcp.pop %v4402
    %v4555 = vrcp.pop %v4404
    %v4556 = vrcp.pop %v4406
    %v4557 = vrcp.pop %v4408
    %v4558 = vrcp.pop %v4410
    %v4559 = vrcp.pop %v4412
    %v4560 = vrcp.pop %v4414
    %v4561 = vrcp.pop %v4416
    %v4562 = vmul.f32 %v4499, %v4546
    %v4563 = vmul.f32 %v4502, %v4547
    %v4564 = vmul.f32 %v4505, %v4548
    %v4565 = vmul.f32 %v4508, %v4549
    %v4566 = vmul.f32 %v4511, %v4550
    %v4567 = vmul.f32 %v4514, %v4551
    %v4568 = vmul.f32 %v4517, %v4552
    %v4569 = vmul.f32 %v4520, %v4553
    %v4570 = vmul.f32 %v4523, %v4554
    %v4571 = vmul.f32 %v4526, %v4555
    %v4572 = vmul.f32 %v4529, %v4556
    %v4573 = vmul.f32 %v4532, %v4557
    %v4574 = vmul.f32 %v4535, %v4558
    %v4575 = vmul.f32 %v4538, %v4559
    %v4576 = vmul.f32 %v4541, %v4560
    %v4577 = vmul.f32 %v4544, %v4561
    %4594 = vrot.lane.b32.xlu0 %v4562, 64
    %v4595 = vpop.permute.xlu0 %4594
    %4596 = vrot.lane.b32.xlu0 %v4563, 64
    %v4597 = vpop.permute.xlu0 %4596
    %4598 = vrot.lane.b32.xlu0 %v4564, 64
    %v4599 = vpop.permute.xlu0 %4598
    %4600 = vrot.lane.b32.xlu0 %v4565, 64
    %v4601 = vpop.permute.xlu0 %4600
    %4602 = vrot.lane.b32.xlu0 %v4566, 64
    %v4603 = vpop.permute.xlu0 %4602
    %4604 = vrot.lane.b32.xlu0 %v4567, 64
    %v4605 = vpop.permute.xlu0 %4604
    %4606 = vrot.lane.b32.xlu0 %v4568, 64
    %v4607 = vpop.permute.xlu0 %4606
    %4608 = vrot.lane.b32.xlu0 %v4569, 64
    %v4609 = vpop.permute.xlu0 %4608
    %4610 = vrot.lane.b32.xlu0 %v4570, 64
    %v4611 = vpop.permute.xlu0 %4610
    %4612 = vrot.lane.b32.xlu0 %v4571, 64
    %v4613 = vpop.permute.xlu0 %4612
    %4614 = vrot.lane.b32.xlu0 %v4572, 64
    %v4615 = vpop.permute.xlu0 %4614
    %4616 = vrot.lane.b32.xlu0 %v4573, 64
    %v4617 = vpop.permute.xlu0 %4616
    %4618 = vrot.lane.b32.xlu0 %v4574, 64
    %v4619 = vpop.permute.xlu0 %4618
    %4620 = vrot.lane.b32.xlu0 %v4575, 64
    %v4621 = vpop.permute.xlu0 %4620
    %4622 = vrot.lane.b32.xlu0 %v4576, 64
    %v4623 = vpop.permute.xlu0 %4622
    %4624 = vrot.lane.b32.xlu0 %v4577, 64
    %v4625 = vpop.permute.xlu0 %4624
    %vm4642 = vcmask 1048064
    %4643 = vst.msk [vmem:[#allocation2] sm:$0xff] %vm4642, %v4595
    %4644 = vst.msk [vmem:[#allocation2 + $0x18] sm:$0xff] %vm4642, %v4597
    %4645 = vst.msk [vmem:[#allocation2 + $0x30] sm:$0xff] %vm4642, %v4599
    %4646 = vst.msk [vmem:[#allocation2 + $0x48] sm:$0xff] %vm4642, %v4601
    %4647 = vst.msk [vmem:[#allocation2 + $0x60] sm:$0xff] %vm4642, %v4603
    %4648 = vst.msk [vmem:[#allocation2 + $0x78] sm:$0xff] %vm4642, %v4605
    %4649 = vst.msk [vmem:[#allocation2 + $0x90] sm:$0xff] %vm4642, %v4607
    %4650 = vst.msk [vmem:[#allocation2 + $0xa8] sm:$0xff] %vm4642, %v4609
    %4651 = vst.msk [vmem:[#allocation2 + $0xc0] sm:$0xff] %vm4642, %v4611
    %4652 = vst.msk [vmem:[#allocation2 + $0xd8] sm:$0xff] %vm4642, %v4613
    %4653 = vst.msk [vmem:[#allocation2 + $0xf0] sm:$0xff] %vm4642, %v4615
    %4654 = vst.msk [vmem:[#allocation2 + $0x108] sm:$0xff] %vm4642, %v4617
    %4655 = vst.msk [vmem:[#allocation2 + $0x120] sm:$0xff] %vm4642, %v4619
    %4656 = vst.msk [vmem:[#allocation2 + $0x138] sm:$0xff] %vm4642, %v4621
    %4657 = vst.msk [vmem:[#allocation2 + $0x150] sm:$0xff] %vm4642, %v4623
    %4658 = vst.msk [vmem:[#allocation2 + $0x168] sm:$0xff] %vm4642, %v4625
    %v4660 = vsel %vm3693, %v1190, 0
    %v4663 = vsel %vm3693, %v1193, 0
    %v4666 = vsel %vm3693, %v1196, 0
    %v4669 = vsel %vm3693, %v1199, 0
    %v4672 = vsel %vm3693, %v1202, 0
    %v4675 = vsel %vm3693, %v1205, 0
    %v4678 = vsel %vm3693, %v1208, 0
    %v4681 = vsel %vm3693, %v1211, 0
    %v4684 = vsel %vm3693, %v1214, 0
    %v4687 = vsel %vm3693, %v1217, 0
    %v4690 = vsel %vm3693, %v1220, 0
    %v4693 = vsel %vm3693, %v1223, 0
    %v4696 = vsel %vm3693, %v1226, 0
    %v4699 = vsel %vm3693, %v1229, 0
    %v4702 = vsel %vm3693, %v1232, 0
    %v4705 = vsel %vm3693, %v1235, 0
    %v4708 = vsel %vm3693, %v2207, 0
    %v4711 = vsel %vm3693, %v2210, 0
    %v4714 = vsel %vm3693, %v2213, 0
    %v4717 = vsel %vm3693, %v2216, 0
    %v4720 = vsel %vm3693, %v2219, 0
    %v4723 = vsel %vm3693, %v2222, 0
    %v4726 = vsel %vm3693, %v2225, 0
    %v4729 = vsel %vm3693, %v2228, 0
    %v4732 = vsel %vm3693, %v2231, 0
    %v4735 = vsel %vm3693, %v2234, 0
    %v4738 = vsel %vm3693, %v2237, 0
    %v4741 = vsel %vm3693, %v2240, 0
    %v4744 = vsel %vm3693, %v2243, 0
    %v4747 = vsel %vm3693, %v2246, 0
    %v4750 = vsel %vm3693, %v2249, 0
    %v4753 = vsel %vm3693, %v2252, 0
    %4755 = vmatpush.xpose.msra.mxu0 %v4753
    %4756 = vmatpush.xpose.msra.mxu0 %v4750
    %4757 = vmatpush.xpose.msra.mxu0 %v4747
    %4758 = vmatpush.xpose.msra.mxu0 %v4744
    %4759 = vmatpush.xpose.msra.mxu0 %v4741
    %4760 = vmatpush.xpose.msra.mxu0 %v4738
    %4761 = vmatpush.xpose.msra.mxu0 %v4735
    %4762 = vmatpush.xpose.msra.mxu0 %v4732
    %4763 = vmatpush.xpose.msra.mxu0 %v4729
    %4764 = vmatpush.xpose.msra.mxu0 %v4726
    %4765 = vmatpush.xpose.msra.mxu0 %v4723
    %4766 = vmatpush.xpose.msra.mxu0 %v4720
    %4767 = vmatpush.xpose.msra.mxu0 %v4717
    %4768 = vmatpush.xpose.msra.mxu0 %v4714
    %4769 = vmatpush.xpose.msra.mxu0 %v4711
    %4770 = vmatpush.xpose.msra.mxu0 %v4708
    %4771 = vmatmul.f32.gmra.mxu0 %v4660
    %v4772 = vpop.f32.mrf.mxu0
    %v4773 = vadd.f32 0.0, %v4772
    %4774 = vmatmul.f32.gmra.mxu0 %v4663
    %v4775 = vpop.f32.mrf.mxu0
    %v4776 = vadd.f32 0.0, %v4775
    %4777 = vmatmul.f32.gmra.mxu0 %v4666
    %v4778 = vpop.f32.mrf.mxu0
    %v4779 = vadd.f32 0.0, %v4778
    %4780 = vmatmul.f32.gmra.mxu0 %v4669
    %v4781 = vpop.f32.mrf.mxu0
    %v4782 = vadd.f32 0.0, %v4781
    %4783 = vmatmul.f32.gmra.mxu0 %v4672
    %v4784 = vpop.f32.mrf.mxu0
    %v4785 = vadd.f32 0.0, %v4784
    %4786 = vmatmul.f32.gmra.mxu0 %v4675
    %v4787 = vpop.f32.mrf.mxu0
    %v4788 = vadd.f32 0.0, %v4787
    %4789 = vmatmul.f32.gmra.mxu0 %v4678
    %v4790 = vpop.f32.mrf.mxu0
    %v4791 = vadd.f32 0.0, %v4790
    %4792 = vmatmul.f32.gmra.mxu0 %v4681
    %v4793 = vpop.f32.mrf.mxu0
    %v4794 = vadd.f32 0.0, %v4793
    %4795 = vmatmul.f32.gmra.mxu0 %v4684
    %v4796 = vpop.f32.mrf.mxu0
    %v4797 = vadd.f32 0.0, %v4796
    %4798 = vmatmul.f32.gmra.mxu0 %v4687
    %v4799 = vpop.f32.mrf.mxu0
    %v4800 = vadd.f32 0.0, %v4799
    %4801 = vmatmul.f32.gmra.mxu0 %v4690
    %v4802 = vpop.f32.mrf.mxu0
    %v4803 = vadd.f32 0.0, %v4802
    %4804 = vmatmul.f32.gmra.mxu0 %v4693
    %v4805 = vpop.f32.mrf.mxu0
    %v4806 = vadd.f32 0.0, %v4805
    %4807 = vmatmul.f32.gmra.mxu0 %v4696
    %v4808 = vpop.f32.mrf.mxu0
    %v4809 = vadd.f32 0.0, %v4808
    %4810 = vmatmul.f32.gmra.mxu0 %v4699
    %v4811 = vpop.f32.mrf.mxu0
    %v4812 = vadd.f32 0.0, %v4811
    %4813 = vmatmul.f32.gmra.mxu0 %v4702
    %v4814 = vpop.f32.mrf.mxu0
    %v4815 = vadd.f32 0.0, %v4814
    %4816 = vmatmul.f32.gmra.mxu0 %v4705
    %v4817 = vpop.f32.mrf.mxu0
    %v4818 = vadd.f32 0.0, %v4817
    %4819 = vdwg.mxu0
    %v4820 = vsel %vm3677, %v4773, -inf
    %v4821 = vsel %vm3678, %v4776, -inf
    %v4822 = vsel %vm3679, %v4779, -inf
    %v4823 = vsel %vm3680, %v4782, -inf
    %v4824 = vsel %vm3681, %v4785, -inf
    %v4825 = vsel %vm3682, %v4788, -inf
    %v4826 = vsel %vm3683, %v4791, -inf
    %v4827 = vsel %vm3684, %v4794, -inf
    %v4828 = vsel %vm3685, %v4797, -inf
    %v4829 = vsel %vm3686, %v4800, -inf
    %v4830 = vsel %vm3687, %v4803, -inf
    %v4831 = vsel %vm3688, %v4806, -inf
    %v4832 = vsel %vm3689, %v4809, -inf
    %v4833 = vsel %vm3690, %v4812, -inf
    %v4834 = vsel %vm3691, %v4815, -inf
    %v4835 = vsel %vm3692, %v4818, -inf
    %4836 = vmax.xlane.f32.xlu0 %v4820
    %v4837 = vpop.xlane.xlu0 %4836
    %4838 = vmax.xlane.f32.xlu0 %v4821
    %v4839 = vpop.xlane.xlu0 %4838
    %4840 = vmax.xlane.f32.xlu0 %v4822
    %v4841 = vpop.xlane.xlu0 %4840
    %4842 = vmax.xlane.f32.xlu0 %v4823
    %v4843 = vpop.xlane.xlu0 %4842
    %4844 = vmax.xlane.f32.xlu0 %v4824
    %v4845 = vpop.xlane.xlu0 %4844
    %4846 = vmax.xlane.f32.xlu0 %v4825
    %v4847 = vpop.xlane.xlu0 %4846
    %4848 = vmax.xlane.f32.xlu0 %v4826
    %v4849 = vpop.xlane.xlu0 %4848
    %4850 = vmax.xlane.f32.xlu0 %v4827
    %v4851 = vpop.xlane.xlu0 %4850
    %4852 = vmax.xlane.f32.xlu0 %v4828
    %v4853 = vpop.xlane.xlu0 %4852
    %4854 = vmax.xlane.f32.xlu0 %v4829
    %v4855 = vpop.xlane.xlu0 %4854
    %4856 = vmax.xlane.f32.xlu0 %v4830
    %v4857 = vpop.xlane.xlu0 %4856
    %4858 = vmax.xlane.f32.xlu0 %v4831
    %v4859 = vpop.xlane.xlu0 %4858
    %4860 = vmax.xlane.f32.xlu0 %v4832
    %v4861 = vpop.xlane.xlu0 %4860
    %4862 = vmax.xlane.f32.xlu0 %v4833
    %v4863 = vpop.xlane.xlu0 %4862
    %4864 = vmax.xlane.f32.xlu0 %v4834
    %v4865 = vpop.xlane.xlu0 %4864
    %4866 = vmax.xlane.f32.xlu0 %v4835
    %v4867 = vpop.xlane.xlu0 %4866
    %v4868 = vsub.f32 %v4820, %v4837
    %v4869 = vsub.f32 %v4821, %v4839
    %v4870 = vsub.f32 %v4822, %v4841
    %v4871 = vsub.f32 %v4823, %v4843
    %v4872 = vsub.f32 %v4824, %v4845
    %v4873 = vsub.f32 %v4825, %v4847
    %v4874 = vsub.f32 %v4826, %v4849
    %v4875 = vsub.f32 %v4827, %v4851
    %v4876 = vsub.f32 %v4828, %v4853
    %v4877 = vsub.f32 %v4829, %v4855
    %v4878 = vsub.f32 %v4830, %v4857
    %v4879 = vsub.f32 %v4831, %v4859
    %v4880 = vsub.f32 %v4832, %v4861
    %v4881 = vsub.f32 %v4833, %v4863
    %v4882 = vsub.f32 %v4834, %v4865
    %v4883 = vsub.f32 %v4835, %v4867
    %v4884 = vmul.f32 %v4868, 1.442695
    %v4885 = vpow.pop %v4884
    %v4886 = vmul.f32 %v4869, 1.442695
    %v4887 = vpow.pop %v4886
    %v4888 = vmul.f32 %v4870, 1.442695
    %v4889 = vpow.pop %v4888
    %v4890 = vmul.f32 %v4871, 1.442695
    %v4891 = vpow.pop %v4890
    %v4892 = vmul.f32 %v4872, 1.442695
    %v4893 = vpow.pop %v4892
    %v4894 = vmul.f32 %v4873, 1.442695
    %v4895 = vpow.pop %v4894
    %v4896 = vmul.f32 %v4874, 1.442695
    %v4897 = vpow.pop %v4896
    %v4898 = vmul.f32 %v4875, 1.442695
    %v4899 = vpow.pop %v4898
    %v4900 = vmul.f32 %v4876, 1.442695
    %v4901 = vpow.pop %v4900
    %v4902 = vmul.f32 %v4877, 1.442695
    %v4903 = vpow.pop %v4902
    %v4904 = vmul.f32 %v4878, 1.442695
    %v4905 = vpow.pop %v4904
    %v4906 = vmul.f32 %v4879, 1.442695
    %v4907 = vpow.pop %v4906
    %v4908 = vmul.f32 %v4880, 1.442695
    %v4909 = vpow.pop %v4908
    %v4910 = vmul.f32 %v4881, 1.442695
    %v4911 = vpow.pop %v4910
    %v4912 = vmul.f32 %v4882, 1.442695
    %v4913 = vpow.pop %v4912
    %v4914 = vmul.f32 %v4883, 1.442695
    %v4915 = vpow.pop %v4914
    %4916 = vadd.xlane.f32.xlu0 %v4885
    %v4917 = vpop.xlane.xlu0 %4916
    %4918 = vadd.xlane.f32.xlu0 %v4887
    %v4919 = vpop.xlane.xlu0 %4918
    %4920 = vadd.xlane.f32.xlu0 %v4889
    %v4921 = vpop.xlane.xlu0 %4920
    %4922 = vadd.xlane.f32.xlu0 %v4891
    %v4923 = vpop.xlane.xlu0 %4922
    %4924 = vadd.xlane.f32.xlu0 %v4893
    %v4925 = vpop.xlane.xlu0 %4924
    %4926 = vadd.xlane.f32.xlu0 %v4895
    %v4927 = vpop.xlane.xlu0 %4926
    %4928 = vadd.xlane.f32.xlu0 %v4897
    %v4929 = vpop.xlane.xlu0 %4928
    %4930 = vadd.xlane.f32.xlu0 %v4899
    %v4931 = vpop.xlane.xlu0 %4930
    %4932 = vadd.xlane.f32.xlu0 %v4901
    %v4933 = vpop.xlane.xlu0 %4932
    %4934 = vadd.xlane.f32.xlu0 %v4903
    %v4935 = vpop.xlane.xlu0 %4934
    %4936 = vadd.xlane.f32.xlu0 %v4905
    %v4937 = vpop.xlane.xlu0 %4936
    %4938 = vadd.xlane.f32.xlu0 %v4907
    %v4939 = vpop.xlane.xlu0 %4938
    %4940 = vadd.xlane.f32.xlu0 %v4909
    %v4941 = vpop.xlane.xlu0 %4940
    %4942 = vadd.xlane.f32.xlu0 %v4911
    %v4943 = vpop.xlane.xlu0 %4942
    %4944 = vadd.xlane.f32.xlu0 %v4913
    %v4945 = vpop.xlane.xlu0 %4944
    %4946 = vadd.xlane.f32.xlu0 %v4915
    %v4947 = vpop.xlane.xlu0 %4946
    %4948 = vmatpush.msra.mxu0 %v3269
    %4949 = vmatpush.msra.mxu0 %v3266
    %4950 = vmatpush.msra.mxu0 %v3263
    %4951 = vmatpush.msra.mxu0 %v3260
    %4952 = vmatpush.msra.mxu0 %v3257
    %4953 = vmatpush.msra.mxu0 %v3254
    %4954 = vmatpush.msra.mxu0 %v3251
    %4955 = vmatpush.msra.mxu0 %v3248
    %4956 = vmatpush.msra.mxu0 %v3245
    %4957 = vmatpush.msra.mxu0 %v3242
    %4958 = vmatpush.msra.mxu0 %v3239
    %4959 = vmatpush.msra.mxu0 %v3236
    %4960 = vmatpush.msra.mxu0 %v3233
    %4961 = vmatpush.msra.mxu0 %v3230
    %4962 = vmatpush.msra.mxu0 %v3227
    %4963 = vmatpush.msra.mxu0 %v3224
    %4964 = vmatmul.f32.gmra.mxu0 %v4885
    %v4965 = vpop.f32.mrf.mxu0
    %v4966 = vadd.f32 0.0, %v4965
    %4967 = vmatmul.f32.gmra.mxu0 %v4887
    %v4968 = vpop.f32.mrf.mxu0
    %v4969 = vadd.f32 0.0, %v4968
    %4970 = vmatmul.f32.gmra.mxu0 %v4889
    %v4971 = vpop.f32.mrf.mxu0
    %v4972 = vadd.f32 0.0, %v4971
    %4973 = vmatmul.f32.gmra.mxu0 %v4891
    %v4974 = vpop.f32.mrf.mxu0
    %v4975 = vadd.f32 0.0, %v4974
    %4976 = vmatmul.f32.gmra.mxu0 %v4893
    %v4977 = vpop.f32.mrf.mxu0
    %v4978 = vadd.f32 0.0, %v4977
    %4979 = vmatmul.f32.gmra.mxu0 %v4895
    %v4980 = vpop.f32.mrf.mxu0
    %v4981 = vadd.f32 0.0, %v4980
    %4982 = vmatmul.f32.gmra.mxu0 %v4897
    %v4983 = vpop.f32.mrf.mxu0
    %v4984 = vadd.f32 0.0, %v4983
    %4985 = vmatmul.f32.gmra.mxu0 %v4899
    %v4986 = vpop.f32.mrf.mxu0
    %v4987 = vadd.f32 0.0, %v4986
    %4988 = vmatmul.f32.gmra.mxu0 %v4901
    %v4989 = vpop.f32.mrf.mxu0
    %v4990 = vadd.f32 0.0, %v4989
    %4991 = vmatmul.f32.gmra.mxu0 %v4903
    %v4992 = vpop.f32.mrf.mxu0
    %v4993 = vadd.f32 0.0, %v4992
    %4994 = vmatmul.f32.gmra.mxu0 %v4905
    %v4995 = vpop.f32.mrf.mxu0
    %v4996 = vadd.f32 0.0, %v4995
    %4997 = vmatmul.f32.gmra.mxu0 %v4907
    %v4998 = vpop.f32.mrf.mxu0
    %v4999 = vadd.f32 0.0, %v4998
    %5000 = vmatmul.f32.gmra.mxu0 %v4909
    %v5001 = vpop.f32.mrf.mxu0
    %v5002 = vadd.f32 0.0, %v5001
    %5003 = vmatmul.f32.gmra.mxu0 %v4911
    %v5004 = vpop.f32.mrf.mxu0
    %v5005 = vadd.f32 0.0, %v5004
    %5006 = vmatmul.f32.gmra.mxu0 %v4913
    %v5007 = vpop.f32.mrf.mxu0
    %v5008 = vadd.f32 0.0, %v5007
    %5009 = vmatmul.f32.gmra.mxu0 %v4915
    %v5010 = vpop.f32.mrf.mxu0
    %v5011 = vadd.f32 0.0, %v5010
    %5012 = vdwg.mxu0
    %v5013 = vrcp.pop %v4917
    %v5014 = vrcp.pop %v4919
    %v5015 = vrcp.pop %v4921
    %v5016 = vrcp.pop %v4923
    %v5017 = vrcp.pop %v4925
    %v5018 = vrcp.pop %v4927
    %v5019 = vrcp.pop %v4929
    %v5020 = vrcp.pop %v4931
    %v5021 = vrcp.pop %v4933
    %v5022 = vrcp.pop %v4935
    %v5023 = vrcp.pop %v4937
    %v5024 = vrcp.pop %v4939
    %v5025 = vrcp.pop %v4941
    %v5026 = vrcp.pop %v4943
    %v5027 = vrcp.pop %v4945
    %v5028 = vrcp.pop %v4947
    %v5029 = vmul.f32 %v4966, %v5013
    %v5030 = vmul.f32 %v4969, %v5014
    %v5031 = vmul.f32 %v4972, %v5015
    %v5032 = vmul.f32 %v4975, %v5016
    %v5033 = vmul.f32 %v4978, %v5017
    %v5034 = vmul.f32 %v4981, %v5018
    %v5035 = vmul.f32 %v4984, %v5019
    %v5036 = vmul.f32 %v4987, %v5020
    %v5037 = vmul.f32 %v4990, %v5021
    %v5038 = vmul.f32 %v4993, %v5022
    %v5039 = vmul.f32 %v4996, %v5023
    %v5040 = vmul.f32 %v4999, %v5024
    %v5041 = vmul.f32 %v5002, %v5025
    %v5042 = vmul.f32 %v5005, %v5026
    %v5043 = vmul.f32 %v5008, %v5027
    %v5044 = vmul.f32 %v5011, %v5028
    %5045 = vst.msk [vmem:[#allocation2 + $0x8] sm:$0xff] %vm3693, %v5029
    %5046 = vst.msk [vmem:[#allocation2 + $0x20] sm:$0xff] %vm3693, %v5030
    %5047 = vst.msk [vmem:[#allocation2 + $0x38] sm:$0xff] %vm3693, %v5031
    %5048 = vst.msk [vmem:[#allocation2 + $0x50] sm:$0xff] %vm3693, %v5032
    %5049 = vst.msk [vmem:[#allocation2 + $0x68] sm:$0xff] %vm3693, %v5033
    %5050 = vst.msk [vmem:[#allocation2 + $0x80] sm:$0xff] %vm3693, %v5034
    %5051 = vst.msk [vmem:[#allocation2 + $0x98] sm:$0xff] %vm3693, %v5035
    %5052 = vst.msk [vmem:[#allocation2 + $0xb0] sm:$0xff] %vm3693, %v5036
    %5053 = vst.msk [vmem:[#allocation2 + $0xc8] sm:$0xff] %vm3693, %v5037
    %5054 = vst.msk [vmem:[#allocation2 + $0xe0] sm:$0xff] %vm3693, %v5038
    %5055 = vst.msk [vmem:[#allocation2 + $0xf8] sm:$0xff] %vm3693, %v5039
    %5056 = vst.msk [vmem:[#allocation2 + $0x110] sm:$0xff] %vm3693, %v5040
    %5057 = vst.msk [vmem:[#allocation2 + $0x128] sm:$0xff] %vm3693, %v5041
    %5058 = vst.msk [vmem:[#allocation2 + $0x140] sm:$0xff] %vm3693, %v5042
    %5059 = vst.msk [vmem:[#allocation2 + $0x158] sm:$0xff] %vm3693, %v5043
    %5060 = vst.msk [vmem:[#allocation2 + $0x170] sm:$0xff] %vm3693, %v5044
    %5061 = vrot.lane.b32.xlu0 %v1190, 64
    %v5062 = vpop.permute.xlu0 %5061
    %5063 = vrot.lane.b32.xlu0 %v1193, 64
    %v5064 = vpop.permute.xlu0 %5063
    %5065 = vrot.lane.b32.xlu0 %v1196, 64
    %v5066 = vpop.permute.xlu0 %5065
    %5067 = vrot.lane.b32.xlu0 %v1199, 64
    %v5068 = vpop.permute.xlu0 %5067
    %5069 = vrot.lane.b32.xlu0 %v1202, 64
    %v5070 = vpop.permute.xlu0 %5069
    %5071 = vrot.lane.b32.xlu0 %v1205, 64
    %v5072 = vpop.permute.xlu0 %5071
    %5073 = vrot.lane.b32.xlu0 %v1208, 64
    %v5074 = vpop.permute.xlu0 %5073
    %5075 = vrot.lane.b32.xlu0 %v1211, 64
    %v5076 = vpop.permute.xlu0 %5075
    %5077 = vrot.lane.b32.xlu0 %v1214, 64
    %v5078 = vpop.permute.xlu0 %5077
    %5079 = vrot.lane.b32.xlu0 %v1217, 64
    %v5080 = vpop.permute.xlu0 %5079
    %5081 = vrot.lane.b32.xlu0 %v1220, 64
    %v5082 = vpop.permute.xlu0 %5081
    %5083 = vrot.lane.b32.xlu0 %v1223, 64
    %v5084 = vpop.permute.xlu0 %5083
    %5085 = vrot.lane.b32.xlu0 %v1226, 64
    %v5086 = vpop.permute.xlu0 %5085
    %5087 = vrot.lane.b32.xlu0 %v1229, 64
    %v5088 = vpop.permute.xlu0 %5087
    %5089 = vrot.lane.b32.xlu0 %v1232, 64
    %v5090 = vpop.permute.xlu0 %5089
    %5091 = vrot.lane.b32.xlu0 %v1235, 64
    %v5092 = vpop.permute.xlu0 %5091
    %5093 = vrot.lane.b32.xlu0 %v2207, 64
    %v5094 = vpop.permute.xlu0 %5093
    %5095 = vrot.lane.b32.xlu0 %v2210, 64
    %v5096 = vpop.permute.xlu0 %5095
    %5097 = vrot.lane.b32.xlu0 %v2213, 64
    %v5098 = vpop.permute.xlu0 %5097
    %5099 = vrot.lane.b32.xlu0 %v2216, 64
    %v5100 = vpop.permute.xlu0 %5099
    %5101 = vrot.lane.b32.xlu0 %v2219, 64
    %v5102 = vpop.permute.xlu0 %5101
    %5103 = vrot.lane.b32.xlu0 %v2222, 64
    %v5104 = vpop.permute.xlu0 %5103
    %5105 = vrot.lane.b32.xlu0 %v2225, 64
    %v5106 = vpop.permute.xlu0 %5105
    %5107 = vrot.lane.b32.xlu0 %v2228, 64
    %v5108 = vpop.permute.xlu0 %5107
    %5109 = vrot.lane.b32.xlu0 %v2231, 64
    %v5110 = vpop.permute.xlu0 %5109
    %5111 = vrot.lane.b32.xlu0 %v2234, 64
    %v5112 = vpop.permute.xlu0 %5111
    %5113 = vrot.lane.b32.xlu0 %v2237, 64
    %v5114 = vpop.permute.xlu0 %5113
    %5115 = vrot.lane.b32.xlu0 %v2240, 64
    %v5116 = vpop.permute.xlu0 %5115
    %5117 = vrot.lane.b32.xlu0 %v2243, 64
    %v5118 = vpop.permute.xlu0 %5117
    %5119 = vrot.lane.b32.xlu0 %v2246, 64
    %v5120 = vpop.permute.xlu0 %5119
    %5121 = vrot.lane.b32.xlu0 %v2249, 64
    %v5122 = vpop.permute.xlu0 %5121
    %5123 = vrot.lane.b32.xlu0 %v2252, 64
    %v5124 = vpop.permute.xlu0 %5123
    %v5125 = vsel %vm3693, %v5062, 0
    %v5127 = vsel %vm3693, %v5064, 0
    %v5129 = vsel %vm3693, %v5066, 0
    %v5131 = vsel %vm3693, %v5068, 0
    %v5133 = vsel %vm3693, %v5070, 0
    %v5135 = vsel %vm3693, %v5072, 0
    %v5137 = vsel %vm3693, %v5074, 0
    %v5139 = vsel %vm3693, %v5076, 0
    %v5141 = vsel %vm3693, %v5078, 0
    %v5143 = vsel %vm3693, %v5080, 0
    %v5145 = vsel %vm3693, %v5082, 0
    %v5147 = vsel %vm3693, %v5084, 0
    %v5149 = vsel %vm3693, %v5086, 0
    %v5151 = vsel %vm3693, %v5088, 0
    %v5153 = vsel %vm3693, %v5090, 0
    %v5155 = vsel %vm3693, %v5092, 0
    %v5157 = vsel %vm3693, %v5094, 0
    %v5159 = vsel %vm3693, %v5096, 0
    %v5161 = vsel %vm3693, %v5098, 0
    %v5163 = vsel %vm3693, %v5100, 0
    %v5165 = vsel %vm3693, %v5102, 0
    %v5167 = vsel %vm3693, %v5104, 0
    %v5169 = vsel %vm3693, %v5106, 0
    %v5171 = vsel %vm3693, %v5108, 0
    %v5173 = vsel %vm3693, %v5110, 0
    %v5175 = vsel %vm3693, %v5112, 0
    %v5177 = vsel %vm3693, %v5114, 0
    %v5179 = vsel %vm3693, %v5116, 0
    %v5181 = vsel %vm3693, %v5118, 0
    %v5183 = vsel %vm3693, %v5120, 0
    %v5185 = vsel %vm3693, %v5122, 0
    %v5187 = vsel %vm3693, %v5124, 0
    %5189 = vmatpush.xpose.msra.mxu0 %v5187
    %5190 = vmatpush.xpose.msra.mxu0 %v5185
    %5191 = vmatpush.xpose.msra.mxu0 %v5183
    %5192 = vmatpush.xpose.msra.mxu0 %v5181
    %5193 = vmatpush.xpose.msra.mxu0 %v5179
    %5194 = vmatpush.xpose.msra.mxu0 %v5177
    %5195 = vmatpush.xpose.msra.mxu0 %v5175
    %5196 = vmatpush.xpose.msra.mxu0 %v5173
    %5197 = vmatpush.xpose.msra.mxu0 %v5171
    %5198 = vmatpush.xpose.msra.mxu0 %v5169
    %5199 = vmatpush.xpose.msra.mxu0 %v5167
    %5200 = vmatpush.xpose.msra.mxu0 %v5165
    %5201 = vmatpush.xpose.msra.mxu0 %v5163
    %5202 = vmatpush.xpose.msra.mxu0 %v5161
    %5203 = vmatpush.xpose.msra.mxu0 %v5159
    %5204 = vmatpush.xpose.msra.mxu0 %v5157
    %5205 = vmatmul.f32.gmra.mxu0 %v5125
    %v5206 = vpop.f32.mrf.mxu0
    %v5207 = vadd.f32 0.0, %v5206
    %5208 = vmatmul.f32.gmra.mxu0 %v5127
    %v5209 = vpop.f32.mrf.mxu0
    %v5210 = vadd.f32 0.0, %v5209
    %5211 = vmatmul.f32.gmra.mxu0 %v5129
    %v5212 = vpop.f32.mrf.mxu0
    %v5213 = vadd.f32 0.0, %v5212
    %5214 = vmatmul.f32.gmra.mxu0 %v5131
    %v5215 = vpop.f32.mrf.mxu0
    %v5216 = vadd.f32 0.0, %v5215
    %5217 = vmatmul.f32.gmra.mxu0 %v5133
    %v5218 = vpop.f32.mrf.mxu0
    %v5219 = vadd.f32 0.0, %v5218
    %5220 = vmatmul.f32.gmra.mxu0 %v5135
    %v5221 = vpop.f32.mrf.mxu0
    %v5222 = vadd.f32 0.0, %v5221
    %5223 = vmatmul.f32.gmra.mxu0 %v5137
    %v5224 = vpop.f32.mrf.mxu0
    %v5225 = vadd.f32 0.0, %v5224
    %5226 = vmatmul.f32.gmra.mxu0 %v5139
    %v5227 = vpop.f32.mrf.mxu0
    %v5228 = vadd.f32 0.0, %v5227
    %5229 = vmatmul.f32.gmra.mxu0 %v5141
    %v5230 = vpop.f32.mrf.mxu0
    %v5231 = vadd.f32 0.0, %v5230
    %5232 = vmatmul.f32.gmra.mxu0 %v5143
    %v5233 = vpop.f32.mrf.mxu0
    %v5234 = vadd.f32 0.0, %v5233
    %5235 = vmatmul.f32.gmra.mxu0 %v5145
    %v5236 = vpop.f32.mrf.mxu0
    %v5237 = vadd.f32 0.0, %v5236
    %5238 = vmatmul.f32.gmra.mxu0 %v5147
    %v5239 = vpop.f32.mrf.mxu0
    %v5240 = vadd.f32 0.0, %v5239
    %5241 = vmatmul.f32.gmra.mxu0 %v5149
    %v5242 = vpop.f32.mrf.mxu0
    %v5243 = vadd.f32 0.0, %v5242
    %5244 = vmatmul.f32.gmra.mxu0 %v5151
    %v5245 = vpop.f32.mrf.mxu0
    %v5246 = vadd.f32 0.0, %v5245
    %5247 = vmatmul.f32.gmra.mxu0 %v5153
    %v5248 = vpop.f32.mrf.mxu0
    %v5249 = vadd.f32 0.0, %v5248
    %5250 = vmatmul.f32.gmra.mxu0 %v5155
    %v5251 = vpop.f32.mrf.mxu0
    %v5252 = vadd.f32 0.0, %v5251
    %5253 = vdwg.mxu0
    %v5254 = vsel %vm3677, %v5207, -inf
    %v5255 = vsel %vm3678, %v5210, -inf
    %v5256 = vsel %vm3679, %v5213, -inf
    %v5257 = vsel %vm3680, %v5216, -inf
    %v5258 = vsel %vm3681, %v5219, -inf
    %v5259 = vsel %vm3682, %v5222, -inf
    %v5260 = vsel %vm3683, %v5225, -inf
    %v5261 = vsel %vm3684, %v5228, -inf
    %v5262 = vsel %vm3685, %v5231, -inf
    %v5263 = vsel %vm3686, %v5234, -inf
    %v5264 = vsel %vm3687, %v5237, -inf
    %v5265 = vsel %vm3688, %v5240, -inf
    %v5266 = vsel %vm3689, %v5243, -inf
    %v5267 = vsel %vm3690, %v5246, -inf
    %v5268 = vsel %vm3691, %v5249, -inf
    %v5269 = vsel %vm3692, %v5252, -inf
    %5270 = vmax.xlane.f32.xlu0 %v5254
    %v5271 = vpop.xlane.xlu0 %5270
    %5272 = vmax.xlane.f32.xlu0 %v5255
    %v5273 = vpop.xlane.xlu0 %5272
    %5274 = vmax.xlane.f32.xlu0 %v5256
    %v5275 = vpop.xlane.xlu0 %5274
    %5276 = vmax.xlane.f32.xlu0 %v5257
    %v5277 = vpop.xlane.xlu0 %5276
    %5278 = vmax.xlane.f32.xlu0 %v5258
    %v5279 = vpop.xlane.xlu0 %5278
    %5280 = vmax.xlane.f32.xlu0 %v5259
    %v5281 = vpop.xlane.xlu0 %5280
    %5282 = vmax.xlane.f32.xlu0 %v5260
    %v5283 = vpop.xlane.xlu0 %5282
    %5284 = vmax.xlane.f32.xlu0 %v5261
    %v5285 = vpop.xlane.xlu0 %5284
    %5286 = vmax.xlane.f32.xlu0 %v5262
    %v5287 = vpop.xlane.xlu0 %5286
    %5288 = vmax.xlane.f32.xlu0 %v5263
    %v5289 = vpop.xlane.xlu0 %5288
    %5290 = vmax.xlane.f32.xlu0 %v5264
    %v5291 = vpop.xlane.xlu0 %5290
    %5292 = vmax.xlane.f32.xlu0 %v5265
    %v5293 = vpop.xlane.xlu0 %5292
    %5294 = vmax.xlane.f32.xlu0 %v5266
    %v5295 = vpop.xlane.xlu0 %5294
    %5296 = vmax.xlane.f32.xlu0 %v5267
    %v5297 = vpop.xlane.xlu0 %5296
    %5298 = vmax.xlane.f32.xlu0 %v5268
    %v5299 = vpop.xlane.xlu0 %5298
    %5300 = vmax.xlane.f32.xlu0 %v5269
    %v5301 = vpop.xlane.xlu0 %5300
    %v5302 = vsub.f32 %v5254, %v5271
    %v5303 = vsub.f32 %v5255, %v5273
    %v5304 = vsub.f32 %v5256, %v5275
    %v5305 = vsub.f32 %v5257, %v5277
    %v5306 = vsub.f32 %v5258, %v5279
    %v5307 = vsub.f32 %v5259, %v5281
    %v5308 = vsub.f32 %v5260, %v5283
    %v5309 = vsub.f32 %v5261, %v5285
    %v5310 = vsub.f32 %v5262, %v5287
    %v5311 = vsub.f32 %v5263, %v5289
    %v5312 = vsub.f32 %v5264, %v5291
    %v5313 = vsub.f32 %v5265, %v5293
    %v5314 = vsub.f32 %v5266, %v5295
    %v5315 = vsub.f32 %v5267, %v5297
    %v5316 = vsub.f32 %v5268, %v5299
    %v5317 = vsub.f32 %v5269, %v5301
    %v5318 = vmul.f32 %v5302, 1.442695
    %v5319 = vpow.pop %v5318
    %v5320 = vmul.f32 %v5303, 1.442695
    %v5321 = vpow.pop %v5320
    %v5322 = vmul.f32 %v5304, 1.442695
    %v5323 = vpow.pop %v5322
    %v5324 = vmul.f32 %v5305, 1.442695
    %v5325 = vpow.pop %v5324
    %v5326 = vmul.f32 %v5306, 1.442695
    %v5327 = vpow.pop %v5326
    %v5328 = vmul.f32 %v5307, 1.442695
    %v5329 = vpow.pop %v5328
    %v5330 = vmul.f32 %v5308, 1.442695
    %v5331 = vpow.pop %v5330
    %v5332 = vmul.f32 %v5309, 1.442695
    %v5333 = vpow.pop %v5332
    %v5334 = vmul.f32 %v5310, 1.442695
    %v5335 = vpow.pop %v5334
    %v5336 = vmul.f32 %v5311, 1.442695
    %v5337 = vpow.pop %v5336
    %v5338 = vmul.f32 %v5312, 1.442695
    %v5339 = vpow.pop %v5338
    %v5340 = vmul.f32 %v5313, 1.442695
    %v5341 = vpow.pop %v5340
    %v5342 = vmul.f32 %v5314, 1.442695
    %v5343 = vpow.pop %v5342
    %v5344 = vmul.f32 %v5315, 1.442695
    %v5345 = vpow.pop %v5344
    %v5346 = vmul.f32 %v5316, 1.442695
    %v5347 = vpow.pop %v5346
    %v5348 = vmul.f32 %v5317, 1.442695
    %v5349 = vpow.pop %v5348
    %5350 = vadd.xlane.f32.xlu0 %v5319
    %v5351 = vpop.xlane.xlu0 %5350
    %5352 = vadd.xlane.f32.xlu0 %v5321
    %v5353 = vpop.xlane.xlu0 %5352
    %5354 = vadd.xlane.f32.xlu0 %v5323
    %v5355 = vpop.xlane.xlu0 %5354
    %5356 = vadd.xlane.f32.xlu0 %v5325
    %v5357 = vpop.xlane.xlu0 %5356
    %5358 = vadd.xlane.f32.xlu0 %v5327
    %v5359 = vpop.xlane.xlu0 %5358
    %5360 = vadd.xlane.f32.xlu0 %v5329
    %v5361 = vpop.xlane.xlu0 %5360
    %5362 = vadd.xlane.f32.xlu0 %v5331
    %v5363 = vpop.xlane.xlu0 %5362
    %5364 = vadd.xlane.f32.xlu0 %v5333
    %v5365 = vpop.xlane.xlu0 %5364
    %5366 = vadd.xlane.f32.xlu0 %v5335
    %v5367 = vpop.xlane.xlu0 %5366
    %5368 = vadd.xlane.f32.xlu0 %v5337
    %v5369 = vpop.xlane.xlu0 %5368
    %5370 = vadd.xlane.f32.xlu0 %v5339
    %v5371 = vpop.xlane.xlu0 %5370
    %5372 = vadd.xlane.f32.xlu0 %v5341
    %v5373 = vpop.xlane.xlu0 %5372
    %5374 = vadd.xlane.f32.xlu0 %v5343
    %v5375 = vpop.xlane.xlu0 %5374
    %5376 = vadd.xlane.f32.xlu0 %v5345
    %v5377 = vpop.xlane.xlu0 %5376
    %5378 = vadd.xlane.f32.xlu0 %v5347
    %v5379 = vpop.xlane.xlu0 %5378
    %5380 = vadd.xlane.f32.xlu0 %v5349
    %v5381 = vpop.xlane.xlu0 %5380
    %5398 = vrot.lane.b32.xlu0 %v3224, 64
    %v5399 = vpop.permute.xlu0 %5398
    %5400 = vrot.lane.b32.xlu0 %v3227, 64
    %v5401 = vpop.permute.xlu0 %5400
    %5402 = vrot.lane.b32.xlu0 %v3230, 64
    %v5403 = vpop.permute.xlu0 %5402
    %5404 = vrot.lane.b32.xlu0 %v3233, 64
    %v5405 = vpop.permute.xlu0 %5404
    %5406 = vrot.lane.b32.xlu0 %v3236, 64
    %v5407 = vpop.permute.xlu0 %5406
    %5408 = vrot.lane.b32.xlu0 %v3239, 64
    %v5409 = vpop.permute.xlu0 %5408
    %5410 = vrot.lane.b32.xlu0 %v3242, 64
    %v5411 = vpop.permute.xlu0 %5410
    %5412 = vrot.lane.b32.xlu0 %v3245, 64
    %v5413 = vpop.permute.xlu0 %5412
    %5414 = vrot.lane.b32.xlu0 %v3248, 64
    %v5415 = vpop.permute.xlu0 %5414
    %5416 = vrot.lane.b32.xlu0 %v3251, 64
    %v5417 = vpop.permute.xlu0 %5416
    %5418 = vrot.lane.b32.xlu0 %v3254, 64
    %v5419 = vpop.permute.xlu0 %5418
    %5420 = vrot.lane.b32.xlu0 %v3257, 64
    %v5421 = vpop.permute.xlu0 %5420
    %5422 = vrot.lane.b32.xlu0 %v3260, 64
    %v5423 = vpop.permute.xlu0 %5422
    %5424 = vrot.lane.b32.xlu0 %v3263, 64
    %v5425 = vpop.permute.xlu0 %5424
    %5426 = vrot.lane.b32.xlu0 %v3266, 64
    %v5427 = vpop.permute.xlu0 %5426
    %5428 = vrot.lane.b32.xlu0 %v3269, 64
    %v5429 = vpop.permute.xlu0 %5428
    %5446 = vmatpush.msra.mxu0 %v5429
    %5447 = vmatpush.msra.mxu0 %v5427
    %5448 = vmatpush.msra.mxu0 %v5425
    %5449 = vmatpush.msra.mxu0 %v5423
    %5450 = vmatpush.msra.mxu0 %v5421
    %5451 = vmatpush.msra.mxu0 %v5419
    %5452 = vmatpush.msra.mxu0 %v5417
    %5453 = vmatpush.msra.mxu0 %v5415
    %5454 = vmatpush.msra.mxu0 %v5413
    %5455 = vmatpush.msra.mxu0 %v5411
    %5456 = vmatpush.msra.mxu0 %v5409
    %5457 = vmatpush.msra.mxu0 %v5407
    %5458 = vmatpush.msra.mxu0 %v5405
    %5459 = vmatpush.msra.mxu0 %v5403
    %5460 = vmatpush.msra.mxu0 %v5401
    %5461 = vmatpush.msra.mxu0 %v5399
    %5462 = vmatmul.f32.gmra.mxu0 %v5319
    %v5463 = vpop.f32.mrf.mxu0
    %v5464 = vadd.f32 0.0, %v5463
    %5465 = vmatmul.f32.gmra.mxu0 %v5321
    %v5466 = vpop.f32.mrf.mxu0
    %v5467 = vadd.f32 0.0, %v5466
    %5468 = vmatmul.f32.gmra.mxu0 %v5323
    %v5469 = vpop.f32.mrf.mxu0
    %v5470 = vadd.f32 0.0, %v5469
    %5471 = vmatmul.f32.gmra.mxu0 %v5325
    %v5472 = vpop.f32.mrf.mxu0
    %v5473 = vadd.f32 0.0, %v5472
    %5474 = vmatmul.f32.gmra.mxu0 %v5327
    %v5475 = vpop.f32.mrf.mxu0
    %v5476 = vadd.f32 0.0, %v5475
    %5477 = vmatmul.f32.gmra.mxu0 %v5329
    %v5478 = vpop.f32.mrf.mxu0
    %v5479 = vadd.f32 0.0, %v5478
    %5480 = vmatmul.f32.gmra.mxu0 %v5331
    %v5481 = vpop.f32.mrf.mxu0
    %v5482 = vadd.f32 0.0, %v5481
    %5483 = vmatmul.f32.gmra.mxu0 %v5333
    %v5484 = vpop.f32.mrf.mxu0
    %v5485 = vadd.f32 0.0, %v5484
    %5486 = vmatmul.f32.gmra.mxu0 %v5335
    %v5487 = vpop.f32.mrf.mxu0
    %v5488 = vadd.f32 0.0, %v5487
    %5489 = vmatmul.f32.gmra.mxu0 %v5337
    %v5490 = vpop.f32.mrf.mxu0
    %v5491 = vadd.f32 0.0, %v5490
    %5492 = vmatmul.f32.gmra.mxu0 %v5339
    %v5493 = vpop.f32.mrf.mxu0
    %v5494 = vadd.f32 0.0, %v5493
    %5495 = vmatmul.f32.gmra.mxu0 %v5341
    %v5496 = vpop.f32.mrf.mxu0
    %v5497 = vadd.f32 0.0, %v5496
    %5498 = vmatmul.f32.gmra.mxu0 %v5343
    %v5499 = vpop.f32.mrf.mxu0
    %v5500 = vadd.f32 0.0, %v5499
    %5501 = vmatmul.f32.gmra.mxu0 %v5345
    %v5502 = vpop.f32.mrf.mxu0
    %v5503 = vadd.f32 0.0, %v5502
    %5504 = vmatmul.f32.gmra.mxu0 %v5347
    %v5505 = vpop.f32.mrf.mxu0
    %v5506 = vadd.f32 0.0, %v5505
    %5507 = vmatmul.f32.gmra.mxu0 %v5349
    %v5508 = vpop.f32.mrf.mxu0
    %v5509 = vadd.f32 0.0, %v5508
    %5510 = vdwg.mxu0
    %v5511 = vrcp.pop %v5351
    %v5512 = vrcp.pop %v5353
    %v5513 = vrcp.pop %v5355
    %v5514 = vrcp.pop %v5357
    %v5515 = vrcp.pop %v5359
    %v5516 = vrcp.pop %v5361
    %v5517 = vrcp.pop %v5363
    %v5518 = vrcp.pop %v5365
    %v5519 = vrcp.pop %v5367
    %v5520 = vrcp.pop %v5369
    %v5521 = vrcp.pop %v5371
    %v5522 = vrcp.pop %v5373
    %v5523 = vrcp.pop %v5375
    %v5524 = vrcp.pop %v5377
    %v5525 = vrcp.pop %v5379
    %v5526 = vrcp.pop %v5381
    %v5527 = vmul.f32 %v5464, %v5511
    %v5528 = vmul.f32 %v5467, %v5512
    %v5529 = vmul.f32 %v5470, %v5513
    %v5530 = vmul.f32 %v5473, %v5514
    %v5531 = vmul.f32 %v5476, %v5515
    %v5532 = vmul.f32 %v5479, %v5516
    %v5533 = vmul.f32 %v5482, %v5517
    %v5534 = vmul.f32 %v5485, %v5518
    %v5535 = vmul.f32 %v5488, %v5519
    %v5536 = vmul.f32 %v5491, %v5520
    %v5537 = vmul.f32 %v5494, %v5521
    %v5538 = vmul.f32 %v5497, %v5522
    %v5539 = vmul.f32 %v5500, %v5523
    %v5540 = vmul.f32 %v5503, %v5524
    %v5541 = vmul.f32 %v5506, %v5525
    %v5542 = vmul.f32 %v5509, %v5526
    %5559 = vrot.lane.b32.xlu0 %v5527, 64
    %v5560 = vpop.permute.xlu0 %5559
    %5561 = vrot.lane.b32.xlu0 %v5528, 64
    %v5562 = vpop.permute.xlu0 %5561
    %5563 = vrot.lane.b32.xlu0 %v5529, 64
    %v5564 = vpop.permute.xlu0 %5563
    %5565 = vrot.lane.b32.xlu0 %v5530, 64
    %v5566 = vpop.permute.xlu0 %5565
    %5567 = vrot.lane.b32.xlu0 %v5531, 64
    %v5568 = vpop.permute.xlu0 %5567
    %5569 = vrot.lane.b32.xlu0 %v5532, 64
    %v5570 = vpop.permute.xlu0 %5569
    %5571 = vrot.lane.b32.xlu0 %v5533, 64
    %v5572 = vpop.permute.xlu0 %5571
    %5573 = vrot.lane.b32.xlu0 %v5534, 64
    %v5574 = vpop.permute.xlu0 %5573
    %5575 = vrot.lane.b32.xlu0 %v5535, 64
    %v5576 = vpop.permute.xlu0 %5575
    %5577 = vrot.lane.b32.xlu0 %v5536, 64
    %v5578 = vpop.permute.xlu0 %5577
    %5579 = vrot.lane.b32.xlu0 %v5537, 64
    %v5580 = vpop.permute.xlu0 %5579
    %5581 = vrot.lane.b32.xlu0 %v5538, 64
    %v5582 = vpop.permute.xlu0 %5581
    %5583 = vrot.lane.b32.xlu0 %v5539, 64
    %v5584 = vpop.permute.xlu0 %5583
    %5585 = vrot.lane.b32.xlu0 %v5540, 64
    %v5586 = vpop.permute.xlu0 %5585
    %5587 = vrot.lane.b32.xlu0 %v5541, 64
    %v5588 = vpop.permute.xlu0 %5587
    %5589 = vrot.lane.b32.xlu0 %v5542, 64
    %v5590 = vpop.permute.xlu0 %5589
    %5607 = vst.msk [vmem:[#allocation2 + $0x8] sm:$0xff] %vm4642, %v5560
    %5608 = vst.msk [vmem:[#allocation2 + $0x20] sm:$0xff] %vm4642, %v5562
    %5609 = vst.msk [vmem:[#allocation2 + $0x38] sm:$0xff] %vm4642, %v5564
    %5610 = vst.msk [vmem:[#allocation2 + $0x50] sm:$0xff] %vm4642, %v5566
    %5611 = vst.msk [vmem:[#allocation2 + $0x68] sm:$0xff] %vm4642, %v5568
    %5612 = vst.msk [vmem:[#allocation2 + $0x80] sm:$0xff] %vm4642, %v5570
    %5613 = vst.msk [vmem:[#allocation2 + $0x98] sm:$0xff] %vm4642, %v5572
    %5614 = vst.msk [vmem:[#allocation2 + $0xb0] sm:$0xff] %vm4642, %v5574
    %5615 = vst.msk [vmem:[#allocation2 + $0xc8] sm:$0xff] %vm4642, %v5576
    %5616 = vst.msk [vmem:[#allocation2 + $0xe0] sm:$0xff] %vm4642, %v5578
    %5617 = vst.msk [vmem:[#allocation2 + $0xf8] sm:$0xff] %vm4642, %v5580
    %5618 = vst.msk [vmem:[#allocation2 + $0x110] sm:$0xff] %vm4642, %v5582
    %5619 = vst.msk [vmem:[#allocation2 + $0x128] sm:$0xff] %vm4642, %v5584
    %5620 = vst.msk [vmem:[#allocation2 + $0x140] sm:$0xff] %vm4642, %v5586
    %5621 = vst.msk [vmem:[#allocation2 + $0x158] sm:$0xff] %vm4642, %v5588
    %5622 = vst.msk [vmem:[#allocation2 + $0x170] sm:$0xff] %vm4642, %v5590
    %v5624 = vsel %vm3693, %v1529, 0
    %v5627 = vsel %vm3693, %v1532, 0
    %v5630 = vsel %vm3693, %v1535, 0
    %v5633 = vsel %vm3693, %v1538, 0
    %v5636 = vsel %vm3693, %v1541, 0
    %v5639 = vsel %vm3693, %v1544, 0
    %v5642 = vsel %vm3693, %v1547, 0
    %v5645 = vsel %vm3693, %v1550, 0
    %v5648 = vsel %vm3693, %v1553, 0
    %v5651 = vsel %vm3693, %v1556, 0
    %v5654 = vsel %vm3693, %v1559, 0
    %v5657 = vsel %vm3693, %v1562, 0
    %v5660 = vsel %vm3693, %v1565, 0
    %v5663 = vsel %vm3693, %v1568, 0
    %v5666 = vsel %vm3693, %v1571, 0
    %v5669 = vsel %vm3693, %v1574, 0
    %v5672 = vsel %vm3693, %v2546, 0
    %v5675 = vsel %vm3693, %v2549, 0
    %v5678 = vsel %vm3693, %v2552, 0
    %v5681 = vsel %vm3693, %v2555, 0
    %v5684 = vsel %vm3693, %v2558, 0
    %v5687 = vsel %vm3693, %v2561, 0
    %v5690 = vsel %vm3693, %v2564, 0
    %v5693 = vsel %vm3693, %v2567, 0
    %v5696 = vsel %vm3693, %v2570, 0
    %v5699 = vsel %vm3693, %v2573, 0
    %v5702 = vsel %vm3693, %v2576, 0
    %v5705 = vsel %vm3693, %v2579, 0
    %v5708 = vsel %vm3693, %v2582, 0
    %v5711 = vsel %vm3693, %v2585, 0
    %v5714 = vsel %vm3693, %v2588, 0
    %v5717 = vsel %vm3693, %v2591, 0
    %5719 = vmatpush.xpose.msra.mxu0 %v5717
    %5720 = vmatpush.xpose.msra.mxu0 %v5714
    %5721 = vmatpush.xpose.msra.mxu0 %v5711
    %5722 = vmatpush.xpose.msra.mxu0 %v5708
    %5723 = vmatpush.xpose.msra.mxu0 %v5705
    %5724 = vmatpush.xpose.msra.mxu0 %v5702
    %5725 = vmatpush.xpose.msra.mxu0 %v5699
    %5726 = vmatpush.xpose.msra.mxu0 %v5696
    %5727 = vmatpush.xpose.msra.mxu0 %v5693
    %5728 = vmatpush.xpose.msra.mxu0 %v5690
    %5729 = vmatpush.xpose.msra.mxu0 %v5687
    %5730 = vmatpush.xpose.msra.mxu0 %v5684
    %5731 = vmatpush.xpose.msra.mxu0 %v5681
    %5732 = vmatpush.xpose.msra.mxu0 %v5678
    %5733 = vmatpush.xpose.msra.mxu0 %v5675
    %5734 = vmatpush.xpose.msra.mxu0 %v5672
    %5735 = vmatmul.f32.gmra.mxu0 %v5624
    %v5736 = vpop.f32.mrf.mxu0
    %v5737 = vadd.f32 0.0, %v5736
    %5738 = vmatmul.f32.gmra.mxu0 %v5627
    %v5739 = vpop.f32.mrf.mxu0
    %v5740 = vadd.f32 0.0, %v5739
    %5741 = vmatmul.f32.gmra.mxu0 %v5630
    %v5742 = vpop.f32.mrf.mxu0
    %v5743 = vadd.f32 0.0, %v5742
    %5744 = vmatmul.f32.gmra.mxu0 %v5633
    %v5745 = vpop.f32.mrf.mxu0
    %v5746 = vadd.f32 0.0, %v5745
    %5747 = vmatmul.f32.gmra.mxu0 %v5636
    %v5748 = vpop.f32.mrf.mxu0
    %v5749 = vadd.f32 0.0, %v5748
    %5750 = vmatmul.f32.gmra.mxu0 %v5639
    %v5751 = vpop.f32.mrf.mxu0
    %v5752 = vadd.f32 0.0, %v5751
    %5753 = vmatmul.f32.gmra.mxu0 %v5642
    %v5754 = vpop.f32.mrf.mxu0
    %v5755 = vadd.f32 0.0, %v5754
    %5756 = vmatmul.f32.gmra.mxu0 %v5645
    %v5757 = vpop.f32.mrf.mxu0
    %v5758 = vadd.f32 0.0, %v5757
    %5759 = vmatmul.f32.gmra.mxu0 %v5648
    %v5760 = vpop.f32.mrf.mxu0
    %v5761 = vadd.f32 0.0, %v5760
    %5762 = vmatmul.f32.gmra.mxu0 %v5651
    %v5763 = vpop.f32.mrf.mxu0
    %v5764 = vadd.f32 0.0, %v5763
    %5765 = vmatmul.f32.gmra.mxu0 %v5654
    %v5766 = vpop.f32.mrf.mxu0
    %v5767 = vadd.f32 0.0, %v5766
    %5768 = vmatmul.f32.gmra.mxu0 %v5657
    %v5769 = vpop.f32.mrf.mxu0
    %v5770 = vadd.f32 0.0, %v5769
    %5771 = vmatmul.f32.gmra.mxu0 %v5660
    %v5772 = vpop.f32.mrf.mxu0
    %v5773 = vadd.f32 0.0, %v5772
    %5774 = vmatmul.f32.gmra.mxu0 %v5663
    %v5775 = vpop.f32.mrf.mxu0
    %v5776 = vadd.f32 0.0, %v5775
    %5777 = vmatmul.f32.gmra.mxu0 %v5666
    %v5778 = vpop.f32.mrf.mxu0
    %v5779 = vadd.f32 0.0, %v5778
    %5780 = vmatmul.f32.gmra.mxu0 %v5669
    %v5781 = vpop.f32.mrf.mxu0
    %v5782 = vadd.f32 0.0, %v5781
    %5783 = vdwg.mxu0
    %v5784 = vsel %vm3677, %v5737, -inf
    %v5785 = vsel %vm3678, %v5740, -inf
    %v5786 = vsel %vm3679, %v5743, -inf
    %v5787 = vsel %vm3680, %v5746, -inf
    %v5788 = vsel %vm3681, %v5749, -inf
    %v5789 = vsel %vm3682, %v5752, -inf
    %v5790 = vsel %vm3683, %v5755, -inf
    %v5791 = vsel %vm3684, %v5758, -inf
    %v5792 = vsel %vm3685, %v5761, -inf
    %v5793 = vsel %vm3686, %v5764, -inf
    %v5794 = vsel %vm3687, %v5767, -inf
    %v5795 = vsel %vm3688, %v5770, -inf
    %v5796 = vsel %vm3689, %v5773, -inf
    %v5797 = vsel %vm3690, %v5776, -inf
    %v5798 = vsel %vm3691, %v5779, -inf
    %v5799 = vsel %vm3692, %v5782, -inf
    %5800 = vmax.xlane.f32.xlu0 %v5784
    %v5801 = vpop.xlane.xlu0 %5800
    %5802 = vmax.xlane.f32.xlu0 %v5785
    %v5803 = vpop.xlane.xlu0 %5802
    %5804 = vmax.xlane.f32.xlu0 %v5786
    %v5805 = vpop.xlane.xlu0 %5804
    %5806 = vmax.xlane.f32.xlu0 %v5787
    %v5807 = vpop.xlane.xlu0 %5806
    %5808 = vmax.xlane.f32.xlu0 %v5788
    %v5809 = vpop.xlane.xlu0 %5808
    %5810 = vmax.xlane.f32.xlu0 %v5789
    %v5811 = vpop.xlane.xlu0 %5810
    %5812 = vmax.xlane.f32.xlu0 %v5790
    %v5813 = vpop.xlane.xlu0 %5812
    %5814 = vmax.xlane.f32.xlu0 %v5791
    %v5815 = vpop.xlane.xlu0 %5814
    %5816 = vmax.xlane.f32.xlu0 %v5792
    %v5817 = vpop.xlane.xlu0 %5816
    %5818 = vmax.xlane.f32.xlu0 %v5793
    %v5819 = vpop.xlane.xlu0 %5818
    %5820 = vmax.xlane.f32.xlu0 %v5794
    %v5821 = vpop.xlane.xlu0 %5820
    %5822 = vmax.xlane.f32.xlu0 %v5795
    %v5823 = vpop.xlane.xlu0 %5822
    %5824 = vmax.xlane.f32.xlu0 %v5796
    %v5825 = vpop.xlane.xlu0 %5824
    %5826 = vmax.xlane.f32.xlu0 %v5797
    %v5827 = vpop.xlane.xlu0 %5826
    %5828 = vmax.xlane.f32.xlu0 %v5798
    %v5829 = vpop.xlane.xlu0 %5828
    %5830 = vmax.xlane.f32.xlu0 %v5799
    %v5831 = vpop.xlane.xlu0 %5830
    %v5832 = vsub.f32 %v5784, %v5801
    %v5833 = vsub.f32 %v5785, %v5803
    %v5834 = vsub.f32 %v5786, %v5805
    %v5835 = vsub.f32 %v5787, %v5807
    %v5836 = vsub.f32 %v5788, %v5809
    %v5837 = vsub.f32 %v5789, %v5811
    %v5838 = vsub.f32 %v5790, %v5813
    %v5839 = vsub.f32 %v5791, %v5815
    %v5840 = vsub.f32 %v5792, %v5817
    %v5841 = vsub.f32 %v5793, %v5819
    %v5842 = vsub.f32 %v5794, %v5821
    %v5843 = vsub.f32 %v5795, %v5823
    %v5844 = vsub.f32 %v5796, %v5825
    %v5845 = vsub.f32 %v5797, %v5827
    %v5846 = vsub.f32 %v5798, %v5829
    %v5847 = vsub.f32 %v5799, %v5831
    %v5848 = vmul.f32 %v5832, 1.442695
    %v5849 = vpow.pop %v5848
    %v5850 = vmul.f32 %v5833, 1.442695
    %v5851 = vpow.pop %v5850
    %v5852 = vmul.f32 %v5834, 1.442695
    %v5853 = vpow.pop %v5852
    %v5854 = vmul.f32 %v5835, 1.442695
    %v5855 = vpow.pop %v5854
    %v5856 = vmul.f32 %v5836, 1.442695
    %v5857 = vpow.pop %v5856
    %v5858 = vmul.f32 %v5837, 1.442695
    %v5859 = vpow.pop %v5858
    %v5860 = vmul.f32 %v5838, 1.442695
    %v5861 = vpow.pop %v5860
    %v5862 = vmul.f32 %v5839, 1.442695
    %v5863 = vpow.pop %v5862
    %v5864 = vmul.f32 %v5840, 1.442695
    %v5865 = vpow.pop %v5864
    %v5866 = vmul.f32 %v5841, 1.442695
    %v5867 = vpow.pop %v5866
    %v5868 = vmul.f32 %v5842, 1.442695
    %v5869 = vpow.pop %v5868
    %v5870 = vmul.f32 %v5843, 1.442695
    %v5871 = vpow.pop %v5870
    %v5872 = vmul.f32 %v5844, 1.442695
    %v5873 = vpow.pop %v5872
    %v5874 = vmul.f32 %v5845, 1.442695
    %v5875 = vpow.pop %v5874
    %v5876 = vmul.f32 %v5846, 1.442695
    %v5877 = vpow.pop %v5876
    %v5878 = vmul.f32 %v5847, 1.442695
    %v5879 = vpow.pop %v5878
    %5880 = vadd.xlane.f32.xlu0 %v5849
    %v5881 = vpop.xlane.xlu0 %5880
    %5882 = vadd.xlane.f32.xlu0 %v5851
    %v5883 = vpop.xlane.xlu0 %5882
    %5884 = vadd.xlane.f32.xlu0 %v5853
    %v5885 = vpop.xlane.xlu0 %5884
    %5886 = vadd.xlane.f32.xlu0 %v5855
    %v5887 = vpop.xlane.xlu0 %5886
    %5888 = vadd.xlane.f32.xlu0 %v5857
    %v5889 = vpop.xlane.xlu0 %5888
    %5890 = vadd.xlane.f32.xlu0 %v5859
    %v5891 = vpop.xlane.xlu0 %5890
    %5892 = vadd.xlane.f32.xlu0 %v5861
    %v5893 = vpop.xlane.xlu0 %5892
    %5894 = vadd.xlane.f32.xlu0 %v5863
    %v5895 = vpop.xlane.xlu0 %5894
    %5896 = vadd.xlane.f32.xlu0 %v5865
    %v5897 = vpop.xlane.xlu0 %5896
    %5898 = vadd.xlane.f32.xlu0 %v5867
    %v5899 = vpop.xlane.xlu0 %5898
    %5900 = vadd.xlane.f32.xlu0 %v5869
    %v5901 = vpop.xlane.xlu0 %5900
    %5902 = vadd.xlane.f32.xlu0 %v5871
    %v5903 = vpop.xlane.xlu0 %5902
    %5904 = vadd.xlane.f32.xlu0 %v5873
    %v5905 = vpop.xlane.xlu0 %5904
    %5906 = vadd.xlane.f32.xlu0 %v5875
    %v5907 = vpop.xlane.xlu0 %5906
    %5908 = vadd.xlane.f32.xlu0 %v5877
    %v5909 = vpop.xlane.xlu0 %5908
    %5910 = vadd.xlane.f32.xlu0 %v5879
    %v5911 = vpop.xlane.xlu0 %5910
    %5912 = vmatpush.msra.mxu0 %v3608
    %5913 = vmatpush.msra.mxu0 %v3605
    %5914 = vmatpush.msra.mxu0 %v3602
    %5915 = vmatpush.msra.mxu0 %v3599
    %5916 = vmatpush.msra.mxu0 %v3596
    %5917 = vmatpush.msra.mxu0 %v3593
    %5918 = vmatpush.msra.mxu0 %v3590
    %5919 = vmatpush.msra.mxu0 %v3587
    %5920 = vmatpush.msra.mxu0 %v3584
    %5921 = vmatpush.msra.mxu0 %v3581
    %5922 = vmatpush.msra.mxu0 %v3578
    %5923 = vmatpush.msra.mxu0 %v3575
    %5924 = vmatpush.msra.mxu0 %v3572
    %5925 = vmatpush.msra.mxu0 %v3569
    %5926 = vmatpush.msra.mxu0 %v3566
    %5927 = vmatpush.msra.mxu0 %v3563
    %5928 = vmatmul.f32.gmra.mxu0 %v5849
    %v5929 = vpop.f32.mrf.mxu0
    %v5930 = vadd.f32 0.0, %v5929
    %5931 = vmatmul.f32.gmra.mxu0 %v5851
    %v5932 = vpop.f32.mrf.mxu0
    %v5933 = vadd.f32 0.0, %v5932
    %5934 = vmatmul.f32.gmra.mxu0 %v5853
    %v5935 = vpop.f32.mrf.mxu0
    %v5936 = vadd.f32 0.0, %v5935
    %5937 = vmatmul.f32.gmra.mxu0 %v5855
    %v5938 = vpop.f32.mrf.mxu0
    %v5939 = vadd.f32 0.0, %v5938
    %5940 = vmatmul.f32.gmra.mxu0 %v5857
    %v5941 = vpop.f32.mrf.mxu0
    %v5942 = vadd.f32 0.0, %v5941
    %5943 = vmatmul.f32.gmra.mxu0 %v5859
    %v5944 = vpop.f32.mrf.mxu0
    %v5945 = vadd.f32 0.0, %v5944
    %5946 = vmatmul.f32.gmra.mxu0 %v5861
    %v5947 = vpop.f32.mrf.mxu0
    %v5948 = vadd.f32 0.0, %v5947
    %5949 = vmatmul.f32.gmra.mxu0 %v5863
    %v5950 = vpop.f32.mrf.mxu0
    %v5951 = vadd.f32 0.0, %v5950
    %5952 = vmatmul.f32.gmra.mxu0 %v5865
    %v5953 = vpop.f32.mrf.mxu0
    %v5954 = vadd.f32 0.0, %v5953
    %5955 = vmatmul.f32.gmra.mxu0 %v5867
    %v5956 = vpop.f32.mrf.mxu0
    %v5957 = vadd.f32 0.0, %v5956
    %5958 = vmatmul.f32.gmra.mxu0 %v5869
    %v5959 = vpop.f32.mrf.mxu0
    %v5960 = vadd.f32 0.0, %v5959
    %5961 = vmatmul.f32.gmra.mxu0 %v5871
    %v5962 = vpop.f32.mrf.mxu0
    %v5963 = vadd.f32 0.0, %v5962
    %5964 = vmatmul.f32.gmra.mxu0 %v5873
    %v5965 = vpop.f32.mrf.mxu0
    %v5966 = vadd.f32 0.0, %v5965
    %5967 = vmatmul.f32.gmra.mxu0 %v5875
    %v5968 = vpop.f32.mrf.mxu0
    %v5969 = vadd.f32 0.0, %v5968
    %5970 = vmatmul.f32.gmra.mxu0 %v5877
    %v5971 = vpop.f32.mrf.mxu0
    %v5972 = vadd.f32 0.0, %v5971
    %5973 = vmatmul.f32.gmra.mxu0 %v5879
    %v5974 = vpop.f32.mrf.mxu0
    %v5975 = vadd.f32 0.0, %v5974
    %5976 = vdwg.mxu0
    %v5977 = vrcp.pop %v5881
    %v5978 = vrcp.pop %v5883
    %v5979 = vrcp.pop %v5885
    %v5980 = vrcp.pop %v5887
    %v5981 = vrcp.pop %v5889
    %v5982 = vrcp.pop %v5891
    %v5983 = vrcp.pop %v5893
    %v5984 = vrcp.pop %v5895
    %v5985 = vrcp.pop %v5897
    %v5986 = vrcp.pop %v5899
    %v5987 = vrcp.pop %v5901
    %v5988 = vrcp.pop %v5903
    %v5989 = vrcp.pop %v5905
    %v5990 = vrcp.pop %v5907
    %v5991 = vrcp.pop %v5909
    %v5992 = vrcp.pop %v5911
    %v5993 = vmul.f32 %v5930, %v5977
    %v5994 = vmul.f32 %v5933, %v5978
    %v5995 = vmul.f32 %v5936, %v5979
    %v5996 = vmul.f32 %v5939, %v5980
    %v5997 = vmul.f32 %v5942, %v5981
    %v5998 = vmul.f32 %v5945, %v5982
    %v5999 = vmul.f32 %v5948, %v5983
    %v6000 = vmul.f32 %v5951, %v5984
    %v6001 = vmul.f32 %v5954, %v5985
    %v6002 = vmul.f32 %v5957, %v5986
    %v6003 = vmul.f32 %v5960, %v5987
    %v6004 = vmul.f32 %v5963, %v5988
    %v6005 = vmul.f32 %v5966, %v5989
    %v6006 = vmul.f32 %v5969, %v5990
    %v6007 = vmul.f32 %v5972, %v5991
    %v6008 = vmul.f32 %v5975, %v5992
    %6009 = vst.msk [vmem:[#allocation2 + $0x10] sm:$0xff] %vm3693, %v5993
    %6010 = vst.msk [vmem:[#allocation2 + $0x28] sm:$0xff] %vm3693, %v5994
    %6011 = vst.msk [vmem:[#allocation2 + $0x40] sm:$0xff] %vm3693, %v5995
    %6012 = vst.msk [vmem:[#allocation2 + $0x58] sm:$0xff] %vm3693, %v5996
    %6013 = vst.msk [vmem:[#allocation2 + $0x70] sm:$0xff] %vm3693, %v5997
    %6014 = vst.msk [vmem:[#allocation2 + $0x88] sm:$0xff] %vm3693, %v5998
    %6015 = vst.msk [vmem:[#allocation2 + $0xa0] sm:$0xff] %vm3693, %v5999
    %6016 = vst.msk [vmem:[#allocation2 + $0xb8] sm:$0xff] %vm3693, %v6000
    %6017 = vst.msk [vmem:[#allocation2 + $0xd0] sm:$0xff] %vm3693, %v6001
    %6018 = vst.msk [vmem:[#allocation2 + $0xe8] sm:$0xff] %vm3693, %v6002
    %6019 = vst.msk [vmem:[#allocation2 + $0x100] sm:$0xff] %vm3693, %v6003
    %6020 = vst.msk [vmem:[#allocation2 + $0x118] sm:$0xff] %vm3693, %v6004
    %6021 = vst.msk [vmem:[#allocation2 + $0x130] sm:$0xff] %vm3693, %v6005
    %6022 = vst.msk [vmem:[#allocation2 + $0x148] sm:$0xff] %vm3693, %v6006
    %6023 = vst.msk [vmem:[#allocation2 + $0x160] sm:$0xff] %vm3693, %v6007
    %6024 = vst.msk [vmem:[#allocation2 + $0x178] sm:$0xff] %vm3693, %v6008
    %6025 = vrot.lane.b32.xlu0 %v1529, 64
    %v6026 = vpop.permute.xlu0 %6025
    %6027 = vrot.lane.b32.xlu0 %v1532, 64
    %v6028 = vpop.permute.xlu0 %6027
    %6029 = vrot.lane.b32.xlu0 %v1535, 64
    %v6030 = vpop.permute.xlu0 %6029
    %6031 = vrot.lane.b32.xlu0 %v1538, 64
    %v6032 = vpop.permute.xlu0 %6031
    %6033 = vrot.lane.b32.xlu0 %v1541, 64
    %v6034 = vpop.permute.xlu0 %6033
    %6035 = vrot.lane.b32.xlu0 %v1544, 64
    %v6036 = vpop.permute.xlu0 %6035
    %6037 = vrot.lane.b32.xlu0 %v1547, 64
    %v6038 = vpop.permute.xlu0 %6037
    %6039 = vrot.lane.b32.xlu0 %v1550, 64
    %v6040 = vpop.permute.xlu0 %6039
    %6041 = vrot.lane.b32.xlu0 %v1553, 64
    %v6042 = vpop.permute.xlu0 %6041
    %6043 = vrot.lane.b32.xlu0 %v1556, 64
    %v6044 = vpop.permute.xlu0 %6043
    %6045 = vrot.lane.b32.xlu0 %v1559, 64
    %v6046 = vpop.permute.xlu0 %6045
    %6047 = vrot.lane.b32.xlu0 %v1562, 64
    %v6048 = vpop.permute.xlu0 %6047
    %6049 = vrot.lane.b32.xlu0 %v1565, 64
    %v6050 = vpop.permute.xlu0 %6049
    %6051 = vrot.lane.b32.xlu0 %v1568, 64
    %v6052 = vpop.permute.xlu0 %6051
    %6053 = vrot.lane.b32.xlu0 %v1571, 64
    %v6054 = vpop.permute.xlu0 %6053
    %6055 = vrot.lane.b32.xlu0 %v1574, 64
    %v6056 = vpop.permute.xlu0 %6055
    %6057 = vrot.lane.b32.xlu0 %v2546, 64
    %v6058 = vpop.permute.xlu0 %6057
    %6059 = vrot.lane.b32.xlu0 %v2549, 64
    %v6060 = vpop.permute.xlu0 %6059
    %6061 = vrot.lane.b32.xlu0 %v2552, 64
    %v6062 = vpop.permute.xlu0 %6061
    %6063 = vrot.lane.b32.xlu0 %v2555, 64
    %v6064 = vpop.permute.xlu0 %6063
    %6065 = vrot.lane.b32.xlu0 %v2558, 64
    %v6066 = vpop.permute.xlu0 %6065
    %6067 = vrot.lane.b32.xlu0 %v2561, 64
    %v6068 = vpop.permute.xlu0 %6067
    %6069 = vrot.lane.b32.xlu0 %v2564, 64
    %v6070 = vpop.permute.xlu0 %6069
    %6071 = vrot.lane.b32.xlu0 %v2567, 64
    %v6072 = vpop.permute.xlu0 %6071
    %6073 = vrot.lane.b32.xlu0 %v2570, 64
    %v6074 = vpop.permute.xlu0 %6073
    %6075 = vrot.lane.b32.xlu0 %v2573, 64
    %v6076 = vpop.permute.xlu0 %6075
    %6077 = vrot.lane.b32.xlu0 %v2576, 64
    %v6078 = vpop.permute.xlu0 %6077
    %6079 = vrot.lane.b32.xlu0 %v2579, 64
    %v6080 = vpop.permute.xlu0 %6079
    %6081 = vrot.lane.b32.xlu0 %v2582, 64
    %v6082 = vpop.permute.xlu0 %6081
    %6083 = vrot.lane.b32.xlu0 %v2585, 64
    %v6084 = vpop.permute.xlu0 %6083
    %6085 = vrot.lane.b32.xlu0 %v2588, 64
    %v6086 = vpop.permute.xlu0 %6085
    %6087 = vrot.lane.b32.xlu0 %v2591, 64
    %v6088 = vpop.permute.xlu0 %6087
    %v6089 = vsel %vm3693, %v6026, 0
    %v6091 = vsel %vm3693, %v6028, 0
    %v6093 = vsel %vm3693, %v6030, 0
    %v6095 = vsel %vm3693, %v6032, 0
    %v6097 = vsel %vm3693, %v6034, 0
    %v6099 = vsel %vm3693, %v6036, 0
    %v6101 = vsel %vm3693, %v6038, 0
    %v6103 = vsel %vm3693, %v6040, 0
    %v6105 = vsel %vm3693, %v6042, 0
    %v6107 = vsel %vm3693, %v6044, 0
    %v6109 = vsel %vm3693, %v6046, 0
    %v6111 = vsel %vm3693, %v6048, 0
    %v6113 = vsel %vm3693, %v6050, 0
    %v6115 = vsel %vm3693, %v6052, 0
    %v6117 = vsel %vm3693, %v6054, 0
    %v6119 = vsel %vm3693, %v6056, 0
    %v6121 = vsel %vm3693, %v6058, 0
    %v6123 = vsel %vm3693, %v6060, 0
    %v6125 = vsel %vm3693, %v6062, 0
    %v6127 = vsel %vm3693, %v6064, 0
    %v6129 = vsel %vm3693, %v6066, 0
    %v6131 = vsel %vm3693, %v6068, 0
    %v6133 = vsel %vm3693, %v6070, 0
    %v6135 = vsel %vm3693, %v6072, 0
    %v6137 = vsel %vm3693, %v6074, 0
    %v6139 = vsel %vm3693, %v6076, 0
    %v6141 = vsel %vm3693, %v6078, 0
    %v6143 = vsel %vm3693, %v6080, 0
    %v6145 = vsel %vm3693, %v6082, 0
    %v6147 = vsel %vm3693, %v6084, 0
    %v6149 = vsel %vm3693, %v6086, 0
    %v6151 = vsel %vm3693, %v6088, 0
    %6153 = vmatpush.xpose.msra.mxu0 %v6151
    %6154 = vmatpush.xpose.msra.mxu0 %v6149
    %6155 = vmatpush.xpose.msra.mxu0 %v6147
    %6156 = vmatpush.xpose.msra.mxu0 %v6145
    %6157 = vmatpush.xpose.msra.mxu0 %v6143
    %6158 = vmatpush.xpose.msra.mxu0 %v6141
    %6159 = vmatpush.xpose.msra.mxu0 %v6139
    %6160 = vmatpush.xpose.msra.mxu0 %v6137
    %6161 = vmatpush.xpose.msra.mxu0 %v6135
    %6162 = vmatpush.xpose.msra.mxu0 %v6133
    %6163 = vmatpush.xpose.msra.mxu0 %v6131
    %6164 = vmatpush.xpose.msra.mxu0 %v6129
    %6165 = vmatpush.xpose.msra.mxu0 %v6127
    %6166 = vmatpush.xpose.msra.mxu0 %v6125
    %6167 = vmatpush.xpose.msra.mxu0 %v6123
    %6168 = vmatpush.xpose.msra.mxu0 %v6121
    %6169 = vmatmul.f32.gmra.mxu0 %v6089
    %v6170 = vpop.f32.mrf.mxu0
    %v6171 = vadd.f32 0.0, %v6170
    %6172 = vmatmul.f32.gmra.mxu0 %v6091
    %v6173 = vpop.f32.mrf.mxu0
    %v6174 = vadd.f32 0.0, %v6173
    %6175 = vmatmul.f32.gmra.mxu0 %v6093
    %v6176 = vpop.f32.mrf.mxu0
    %v6177 = vadd.f32 0.0, %v6176
    %6178 = vmatmul.f32.gmra.mxu0 %v6095
    %v6179 = vpop.f32.mrf.mxu0
    %v6180 = vadd.f32 0.0, %v6179
    %6181 = vmatmul.f32.gmra.mxu0 %v6097
    %v6182 = vpop.f32.mrf.mxu0
    %v6183 = vadd.f32 0.0, %v6182
    %6184 = vmatmul.f32.gmra.mxu0 %v6099
    %v6185 = vpop.f32.mrf.mxu0
    %v6186 = vadd.f32 0.0, %v6185
    %6187 = vmatmul.f32.gmra.mxu0 %v6101
    %v6188 = vpop.f32.mrf.mxu0
    %v6189 = vadd.f32 0.0, %v6188
    %6190 = vmatmul.f32.gmra.mxu0 %v6103
    %v6191 = vpop.f32.mrf.mxu0
    %v6192 = vadd.f32 0.0, %v6191
    %6193 = vmatmul.f32.gmra.mxu0 %v6105
    %v6194 = vpop.f32.mrf.mxu0
    %v6195 = vadd.f32 0.0, %v6194
    %6196 = vmatmul.f32.gmra.mxu0 %v6107
    %v6197 = vpop.f32.mrf.mxu0
    %v6198 = vadd.f32 0.0, %v6197
    %6199 = vmatmul.f32.gmra.mxu0 %v6109
    %v6200 = vpop.f32.mrf.mxu0
    %v6201 = vadd.f32 0.0, %v6200
    %6202 = vmatmul.f32.gmra.mxu0 %v6111
    %v6203 = vpop.f32.mrf.mxu0
    %v6204 = vadd.f32 0.0, %v6203
    %6205 = vmatmul.f32.gmra.mxu0 %v6113
    %v6206 = vpop.f32.mrf.mxu0
    %v6207 = vadd.f32 0.0, %v6206
    %6208 = vmatmul.f32.gmra.mxu0 %v6115
    %v6209 = vpop.f32.mrf.mxu0
    %v6210 = vadd.f32 0.0, %v6209
    %6211 = vmatmul.f32.gmra.mxu0 %v6117
    %v6212 = vpop.f32.mrf.mxu0
    %v6213 = vadd.f32 0.0, %v6212
    %6214 = vmatmul.f32.gmra.mxu0 %v6119
    %v6215 = vpop.f32.mrf.mxu0
    %v6216 = vadd.f32 0.0, %v6215
    %6217 = vdwg.mxu0
    %v6218 = vsel %vm3677, %v6171, -inf
    %v6219 = vsel %vm3678, %v6174, -inf
    %v6220 = vsel %vm3679, %v6177, -inf
    %v6221 = vsel %vm3680, %v6180, -inf
    %v6222 = vsel %vm3681, %v6183, -inf
    %v6223 = vsel %vm3682, %v6186, -inf
    %v6224 = vsel %vm3683, %v6189, -inf
    %v6225 = vsel %vm3684, %v6192, -inf
    %v6226 = vsel %vm3685, %v6195, -inf
    %v6227 = vsel %vm3686, %v6198, -inf
    %v6228 = vsel %vm3687, %v6201, -inf
    %v6229 = vsel %vm3688, %v6204, -inf
    %v6230 = vsel %vm3689, %v6207, -inf
    %v6231 = vsel %vm3690, %v6210, -inf
    %v6232 = vsel %vm3691, %v6213, -inf
    %v6233 = vsel %vm3692, %v6216, -inf
    %6234 = vmax.xlane.f32.xlu0 %v6218
    %v6235 = vpop.xlane.xlu0 %6234
    %6236 = vmax.xlane.f32.xlu0 %v6219
    %v6237 = vpop.xlane.xlu0 %6236
    %6238 = vmax.xlane.f32.xlu0 %v6220
    %v6239 = vpop.xlane.xlu0 %6238
    %6240 = vmax.xlane.f32.xlu0 %v6221
    %v6241 = vpop.xlane.xlu0 %6240
    %6242 = vmax.xlane.f32.xlu0 %v6222
    %v6243 = vpop.xlane.xlu0 %6242
    %6244 = vmax.xlane.f32.xlu0 %v6223
    %v6245 = vpop.xlane.xlu0 %6244
    %6246 = vmax.xlane.f32.xlu0 %v6224
    %v6247 = vpop.xlane.xlu0 %6246
    %6248 = vmax.xlane.f32.xlu0 %v6225
    %v6249 = vpop.xlane.xlu0 %6248
    %6250 = vmax.xlane.f32.xlu0 %v6226
    %v6251 = vpop.xlane.xlu0 %6250
    %6252 = vmax.xlane.f32.xlu0 %v6227
    %v6253 = vpop.xlane.xlu0 %6252
    %6254 = vmax.xlane.f32.xlu0 %v6228
    %v6255 = vpop.xlane.xlu0 %6254
    %6256 = vmax.xlane.f32.xlu0 %v6229
    %v6257 = vpop.xlane.xlu0 %6256
    %6258 = vmax.xlane.f32.xlu0 %v6230
    %v6259 = vpop.xlane.xlu0 %6258
    %6260 = vmax.xlane.f32.xlu0 %v6231
    %v6261 = vpop.xlane.xlu0 %6260
    %6262 = vmax.xlane.f32.xlu0 %v6232
    %v6263 = vpop.xlane.xlu0 %6262
    %6264 = vmax.xlane.f32.xlu0 %v6233
    %v6265 = vpop.xlane.xlu0 %6264
    %v6266 = vsub.f32 %v6218, %v6235
    %v6267 = vsub.f32 %v6219, %v6237
    %v6268 = vsub.f32 %v6220, %v6239
    %v6269 = vsub.f32 %v6221, %v6241
    %v6270 = vsub.f32 %v6222, %v6243
    %v6271 = vsub.f32 %v6223, %v6245
    %v6272 = vsub.f32 %v6224, %v6247
    %v6273 = vsub.f32 %v6225, %v6249
    %v6274 = vsub.f32 %v6226, %v6251
    %v6275 = vsub.f32 %v6227, %v6253
    %v6276 = vsub.f32 %v6228, %v6255
    %v6277 = vsub.f32 %v6229, %v6257
    %v6278 = vsub.f32 %v6230, %v6259
    %v6279 = vsub.f32 %v6231, %v6261
    %v6280 = vsub.f32 %v6232, %v6263
    %v6281 = vsub.f32 %v6233, %v6265
    %v6282 = vmul.f32 %v6266, 1.442695
    %v6283 = vpow.pop %v6282
    %v6284 = vmul.f32 %v6267, 1.442695
    %v6285 = vpow.pop %v6284
    %v6286 = vmul.f32 %v6268, 1.442695
    %v6287 = vpow.pop %v6286
    %v6288 = vmul.f32 %v6269, 1.442695
    %v6289 = vpow.pop %v6288
    %v6290 = vmul.f32 %v6270, 1.442695
    %v6291 = vpow.pop %v6290
    %v6292 = vmul.f32 %v6271, 1.442695
    %v6293 = vpow.pop %v6292
    %v6294 = vmul.f32 %v6272, 1.442695
    %v6295 = vpow.pop %v6294
    %v6296 = vmul.f32 %v6273, 1.442695
    %v6297 = vpow.pop %v6296
    %v6298 = vmul.f32 %v6274, 1.442695
    %v6299 = vpow.pop %v6298
    %v6300 = vmul.f32 %v6275, 1.442695
    %v6301 = vpow.pop %v6300
    %v6302 = vmul.f32 %v6276, 1.442695
    %v6303 = vpow.pop %v6302
    %v6304 = vmul.f32 %v6277, 1.442695
    %v6305 = vpow.pop %v6304
    %v6306 = vmul.f32 %v6278, 1.442695
    %v6307 = vpow.pop %v6306
    %v6308 = vmul.f32 %v6279, 1.442695
    %v6309 = vpow.pop %v6308
    %v6310 = vmul.f32 %v6280, 1.442695
    %v6311 = vpow.pop %v6310
    %v6312 = vmul.f32 %v6281, 1.442695
    %v6313 = vpow.pop %v6312
    %6314 = vadd.xlane.f32.xlu0 %v6283
    %v6315 = vpop.xlane.xlu0 %6314
    %6316 = vadd.xlane.f32.xlu0 %v6285
    %v6317 = vpop.xlane.xlu0 %6316
    %6318 = vadd.xlane.f32.xlu0 %v6287
    %v6319 = vpop.xlane.xlu0 %6318
    %6320 = vadd.xlane.f32.xlu0 %v6289
    %v6321 = vpop.xlane.xlu0 %6320
    %6322 = vadd.xlane.f32.xlu0 %v6291
    %v6323 = vpop.xlane.xlu0 %6322
    %6324 = vadd.xlane.f32.xlu0 %v6293
    %v6325 = vpop.xlane.xlu0 %6324
    %6326 = vadd.xlane.f32.xlu0 %v6295
    %v6327 = vpop.xlane.xlu0 %6326
    %6328 = vadd.xlane.f32.xlu0 %v6297
    %v6329 = vpop.xlane.xlu0 %6328
    %6330 = vadd.xlane.f32.xlu0 %v6299
    %v6331 = vpop.xlane.xlu0 %6330
    %6332 = vadd.xlane.f32.xlu0 %v6301
    %v6333 = vpop.xlane.xlu0 %6332
    %6334 = vadd.xlane.f32.xlu0 %v6303
    %v6335 = vpop.xlane.xlu0 %6334
    %6336 = vadd.xlane.f32.xlu0 %v6305
    %v6337 = vpop.xlane.xlu0 %6336
    %6338 = vadd.xlane.f32.xlu0 %v6307
    %v6339 = vpop.xlane.xlu0 %6338
    %6340 = vadd.xlane.f32.xlu0 %v6309
    %v6341 = vpop.xlane.xlu0 %6340
    %6342 = vadd.xlane.f32.xlu0 %v6311
    %v6343 = vpop.xlane.xlu0 %6342
    %6344 = vadd.xlane.f32.xlu0 %v6313
    %v6345 = vpop.xlane.xlu0 %6344
    %6362 = vrot.lane.b32.xlu0 %v3563, 64
    %v6363 = vpop.permute.xlu0 %6362
    %6364 = vrot.lane.b32.xlu0 %v3566, 64
    %v6365 = vpop.permute.xlu0 %6364
    %6366 = vrot.lane.b32.xlu0 %v3569, 64
    %v6367 = vpop.permute.xlu0 %6366
    %6368 = vrot.lane.b32.xlu0 %v3572, 64
    %v6369 = vpop.permute.xlu0 %6368
    %6370 = vrot.lane.b32.xlu0 %v3575, 64
    %v6371 = vpop.permute.xlu0 %6370
    %6372 = vrot.lane.b32.xlu0 %v3578, 64
    %v6373 = vpop.permute.xlu0 %6372
    %6374 = vrot.lane.b32.xlu0 %v3581, 64
    %v6375 = vpop.permute.xlu0 %6374
    %6376 = vrot.lane.b32.xlu0 %v3584, 64
    %v6377 = vpop.permute.xlu0 %6376
    %6378 = vrot.lane.b32.xlu0 %v3587, 64
    %v6379 = vpop.permute.xlu0 %6378
    %6380 = vrot.lane.b32.xlu0 %v3590, 64
    %v6381 = vpop.permute.xlu0 %6380
    %6382 = vrot.lane.b32.xlu0 %v3593, 64
    %v6383 = vpop.permute.xlu0 %6382
    %6384 = vrot.lane.b32.xlu0 %v3596, 64
    %v6385 = vpop.permute.xlu0 %6384
    %6386 = vrot.lane.b32.xlu0 %v3599, 64
    %v6387 = vpop.permute.xlu0 %6386
    %6388 = vrot.lane.b32.xlu0 %v3602, 64
    %v6389 = vpop.permute.xlu0 %6388
    %6390 = vrot.lane.b32.xlu0 %v3605, 64
    %v6391 = vpop.permute.xlu0 %6390
    %6392 = vrot.lane.b32.xlu0 %v3608, 64
    %v6393 = vpop.permute.xlu0 %6392
    %6410 = vmatpush.msra.mxu0 %v6393
    %6411 = vmatpush.msra.mxu0 %v6391
    %6412 = vmatpush.msra.mxu0 %v6389
    %6413 = vmatpush.msra.mxu0 %v6387
    %6414 = vmatpush.msra.mxu0 %v6385
    %6415 = vmatpush.msra.mxu0 %v6383
    %6416 = vmatpush.msra.mxu0 %v6381
    %6417 = vmatpush.msra.mxu0 %v6379
    %6418 = vmatpush.msra.mxu0 %v6377
    %6419 = vmatpush.msra.mxu0 %v6375
    %6420 = vmatpush.msra.mxu0 %v6373
    %6421 = vmatpush.msra.mxu0 %v6371
    %6422 = vmatpush.msra.mxu0 %v6369
    %6423 = vmatpush.msra.mxu0 %v6367
    %6424 = vmatpush.msra.mxu0 %v6365
    %6425 = vmatpush.msra.mxu0 %v6363
    %6426 = vmatmul.f32.gmra.mxu0 %v6283
    %v6427 = vpop.f32.mrf.mxu0
    %v6428 = vadd.f32 0.0, %v6427
    %6429 = vmatmul.f32.gmra.mxu0 %v6285
    %v6430 = vpop.f32.mrf.mxu0
    %v6431 = vadd.f32 0.0, %v6430
    %6432 = vmatmul.f32.gmra.mxu0 %v6287
    %v6433 = vpop.f32.mrf.mxu0
    %v6434 = vadd.f32 0.0, %v6433
    %6435 = vmatmul.f32.gmra.mxu0 %v6289
    %v6436 = vpop.f32.mrf.mxu0
    %v6437 = vadd.f32 0.0, %v6436
    %6438 = vmatmul.f32.gmra.mxu0 %v6291
    %v6439 = vpop.f32.mrf.mxu0
    %v6440 = vadd.f32 0.0, %v6439
    %6441 = vmatmul.f32.gmra.mxu0 %v6293
    %v6442 = vpop.f32.mrf.mxu0
    %v6443 = vadd.f32 0.0, %v6442
    %6444 = vmatmul.f32.gmra.mxu0 %v6295
    %v6445 = vpop.f32.mrf.mxu0
    %v6446 = vadd.f32 0.0, %v6445
    %6447 = vmatmul.f32.gmra.mxu0 %v6297
    %v6448 = vpop.f32.mrf.mxu0
    %v6449 = vadd.f32 0.0, %v6448
    %6450 = vmatmul.f32.gmra.mxu0 %v6299
    %v6451 = vpop.f32.mrf.mxu0
    %v6452 = vadd.f32 0.0, %v6451
    %6453 = vmatmul.f32.gmra.mxu0 %v6301
    %v6454 = vpop.f32.mrf.mxu0
    %v6455 = vadd.f32 0.0, %v6454
    %6456 = vmatmul.f32.gmra.mxu0 %v6303
    %v6457 = vpop.f32.mrf.mxu0
    %v6458 = vadd.f32 0.0, %v6457
    %6459 = vmatmul.f32.gmra.mxu0 %v6305
    %v6460 = vpop.f32.mrf.mxu0
    %v6461 = vadd.f32 0.0, %v6460
    %6462 = vmatmul.f32.gmra.mxu0 %v6307
    %v6463 = vpop.f32.mrf.mxu0
    %v6464 = vadd.f32 0.0, %v6463
    %6465 = vmatmul.f32.gmra.mxu0 %v6309
    %v6466 = vpop.f32.mrf.mxu0
    %v6467 = vadd.f32 0.0, %v6466
    %6468 = vmatmul.f32.gmra.mxu0 %v6311
    %v6469 = vpop.f32.mrf.mxu0
    %v6470 = vadd.f32 0.0, %v6469
    %6471 = vmatmul.f32.gmra.mxu0 %v6313
    %v6472 = vpop.f32.mrf.mxu0
    %v6473 = vadd.f32 0.0, %v6472
    %6474 = vdwg.mxu0
    %v6475 = vrcp.pop %v6315
    %v6476 = vrcp.pop %v6317
    %v6477 = vrcp.pop %v6319
    %v6478 = vrcp.pop %v6321
    %v6479 = vrcp.pop %v6323
    %v6480 = vrcp.pop %v6325
    %v6481 = vrcp.pop %v6327
    %v6482 = vrcp.pop %v6329
    %v6483 = vrcp.pop %v6331
    %v6484 = vrcp.pop %v6333
    %v6485 = vrcp.pop %v6335
    %v6486 = vrcp.pop %v6337
    %v6487 = vrcp.pop %v6339
    %v6488 = vrcp.pop %v6341
    %v6489 = vrcp.pop %v6343
    %v6490 = vrcp.pop %v6345
    %v6491 = vmul.f32 %v6428, %v6475
    %v6492 = vmul.f32 %v6431, %v6476
    %v6493 = vmul.f32 %v6434, %v6477
    %v6494 = vmul.f32 %v6437, %v6478
    %v6495 = vmul.f32 %v6440, %v6479
    %v6496 = vmul.f32 %v6443, %v6480
    %v6497 = vmul.f32 %v6446, %v6481
    %v6498 = vmul.f32 %v6449, %v6482
    %v6499 = vmul.f32 %v6452, %v6483
    %v6500 = vmul.f32 %v6455, %v6484
    %v6501 = vmul.f32 %v6458, %v6485
    %v6502 = vmul.f32 %v6461, %v6486
    %v6503 = vmul.f32 %v6464, %v6487
    %v6504 = vmul.f32 %v6467, %v6488
    %v6505 = vmul.f32 %v6470, %v6489
    %v6506 = vmul.f32 %v6473, %v6490
    %6523 = vrot.lane.b32.xlu0 %v6491, 64
    %v6524 = vpop.permute.xlu0 %6523
    %6525 = vrot.lane.b32.xlu0 %v6492, 64
    %v6526 = vpop.permute.xlu0 %6525
    %6527 = vrot.lane.b32.xlu0 %v6493, 64
    %v6528 = vpop.permute.xlu0 %6527
    %6529 = vrot.lane.b32.xlu0 %v6494, 64
    %v6530 = vpop.permute.xlu0 %6529
    %6531 = vrot.lane.b32.xlu0 %v6495, 64
    %v6532 = vpop.permute.xlu0 %6531
    %6533 = vrot.lane.b32.xlu0 %v6496, 64
    %v6534 = vpop.permute.xlu0 %6533
    %6535 = vrot.lane.b32.xlu0 %v6497, 64
    %v6536 = vpop.permute.xlu0 %6535
    %6537 = vrot.lane.b32.xlu0 %v6498, 64
    %v6538 = vpop.permute.xlu0 %6537
    %6539 = vrot.lane.b32.xlu0 %v6499, 64
    %v6540 = vpop.permute.xlu0 %6539
    %6541 = vrot.lane.b32.xlu0 %v6500, 64
    %v6542 = vpop.permute.xlu0 %6541
    %6543 = vrot.lane.b32.xlu0 %v6501, 64
    %v6544 = vpop.permute.xlu0 %6543
    %6545 = vrot.lane.b32.xlu0 %v6502, 64
    %v6546 = vpop.permute.xlu0 %6545
    %6547 = vrot.lane.b32.xlu0 %v6503, 64
    %v6548 = vpop.permute.xlu0 %6547
    %6549 = vrot.lane.b32.xlu0 %v6504, 64
    %v6550 = vpop.permute.xlu0 %6549
    %6551 = vrot.lane.b32.xlu0 %v6505, 64
    %v6552 = vpop.permute.xlu0 %6551
    %6553 = vrot.lane.b32.xlu0 %v6506, 64
    %v6554 = vpop.permute.xlu0 %6553
    %6571 = vst.msk [vmem:[#allocation2 + $0x10] sm:$0xff] %vm4642, %v6524
    %6572 = vst.msk [vmem:[#allocation2 + $0x28] sm:$0xff] %vm4642, %v6526
    %6573 = vst.msk [vmem:[#allocation2 + $0x40] sm:$0xff] %vm4642, %v6528
    %6574 = vst.msk [vmem:[#allocation2 + $0x58] sm:$0xff] %vm4642, %v6530
    %6575 = vst.msk [vmem:[#allocation2 + $0x70] sm:$0xff] %vm4642, %v6532
    %6576 = vst.msk [vmem:[#allocation2 + $0x88] sm:$0xff] %vm4642, %v6534
    %6577 = vst.msk [vmem:[#allocation2 + $0xa0] sm:$0xff] %vm4642, %v6536
    %6578 = vst.msk [vmem:[#allocation2 + $0xb8] sm:$0xff] %vm4642, %v6538
    %6579 = vst.msk [vmem:[#allocation2 + $0xd0] sm:$0xff] %vm4642, %v6540
    %6580 = vst.msk [vmem:[#allocation2 + $0xe8] sm:$0xff] %vm4642, %v6542
    %6581 = vst.msk [vmem:[#allocation2 + $0x100] sm:$0xff] %vm4642, %v6544
    %6582 = vst.msk [vmem:[#allocation2 + $0x118] sm:$0xff] %vm4642, %v6546
    %6583 = vst.msk [vmem:[#allocation2 + $0x130] sm:$0xff] %vm4642, %v6548
    %6584 = vst.msk [vmem:[#allocation2 + $0x148] sm:$0xff] %vm4642, %v6550
    %6585 = vst.msk [vmem:[#allocation2 + $0x160] sm:$0xff] %vm4642, %v6552
    %6586 = vst.msk [vmem:[#allocation2 + $0x178] sm:$0xff] %vm4642, %v6554
    %v6588 = vsel %vm3693, %v899, 0
    %v6591 = vsel %vm3693, %v902, 0
    %v6594 = vsel %vm3693, %v905, 0
    %v6597 = vsel %vm3693, %v908, 0
    %v6600 = vsel %vm3693, %v911, 0
    %v6603 = vsel %vm3693, %v914, 0
    %v6606 = vsel %vm3693, %v917, 0
    %v6609 = vsel %vm3693, %v920, 0
    %v6612 = vsel %vm3693, %v923, 0
    %v6615 = vsel %vm3693, %v926, 0
    %v6618 = vsel %vm3693, %v929, 0
    %v6621 = vsel %vm3693, %v932, 0
    %v6624 = vsel %vm3693, %v935, 0
    %v6627 = vsel %vm3693, %v938, 0
    %v6630 = vsel %vm3693, %v941, 0
    %v6633 = vsel %vm3693, %v944, 0
    %v6636 = vsel %vm3693, %v1916, 0
    %v6639 = vsel %vm3693, %v1919, 0
    %v6642 = vsel %vm3693, %v1922, 0
    %v6645 = vsel %vm3693, %v1925, 0
    %v6648 = vsel %vm3693, %v1928, 0
    %v6651 = vsel %vm3693, %v1931, 0
    %v6654 = vsel %vm3693, %v1934, 0
    %v6657 = vsel %vm3693, %v1937, 0
    %v6660 = vsel %vm3693, %v1940, 0
    %v6663 = vsel %vm3693, %v1943, 0
    %v6666 = vsel %vm3693, %v1946, 0
    %v6669 = vsel %vm3693, %v1949, 0
    %v6672 = vsel %vm3693, %v1952, 0
    %v6675 = vsel %vm3693, %v1955, 0
    %v6678 = vsel %vm3693, %v1958, 0
    %v6681 = vsel %vm3693, %v1961, 0
    %6683 = vmatpush.xpose.msra.mxu0 %v6681
    %6684 = vmatpush.xpose.msra.mxu0 %v6678
    %6685 = vmatpush.xpose.msra.mxu0 %v6675
    %6686 = vmatpush.xpose.msra.mxu0 %v6672
    %6687 = vmatpush.xpose.msra.mxu0 %v6669
    %6688 = vmatpush.xpose.msra.mxu0 %v6666
    %6689 = vmatpush.xpose.msra.mxu0 %v6663
    %6690 = vmatpush.xpose.msra.mxu0 %v6660
    %6691 = vmatpush.xpose.msra.mxu0 %v6657
    %6692 = vmatpush.xpose.msra.mxu0 %v6654
    %6693 = vmatpush.xpose.msra.mxu0 %v6651
    %6694 = vmatpush.xpose.msra.mxu0 %v6648
    %6695 = vmatpush.xpose.msra.mxu0 %v6645
    %6696 = vmatpush.xpose.msra.mxu0 %v6642
    %6697 = vmatpush.xpose.msra.mxu0 %v6639
    %6698 = vmatpush.xpose.msra.mxu0 %v6636
    %6699 = vmatmul.f32.gmra.mxu0 %v6588
    %v6700 = vpop.f32.mrf.mxu0
    %v6701 = vadd.f32 0.0, %v6700
    %6702 = vmatmul.f32.gmra.mxu0 %v6591
    %v6703 = vpop.f32.mrf.mxu0
    %v6704 = vadd.f32 0.0, %v6703
    %6705 = vmatmul.f32.gmra.mxu0 %v6594
    %v6706 = vpop.f32.mrf.mxu0
    %v6707 = vadd.f32 0.0, %v6706
    %6708 = vmatmul.f32.gmra.mxu0 %v6597
    %v6709 = vpop.f32.mrf.mxu0
    %v6710 = vadd.f32 0.0, %v6709
    %6711 = vmatmul.f32.gmra.mxu0 %v6600
    %v6712 = vpop.f32.mrf.mxu0
    %v6713 = vadd.f32 0.0, %v6712
    %6714 = vmatmul.f32.gmra.mxu0 %v6603
    %v6715 = vpop.f32.mrf.mxu0
    %v6716 = vadd.f32 0.0, %v6715
    %6717 = vmatmul.f32.gmra.mxu0 %v6606
    %v6718 = vpop.f32.mrf.mxu0
    %v6719 = vadd.f32 0.0, %v6718
    %6720 = vmatmul.f32.gmra.mxu0 %v6609
    %v6721 = vpop.f32.mrf.mxu0
    %v6722 = vadd.f32 0.0, %v6721
    %6723 = vmatmul.f32.gmra.mxu0 %v6612
    %v6724 = vpop.f32.mrf.mxu0
    %v6725 = vadd.f32 0.0, %v6724
    %6726 = vmatmul.f32.gmra.mxu0 %v6615
    %v6727 = vpop.f32.mrf.mxu0
    %v6728 = vadd.f32 0.0, %v6727
    %6729 = vmatmul.f32.gmra.mxu0 %v6618
    %v6730 = vpop.f32.mrf.mxu0
    %v6731 = vadd.f32 0.0, %v6730
    %6732 = vmatmul.f32.gmra.mxu0 %v6621
    %v6733 = vpop.f32.mrf.mxu0
    %v6734 = vadd.f32 0.0, %v6733
    %6735 = vmatmul.f32.gmra.mxu0 %v6624
    %v6736 = vpop.f32.mrf.mxu0
    %v6737 = vadd.f32 0.0, %v6736
    %6738 = vmatmul.f32.gmra.mxu0 %v6627
    %v6739 = vpop.f32.mrf.mxu0
    %v6740 = vadd.f32 0.0, %v6739
    %6741 = vmatmul.f32.gmra.mxu0 %v6630
    %v6742 = vpop.f32.mrf.mxu0
    %v6743 = vadd.f32 0.0, %v6742
    %6744 = vmatmul.f32.gmra.mxu0 %v6633
    %v6745 = vpop.f32.mrf.mxu0
    %v6746 = vadd.f32 0.0, %v6745
    %6747 = vdwg.mxu0
    %v6748 = vsel %vm3677, %v6701, -inf
    %v6749 = vsel %vm3678, %v6704, -inf
    %v6750 = vsel %vm3679, %v6707, -inf
    %v6751 = vsel %vm3680, %v6710, -inf
    %v6752 = vsel %vm3681, %v6713, -inf
    %v6753 = vsel %vm3682, %v6716, -inf
    %v6754 = vsel %vm3683, %v6719, -inf
    %v6755 = vsel %vm3684, %v6722, -inf
    %v6756 = vsel %vm3685, %v6725, -inf
    %v6757 = vsel %vm3686, %v6728, -inf
    %v6758 = vsel %vm3687, %v6731, -inf
    %v6759 = vsel %vm3688, %v6734, -inf
    %v6760 = vsel %vm3689, %v6737, -inf
    %v6761 = vsel %vm3690, %v6740, -inf
    %v6762 = vsel %vm3691, %v6743, -inf
    %v6763 = vsel %vm3692, %v6746, -inf
    %6764 = vmax.xlane.f32.xlu0 %v6748
    %v6765 = vpop.xlane.xlu0 %6764
    %6766 = vmax.xlane.f32.xlu0 %v6749
    %v6767 = vpop.xlane.xlu0 %6766
    %6768 = vmax.xlane.f32.xlu0 %v6750
    %v6769 = vpop.xlane.xlu0 %6768
    %6770 = vmax.xlane.f32.xlu0 %v6751
    %v6771 = vpop.xlane.xlu0 %6770
    %6772 = vmax.xlane.f32.xlu0 %v6752
    %v6773 = vpop.xlane.xlu0 %6772
    %6774 = vmax.xlane.f32.xlu0 %v6753
    %v6775 = vpop.xlane.xlu0 %6774
    %6776 = vmax.xlane.f32.xlu0 %v6754
    %v6777 = vpop.xlane.xlu0 %6776
    %6778 = vmax.xlane.f32.xlu0 %v6755
    %v6779 = vpop.xlane.xlu0 %6778
    %6780 = vmax.xlane.f32.xlu0 %v6756
    %v6781 = vpop.xlane.xlu0 %6780
    %6782 = vmax.xlane.f32.xlu0 %v6757
    %v6783 = vpop.xlane.xlu0 %6782
    %6784 = vmax.xlane.f32.xlu0 %v6758
    %v6785 = vpop.xlane.xlu0 %6784
    %6786 = vmax.xlane.f32.xlu0 %v6759
    %v6787 = vpop.xlane.xlu0 %6786
    %6788 = vmax.xlane.f32.xlu0 %v6760
    %v6789 = vpop.xlane.xlu0 %6788
    %6790 = vmax.xlane.f32.xlu0 %v6761
    %v6791 = vpop.xlane.xlu0 %6790
    %6792 = vmax.xlane.f32.xlu0 %v6762
    %v6793 = vpop.xlane.xlu0 %6792
    %6794 = vmax.xlane.f32.xlu0 %v6763
    %v6795 = vpop.xlane.xlu0 %6794
    %v6796 = vsub.f32 %v6748, %v6765
    %v6797 = vsub.f32 %v6749, %v6767
    %v6798 = vsub.f32 %v6750, %v6769
    %v6799 = vsub.f32 %v6751, %v6771
    %v6800 = vsub.f32 %v6752, %v6773
    %v6801 = vsub.f32 %v6753, %v6775
    %v6802 = vsub.f32 %v6754, %v6777
    %v6803 = vsub.f32 %v6755, %v6779
    %v6804 = vsub.f32 %v6756, %v6781
    %v6805 = vsub.f32 %v6757, %v6783
    %v6806 = vsub.f32 %v6758, %v6785
    %v6807 = vsub.f32 %v6759, %v6787
    %v6808 = vsub.f32 %v6760, %v6789
    %v6809 = vsub.f32 %v6761, %v6791
    %v6810 = vsub.f32 %v6762, %v6793
    %v6811 = vsub.f32 %v6763, %v6795
    %v6812 = vmul.f32 %v6796, 1.442695
    %v6813 = vpow.pop %v6812
    %v6814 = vmul.f32 %v6797, 1.442695
    %v6815 = vpow.pop %v6814
    %v6816 = vmul.f32 %v6798, 1.442695
    %v6817 = vpow.pop %v6816
    %v6818 = vmul.f32 %v6799, 1.442695
    %v6819 = vpow.pop %v6818
    %v6820 = vmul.f32 %v6800, 1.442695
    %v6821 = vpow.pop %v6820
    %v6822 = vmul.f32 %v6801, 1.442695
    %v6823 = vpow.pop %v6822
    %v6824 = vmul.f32 %v6802, 1.442695
    %v6825 = vpow.pop %v6824
    %v6826 = vmul.f32 %v6803, 1.442695
    %v6827 = vpow.pop %v6826
    %v6828 = vmul.f32 %v6804, 1.442695
    %v6829 = vpow.pop %v6828
    %v6830 = vmul.f32 %v6805, 1.442695
    %v6831 = vpow.pop %v6830
    %v6832 = vmul.f32 %v6806, 1.442695
    %v6833 = vpow.pop %v6832
    %v6834 = vmul.f32 %v6807, 1.442695
    %v6835 = vpow.pop %v6834
    %v6836 = vmul.f32 %v6808, 1.442695
    %v6837 = vpow.pop %v6836
    %v6838 = vmul.f32 %v6809, 1.442695
    %v6839 = vpow.pop %v6838
    %v6840 = vmul.f32 %v6810, 1.442695
    %v6841 = vpow.pop %v6840
    %v6842 = vmul.f32 %v6811, 1.442695
    %v6843 = vpow.pop %v6842
    %6844 = vadd.xlane.f32.xlu0 %v6813
    %v6845 = vpop.xlane.xlu0 %6844
    %6846 = vadd.xlane.f32.xlu0 %v6815
    %v6847 = vpop.xlane.xlu0 %6846
    %6848 = vadd.xlane.f32.xlu0 %v6817
    %v6849 = vpop.xlane.xlu0 %6848
    %6850 = vadd.xlane.f32.xlu0 %v6819
    %v6851 = vpop.xlane.xlu0 %6850
    %6852 = vadd.xlane.f32.xlu0 %v6821
    %v6853 = vpop.xlane.xlu0 %6852
    %6854 = vadd.xlane.f32.xlu0 %v6823
    %v6855 = vpop.xlane.xlu0 %6854
    %6856 = vadd.xlane.f32.xlu0 %v6825
    %v6857 = vpop.xlane.xlu0 %6856
    %6858 = vadd.xlane.f32.xlu0 %v6827
    %v6859 = vpop.xlane.xlu0 %6858
    %6860 = vadd.xlane.f32.xlu0 %v6829
    %v6861 = vpop.xlane.xlu0 %6860
    %6862 = vadd.xlane.f32.xlu0 %v6831
    %v6863 = vpop.xlane.xlu0 %6862
    %6864 = vadd.xlane.f32.xlu0 %v6833
    %v6865 = vpop.xlane.xlu0 %6864
    %6866 = vadd.xlane.f32.xlu0 %v6835
    %v6867 = vpop.xlane.xlu0 %6866
    %6868 = vadd.xlane.f32.xlu0 %v6837
    %v6869 = vpop.xlane.xlu0 %6868
    %6870 = vadd.xlane.f32.xlu0 %v6839
    %v6871 = vpop.xlane.xlu0 %6870
    %6872 = vadd.xlane.f32.xlu0 %v6841
    %v6873 = vpop.xlane.xlu0 %6872
    %6874 = vadd.xlane.f32.xlu0 %v6843
    %v6875 = vpop.xlane.xlu0 %6874
    %6876 = vmatpush.msra.mxu0 %v2978
    %6877 = vmatpush.msra.mxu0 %v2975
    %6878 = vmatpush.msra.mxu0 %v2972
    %6879 = vmatpush.msra.mxu0 %v2969
    %6880 = vmatpush.msra.mxu0 %v2966
    %6881 = vmatpush.msra.mxu0 %v2963
    %6882 = vmatpush.msra.mxu0 %v2960
    %6883 = vmatpush.msra.mxu0 %v2957
    %6884 = vmatpush.msra.mxu0 %v2954
    %6885 = vmatpush.msra.mxu0 %v2951
    %6886 = vmatpush.msra.mxu0 %v2948
    %6887 = vmatpush.msra.mxu0 %v2945
    %6888 = vmatpush.msra.mxu0 %v2942
    %6889 = vmatpush.msra.mxu0 %v2939
    %6890 = vmatpush.msra.mxu0 %v2936
    %6891 = vmatpush.msra.mxu0 %v2933
    %6892 = vmatmul.f32.gmra.mxu0 %v6813
    %v6893 = vpop.f32.mrf.mxu0
    %v6894 = vadd.f32 0.0, %v6893
    %6895 = vmatmul.f32.gmra.mxu0 %v6815
    %v6896 = vpop.f32.mrf.mxu0
    %v6897 = vadd.f32 0.0, %v6896
    %6898 = vmatmul.f32.gmra.mxu0 %v6817
    %v6899 = vpop.f32.mrf.mxu0
    %v6900 = vadd.f32 0.0, %v6899
    %6901 = vmatmul.f32.gmra.mxu0 %v6819
    %v6902 = vpop.f32.mrf.mxu0
    %v6903 = vadd.f32 0.0, %v6902
    %6904 = vmatmul.f32.gmra.mxu0 %v6821
    %v6905 = vpop.f32.mrf.mxu0
    %v6906 = vadd.f32 0.0, %v6905
    %6907 = vmatmul.f32.gmra.mxu0 %v6823
    %v6908 = vpop.f32.mrf.mxu0
    %v6909 = vadd.f32 0.0, %v6908
    %6910 = vmatmul.f32.gmra.mxu0 %v6825
    %v6911 = vpop.f32.mrf.mxu0
    %v6912 = vadd.f32 0.0, %v6911
    %6913 = vmatmul.f32.gmra.mxu0 %v6827
    %v6914 = vpop.f32.mrf.mxu0
    %v6915 = vadd.f32 0.0, %v6914
    %6916 = vmatmul.f32.gmra.mxu0 %v6829
    %v6917 = vpop.f32.mrf.mxu0
    %v6918 = vadd.f32 0.0, %v6917
    %6919 = vmatmul.f32.gmra.mxu0 %v6831
    %v6920 = vpop.f32.mrf.mxu0
    %v6921 = vadd.f32 0.0, %v6920
    %6922 = vmatmul.f32.gmra.mxu0 %v6833
    %v6923 = vpop.f32.mrf.mxu0
    %v6924 = vadd.f32 0.0, %v6923
    %6925 = vmatmul.f32.gmra.mxu0 %v6835
    %v6926 = vpop.f32.mrf.mxu0
    %v6927 = vadd.f32 0.0, %v6926
    %6928 = vmatmul.f32.gmra.mxu0 %v6837
    %v6929 = vpop.f32.mrf.mxu0
    %v6930 = vadd.f32 0.0, %v6929
    %6931 = vmatmul.f32.gmra.mxu0 %v6839
    %v6932 = vpop.f32.mrf.mxu0
    %v6933 = vadd.f32 0.0, %v6932
    %6934 = vmatmul.f32.gmra.mxu0 %v6841
    %v6935 = vpop.f32.mrf.mxu0
    %v6936 = vadd.f32 0.0, %v6935
    %6937 = vmatmul.f32.gmra.mxu0 %v6843
    %v6938 = vpop.f32.mrf.mxu0
    %v6939 = vadd.f32 0.0, %v6938
    %6940 = vdwg.mxu0
    %v6941 = vrcp.pop %v6845
    %v6942 = vrcp.pop %v6847
    %v6943 = vrcp.pop %v6849
    %v6944 = vrcp.pop %v6851
    %v6945 = vrcp.pop %v6853
    %v6946 = vrcp.pop %v6855
    %v6947 = vrcp.pop %v6857
    %v6948 = vrcp.pop %v6859
    %v6949 = vrcp.pop %v6861
    %v6950 = vrcp.pop %v6863
    %v6951 = vrcp.pop %v6865
    %v6952 = vrcp.pop %v6867
    %v6953 = vrcp.pop %v6869
    %v6954 = vrcp.pop %v6871
    %v6955 = vrcp.pop %v6873
    %v6956 = vrcp.pop %v6875
    %v6957 = vmul.f32 %v6894, %v6941
    %v6958 = vmul.f32 %v6897, %v6942
    %v6959 = vmul.f32 %v6900, %v6943
    %v6960 = vmul.f32 %v6903, %v6944
    %v6961 = vmul.f32 %v6906, %v6945
    %v6962 = vmul.f32 %v6909, %v6946
    %v6963 = vmul.f32 %v6912, %v6947
    %v6964 = vmul.f32 %v6915, %v6948
    %v6965 = vmul.f32 %v6918, %v6949
    %v6966 = vmul.f32 %v6921, %v6950
    %v6967 = vmul.f32 %v6924, %v6951
    %v6968 = vmul.f32 %v6927, %v6952
    %v6969 = vmul.f32 %v6930, %v6953
    %v6970 = vmul.f32 %v6933, %v6954
    %v6971 = vmul.f32 %v6936, %v6955
    %v6972 = vmul.f32 %v6939, %v6956
    %6973 = vst.msk [vmem:[#allocation2 + $0x180] sm:$0xff] %vm3693, %v6957
    %6974 = vst.msk [vmem:[#allocation2 + $0x198] sm:$0xff] %vm3693, %v6958
    %6975 = vst.msk [vmem:[#allocation2 + $0x1b0] sm:$0xff] %vm3693, %v6959
    %6976 = vst.msk [vmem:[#allocation2 + $0x1c8] sm:$0xff] %vm3693, %v6960
    %6977 = vst.msk [vmem:[#allocation2 + $0x1e0] sm:$0xff] %vm3693, %v6961
    %6978 = vst.msk [vmem:[#allocation2 + $0x1f8] sm:$0xff] %vm3693, %v6962
    %6979 = vst.msk [vmem:[#allocation2 + $0x210] sm:$0xff] %vm3693, %v6963
    %6980 = vst.msk [vmem:[#allocation2 + $0x228] sm:$0xff] %vm3693, %v6964
    %6981 = vst.msk [vmem:[#allocation2 + $0x240] sm:$0xff] %vm3693, %v6965
    %6982 = vst.msk [vmem:[#allocation2 + $0x258] sm:$0xff] %vm3693, %v6966
    %6983 = vst.msk [vmem:[#allocation2 + $0x270] sm:$0xff] %vm3693, %v6967
    %6984 = vst.msk [vmem:[#allocation2 + $0x288] sm:$0xff] %vm3693, %v6968
    %6985 = vst.msk [vmem:[#allocation2 + $0x2a0] sm:$0xff] %vm3693, %v6969
    %6986 = vst.msk [vmem:[#allocation2 + $0x2b8] sm:$0xff] %vm3693, %v6970
    %6987 = vst.msk [vmem:[#allocation2 + $0x2d0] sm:$0xff] %vm3693, %v6971
    %6988 = vst.msk [vmem:[#allocation2 + $0x2e8] sm:$0xff] %vm3693, %v6972
    %6989 = vrot.lane.b32.xlu0 %v899, 64
    %v6990 = vpop.permute.xlu0 %6989
    %6991 = vrot.lane.b32.xlu0 %v902, 64
    %v6992 = vpop.permute.xlu0 %6991
    %6993 = vrot.lane.b32.xlu0 %v905, 64
    %v6994 = vpop.permute.xlu0 %6993
    %6995 = vrot.lane.b32.xlu0 %v908, 64
    %v6996 = vpop.permute.xlu0 %6995
    %6997 = vrot.lane.b32.xlu0 %v911, 64
    %v6998 = vpop.permute.xlu0 %6997
    %6999 = vrot.lane.b32.xlu0 %v914, 64
    %v7000 = vpop.permute.xlu0 %6999
    %7001 = vrot.lane.b32.xlu0 %v917, 64
    %v7002 = vpop.permute.xlu0 %7001
    %7003 = vrot.lane.b32.xlu0 %v920, 64
    %v7004 = vpop.permute.xlu0 %7003
    %7005 = vrot.lane.b32.xlu0 %v923, 64
    %v7006 = vpop.permute.xlu0 %7005
    %7007 = vrot.lane.b32.xlu0 %v926, 64
    %v7008 = vpop.permute.xlu0 %7007
    %7009 = vrot.lane.b32.xlu0 %v929, 64
    %v7010 = vpop.permute.xlu0 %7009
    %7011 = vrot.lane.b32.xlu0 %v932, 64
    %v7012 = vpop.permute.xlu0 %7011
    %7013 = vrot.lane.b32.xlu0 %v935, 64
    %v7014 = vpop.permute.xlu0 %7013
    %7015 = vrot.lane.b32.xlu0 %v938, 64
    %v7016 = vpop.permute.xlu0 %7015
    %7017 = vrot.lane.b32.xlu0 %v941, 64
    %v7018 = vpop.permute.xlu0 %7017
    %7019 = vrot.lane.b32.xlu0 %v944, 64
    %v7020 = vpop.permute.xlu0 %7019
    %7021 = vrot.lane.b32.xlu0 %v1916, 64
    %v7022 = vpop.permute.xlu0 %7021
    %7023 = vrot.lane.b32.xlu0 %v1919, 64
    %v7024 = vpop.permute.xlu0 %7023
    %7025 = vrot.lane.b32.xlu0 %v1922, 64
    %v7026 = vpop.permute.xlu0 %7025
    %7027 = vrot.lane.b32.xlu0 %v1925, 64
    %v7028 = vpop.permute.xlu0 %7027
    %7029 = vrot.lane.b32.xlu0 %v1928, 64
    %v7030 = vpop.permute.xlu0 %7029
    %7031 = vrot.lane.b32.xlu0 %v1931, 64
    %v7032 = vpop.permute.xlu0 %7031
    %7033 = vrot.lane.b32.xlu0 %v1934, 64
    %v7034 = vpop.permute.xlu0 %7033
    %7035 = vrot.lane.b32.xlu0 %v1937, 64
    %v7036 = vpop.permute.xlu0 %7035
    %7037 = vrot.lane.b32.xlu0 %v1940, 64
    %v7038 = vpop.permute.xlu0 %7037
    %7039 = vrot.lane.b32.xlu0 %v1943, 64
    %v7040 = vpop.permute.xlu0 %7039
    %7041 = vrot.lane.b32.xlu0 %v1946, 64
    %v7042 = vpop.permute.xlu0 %7041
    %7043 = vrot.lane.b32.xlu0 %v1949, 64
    %v7044 = vpop.permute.xlu0 %7043
    %7045 = vrot.lane.b32.xlu0 %v1952, 64
    %v7046 = vpop.permute.xlu0 %7045
    %7047 = vrot.lane.b32.xlu0 %v1955, 64
    %v7048 = vpop.permute.xlu0 %7047
    %7049 = vrot.lane.b32.xlu0 %v1958, 64
    %v7050 = vpop.permute.xlu0 %7049
    %7051 = vrot.lane.b32.xlu0 %v1961, 64
    %v7052 = vpop.permute.xlu0 %7051
    %v7053 = vsel %vm3693, %v6990, 0
    %v7055 = vsel %vm3693, %v6992, 0
    %v7057 = vsel %vm3693, %v6994, 0
    %v7059 = vsel %vm3693, %v6996, 0
    %v7061 = vsel %vm3693, %v6998, 0
    %v7063 = vsel %vm3693, %v7000, 0
    %v7065 = vsel %vm3693, %v7002, 0
    %v7067 = vsel %vm3693, %v7004, 0
    %v7069 = vsel %vm3693, %v7006, 0
    %v7071 = vsel %vm3693, %v7008, 0
    %v7073 = vsel %vm3693, %v7010, 0
    %v7075 = vsel %vm3693, %v7012, 0
    %v7077 = vsel %vm3693, %v7014, 0
    %v7079 = vsel %vm3693, %v7016, 0
    %v7081 = vsel %vm3693, %v7018, 0
    %v7083 = vsel %vm3693, %v7020, 0
    %v7085 = vsel %vm3693, %v7022, 0
    %v7087 = vsel %vm3693, %v7024, 0
    %v7089 = vsel %vm3693, %v7026, 0
    %v7091 = vsel %vm3693, %v7028, 0
    %v7093 = vsel %vm3693, %v7030, 0
    %v7095 = vsel %vm3693, %v7032, 0
    %v7097 = vsel %vm3693, %v7034, 0
    %v7099 = vsel %vm3693, %v7036, 0
    %v7101 = vsel %vm3693, %v7038, 0
    %v7103 = vsel %vm3693, %v7040, 0
    %v7105 = vsel %vm3693, %v7042, 0
    %v7107 = vsel %vm3693, %v7044, 0
    %v7109 = vsel %vm3693, %v7046, 0
    %v7111 = vsel %vm3693, %v7048, 0
    %v7113 = vsel %vm3693, %v7050, 0
    %v7115 = vsel %vm3693, %v7052, 0
    %7117 = vmatpush.xpose.msra.mxu0 %v7115
    %7118 = vmatpush.xpose.msra.mxu0 %v7113
    %7119 = vmatpush.xpose.msra.mxu0 %v7111
    %7120 = vmatpush.xpose.msra.mxu0 %v7109
    %7121 = vmatpush.xpose.msra.mxu0 %v7107
    %7122 = vmatpush.xpose.msra.mxu0 %v7105
    %7123 = vmatpush.xpose.msra.mxu0 %v7103
    %7124 = vmatpush.xpose.msra.mxu0 %v7101
    %7125 = vmatpush.xpose.msra.mxu0 %v7099
    %7126 = vmatpush.xpose.msra.mxu0 %v7097
    %7127 = vmatpush.xpose.msra.mxu0 %v7095
    %7128 = vmatpush.xpose.msra.mxu0 %v7093
    %7129 = vmatpush.xpose.msra.mxu0 %v7091
    %7130 = vmatpush.xpose.msra.mxu0 %v7089
    %7131 = vmatpush.xpose.msra.mxu0 %v7087
    %7132 = vmatpush.xpose.msra.mxu0 %v7085
    %7133 = vmatmul.f32.gmra.mxu0 %v7053
    %v7134 = vpop.f32.mrf.mxu0
    %v7135 = vadd.f32 0.0, %v7134
    %7136 = vmatmul.f32.gmra.mxu0 %v7055
    %v7137 = vpop.f32.mrf.mxu0
    %v7138 = vadd.f32 0.0, %v7137
    %7139 = vmatmul.f32.gmra.mxu0 %v7057
    %v7140 = vpop.f32.mrf.mxu0
    %v7141 = vadd.f32 0.0, %v7140
    %7142 = vmatmul.f32.gmra.mxu0 %v7059
    %v7143 = vpop.f32.mrf.mxu0
    %v7144 = vadd.f32 0.0, %v7143
    %7145 = vmatmul.f32.gmra.mxu0 %v7061
    %v7146 = vpop.f32.mrf.mxu0
    %v7147 = vadd.f32 0.0, %v7146
    %7148 = vmatmul.f32.gmra.mxu0 %v7063
    %v7149 = vpop.f32.mrf.mxu0
    %v7150 = vadd.f32 0.0, %v7149
    %7151 = vmatmul.f32.gmra.mxu0 %v7065
    %v7152 = vpop.f32.mrf.mxu0
    %v7153 = vadd.f32 0.0, %v7152
    %7154 = vmatmul.f32.gmra.mxu0 %v7067
    %v7155 = vpop.f32.mrf.mxu0
    %v7156 = vadd.f32 0.0, %v7155
    %7157 = vmatmul.f32.gmra.mxu0 %v7069
    %v7158 = vpop.f32.mrf.mxu0
    %v7159 = vadd.f32 0.0, %v7158
    %7160 = vmatmul.f32.gmra.mxu0 %v7071
    %v7161 = vpop.f32.mrf.mxu0
    %v7162 = vadd.f32 0.0, %v7161
    %7163 = vmatmul.f32.gmra.mxu0 %v7073
    %v7164 = vpop.f32.mrf.mxu0
    %v7165 = vadd.f32 0.0, %v7164
    %7166 = vmatmul.f32.gmra.mxu0 %v7075
    %v7167 = vpop.f32.mrf.mxu0
    %v7168 = vadd.f32 0.0, %v7167
    %7169 = vmatmul.f32.gmra.mxu0 %v7077
    %v7170 = vpop.f32.mrf.mxu0
    %v7171 = vadd.f32 0.0, %v7170
    %7172 = vmatmul.f32.gmra.mxu0 %v7079
    %v7173 = vpop.f32.mrf.mxu0
    %v7174 = vadd.f32 0.0, %v7173
    %7175 = vmatmul.f32.gmra.mxu0 %v7081
    %v7176 = vpop.f32.mrf.mxu0
    %v7177 = vadd.f32 0.0, %v7176
    %7178 = vmatmul.f32.gmra.mxu0 %v7083
    %v7179 = vpop.f32.mrf.mxu0
    %v7180 = vadd.f32 0.0, %v7179
    %7181 = vdwg.mxu0
    %v7182 = vsel %vm3677, %v7135, -inf
    %v7183 = vsel %vm3678, %v7138, -inf
    %v7184 = vsel %vm3679, %v7141, -inf
    %v7185 = vsel %vm3680, %v7144, -inf
    %v7186 = vsel %vm3681, %v7147, -inf
    %v7187 = vsel %vm3682, %v7150, -inf
    %v7188 = vsel %vm3683, %v7153, -inf
    %v7189 = vsel %vm3684, %v7156, -inf
    %v7190 = vsel %vm3685, %v7159, -inf
    %v7191 = vsel %vm3686, %v7162, -inf
    %v7192 = vsel %vm3687, %v7165, -inf
    %v7193 = vsel %vm3688, %v7168, -inf
    %v7194 = vsel %vm3689, %v7171, -inf
    %v7195 = vsel %vm3690, %v7174, -inf
    %v7196 = vsel %vm3691, %v7177, -inf
    %v7197 = vsel %vm3692, %v7180, -inf
    %7198 = vmax.xlane.f32.xlu0 %v7182
    %v7199 = vpop.xlane.xlu0 %7198
    %7200 = vmax.xlane.f32.xlu0 %v7183
    %v7201 = vpop.xlane.xlu0 %7200
    %7202 = vmax.xlane.f32.xlu0 %v7184
    %v7203 = vpop.xlane.xlu0 %7202
    %7204 = vmax.xlane.f32.xlu0 %v7185
    %v7205 = vpop.xlane.xlu0 %7204
    %7206 = vmax.xlane.f32.xlu0 %v7186
    %v7207 = vpop.xlane.xlu0 %7206
    %7208 = vmax.xlane.f32.xlu0 %v7187
    %v7209 = vpop.xlane.xlu0 %7208
    %7210 = vmax.xlane.f32.xlu0 %v7188
    %v7211 = vpop.xlane.xlu0 %7210
    %7212 = vmax.xlane.f32.xlu0 %v7189
    %v7213 = vpop.xlane.xlu0 %7212
    %7214 = vmax.xlane.f32.xlu0 %v7190
    %v7215 = vpop.xlane.xlu0 %7214
    %7216 = vmax.xlane.f32.xlu0 %v7191
    %v7217 = vpop.xlane.xlu0 %7216
    %7218 = vmax.xlane.f32.xlu0 %v7192
    %v7219 = vpop.xlane.xlu0 %7218
    %7220 = vmax.xlane.f32.xlu0 %v7193
    %v7221 = vpop.xlane.xlu0 %7220
    %7222 = vmax.xlane.f32.xlu0 %v7194
    %v7223 = vpop.xlane.xlu0 %7222
    %7224 = vmax.xlane.f32.xlu0 %v7195
    %v7225 = vpop.xlane.xlu0 %7224
    %7226 = vmax.xlane.f32.xlu0 %v7196
    %v7227 = vpop.xlane.xlu0 %7226
    %7228 = vmax.xlane.f32.xlu0 %v7197
    %v7229 = vpop.xlane.xlu0 %7228
    %v7230 = vsub.f32 %v7182, %v7199
    %v7231 = vsub.f32 %v7183, %v7201
    %v7232 = vsub.f32 %v7184, %v7203
    %v7233 = vsub.f32 %v7185, %v7205
    %v7234 = vsub.f32 %v7186, %v7207
    %v7235 = vsub.f32 %v7187, %v7209
    %v7236 = vsub.f32 %v7188, %v7211
    %v7237 = vsub.f32 %v7189, %v7213
    %v7238 = vsub.f32 %v7190, %v7215
    %v7239 = vsub.f32 %v7191, %v7217
    %v7240 = vsub.f32 %v7192, %v7219
    %v7241 = vsub.f32 %v7193, %v7221
    %v7242 = vsub.f32 %v7194, %v7223
    %v7243 = vsub.f32 %v7195, %v7225
    %v7244 = vsub.f32 %v7196, %v7227
    %v7245 = vsub.f32 %v7197, %v7229
    %v7246 = vmul.f32 %v7230, 1.442695
    %v7247 = vpow.pop %v7246
    %v7248 = vmul.f32 %v7231, 1.442695
    %v7249 = vpow.pop %v7248
    %v7250 = vmul.f32 %v7232, 1.442695
    %v7251 = vpow.pop %v7250
    %v7252 = vmul.f32 %v7233, 1.442695
    %v7253 = vpow.pop %v7252
    %v7254 = vmul.f32 %v7234, 1.442695
    %v7255 = vpow.pop %v7254
    %v7256 = vmul.f32 %v7235, 1.442695
    %v7257 = vpow.pop %v7256
    %v7258 = vmul.f32 %v7236, 1.442695
    %v7259 = vpow.pop %v7258
    %v7260 = vmul.f32 %v7237, 1.442695
    %v7261 = vpow.pop %v7260
    %v7262 = vmul.f32 %v7238, 1.442695
    %v7263 = vpow.pop %v7262
    %v7264 = vmul.f32 %v7239, 1.442695
    %v7265 = vpow.pop %v7264
    %v7266 = vmul.f32 %v7240, 1.442695
    %v7267 = vpow.pop %v7266
    %v7268 = vmul.f32 %v7241, 1.442695
    %v7269 = vpow.pop %v7268
    %v7270 = vmul.f32 %v7242, 1.442695
    %v7271 = vpow.pop %v7270
    %v7272 = vmul.f32 %v7243, 1.442695
    %v7273 = vpow.pop %v7272
    %v7274 = vmul.f32 %v7244, 1.442695
    %v7275 = vpow.pop %v7274
    %v7276 = vmul.f32 %v7245, 1.442695
    %v7277 = vpow.pop %v7276
    %7278 = vadd.xlane.f32.xlu0 %v7247
    %v7279 = vpop.xlane.xlu0 %7278
    %7280 = vadd.xlane.f32.xlu0 %v7249
    %v7281 = vpop.xlane.xlu0 %7280
    %7282 = vadd.xlane.f32.xlu0 %v7251
    %v7283 = vpop.xlane.xlu0 %7282
    %7284 = vadd.xlane.f32.xlu0 %v7253
    %v7285 = vpop.xlane.xlu0 %7284
    %7286 = vadd.xlane.f32.xlu0 %v7255
    %v7287 = vpop.xlane.xlu0 %7286
    %7288 = vadd.xlane.f32.xlu0 %v7257
    %v7289 = vpop.xlane.xlu0 %7288
    %7290 = vadd.xlane.f32.xlu0 %v7259
    %v7291 = vpop.xlane.xlu0 %7290
    %7292 = vadd.xlane.f32.xlu0 %v7261
    %v7293 = vpop.xlane.xlu0 %7292
    %7294 = vadd.xlane.f32.xlu0 %v7263
    %v7295 = vpop.xlane.xlu0 %7294
    %7296 = vadd.xlane.f32.xlu0 %v7265
    %v7297 = vpop.xlane.xlu0 %7296
    %7298 = vadd.xlane.f32.xlu0 %v7267
    %v7299 = vpop.xlane.xlu0 %7298
    %7300 = vadd.xlane.f32.xlu0 %v7269
    %v7301 = vpop.xlane.xlu0 %7300
    %7302 = vadd.xlane.f32.xlu0 %v7271
    %v7303 = vpop.xlane.xlu0 %7302
    %7304 = vadd.xlane.f32.xlu0 %v7273
    %v7305 = vpop.xlane.xlu0 %7304
    %7306 = vadd.xlane.f32.xlu0 %v7275
    %v7307 = vpop.xlane.xlu0 %7306
    %7308 = vadd.xlane.f32.xlu0 %v7277
    %v7309 = vpop.xlane.xlu0 %7308
    %7326 = vrot.lane.b32.xlu0 %v2933, 64
    %v7327 = vpop.permute.xlu0 %7326
    %7328 = vrot.lane.b32.xlu0 %v2936, 64
    %v7329 = vpop.permute.xlu0 %7328
    %7330 = vrot.lane.b32.xlu0 %v2939, 64
    %v7331 = vpop.permute.xlu0 %7330
    %7332 = vrot.lane.b32.xlu0 %v2942, 64
    %v7333 = vpop.permute.xlu0 %7332
    %7334 = vrot.lane.b32.xlu0 %v2945, 64
    %v7335 = vpop.permute.xlu0 %7334
    %7336 = vrot.lane.b32.xlu0 %v2948, 64
    %v7337 = vpop.permute.xlu0 %7336
    %7338 = vrot.lane.b32.xlu0 %v2951, 64
    %v7339 = vpop.permute.xlu0 %7338
    %7340 = vrot.lane.b32.xlu0 %v2954, 64
    %v7341 = vpop.permute.xlu0 %7340
    %7342 = vrot.lane.b32.xlu0 %v2957, 64
    %v7343 = vpop.permute.xlu0 %7342
    %7344 = vrot.lane.b32.xlu0 %v2960, 64
    %v7345 = vpop.permute.xlu0 %7344
    %7346 = vrot.lane.b32.xlu0 %v2963, 64
    %v7347 = vpop.permute.xlu0 %7346
    %7348 = vrot.lane.b32.xlu0 %v2966, 64
    %v7349 = vpop.permute.xlu0 %7348
    %7350 = vrot.lane.b32.xlu0 %v2969, 64
    %v7351 = vpop.permute.xlu0 %7350
    %7352 = vrot.lane.b32.xlu0 %v2972, 64
    %v7353 = vpop.permute.xlu0 %7352
    %7354 = vrot.lane.b32.xlu0 %v2975, 64
    %v7355 = vpop.permute.xlu0 %7354
    %7356 = vrot.lane.b32.xlu0 %v2978, 64
    %v7357 = vpop.permute.xlu0 %7356
    %7374 = vmatpush.msra.mxu0 %v7357
    %7375 = vmatpush.msra.mxu0 %v7355
    %7376 = vmatpush.msra.mxu0 %v7353
    %7377 = vmatpush.msra.mxu0 %v7351
    %7378 = vmatpush.msra.mxu0 %v7349
    %7379 = vmatpush.msra.mxu0 %v7347
    %7380 = vmatpush.msra.mxu0 %v7345
    %7381 = vmatpush.msra.mxu0 %v7343
    %7382 = vmatpush.msra.mxu0 %v7341
    %7383 = vmatpush.msra.mxu0 %v7339
    %7384 = vmatpush.msra.mxu0 %v7337
    %7385 = vmatpush.msra.mxu0 %v7335
    %7386 = vmatpush.msra.mxu0 %v7333
    %7387 = vmatpush.msra.mxu0 %v7331
    %7388 = vmatpush.msra.mxu0 %v7329
    %7389 = vmatpush.msra.mxu0 %v7327
    %7390 = vmatmul.f32.gmra.mxu0 %v7247
    %v7391 = vpop.f32.mrf.mxu0
    %v7392 = vadd.f32 0.0, %v7391
    %7393 = vmatmul.f32.gmra.mxu0 %v7249
    %v7394 = vpop.f32.mrf.mxu0
    %v7395 = vadd.f32 0.0, %v7394
    %7396 = vmatmul.f32.gmra.mxu0 %v7251
    %v7397 = vpop.f32.mrf.mxu0
    %v7398 = vadd.f32 0.0, %v7397
    %7399 = vmatmul.f32.gmra.mxu0 %v7253
    %v7400 = vpop.f32.mrf.mxu0
    %v7401 = vadd.f32 0.0, %v7400
    %7402 = vmatmul.f32.gmra.mxu0 %v7255
    %v7403 = vpop.f32.mrf.mxu0
    %v7404 = vadd.f32 0.0, %v7403
    %7405 = vmatmul.f32.gmra.mxu0 %v7257
    %v7406 = vpop.f32.mrf.mxu0
    %v7407 = vadd.f32 0.0, %v7406
    %7408 = vmatmul.f32.gmra.mxu0 %v7259
    %v7409 = vpop.f32.mrf.mxu0
    %v7410 = vadd.f32 0.0, %v7409
    %7411 = vmatmul.f32.gmra.mxu0 %v7261
    %v7412 = vpop.f32.mrf.mxu0
    %v7413 = vadd.f32 0.0, %v7412
    %7414 = vmatmul.f32.gmra.mxu0 %v7263
    %v7415 = vpop.f32.mrf.mxu0
    %v7416 = vadd.f32 0.0, %v7415
    %7417 = vmatmul.f32.gmra.mxu0 %v7265
    %v7418 = vpop.f32.mrf.mxu0
    %v7419 = vadd.f32 0.0, %v7418
    %7420 = vmatmul.f32.gmra.mxu0 %v7267
    %v7421 = vpop.f32.mrf.mxu0
    %v7422 = vadd.f32 0.0, %v7421
    %7423 = vmatmul.f32.gmra.mxu0 %v7269
    %v7424 = vpop.f32.mrf.mxu0
    %v7425 = vadd.f32 0.0, %v7424
    %7426 = vmatmul.f32.gmra.mxu0 %v7271
    %v7427 = vpop.f32.mrf.mxu0
    %v7428 = vadd.f32 0.0, %v7427
    %7429 = vmatmul.f32.gmra.mxu0 %v7273
    %v7430 = vpop.f32.mrf.mxu0
    %v7431 = vadd.f32 0.0, %v7430
    %7432 = vmatmul.f32.gmra.mxu0 %v7275
    %v7433 = vpop.f32.mrf.mxu0
    %v7434 = vadd.f32 0.0, %v7433
    %7435 = vmatmul.f32.gmra.mxu0 %v7277
    %v7436 = vpop.f32.mrf.mxu0
    %v7437 = vadd.f32 0.0, %v7436
    %7438 = vdwg.mxu0
    %v7439 = vrcp.pop %v7279
    %v7440 = vrcp.pop %v7281
    %v7441 = vrcp.pop %v7283
    %v7442 = vrcp.pop %v7285
    %v7443 = vrcp.pop %v7287
    %v7444 = vrcp.pop %v7289
    %v7445 = vrcp.pop %v7291
    %v7446 = vrcp.pop %v7293
    %v7447 = vrcp.pop %v7295
    %v7448 = vrcp.pop %v7297
    %v7449 = vrcp.pop %v7299
    %v7450 = vrcp.pop %v7301
    %v7451 = vrcp.pop %v7303
    %v7452 = vrcp.pop %v7305
    %v7453 = vrcp.pop %v7307
    %v7454 = vrcp.pop %v7309
    %v7455 = vmul.f32 %v7392, %v7439
    %v7456 = vmul.f32 %v7395, %v7440
    %v7457 = vmul.f32 %v7398, %v7441
    %v7458 = vmul.f32 %v7401, %v7442
    %v7459 = vmul.f32 %v7404, %v7443
    %v7460 = vmul.f32 %v7407, %v7444
    %v7461 = vmul.f32 %v7410, %v7445
    %v7462 = vmul.f32 %v7413, %v7446
    %v7463 = vmul.f32 %v7416, %v7447
    %v7464 = vmul.f32 %v7419, %v7448
    %v7465 = vmul.f32 %v7422, %v7449
    %v7466 = vmul.f32 %v7425, %v7450
    %v7467 = vmul.f32 %v7428, %v7451
    %v7468 = vmul.f32 %v7431, %v7452
    %v7469 = vmul.f32 %v7434, %v7453
    %v7470 = vmul.f32 %v7437, %v7454
    %7487 = vrot.lane.b32.xlu0 %v7455, 64
    %v7488 = vpop.permute.xlu0 %7487
    %7489 = vrot.lane.b32.xlu0 %v7456, 64
    %v7490 = vpop.permute.xlu0 %7489
    %7491 = vrot.lane.b32.xlu0 %v7457, 64
    %v7492 = vpop.permute.xlu0 %7491
    %7493 = vrot.lane.b32.xlu0 %v7458, 64
    %v7494 = vpop.permute.xlu0 %7493
    %7495 = vrot.lane.b32.xlu0 %v7459, 64
    %v7496 = vpop.permute.xlu0 %7495
    %7497 = vrot.lane.b32.xlu0 %v7460, 64
    %v7498 = vpop.permute.xlu0 %7497
    %7499 = vrot.lane.b32.xlu0 %v7461, 64
    %v7500 = vpop.permute.xlu0 %7499
    %7501 = vrot.lane.b32.xlu0 %v7462, 64
    %v7502 = vpop.permute.xlu0 %7501
    %7503 = vrot.lane.b32.xlu0 %v7463, 64
    %v7504 = vpop.permute.xlu0 %7503
    %7505 = vrot.lane.b32.xlu0 %v7464, 64
    %v7506 = vpop.permute.xlu0 %7505
    %7507 = vrot.lane.b32.xlu0 %v7465, 64
    %v7508 = vpop.permute.xlu0 %7507
    %7509 = vrot.lane.b32.xlu0 %v7466, 64
    %v7510 = vpop.permute.xlu0 %7509
    %7511 = vrot.lane.b32.xlu0 %v7467, 64
    %v7512 = vpop.permute.xlu0 %7511
    %7513 = vrot.lane.b32.xlu0 %v7468, 64
    %v7514 = vpop.permute.xlu0 %7513
    %7515 = vrot.lane.b32.xlu0 %v7469, 64
    %v7516 = vpop.permute.xlu0 %7515
    %7517 = vrot.lane.b32.xlu0 %v7470, 64
    %v7518 = vpop.permute.xlu0 %7517
    %7535 = vst.msk [vmem:[#allocation2 + $0x180] sm:$0xff] %vm4642, %v7488
    %7536 = vst.msk [vmem:[#allocation2 + $0x198] sm:$0xff] %vm4642, %v7490
    %7537 = vst.msk [vmem:[#allocation2 + $0x1b0] sm:$0xff] %vm4642, %v7492
    %7538 = vst.msk [vmem:[#allocation2 + $0x1c8] sm:$0xff] %vm4642, %v7494
    %7539 = vst.msk [vmem:[#allocation2 + $0x1e0] sm:$0xff] %vm4642, %v7496
    %7540 = vst.msk [vmem:[#allocation2 + $0x1f8] sm:$0xff] %vm4642, %v7498
    %7541 = vst.msk [vmem:[#allocation2 + $0x210] sm:$0xff] %vm4642, %v7500
    %7542 = vst.msk [vmem:[#allocation2 + $0x228] sm:$0xff] %vm4642, %v7502
    %7543 = vst.msk [vmem:[#allocation2 + $0x240] sm:$0xff] %vm4642, %v7504
    %7544 = vst.msk [vmem:[#allocation2 + $0x258] sm:$0xff] %vm4642, %v7506
    %7545 = vst.msk [vmem:[#allocation2 + $0x270] sm:$0xff] %vm4642, %v7508
    %7546 = vst.msk [vmem:[#allocation2 + $0x288] sm:$0xff] %vm4642, %v7510
    %7547 = vst.msk [vmem:[#allocation2 + $0x2a0] sm:$0xff] %vm4642, %v7512
    %7548 = vst.msk [vmem:[#allocation2 + $0x2b8] sm:$0xff] %vm4642, %v7514
    %7549 = vst.msk [vmem:[#allocation2 + $0x2d0] sm:$0xff] %vm4642, %v7516
    %7550 = vst.msk [vmem:[#allocation2 + $0x2e8] sm:$0xff] %vm4642, %v7518
    %v7552 = vsel %vm3693, %v1238, 0
    %v7555 = vsel %vm3693, %v1241, 0
    %v7558 = vsel %vm3693, %v1244, 0
    %v7561 = vsel %vm3693, %v1247, 0
    %v7564 = vsel %vm3693, %v1250, 0
    %v7567 = vsel %vm3693, %v1253, 0
    %v7570 = vsel %vm3693, %v1256, 0
    %v7573 = vsel %vm3693, %v1259, 0
    %v7576 = vsel %vm3693, %v1262, 0
    %v7579 = vsel %vm3693, %v1265, 0
    %v7582 = vsel %vm3693, %v1268, 0
    %v7585 = vsel %vm3693, %v1271, 0
    %v7588 = vsel %vm3693, %v1274, 0
    %v7591 = vsel %vm3693, %v1277, 0
    %v7594 = vsel %vm3693, %v1280, 0
    %v7597 = vsel %vm3693, %v1283, 0
    %v7600 = vsel %vm3693, %v2255, 0
    %v7603 = vsel %vm3693, %v2258, 0
    %v7606 = vsel %vm3693, %v2261, 0
    %v7609 = vsel %vm3693, %v2264, 0
    %v7612 = vsel %vm3693, %v2267, 0
    %v7615 = vsel %vm3693, %v2270, 0
    %v7618 = vsel %vm3693, %v2273, 0
    %v7621 = vsel %vm3693, %v2276, 0
    %v7624 = vsel %vm3693, %v2279, 0
    %v7627 = vsel %vm3693, %v2282, 0
    %v7630 = vsel %vm3693, %v2285, 0
    %v7633 = vsel %vm3693, %v2288, 0
    %v7636 = vsel %vm3693, %v2291, 0
    %v7639 = vsel %vm3693, %v2294, 0
    %v7642 = vsel %vm3693, %v2297, 0
    %v7645 = vsel %vm3693, %v2300, 0
    %7647 = vmatpush.xpose.msra.mxu0 %v7645
    %7648 = vmatpush.xpose.msra.mxu0 %v7642
    %7649 = vmatpush.xpose.msra.mxu0 %v7639
    %7650 = vmatpush.xpose.msra.mxu0 %v7636
    %7651 = vmatpush.xpose.msra.mxu0 %v7633
    %7652 = vmatpush.xpose.msra.mxu0 %v7630
    %7653 = vmatpush.xpose.msra.mxu0 %v7627
    %7654 = vmatpush.xpose.msra.mxu0 %v7624
    %7655 = vmatpush.xpose.msra.mxu0 %v7621
    %7656 = vmatpush.xpose.msra.mxu0 %v7618
    %7657 = vmatpush.xpose.msra.mxu0 %v7615
    %7658 = vmatpush.xpose.msra.mxu0 %v7612
    %7659 = vmatpush.xpose.msra.mxu0 %v7609
    %7660 = vmatpush.xpose.msra.mxu0 %v7606
    %7661 = vmatpush.xpose.msra.mxu0 %v7603
    %7662 = vmatpush.xpose.msra.mxu0 %v7600
    %7663 = vmatmul.f32.gmra.mxu0 %v7552
    %v7664 = vpop.f32.mrf.mxu0
    %v7665 = vadd.f32 0.0, %v7664
    %7666 = vmatmul.f32.gmra.mxu0 %v7555
    %v7667 = vpop.f32.mrf.mxu0
    %v7668 = vadd.f32 0.0, %v7667
    %7669 = vmatmul.f32.gmra.mxu0 %v7558
    %v7670 = vpop.f32.mrf.mxu0
    %v7671 = vadd.f32 0.0, %v7670
    %7672 = vmatmul.f32.gmra.mxu0 %v7561
    %v7673 = vpop.f32.mrf.mxu0
    %v7674 = vadd.f32 0.0, %v7673
    %7675 = vmatmul.f32.gmra.mxu0 %v7564
    %v7676 = vpop.f32.mrf.mxu0
    %v7677 = vadd.f32 0.0, %v7676
    %7678 = vmatmul.f32.gmra.mxu0 %v7567
    %v7679 = vpop.f32.mrf.mxu0
    %v7680 = vadd.f32 0.0, %v7679
    %7681 = vmatmul.f32.gmra.mxu0 %v7570
    %v7682 = vpop.f32.mrf.mxu0
    %v7683 = vadd.f32 0.0, %v7682
    %7684 = vmatmul.f32.gmra.mxu0 %v7573
    %v7685 = vpop.f32.mrf.mxu0
    %v7686 = vadd.f32 0.0, %v7685
    %7687 = vmatmul.f32.gmra.mxu0 %v7576
    %v7688 = vpop.f32.mrf.mxu0
    %v7689 = vadd.f32 0.0, %v7688
    %7690 = vmatmul.f32.gmra.mxu0 %v7579
    %v7691 = vpop.f32.mrf.mxu0
    %v7692 = vadd.f32 0.0, %v7691
    %7693 = vmatmul.f32.gmra.mxu0 %v7582
    %v7694 = vpop.f32.mrf.mxu0
    %v7695 = vadd.f32 0.0, %v7694
    %7696 = vmatmul.f32.gmra.mxu0 %v7585
    %v7697 = vpop.f32.mrf.mxu0
    %v7698 = vadd.f32 0.0, %v7697
    %7699 = vmatmul.f32.gmra.mxu0 %v7588
    %v7700 = vpop.f32.mrf.mxu0
    %v7701 = vadd.f32 0.0, %v7700
    %7702 = vmatmul.f32.gmra.mxu0 %v7591
    %v7703 = vpop.f32.mrf.mxu0
    %v7704 = vadd.f32 0.0, %v7703
    %7705 = vmatmul.f32.gmra.mxu0 %v7594
    %v7706 = vpop.f32.mrf.mxu0
    %v7707 = vadd.f32 0.0, %v7706
    %7708 = vmatmul.f32.gmra.mxu0 %v7597
    %v7709 = vpop.f32.mrf.mxu0
    %v7710 = vadd.f32 0.0, %v7709
    %7711 = vdwg.mxu0
    %v7712 = vsel %vm3677, %v7665, -inf
    %v7713 = vsel %vm3678, %v7668, -inf
    %v7714 = vsel %vm3679, %v7671, -inf
    %v7715 = vsel %vm3680, %v7674, -inf
    %v7716 = vsel %vm3681, %v7677, -inf
    %v7717 = vsel %vm3682, %v7680, -inf
    %v7718 = vsel %vm3683, %v7683, -inf
    %v7719 = vsel %vm3684, %v7686, -inf
    %v7720 = vsel %vm3685, %v7689, -inf
    %v7721 = vsel %vm3686, %v7692, -inf
    %v7722 = vsel %vm3687, %v7695, -inf
    %v7723 = vsel %vm3688, %v7698, -inf
    %v7724 = vsel %vm3689, %v7701, -inf
    %v7725 = vsel %vm3690, %v7704, -inf
    %v7726 = vsel %vm3691, %v7707, -inf
    %v7727 = vsel %vm3692, %v7710, -inf
    %7728 = vmax.xlane.f32.xlu0 %v7712
    %v7729 = vpop.xlane.xlu0 %7728
    %7730 = vmax.xlane.f32.xlu0 %v7713
    %v7731 = vpop.xlane.xlu0 %7730
    %7732 = vmax.xlane.f32.xlu0 %v7714
    %v7733 = vpop.xlane.xlu0 %7732
    %7734 = vmax.xlane.f32.xlu0 %v7715
    %v7735 = vpop.xlane.xlu0 %7734
    %7736 = vmax.xlane.f32.xlu0 %v7716
    %v7737 = vpop.xlane.xlu0 %7736
    %7738 = vmax.xlane.f32.xlu0 %v7717
    %v7739 = vpop.xlane.xlu0 %7738
    %7740 = vmax.xlane.f32.xlu0 %v7718
    %v7741 = vpop.xlane.xlu0 %7740
    %7742 = vmax.xlane.f32.xlu0 %v7719
    %v7743 = vpop.xlane.xlu0 %7742
    %7744 = vmax.xlane.f32.xlu0 %v7720
    %v7745 = vpop.xlane.xlu0 %7744
    %7746 = vmax.xlane.f32.xlu0 %v7721
    %v7747 = vpop.xlane.xlu0 %7746
    %7748 = vmax.xlane.f32.xlu0 %v7722
    %v7749 = vpop.xlane.xlu0 %7748
    %7750 = vmax.xlane.f32.xlu0 %v7723
    %v7751 = vpop.xlane.xlu0 %7750
    %7752 = vmax.xlane.f32.xlu0 %v7724
    %v7753 = vpop.xlane.xlu0 %7752
    %7754 = vmax.xlane.f32.xlu0 %v7725
    %v7755 = vpop.xlane.xlu0 %7754
    %7756 = vmax.xlane.f32.xlu0 %v7726
    %v7757 = vpop.xlane.xlu0 %7756
    %7758 = vmax.xlane.f32.xlu0 %v7727
    %v7759 = vpop.xlane.xlu0 %7758
    %v7760 = vsub.f32 %v7712, %v7729
    %v7761 = vsub.f32 %v7713, %v7731
    %v7762 = vsub.f32 %v7714, %v7733
    %v7763 = vsub.f32 %v7715, %v7735
    %v7764 = vsub.f32 %v7716, %v7737
    %v7765 = vsub.f32 %v7717, %v7739
    %v7766 = vsub.f32 %v7718, %v7741
    %v7767 = vsub.f32 %v7719, %v7743
    %v7768 = vsub.f32 %v7720, %v7745
    %v7769 = vsub.f32 %v7721, %v7747
    %v7770 = vsub.f32 %v7722, %v7749
    %v7771 = vsub.f32 %v7723, %v7751
    %v7772 = vsub.f32 %v7724, %v7753
    %v7773 = vsub.f32 %v7725, %v7755
    %v7774 = vsub.f32 %v7726, %v7757
    %v7775 = vsub.f32 %v7727, %v7759
    %v7776 = vmul.f32 %v7760, 1.442695
    %v7777 = vpow.pop %v7776
    %v7778 = vmul.f32 %v7761, 1.442695
    %v7779 = vpow.pop %v7778
    %v7780 = vmul.f32 %v7762, 1.442695
    %v7781 = vpow.pop %v7780
    %v7782 = vmul.f32 %v7763, 1.442695
    %v7783 = vpow.pop %v7782
    %v7784 = vmul.f32 %v7764, 1.442695
    %v7785 = vpow.pop %v7784
    %v7786 = vmul.f32 %v7765, 1.442695
    %v7787 = vpow.pop %v7786
    %v7788 = vmul.f32 %v7766, 1.442695
    %v7789 = vpow.pop %v7788
    %v7790 = vmul.f32 %v7767, 1.442695
    %v7791 = vpow.pop %v7790
    %v7792 = vmul.f32 %v7768, 1.442695
    %v7793 = vpow.pop %v7792
    %v7794 = vmul.f32 %v7769, 1.442695
    %v7795 = vpow.pop %v7794
    %v7796 = vmul.f32 %v7770, 1.442695
    %v7797 = vpow.pop %v7796
    %v7798 = vmul.f32 %v7771, 1.442695
    %v7799 = vpow.pop %v7798
    %v7800 = vmul.f32 %v7772, 1.442695
    %v7801 = vpow.pop %v7800
    %v7802 = vmul.f32 %v7773, 1.442695
    %v7803 = vpow.pop %v7802
    %v7804 = vmul.f32 %v7774, 1.442695
    %v7805 = vpow.pop %v7804
    %v7806 = vmul.f32 %v7775, 1.442695
    %v7807 = vpow.pop %v7806
    %7808 = vadd.xlane.f32.xlu0 %v7777
    %v7809 = vpop.xlane.xlu0 %7808
    %7810 = vadd.xlane.f32.xlu0 %v7779
    %v7811 = vpop.xlane.xlu0 %7810
    %7812 = vadd.xlane.f32.xlu0 %v7781
    %v7813 = vpop.xlane.xlu0 %7812
    %7814 = vadd.xlane.f32.xlu0 %v7783
    %v7815 = vpop.xlane.xlu0 %7814
    %7816 = vadd.xlane.f32.xlu0 %v7785
    %v7817 = vpop.xlane.xlu0 %7816
    %7818 = vadd.xlane.f32.xlu0 %v7787
    %v7819 = vpop.xlane.xlu0 %7818
    %7820 = vadd.xlane.f32.xlu0 %v7789
    %v7821 = vpop.xlane.xlu0 %7820
    %7822 = vadd.xlane.f32.xlu0 %v7791
    %v7823 = vpop.xlane.xlu0 %7822
    %7824 = vadd.xlane.f32.xlu0 %v7793
    %v7825 = vpop.xlane.xlu0 %7824
    %7826 = vadd.xlane.f32.xlu0 %v7795
    %v7827 = vpop.xlane.xlu0 %7826
    %7828 = vadd.xlane.f32.xlu0 %v7797
    %v7829 = vpop.xlane.xlu0 %7828
    %7830 = vadd.xlane.f32.xlu0 %v7799
    %v7831 = vpop.xlane.xlu0 %7830
    %7832 = vadd.xlane.f32.xlu0 %v7801
    %v7833 = vpop.xlane.xlu0 %7832
    %7834 = vadd.xlane.f32.xlu0 %v7803
    %v7835 = vpop.xlane.xlu0 %7834
    %7836 = vadd.xlane.f32.xlu0 %v7805
    %v7837 = vpop.xlane.xlu0 %7836
    %7838 = vadd.xlane.f32.xlu0 %v7807
    %v7839 = vpop.xlane.xlu0 %7838
    %7840 = vmatpush.msra.mxu0 %v3317
    %7841 = vmatpush.msra.mxu0 %v3314
    %7842 = vmatpush.msra.mxu0 %v3311
    %7843 = vmatpush.msra.mxu0 %v3308
    %7844 = vmatpush.msra.mxu0 %v3305
    %7845 = vmatpush.msra.mxu0 %v3302
    %7846 = vmatpush.msra.mxu0 %v3299
    %7847 = vmatpush.msra.mxu0 %v3296
    %7848 = vmatpush.msra.mxu0 %v3293
    %7849 = vmatpush.msra.mxu0 %v3290
    %7850 = vmatpush.msra.mxu0 %v3287
    %7851 = vmatpush.msra.mxu0 %v3284
    %7852 = vmatpush.msra.mxu0 %v3281
    %7853 = vmatpush.msra.mxu0 %v3278
    %7854 = vmatpush.msra.mxu0 %v3275
    %7855 = vmatpush.msra.mxu0 %v3272
    %7856 = vmatmul.f32.gmra.mxu0 %v7777
    %v7857 = vpop.f32.mrf.mxu0
    %v7858 = vadd.f32 0.0, %v7857
    %7859 = vmatmul.f32.gmra.mxu0 %v7779
    %v7860 = vpop.f32.mrf.mxu0
    %v7861 = vadd.f32 0.0, %v7860
    %7862 = vmatmul.f32.gmra.mxu0 %v7781
    %v7863 = vpop.f32.mrf.mxu0
    %v7864 = vadd.f32 0.0, %v7863
    %7865 = vmatmul.f32.gmra.mxu0 %v7783
    %v7866 = vpop.f32.mrf.mxu0
    %v7867 = vadd.f32 0.0, %v7866
    %7868 = vmatmul.f32.gmra.mxu0 %v7785
    %v7869 = vpop.f32.mrf.mxu0
    %v7870 = vadd.f32 0.0, %v7869
    %7871 = vmatmul.f32.gmra.mxu0 %v7787
    %v7872 = vpop.f32.mrf.mxu0
    %v7873 = vadd.f32 0.0, %v7872
    %7874 = vmatmul.f32.gmra.mxu0 %v7789
    %v7875 = vpop.f32.mrf.mxu0
    %v7876 = vadd.f32 0.0, %v7875
    %7877 = vmatmul.f32.gmra.mxu0 %v7791
    %v7878 = vpop.f32.mrf.mxu0
    %v7879 = vadd.f32 0.0, %v7878
    %7880 = vmatmul.f32.gmra.mxu0 %v7793
    %v7881 = vpop.f32.mrf.mxu0
    %v7882 = vadd.f32 0.0, %v7881
    %7883 = vmatmul.f32.gmra.mxu0 %v7795
    %v7884 = vpop.f32.mrf.mxu0
    %v7885 = vadd.f32 0.0, %v7884
    %7886 = vmatmul.f32.gmra.mxu0 %v7797
    %v7887 = vpop.f32.mrf.mxu0
    %v7888 = vadd.f32 0.0, %v7887
    %7889 = vmatmul.f32.gmra.mxu0 %v7799
    %v7890 = vpop.f32.mrf.mxu0
    %v7891 = vadd.f32 0.0, %v7890
    %7892 = vmatmul.f32.gmra.mxu0 %v7801
    %v7893 = vpop.f32.mrf.mxu0
    %v7894 = vadd.f32 0.0, %v7893
    %7895 = vmatmul.f32.gmra.mxu0 %v7803
    %v7896 = vpop.f32.mrf.mxu0
    %v7897 = vadd.f32 0.0, %v7896
    %7898 = vmatmul.f32.gmra.mxu0 %v7805
    %v7899 = vpop.f32.mrf.mxu0
    %v7900 = vadd.f32 0.0, %v7899
    %7901 = vmatmul.f32.gmra.mxu0 %v7807
    %v7902 = vpop.f32.mrf.mxu0
    %v7903 = vadd.f32 0.0, %v7902
    %7904 = vdwg.mxu0
    %v7905 = vrcp.pop %v7809
    %v7906 = vrcp.pop %v7811
    %v7907 = vrcp.pop %v7813
    %v7908 = vrcp.pop %v7815
    %v7909 = vrcp.pop %v7817
    %v7910 = vrcp.pop %v7819
    %v7911 = vrcp.pop %v7821
    %v7912 = vrcp.pop %v7823
    %v7913 = vrcp.pop %v7825
    %v7914 = vrcp.pop %v7827
    %v7915 = vrcp.pop %v7829
    %v7916 = vrcp.pop %v7831
    %v7917 = vrcp.pop %v7833
    %v7918 = vrcp.pop %v7835
    %v7919 = vrcp.pop %v7837
    %v7920 = vrcp.pop %v7839
    %v7921 = vmul.f32 %v7858, %v7905
    %v7922 = vmul.f32 %v7861, %v7906
    %v7923 = vmul.f32 %v7864, %v7907
    %v7924 = vmul.f32 %v7867, %v7908
    %v7925 = vmul.f32 %v7870, %v7909
    %v7926 = vmul.f32 %v7873, %v7910
    %v7927 = vmul.f32 %v7876, %v7911
    %v7928 = vmul.f32 %v7879, %v7912
    %v7929 = vmul.f32 %v7882, %v7913
    %v7930 = vmul.f32 %v7885, %v7914
    %v7931 = vmul.f32 %v7888, %v7915
    %v7932 = vmul.f32 %v7891, %v7916
    %v7933 = vmul.f32 %v7894, %v7917
    %v7934 = vmul.f32 %v7897, %v7918
    %v7935 = vmul.f32 %v7900, %v7919
    %v7936 = vmul.f32 %v7903, %v7920
    %7937 = vst.msk [vmem:[#allocation2 + $0x188] sm:$0xff] %vm3693, %v7921
    %7938 = vst.msk [vmem:[#allocation2 + $0x1a0] sm:$0xff] %vm3693, %v7922
    %7939 = vst.msk [vmem:[#allocation2 + $0x1b8] sm:$0xff] %vm3693, %v7923
    %7940 = vst.msk [vmem:[#allocation2 + $0x1d0] sm:$0xff] %vm3693, %v7924
    %7941 = vst.msk [vmem:[#allocation2 + $0x1e8] sm:$0xff] %vm3693, %v7925
    %7942 = vst.msk [vmem:[#allocation2 + $0x200] sm:$0xff] %vm3693, %v7926
    %7943 = vst.msk [vmem:[#allocation2 + $0x218] sm:$0xff] %vm3693, %v7927
    %7944 = vst.msk [vmem:[#allocation2 + $0x230] sm:$0xff] %vm3693, %v7928
    %7945 = vst.msk [vmem:[#allocation2 + $0x248] sm:$0xff] %vm3693, %v7929
    %7946 = vst.msk [vmem:[#allocation2 + $0x260] sm:$0xff] %vm3693, %v7930
    %7947 = vst.msk [vmem:[#allocation2 + $0x278] sm:$0xff] %vm3693, %v7931
    %7948 = vst.msk [vmem:[#allocation2 + $0x290] sm:$0xff] %vm3693, %v7932
    %7949 = vst.msk [vmem:[#allocation2 + $0x2a8] sm:$0xff] %vm3693, %v7933
    %7950 = vst.msk [vmem:[#allocation2 + $0x2c0] sm:$0xff] %vm3693, %v7934
    %7951 = vst.msk [vmem:[#allocation2 + $0x2d8] sm:$0xff] %vm3693, %v7935
    %7952 = vst.msk [vmem:[#allocation2 + $0x2f0] sm:$0xff] %vm3693, %v7936
    %7953 = vrot.lane.b32.xlu0 %v1238, 64
    %v7954 = vpop.permute.xlu0 %7953
    %7955 = vrot.lane.b32.xlu0 %v1241, 64
    %v7956 = vpop.permute.xlu0 %7955
    %7957 = vrot.lane.b32.xlu0 %v1244, 64
    %v7958 = vpop.permute.xlu0 %7957
    %7959 = vrot.lane.b32.xlu0 %v1247, 64
    %v7960 = vpop.permute.xlu0 %7959
    %7961 = vrot.lane.b32.xlu0 %v1250, 64
    %v7962 = vpop.permute.xlu0 %7961
    %7963 = vrot.lane.b32.xlu0 %v1253, 64
    %v7964 = vpop.permute.xlu0 %7963
    %7965 = vrot.lane.b32.xlu0 %v1256, 64
    %v7966 = vpop.permute.xlu0 %7965
    %7967 = vrot.lane.b32.xlu0 %v1259, 64
    %v7968 = vpop.permute.xlu0 %7967
    %7969 = vrot.lane.b32.xlu0 %v1262, 64
    %v7970 = vpop.permute.xlu0 %7969
    %7971 = vrot.lane.b32.xlu0 %v1265, 64
    %v7972 = vpop.permute.xlu0 %7971
    %7973 = vrot.lane.b32.xlu0 %v1268, 64
    %v7974 = vpop.permute.xlu0 %7973
    %7975 = vrot.lane.b32.xlu0 %v1271, 64
    %v7976 = vpop.permute.xlu0 %7975
    %7977 = vrot.lane.b32.xlu0 %v1274, 64
    %v7978 = vpop.permute.xlu0 %7977
    %7979 = vrot.lane.b32.xlu0 %v1277, 64
    %v7980 = vpop.permute.xlu0 %7979
    %7981 = vrot.lane.b32.xlu0 %v1280, 64
    %v7982 = vpop.permute.xlu0 %7981
    %7983 = vrot.lane.b32.xlu0 %v1283, 64
    %v7984 = vpop.permute.xlu0 %7983
    %7985 = vrot.lane.b32.xlu0 %v2255, 64
    %v7986 = vpop.permute.xlu0 %7985
    %7987 = vrot.lane.b32.xlu0 %v2258, 64
    %v7988 = vpop.permute.xlu0 %7987
    %7989 = vrot.lane.b32.xlu0 %v2261, 64
    %v7990 = vpop.permute.xlu0 %7989
    %7991 = vrot.lane.b32.xlu0 %v2264, 64
    %v7992 = vpop.permute.xlu0 %7991
    %7993 = vrot.lane.b32.xlu0 %v2267, 64
    %v7994 = vpop.permute.xlu0 %7993
    %7995 = vrot.lane.b32.xlu0 %v2270, 64
    %v7996 = vpop.permute.xlu0 %7995
    %7997 = vrot.lane.b32.xlu0 %v2273, 64
    %v7998 = vpop.permute.xlu0 %7997
    %7999 = vrot.lane.b32.xlu0 %v2276, 64
    %v8000 = vpop.permute.xlu0 %7999
    %8001 = vrot.lane.b32.xlu0 %v2279, 64
    %v8002 = vpop.permute.xlu0 %8001
    %8003 = vrot.lane.b32.xlu0 %v2282, 64
    %v8004 = vpop.permute.xlu0 %8003
    %8005 = vrot.lane.b32.xlu0 %v2285, 64
    %v8006 = vpop.permute.xlu0 %8005
    %8007 = vrot.lane.b32.xlu0 %v2288, 64
    %v8008 = vpop.permute.xlu0 %8007
    %8009 = vrot.lane.b32.xlu0 %v2291, 64
    %v8010 = vpop.permute.xlu0 %8009
    %8011 = vrot.lane.b32.xlu0 %v2294, 64
    %v8012 = vpop.permute.xlu0 %8011
    %8013 = vrot.lane.b32.xlu0 %v2297, 64
    %v8014 = vpop.permute.xlu0 %8013
    %8015 = vrot.lane.b32.xlu0 %v2300, 64
    %v8016 = vpop.permute.xlu0 %8015
    %v8017 = vsel %vm3693, %v7954, 0
    %v8019 = vsel %vm3693, %v7956, 0
    %v8021 = vsel %vm3693, %v7958, 0
    %v8023 = vsel %vm3693, %v7960, 0
    %v8025 = vsel %vm3693, %v7962, 0
    %v8027 = vsel %vm3693, %v7964, 0
    %v8029 = vsel %vm3693, %v7966, 0
    %v8031 = vsel %vm3693, %v7968, 0
    %v8033 = vsel %vm3693, %v7970, 0
    %v8035 = vsel %vm3693, %v7972, 0
    %v8037 = vsel %vm3693, %v7974, 0
    %v8039 = vsel %vm3693, %v7976, 0
    %v8041 = vsel %vm3693, %v7978, 0
    %v8043 = vsel %vm3693, %v7980, 0
    %v8045 = vsel %vm3693, %v7982, 0
    %v8047 = vsel %vm3693, %v7984, 0
    %v8049 = vsel %vm3693, %v7986, 0
    %v8051 = vsel %vm3693, %v7988, 0
    %v8053 = vsel %vm3693, %v7990, 0
    %v8055 = vsel %vm3693, %v7992, 0
    %v8057 = vsel %vm3693, %v7994, 0
    %v8059 = vsel %vm3693, %v7996, 0
    %v8061 = vsel %vm3693, %v7998, 0
    %v8063 = vsel %vm3693, %v8000, 0
    %v8065 = vsel %vm3693, %v8002, 0
    %v8067 = vsel %vm3693, %v8004, 0
    %v8069 = vsel %vm3693, %v8006, 0
    %v8071 = vsel %vm3693, %v8008, 0
    %v8073 = vsel %vm3693, %v8010, 0
    %v8075 = vsel %vm3693, %v8012, 0
    %v8077 = vsel %vm3693, %v8014, 0
    %v8079 = vsel %vm3693, %v8016, 0
    %8081 = vmatpush.xpose.msra.mxu0 %v8079
    %8082 = vmatpush.xpose.msra.mxu0 %v8077
    %8083 = vmatpush.xpose.msra.mxu0 %v8075
    %8084 = vmatpush.xpose.msra.mxu0 %v8073
    %8085 = vmatpush.xpose.msra.mxu0 %v8071
    %8086 = vmatpush.xpose.msra.mxu0 %v8069
    %8087 = vmatpush.xpose.msra.mxu0 %v8067
    %8088 = vmatpush.xpose.msra.mxu0 %v8065
    %8089 = vmatpush.xpose.msra.mxu0 %v8063
    %8090 = vmatpush.xpose.msra.mxu0 %v8061
    %8091 = vmatpush.xpose.msra.mxu0 %v8059
    %8092 = vmatpush.xpose.msra.mxu0 %v8057
    %8093 = vmatpush.xpose.msra.mxu0 %v8055
    %8094 = vmatpush.xpose.msra.mxu0 %v8053
    %8095 = vmatpush.xpose.msra.mxu0 %v8051
    %8096 = vmatpush.xpose.msra.mxu0 %v8049
    %8097 = vmatmul.f32.gmra.mxu0 %v8017
    %v8098 = vpop.f32.mrf.mxu0
    %v8099 = vadd.f32 0.0, %v8098
    %8100 = vmatmul.f32.gmra.mxu0 %v8019
    %v8101 = vpop.f32.mrf.mxu0
    %v8102 = vadd.f32 0.0, %v8101
    %8103 = vmatmul.f32.gmra.mxu0 %v8021
    %v8104 = vpop.f32.mrf.mxu0
    %v8105 = vadd.f32 0.0, %v8104
    %8106 = vmatmul.f32.gmra.mxu0 %v8023
    %v8107 = vpop.f32.mrf.mxu0
    %v8108 = vadd.f32 0.0, %v8107
    %8109 = vmatmul.f32.gmra.mxu0 %v8025
    %v8110 = vpop.f32.mrf.mxu0
    %v8111 = vadd.f32 0.0, %v8110
    %8112 = vmatmul.f32.gmra.mxu0 %v8027
    %v8113 = vpop.f32.mrf.mxu0
    %v8114 = vadd.f32 0.0, %v8113
    %8115 = vmatmul.f32.gmra.mxu0 %v8029
    %v8116 = vpop.f32.mrf.mxu0
    %v8117 = vadd.f32 0.0, %v8116
    %8118 = vmatmul.f32.gmra.mxu0 %v8031
    %v8119 = vpop.f32.mrf.mxu0
    %v8120 = vadd.f32 0.0, %v8119
    %8121 = vmatmul.f32.gmra.mxu0 %v8033
    %v8122 = vpop.f32.mrf.mxu0
    %v8123 = vadd.f32 0.0, %v8122
    %8124 = vmatmul.f32.gmra.mxu0 %v8035
    %v8125 = vpop.f32.mrf.mxu0
    %v8126 = vadd.f32 0.0, %v8125
    %8127 = vmatmul.f32.gmra.mxu0 %v8037
    %v8128 = vpop.f32.mrf.mxu0
    %v8129 = vadd.f32 0.0, %v8128
    %8130 = vmatmul.f32.gmra.mxu0 %v8039
    %v8131 = vpop.f32.mrf.mxu0
    %v8132 = vadd.f32 0.0, %v8131
    %8133 = vmatmul.f32.gmra.mxu0 %v8041
    %v8134 = vpop.f32.mrf.mxu0
    %v8135 = vadd.f32 0.0, %v8134
    %8136 = vmatmul.f32.gmra.mxu0 %v8043
    %v8137 = vpop.f32.mrf.mxu0
    %v8138 = vadd.f32 0.0, %v8137
    %8139 = vmatmul.f32.gmra.mxu0 %v8045
    %v8140 = vpop.f32.mrf.mxu0
    %v8141 = vadd.f32 0.0, %v8140
    %8142 = vmatmul.f32.gmra.mxu0 %v8047
    %v8143 = vpop.f32.mrf.mxu0
    %v8144 = vadd.f32 0.0, %v8143
    %8145 = vdwg.mxu0
    %v8146 = vsel %vm3677, %v8099, -inf
    %v8147 = vsel %vm3678, %v8102, -inf
    %v8148 = vsel %vm3679, %v8105, -inf
    %v8149 = vsel %vm3680, %v8108, -inf
    %v8150 = vsel %vm3681, %v8111, -inf
    %v8151 = vsel %vm3682, %v8114, -inf
    %v8152 = vsel %vm3683, %v8117, -inf
    %v8153 = vsel %vm3684, %v8120, -inf
    %v8154 = vsel %vm3685, %v8123, -inf
    %v8155 = vsel %vm3686, %v8126, -inf
    %v8156 = vsel %vm3687, %v8129, -inf
    %v8157 = vsel %vm3688, %v8132, -inf
    %v8158 = vsel %vm3689, %v8135, -inf
    %v8159 = vsel %vm3690, %v8138, -inf
    %v8160 = vsel %vm3691, %v8141, -inf
    %v8161 = vsel %vm3692, %v8144, -inf
    %8162 = vmax.xlane.f32.xlu0 %v8146
    %v8163 = vpop.xlane.xlu0 %8162
    %8164 = vmax.xlane.f32.xlu0 %v8147
    %v8165 = vpop.xlane.xlu0 %8164
    %8166 = vmax.xlane.f32.xlu0 %v8148
    %v8167 = vpop.xlane.xlu0 %8166
    %8168 = vmax.xlane.f32.xlu0 %v8149
    %v8169 = vpop.xlane.xlu0 %8168
    %8170 = vmax.xlane.f32.xlu0 %v8150
    %v8171 = vpop.xlane.xlu0 %8170
    %8172 = vmax.xlane.f32.xlu0 %v8151
    %v8173 = vpop.xlane.xlu0 %8172
    %8174 = vmax.xlane.f32.xlu0 %v8152
    %v8175 = vpop.xlane.xlu0 %8174
    %8176 = vmax.xlane.f32.xlu0 %v8153
    %v8177 = vpop.xlane.xlu0 %8176
    %8178 = vmax.xlane.f32.xlu0 %v8154
    %v8179 = vpop.xlane.xlu0 %8178
    %8180 = vmax.xlane.f32.xlu0 %v8155
    %v8181 = vpop.xlane.xlu0 %8180
    %8182 = vmax.xlane.f32.xlu0 %v8156
    %v8183 = vpop.xlane.xlu0 %8182
    %8184 = vmax.xlane.f32.xlu0 %v8157
    %v8185 = vpop.xlane.xlu0 %8184
    %8186 = vmax.xlane.f32.xlu0 %v8158
    %v8187 = vpop.xlane.xlu0 %8186
    %8188 = vmax.xlane.f32.xlu0 %v8159
    %v8189 = vpop.xlane.xlu0 %8188
    %8190 = vmax.xlane.f32.xlu0 %v8160
    %v8191 = vpop.xlane.xlu0 %8190
    %8192 = vmax.xlane.f32.xlu0 %v8161
    %v8193 = vpop.xlane.xlu0 %8192
    %v8194 = vsub.f32 %v8146, %v8163
    %v8195 = vsub.f32 %v8147, %v8165
    %v8196 = vsub.f32 %v8148, %v8167
    %v8197 = vsub.f32 %v8149, %v8169
    %v8198 = vsub.f32 %v8150, %v8171
    %v8199 = vsub.f32 %v8151, %v8173
    %v8200 = vsub.f32 %v8152, %v8175
    %v8201 = vsub.f32 %v8153, %v8177
    %v8202 = vsub.f32 %v8154, %v8179
    %v8203 = vsub.f32 %v8155, %v8181
    %v8204 = vsub.f32 %v8156, %v8183
    %v8205 = vsub.f32 %v8157, %v8185
    %v8206 = vsub.f32 %v8158, %v8187
    %v8207 = vsub.f32 %v8159, %v8189
    %v8208 = vsub.f32 %v8160, %v8191
    %v8209 = vsub.f32 %v8161, %v8193
    %v8210 = vmul.f32 %v8194, 1.442695
    %v8211 = vpow.pop %v8210
    %v8212 = vmul.f32 %v8195, 1.442695
    %v8213 = vpow.pop %v8212
    %v8214 = vmul.f32 %v8196, 1.442695
    %v8215 = vpow.pop %v8214
    %v8216 = vmul.f32 %v8197, 1.442695
    %v8217 = vpow.pop %v8216
    %v8218 = vmul.f32 %v8198, 1.442695
    %v8219 = vpow.pop %v8218
    %v8220 = vmul.f32 %v8199, 1.442695
    %v8221 = vpow.pop %v8220
    %v8222 = vmul.f32 %v8200, 1.442695
    %v8223 = vpow.pop %v8222
    %v8224 = vmul.f32 %v8201, 1.442695
    %v8225 = vpow.pop %v8224
    %v8226 = vmul.f32 %v8202, 1.442695
    %v8227 = vpow.pop %v8226
    %v8228 = vmul.f32 %v8203, 1.442695
    %v8229 = vpow.pop %v8228
    %v8230 = vmul.f32 %v8204, 1.442695
    %v8231 = vpow.pop %v8230
    %v8232 = vmul.f32 %v8205, 1.442695
    %v8233 = vpow.pop %v8232
    %v8234 = vmul.f32 %v8206, 1.442695
    %v8235 = vpow.pop %v8234
    %v8236 = vmul.f32 %v8207, 1.442695
    %v8237 = vpow.pop %v8236
    %v8238 = vmul.f32 %v8208, 1.442695
    %v8239 = vpow.pop %v8238
    %v8240 = vmul.f32 %v8209, 1.442695
    %v8241 = vpow.pop %v8240
    %8242 = vadd.xlane.f32.xlu0 %v8211
    %v8243 = vpop.xlane.xlu0 %8242
    %8244 = vadd.xlane.f32.xlu0 %v8213
    %v8245 = vpop.xlane.xlu0 %8244
    %8246 = vadd.xlane.f32.xlu0 %v8215
    %v8247 = vpop.xlane.xlu0 %8246
    %8248 = vadd.xlane.f32.xlu0 %v8217
    %v8249 = vpop.xlane.xlu0 %8248
    %8250 = vadd.xlane.f32.xlu0 %v8219
    %v8251 = vpop.xlane.xlu0 %8250
    %8252 = vadd.xlane.f32.xlu0 %v8221
    %v8253 = vpop.xlane.xlu0 %8252
    %8254 = vadd.xlane.f32.xlu0 %v8223
    %v8255 = vpop.xlane.xlu0 %8254
    %8256 = vadd.xlane.f32.xlu0 %v8225
    %v8257 = vpop.xlane.xlu0 %8256
    %8258 = vadd.xlane.f32.xlu0 %v8227
    %v8259 = vpop.xlane.xlu0 %8258
    %8260 = vadd.xlane.f32.xlu0 %v8229
    %v8261 = vpop.xlane.xlu0 %8260
    %8262 = vadd.xlane.f32.xlu0 %v8231
    %v8263 = vpop.xlane.xlu0 %8262
    %8264 = vadd.xlane.f32.xlu0 %v8233
    %v8265 = vpop.xlane.xlu0 %8264
    %8266 = vadd.xlane.f32.xlu0 %v8235
    %v8267 = vpop.xlane.xlu0 %8266
    %8268 = vadd.xlane.f32.xlu0 %v8237
    %v8269 = vpop.xlane.xlu0 %8268
    %8270 = vadd.xlane.f32.xlu0 %v8239
    %v8271 = vpop.xlane.xlu0 %8270
    %8272 = vadd.xlane.f32.xlu0 %v8241
    %v8273 = vpop.xlane.xlu0 %8272
    %8290 = vrot.lane.b32.xlu0 %v3272, 64
    %v8291 = vpop.permute.xlu0 %8290
    %8292 = vrot.lane.b32.xlu0 %v3275, 64
    %v8293 = vpop.permute.xlu0 %8292
    %8294 = vrot.lane.b32.xlu0 %v3278, 64
    %v8295 = vpop.permute.xlu0 %8294
    %8296 = vrot.lane.b32.xlu0 %v3281, 64
    %v8297 = vpop.permute.xlu0 %8296
    %8298 = vrot.lane.b32.xlu0 %v3284, 64
    %v8299 = vpop.permute.xlu0 %8298
    %8300 = vrot.lane.b32.xlu0 %v3287, 64
    %v8301 = vpop.permute.xlu0 %8300
    %8302 = vrot.lane.b32.xlu0 %v3290, 64
    %v8303 = vpop.permute.xlu0 %8302
    %8304 = vrot.lane.b32.xlu0 %v3293, 64
    %v8305 = vpop.permute.xlu0 %8304
    %8306 = vrot.lane.b32.xlu0 %v3296, 64
    %v8307 = vpop.permute.xlu0 %8306
    %8308 = vrot.lane.b32.xlu0 %v3299, 64
    %v8309 = vpop.permute.xlu0 %8308
    %8310 = vrot.lane.b32.xlu0 %v3302, 64
    %v8311 = vpop.permute.xlu0 %8310
    %8312 = vrot.lane.b32.xlu0 %v3305, 64
    %v8313 = vpop.permute.xlu0 %8312
    %8314 = vrot.lane.b32.xlu0 %v3308, 64
    %v8315 = vpop.permute.xlu0 %8314
    %8316 = vrot.lane.b32.xlu0 %v3311, 64
    %v8317 = vpop.permute.xlu0 %8316
    %8318 = vrot.lane.b32.xlu0 %v3314, 64
    %v8319 = vpop.permute.xlu0 %8318
    %8320 = vrot.lane.b32.xlu0 %v3317, 64
    %v8321 = vpop.permute.xlu0 %8320
    %8338 = vmatpush.msra.mxu0 %v8321
    %8339 = vmatpush.msra.mxu0 %v8319
    %8340 = vmatpush.msra.mxu0 %v8317
    %8341 = vmatpush.msra.mxu0 %v8315
    %8342 = vmatpush.msra.mxu0 %v8313
    %8343 = vmatpush.msra.mxu0 %v8311
    %8344 = vmatpush.msra.mxu0 %v8309
    %8345 = vmatpush.msra.mxu0 %v8307
    %8346 = vmatpush.msra.mxu0 %v8305
    %8347 = vmatpush.msra.mxu0 %v8303
    %8348 = vmatpush.msra.mxu0 %v8301
    %8349 = vmatpush.msra.mxu0 %v8299
    %8350 = vmatpush.msra.mxu0 %v8297
    %8351 = vmatpush.msra.mxu0 %v8295
    %8352 = vmatpush.msra.mxu0 %v8293
    %8353 = vmatpush.msra.mxu0 %v8291
    %8354 = vmatmul.f32.gmra.mxu0 %v8211
    %v8355 = vpop.f32.mrf.mxu0
    %v8356 = vadd.f32 0.0, %v8355
    %8357 = vmatmul.f32.gmra.mxu0 %v8213
    %v8358 = vpop.f32.mrf.mxu0
    %v8359 = vadd.f32 0.0, %v8358
    %8360 = vmatmul.f32.gmra.mxu0 %v8215
    %v8361 = vpop.f32.mrf.mxu0
    %v8362 = vadd.f32 0.0, %v8361
    %8363 = vmatmul.f32.gmra.mxu0 %v8217
    %v8364 = vpop.f32.mrf.mxu0
    %v8365 = vadd.f32 0.0, %v8364
    %8366 = vmatmul.f32.gmra.mxu0 %v8219
    %v8367 = vpop.f32.mrf.mxu0
    %v8368 = vadd.f32 0.0, %v8367
    %8369 = vmatmul.f32.gmra.mxu0 %v8221
    %v8370 = vpop.f32.mrf.mxu0
    %v8371 = vadd.f32 0.0, %v8370
    %8372 = vmatmul.f32.gmra.mxu0 %v8223
    %v8373 = vpop.f32.mrf.mxu0
    %v8374 = vadd.f32 0.0, %v8373
    %8375 = vmatmul.f32.gmra.mxu0 %v8225
    %v8376 = vpop.f32.mrf.mxu0
    %v8377 = vadd.f32 0.0, %v8376
    %8378 = vmatmul.f32.gmra.mxu0 %v8227
    %v8379 = vpop.f32.mrf.mxu0
    %v8380 = vadd.f32 0.0, %v8379
    %8381 = vmatmul.f32.gmra.mxu0 %v8229
    %v8382 = vpop.f32.mrf.mxu0
    %v8383 = vadd.f32 0.0, %v8382
    %8384 = vmatmul.f32.gmra.mxu0 %v8231
    %v8385 = vpop.f32.mrf.mxu0
    %v8386 = vadd.f32 0.0, %v8385
    %8387 = vmatmul.f32.gmra.mxu0 %v8233
    %v8388 = vpop.f32.mrf.mxu0
    %v8389 = vadd.f32 0.0, %v8388
    %8390 = vmatmul.f32.gmra.mxu0 %v8235
    %v8391 = vpop.f32.mrf.mxu0
    %v8392 = vadd.f32 0.0, %v8391
    %8393 = vmatmul.f32.gmra.mxu0 %v8237
    %v8394 = vpop.f32.mrf.mxu0
    %v8395 = vadd.f32 0.0, %v8394
    %8396 = vmatmul.f32.gmra.mxu0 %v8239
    %v8397 = vpop.f32.mrf.mxu0
    %v8398 = vadd.f32 0.0, %v8397
    %8399 = vmatmul.f32.gmra.mxu0 %v8241
    %v8400 = vpop.f32.mrf.mxu0
    %v8401 = vadd.f32 0.0, %v8400
    %8402 = vdwg.mxu0
    %v8403 = vrcp.pop %v8243
    %v8404 = vrcp.pop %v8245
    %v8405 = vrcp.pop %v8247
    %v8406 = vrcp.pop %v8249
    %v8407 = vrcp.pop %v8251
    %v8408 = vrcp.pop %v8253
    %v8409 = vrcp.pop %v8255
    %v8410 = vrcp.pop %v8257
    %v8411 = vrcp.pop %v8259
    %v8412 = vrcp.pop %v8261
    %v8413 = vrcp.pop %v8263
    %v8414 = vrcp.pop %v8265
    %v8415 = vrcp.pop %v8267
    %v8416 = vrcp.pop %v8269
    %v8417 = vrcp.pop %v8271
    %v8418 = vrcp.pop %v8273
    %v8419 = vmul.f32 %v8356, %v8403
    %v8420 = vmul.f32 %v8359, %v8404
    %v8421 = vmul.f32 %v8362, %v8405
    %v8422 = vmul.f32 %v8365, %v8406
    %v8423 = vmul.f32 %v8368, %v8407
    %v8424 = vmul.f32 %v8371, %v8408
    %v8425 = vmul.f32 %v8374, %v8409
    %v8426 = vmul.f32 %v8377, %v8410
    %v8427 = vmul.f32 %v8380, %v8411
    %v8428 = vmul.f32 %v8383, %v8412
    %v8429 = vmul.f32 %v8386, %v8413
    %v8430 = vmul.f32 %v8389, %v8414
    %v8431 = vmul.f32 %v8392, %v8415
    %v8432 = vmul.f32 %v8395, %v8416
    %v8433 = vmul.f32 %v8398, %v8417
    %v8434 = vmul.f32 %v8401, %v8418
    %8451 = vrot.lane.b32.xlu0 %v8419, 64
    %v8452 = vpop.permute.xlu0 %8451
    %8453 = vrot.lane.b32.xlu0 %v8420, 64
    %v8454 = vpop.permute.xlu0 %8453
    %8455 = vrot.lane.b32.xlu0 %v8421, 64
    %v8456 = vpop.permute.xlu0 %8455
    %8457 = vrot.lane.b32.xlu0 %v8422, 64
    %v8458 = vpop.permute.xlu0 %8457
    %8459 = vrot.lane.b32.xlu0 %v8423, 64
    %v8460 = vpop.permute.xlu0 %8459
    %8461 = vrot.lane.b32.xlu0 %v8424, 64
    %v8462 = vpop.permute.xlu0 %8461
    %8463 = vrot.lane.b32.xlu0 %v8425, 64
    %v8464 = vpop.permute.xlu0 %8463
    %8465 = vrot.lane.b32.xlu0 %v8426, 64
    %v8466 = vpop.permute.xlu0 %8465
    %8467 = vrot.lane.b32.xlu0 %v8427, 64
    %v8468 = vpop.permute.xlu0 %8467
    %8469 = vrot.lane.b32.xlu0 %v8428, 64
    %v8470 = vpop.permute.xlu0 %8469
    %8471 = vrot.lane.b32.xlu0 %v8429, 64
    %v8472 = vpop.permute.xlu0 %8471
    %8473 = vrot.lane.b32.xlu0 %v8430, 64
    %v8474 = vpop.permute.xlu0 %8473
    %8475 = vrot.lane.b32.xlu0 %v8431, 64
    %v8476 = vpop.permute.xlu0 %8475
    %8477 = vrot.lane.b32.xlu0 %v8432, 64
    %v8478 = vpop.permute.xlu0 %8477
    %8479 = vrot.lane.b32.xlu0 %v8433, 64
    %v8480 = vpop.permute.xlu0 %8479
    %8481 = vrot.lane.b32.xlu0 %v8434, 64
    %v8482 = vpop.permute.xlu0 %8481
    %8499 = vst.msk [vmem:[#allocation2 + $0x188] sm:$0xff] %vm4642, %v8452
    %8500 = vst.msk [vmem:[#allocation2 + $0x1a0] sm:$0xff] %vm4642, %v8454
    %8501 = vst.msk [vmem:[#allocation2 + $0x1b8] sm:$0xff] %vm4642, %v8456
    %8502 = vst.msk [vmem:[#allocation2 + $0x1d0] sm:$0xff] %vm4642, %v8458
    %8503 = vst.msk [vmem:[#allocation2 + $0x1e8] sm:$0xff] %vm4642, %v8460
    %8504 = vst.msk [vmem:[#allocation2 + $0x200] sm:$0xff] %vm4642, %v8462
    %8505 = vst.msk [vmem:[#allocation2 + $0x218] sm:$0xff] %vm4642, %v8464
    %8506 = vst.msk [vmem:[#allocation2 + $0x230] sm:$0xff] %vm4642, %v8466
    %8507 = vst.msk [vmem:[#allocation2 + $0x248] sm:$0xff] %vm4642, %v8468
    %8508 = vst.msk [vmem:[#allocation2 + $0x260] sm:$0xff] %vm4642, %v8470
    %8509 = vst.msk [vmem:[#allocation2 + $0x278] sm:$0xff] %vm4642, %v8472
    %8510 = vst.msk [vmem:[#allocation2 + $0x290] sm:$0xff] %vm4642, %v8474
    %8511 = vst.msk [vmem:[#allocation2 + $0x2a8] sm:$0xff] %vm4642, %v8476
    %8512 = vst.msk [vmem:[#allocation2 + $0x2c0] sm:$0xff] %vm4642, %v8478
    %8513 = vst.msk [vmem:[#allocation2 + $0x2d8] sm:$0xff] %vm4642, %v8480
    %8514 = vst.msk [vmem:[#allocation2 + $0x2f0] sm:$0xff] %vm4642, %v8482
    %v8516 = vsel %vm3693, %v1577, 0
    %v8519 = vsel %vm3693, %v1580, 0
    %v8522 = vsel %vm3693, %v1583, 0
    %v8525 = vsel %vm3693, %v1586, 0
    %v8528 = vsel %vm3693, %v1589, 0
    %v8531 = vsel %vm3693, %v1592, 0
    %v8534 = vsel %vm3693, %v1595, 0
    %v8537 = vsel %vm3693, %v1598, 0
    %v8540 = vsel %vm3693, %v1601, 0
    %v8543 = vsel %vm3693, %v1604, 0
    %v8546 = vsel %vm3693, %v1607, 0
    %v8549 = vsel %vm3693, %v1610, 0
    %v8552 = vsel %vm3693, %v1613, 0
    %v8555 = vsel %vm3693, %v1616, 0
    %v8558 = vsel %vm3693, %v1619, 0
    %v8561 = vsel %vm3693, %v1622, 0
    %v8564 = vsel %vm3693, %v2594, 0
    %v8567 = vsel %vm3693, %v2597, 0
    %v8570 = vsel %vm3693, %v2600, 0
    %v8573 = vsel %vm3693, %v2603, 0
    %v8576 = vsel %vm3693, %v2606, 0
    %v8579 = vsel %vm3693, %v2609, 0
    %v8582 = vsel %vm3693, %v2612, 0
    %v8585 = vsel %vm3693, %v2615, 0
    %v8588 = vsel %vm3693, %v2618, 0
    %v8591 = vsel %vm3693, %v2621, 0
    %v8594 = vsel %vm3693, %v2624, 0
    %v8597 = vsel %vm3693, %v2627, 0
    %v8600 = vsel %vm3693, %v2630, 0
    %v8603 = vsel %vm3693, %v2633, 0
    %v8606 = vsel %vm3693, %v2636, 0
    %v8609 = vsel %vm3693, %v2639, 0
    %8611 = vmatpush.xpose.msra.mxu0 %v8609
    %8612 = vmatpush.xpose.msra.mxu0 %v8606
    %8613 = vmatpush.xpose.msra.mxu0 %v8603
    %8614 = vmatpush.xpose.msra.mxu0 %v8600
    %8615 = vmatpush.xpose.msra.mxu0 %v8597
    %8616 = vmatpush.xpose.msra.mxu0 %v8594
    %8617 = vmatpush.xpose.msra.mxu0 %v8591
    %8618 = vmatpush.xpose.msra.mxu0 %v8588
    %8619 = vmatpush.xpose.msra.mxu0 %v8585
    %8620 = vmatpush.xpose.msra.mxu0 %v8582
    %8621 = vmatpush.xpose.msra.mxu0 %v8579
    %8622 = vmatpush.xpose.msra.mxu0 %v8576
    %8623 = vmatpush.xpose.msra.mxu0 %v8573
    %8624 = vmatpush.xpose.msra.mxu0 %v8570
    %8625 = vmatpush.xpose.msra.mxu0 %v8567
    %8626 = vmatpush.xpose.msra.mxu0 %v8564
    %8627 = vmatmul.f32.gmra.mxu0 %v8516
    %v8628 = vpop.f32.mrf.mxu0
    %v8629 = vadd.f32 0.0, %v8628
    %8630 = vmatmul.f32.gmra.mxu0 %v8519
    %v8631 = vpop.f32.mrf.mxu0
    %v8632 = vadd.f32 0.0, %v8631
    %8633 = vmatmul.f32.gmra.mxu0 %v8522
    %v8634 = vpop.f32.mrf.mxu0
    %v8635 = vadd.f32 0.0, %v8634
    %8636 = vmatmul.f32.gmra.mxu0 %v8525
    %v8637 = vpop.f32.mrf.mxu0
    %v8638 = vadd.f32 0.0, %v8637
    %8639 = vmatmul.f32.gmra.mxu0 %v8528
    %v8640 = vpop.f32.mrf.mxu0
    %v8641 = vadd.f32 0.0, %v8640
    %8642 = vmatmul.f32.gmra.mxu0 %v8531
    %v8643 = vpop.f32.mrf.mxu0
    %v8644 = vadd.f32 0.0, %v8643
    %8645 = vmatmul.f32.gmra.mxu0 %v8534
    %v8646 = vpop.f32.mrf.mxu0
    %v8647 = vadd.f32 0.0, %v8646
    %8648 = vmatmul.f32.gmra.mxu0 %v8537
    %v8649 = vpop.f32.mrf.mxu0
    %v8650 = vadd.f32 0.0, %v8649
    %8651 = vmatmul.f32.gmra.mxu0 %v8540
    %v8652 = vpop.f32.mrf.mxu0
    %v8653 = vadd.f32 0.0, %v8652
    %8654 = vmatmul.f32.gmra.mxu0 %v8543
    %v8655 = vpop.f32.mrf.mxu0
    %v8656 = vadd.f32 0.0, %v8655
    %8657 = vmatmul.f32.gmra.mxu0 %v8546
    %v8658 = vpop.f32.mrf.mxu0
    %v8659 = vadd.f32 0.0, %v8658
    %8660 = vmatmul.f32.gmra.mxu0 %v8549
    %v8661 = vpop.f32.mrf.mxu0
    %v8662 = vadd.f32 0.0, %v8661
    %8663 = vmatmul.f32.gmra.mxu0 %v8552
    %v8664 = vpop.f32.mrf.mxu0
    %v8665 = vadd.f32 0.0, %v8664
    %8666 = vmatmul.f32.gmra.mxu0 %v8555
    %v8667 = vpop.f32.mrf.mxu0
    %v8668 = vadd.f32 0.0, %v8667
    %8669 = vmatmul.f32.gmra.mxu0 %v8558
    %v8670 = vpop.f32.mrf.mxu0
    %v8671 = vadd.f32 0.0, %v8670
    %8672 = vmatmul.f32.gmra.mxu0 %v8561
    %v8673 = vpop.f32.mrf.mxu0
    %v8674 = vadd.f32 0.0, %v8673
    %8675 = vdwg.mxu0
    %v8676 = vsel %vm3677, %v8629, -inf
    %v8677 = vsel %vm3678, %v8632, -inf
    %v8678 = vsel %vm3679, %v8635, -inf
    %v8679 = vsel %vm3680, %v8638, -inf
    %v8680 = vsel %vm3681, %v8641, -inf
    %v8681 = vsel %vm3682, %v8644, -inf
    %v8682 = vsel %vm3683, %v8647, -inf
    %v8683 = vsel %vm3684, %v8650, -inf
    %v8684 = vsel %vm3685, %v8653, -inf
    %v8685 = vsel %vm3686, %v8656, -inf
    %v8686 = vsel %vm3687, %v8659, -inf
    %v8687 = vsel %vm3688, %v8662, -inf
    %v8688 = vsel %vm3689, %v8665, -inf
    %v8689 = vsel %vm3690, %v8668, -inf
    %v8690 = vsel %vm3691, %v8671, -inf
    %v8691 = vsel %vm3692, %v8674, -inf
    %8692 = vmax.xlane.f32.xlu0 %v8676
    %v8693 = vpop.xlane.xlu0 %8692
    %8694 = vmax.xlane.f32.xlu0 %v8677
    %v8695 = vpop.xlane.xlu0 %8694
    %8696 = vmax.xlane.f32.xlu0 %v8678
    %v8697 = vpop.xlane.xlu0 %8696
    %8698 = vmax.xlane.f32.xlu0 %v8679
    %v8699 = vpop.xlane.xlu0 %8698
    %8700 = vmax.xlane.f32.xlu0 %v8680
    %v8701 = vpop.xlane.xlu0 %8700
    %8702 = vmax.xlane.f32.xlu0 %v8681
    %v8703 = vpop.xlane.xlu0 %8702
    %8704 = vmax.xlane.f32.xlu0 %v8682
    %v8705 = vpop.xlane.xlu0 %8704
    %8706 = vmax.xlane.f32.xlu0 %v8683
    %v8707 = vpop.xlane.xlu0 %8706
    %8708 = vmax.xlane.f32.xlu0 %v8684
    %v8709 = vpop.xlane.xlu0 %8708
    %8710 = vmax.xlane.f32.xlu0 %v8685
    %v8711 = vpop.xlane.xlu0 %8710
    %8712 = vmax.xlane.f32.xlu0 %v8686
    %v8713 = vpop.xlane.xlu0 %8712
    %8714 = vmax.xlane.f32.xlu0 %v8687
    %v8715 = vpop.xlane.xlu0 %8714
    %8716 = vmax.xlane.f32.xlu0 %v8688
    %v8717 = vpop.xlane.xlu0 %8716
    %8718 = vmax.xlane.f32.xlu0 %v8689
    %v8719 = vpop.xlane.xlu0 %8718
    %8720 = vmax.xlane.f32.xlu0 %v8690
    %v8721 = vpop.xlane.xlu0 %8720
    %8722 = vmax.xlane.f32.xlu0 %v8691
    %v8723 = vpop.xlane.xlu0 %8722
    %v8724 = vsub.f32 %v8676, %v8693
    %v8725 = vsub.f32 %v8677, %v8695
    %v8726 = vsub.f32 %v8678, %v8697
    %v8727 = vsub.f32 %v8679, %v8699
    %v8728 = vsub.f32 %v8680, %v8701
    %v8729 = vsub.f32 %v8681, %v8703
    %v8730 = vsub.f32 %v8682, %v8705
    %v8731 = vsub.f32 %v8683, %v8707
    %v8732 = vsub.f32 %v8684, %v8709
    %v8733 = vsub.f32 %v8685, %v8711
    %v8734 = vsub.f32 %v8686, %v8713
    %v8735 = vsub.f32 %v8687, %v8715
    %v8736 = vsub.f32 %v8688, %v8717
    %v8737 = vsub.f32 %v8689, %v8719
    %v8738 = vsub.f32 %v8690, %v8721
    %v8739 = vsub.f32 %v8691, %v8723
    %v8740 = vmul.f32 %v8724, 1.442695
    %v8741 = vpow.pop %v8740
    %v8742 = vmul.f32 %v8725, 1.442695
    %v8743 = vpow.pop %v8742
    %v8744 = vmul.f32 %v8726, 1.442695
    %v8745 = vpow.pop %v8744
    %v8746 = vmul.f32 %v8727, 1.442695
    %v8747 = vpow.pop %v8746
    %v8748 = vmul.f32 %v8728, 1.442695
    %v8749 = vpow.pop %v8748
    %v8750 = vmul.f32 %v8729, 1.442695
    %v8751 = vpow.pop %v8750
    %v8752 = vmul.f32 %v8730, 1.442695
    %v8753 = vpow.pop %v8752
    %v8754 = vmul.f32 %v8731, 1.442695
    %v8755 = vpow.pop %v8754
    %v8756 = vmul.f32 %v8732, 1.442695
    %v8757 = vpow.pop %v8756
    %v8758 = vmul.f32 %v8733, 1.442695
    %v8759 = vpow.pop %v8758
    %v8760 = vmul.f32 %v8734, 1.442695
    %v8761 = vpow.pop %v8760
    %v8762 = vmul.f32 %v8735, 1.442695
    %v8763 = vpow.pop %v8762
    %v8764 = vmul.f32 %v8736, 1.442695
    %v8765 = vpow.pop %v8764
    %v8766 = vmul.f32 %v8737, 1.442695
    %v8767 = vpow.pop %v8766
    %v8768 = vmul.f32 %v8738, 1.442695
    %v8769 = vpow.pop %v8768
    %v8770 = vmul.f32 %v8739, 1.442695
    %v8771 = vpow.pop %v8770
    %8772 = vadd.xlane.f32.xlu0 %v8741
    %v8773 = vpop.xlane.xlu0 %8772
    %8774 = vadd.xlane.f32.xlu0 %v8743
    %v8775 = vpop.xlane.xlu0 %8774
    %8776 = vadd.xlane.f32.xlu0 %v8745
    %v8777 = vpop.xlane.xlu0 %8776
    %8778 = vadd.xlane.f32.xlu0 %v8747
    %v8779 = vpop.xlane.xlu0 %8778
    %8780 = vadd.xlane.f32.xlu0 %v8749
    %v8781 = vpop.xlane.xlu0 %8780
    %8782 = vadd.xlane.f32.xlu0 %v8751
    %v8783 = vpop.xlane.xlu0 %8782
    %8784 = vadd.xlane.f32.xlu0 %v8753
    %v8785 = vpop.xlane.xlu0 %8784
    %8786 = vadd.xlane.f32.xlu0 %v8755
    %v8787 = vpop.xlane.xlu0 %8786
    %8788 = vadd.xlane.f32.xlu0 %v8757
    %v8789 = vpop.xlane.xlu0 %8788
    %8790 = vadd.xlane.f32.xlu0 %v8759
    %v8791 = vpop.xlane.xlu0 %8790
    %8792 = vadd.xlane.f32.xlu0 %v8761
    %v8793 = vpop.xlane.xlu0 %8792
    %8794 = vadd.xlane.f32.xlu0 %v8763
    %v8795 = vpop.xlane.xlu0 %8794
    %8796 = vadd.xlane.f32.xlu0 %v8765
    %v8797 = vpop.xlane.xlu0 %8796
    %8798 = vadd.xlane.f32.xlu0 %v8767
    %v8799 = vpop.xlane.xlu0 %8798
    %8800 = vadd.xlane.f32.xlu0 %v8769
    %v8801 = vpop.xlane.xlu0 %8800
    %8802 = vadd.xlane.f32.xlu0 %v8771
    %v8803 = vpop.xlane.xlu0 %8802
    %8804 = vmatpush.msra.mxu0 %v3656
    %8805 = vmatpush.msra.mxu0 %v3653
    %8806 = vmatpush.msra.mxu0 %v3650
    %8807 = vmatpush.msra.mxu0 %v3647
    %8808 = vmatpush.msra.mxu0 %v3644
    %8809 = vmatpush.msra.mxu0 %v3641
    %8810 = vmatpush.msra.mxu0 %v3638
    %8811 = vmatpush.msra.mxu0 %v3635
    %8812 = vmatpush.msra.mxu0 %v3632
    %8813 = vmatpush.msra.mxu0 %v3629
    %8814 = vmatpush.msra.mxu0 %v3626
    %8815 = vmatpush.msra.mxu0 %v3623
    %8816 = vmatpush.msra.mxu0 %v3620
    %8817 = vmatpush.msra.mxu0 %v3617
    %8818 = vmatpush.msra.mxu0 %v3614
    %8819 = vmatpush.msra.mxu0 %v3611
    %8820 = vmatmul.f32.gmra.mxu0 %v8741
    %v8821 = vpop.f32.mrf.mxu0
    %v8822 = vadd.f32 0.0, %v8821
    %8823 = vmatmul.f32.gmra.mxu0 %v8743
    %v8824 = vpop.f32.mrf.mxu0
    %v8825 = vadd.f32 0.0, %v8824
    %8826 = vmatmul.f32.gmra.mxu0 %v8745
    %v8827 = vpop.f32.mrf.mxu0
    %v8828 = vadd.f32 0.0, %v8827
    %8829 = vmatmul.f32.gmra.mxu0 %v8747
    %v8830 = vpop.f32.mrf.mxu0
    %v8831 = vadd.f32 0.0, %v8830
    %8832 = vmatmul.f32.gmra.mxu0 %v8749
    %v8833 = vpop.f32.mrf.mxu0
    %v8834 = vadd.f32 0.0, %v8833
    %8835 = vmatmul.f32.gmra.mxu0 %v8751
    %v8836 = vpop.f32.mrf.mxu0
    %v8837 = vadd.f32 0.0, %v8836
    %8838 = vmatmul.f32.gmra.mxu0 %v8753
    %v8839 = vpop.f32.mrf.mxu0
    %v8840 = vadd.f32 0.0, %v8839
    %8841 = vmatmul.f32.gmra.mxu0 %v8755
    %v8842 = vpop.f32.mrf.mxu0
    %v8843 = vadd.f32 0.0, %v8842
    %8844 = vmatmul.f32.gmra.mxu0 %v8757
    %v8845 = vpop.f32.mrf.mxu0
    %v8846 = vadd.f32 0.0, %v8845
    %8847 = vmatmul.f32.gmra.mxu0 %v8759
    %v8848 = vpop.f32.mrf.mxu0
    %v8849 = vadd.f32 0.0, %v8848
    %8850 = vmatmul.f32.gmra.mxu0 %v8761
    %v8851 = vpop.f32.mrf.mxu0
    %v8852 = vadd.f32 0.0, %v8851
    %8853 = vmatmul.f32.gmra.mxu0 %v8763
    %v8854 = vpop.f32.mrf.mxu0
    %v8855 = vadd.f32 0.0, %v8854
    %8856 = vmatmul.f32.gmra.mxu0 %v8765
    %v8857 = vpop.f32.mrf.mxu0
    %v8858 = vadd.f32 0.0, %v8857
    %8859 = vmatmul.f32.gmra.mxu0 %v8767
    %v8860 = vpop.f32.mrf.mxu0
    %v8861 = vadd.f32 0.0, %v8860
    %8862 = vmatmul.f32.gmra.mxu0 %v8769
    %v8863 = vpop.f32.mrf.mxu0
    %v8864 = vadd.f32 0.0, %v8863
    %8865 = vmatmul.f32.gmra.mxu0 %v8771
    %v8866 = vpop.f32.mrf.mxu0
    %v8867 = vadd.f32 0.0, %v8866
    %8868 = vdwg.mxu0
    %v8869 = vrcp.pop %v8773
    %v8870 = vrcp.pop %v8775
    %v8871 = vrcp.pop %v8777
    %v8872 = vrcp.pop %v8779
    %v8873 = vrcp.pop %v8781
    %v8874 = vrcp.pop %v8783
    %v8875 = vrcp.pop %v8785
    %v8876 = vrcp.pop %v8787
    %v8877 = vrcp.pop %v8789
    %v8878 = vrcp.pop %v8791
    %v8879 = vrcp.pop %v8793
    %v8880 = vrcp.pop %v8795
    %v8881 = vrcp.pop %v8797
    %v8882 = vrcp.pop %v8799
    %v8883 = vrcp.pop %v8801
    %v8884 = vrcp.pop %v8803
    %v8885 = vmul.f32 %v8822, %v8869
    %v8886 = vmul.f32 %v8825, %v8870
    %v8887 = vmul.f32 %v8828, %v8871
    %v8888 = vmul.f32 %v8831, %v8872
    %v8889 = vmul.f32 %v8834, %v8873
    %v8890 = vmul.f32 %v8837, %v8874
    %v8891 = vmul.f32 %v8840, %v8875
    %v8892 = vmul.f32 %v8843, %v8876
    %v8893 = vmul.f32 %v8846, %v8877
    %v8894 = vmul.f32 %v8849, %v8878
    %v8895 = vmul.f32 %v8852, %v8879
    %v8896 = vmul.f32 %v8855, %v8880
    %v8897 = vmul.f32 %v8858, %v8881
    %v8898 = vmul.f32 %v8861, %v8882
    %v8899 = vmul.f32 %v8864, %v8883
    %v8900 = vmul.f32 %v8867, %v8884
    %8901 = vst.msk [vmem:[#allocation2 + $0x190] sm:$0xff] %vm3693, %v8885
    %8902 = vst.msk [vmem:[#allocation2 + $0x1a8] sm:$0xff] %vm3693, %v8886
    %8903 = vst.msk [vmem:[#allocation2 + $0x1c0] sm:$0xff] %vm3693, %v8887
    %8904 = vst.msk [vmem:[#allocation2 + $0x1d8] sm:$0xff] %vm3693, %v8888
    %8905 = vst.msk [vmem:[#allocation2 + $0x1f0] sm:$0xff] %vm3693, %v8889
    %8906 = vst.msk [vmem:[#allocation2 + $0x208] sm:$0xff] %vm3693, %v8890
    %8907 = vst.msk [vmem:[#allocation2 + $0x220] sm:$0xff] %vm3693, %v8891
    %8908 = vst.msk [vmem:[#allocation2 + $0x238] sm:$0xff] %vm3693, %v8892
    %8909 = vst.msk [vmem:[#allocation2 + $0x250] sm:$0xff] %vm3693, %v8893
    %8910 = vst.msk [vmem:[#allocation2 + $0x268] sm:$0xff] %vm3693, %v8894
    %8911 = vst.msk [vmem:[#allocation2 + $0x280] sm:$0xff] %vm3693, %v8895
    %8912 = vst.msk [vmem:[#allocation2 + $0x298] sm:$0xff] %vm3693, %v8896
    %8913 = vst.msk [vmem:[#allocation2 + $0x2b0] sm:$0xff] %vm3693, %v8897
    %8914 = vst.msk [vmem:[#allocation2 + $0x2c8] sm:$0xff] %vm3693, %v8898
    %8915 = vst.msk [vmem:[#allocation2 + $0x2e0] sm:$0xff] %vm3693, %v8899
    %8916 = vst.msk [vmem:[#allocation2 + $0x2f8] sm:$0xff] %vm3693, %v8900
    %8917 = vrot.lane.b32.xlu0 %v1577, 64
    %v8918 = vpop.permute.xlu0 %8917
    %8919 = vrot.lane.b32.xlu0 %v1580, 64
    %v8920 = vpop.permute.xlu0 %8919
    %8921 = vrot.lane.b32.xlu0 %v1583, 64
    %v8922 = vpop.permute.xlu0 %8921
    %8923 = vrot.lane.b32.xlu0 %v1586, 64
    %v8924 = vpop.permute.xlu0 %8923
    %8925 = vrot.lane.b32.xlu0 %v1589, 64
    %v8926 = vpop.permute.xlu0 %8925
    %8927 = vrot.lane.b32.xlu0 %v1592, 64
    %v8928 = vpop.permute.xlu0 %8927
    %8929 = vrot.lane.b32.xlu0 %v1595, 64
    %v8930 = vpop.permute.xlu0 %8929
    %8931 = vrot.lane.b32.xlu0 %v1598, 64
    %v8932 = vpop.permute.xlu0 %8931
    %8933 = vrot.lane.b32.xlu0 %v1601, 64
    %v8934 = vpop.permute.xlu0 %8933
    %8935 = vrot.lane.b32.xlu0 %v1604, 64
    %v8936 = vpop.permute.xlu0 %8935
    %8937 = vrot.lane.b32.xlu0 %v1607, 64
    %v8938 = vpop.permute.xlu0 %8937
    %8939 = vrot.lane.b32.xlu0 %v1610, 64
    %v8940 = vpop.permute.xlu0 %8939
    %8941 = vrot.lane.b32.xlu0 %v1613, 64
    %v8942 = vpop.permute.xlu0 %8941
    %8943 = vrot.lane.b32.xlu0 %v1616, 64
    %v8944 = vpop.permute.xlu0 %8943
    %8945 = vrot.lane.b32.xlu0 %v1619, 64
    %v8946 = vpop.permute.xlu0 %8945
    %8947 = vrot.lane.b32.xlu0 %v1622, 64
    %v8948 = vpop.permute.xlu0 %8947
    %8949 = vrot.lane.b32.xlu0 %v2594, 64
    %v8950 = vpop.permute.xlu0 %8949
    %8951 = vrot.lane.b32.xlu0 %v2597, 64
    %v8952 = vpop.permute.xlu0 %8951
    %8953 = vrot.lane.b32.xlu0 %v2600, 64
    %v8954 = vpop.permute.xlu0 %8953
    %8955 = vrot.lane.b32.xlu0 %v2603, 64
    %v8956 = vpop.permute.xlu0 %8955
    %8957 = vrot.lane.b32.xlu0 %v2606, 64
    %v8958 = vpop.permute.xlu0 %8957
    %8959 = vrot.lane.b32.xlu0 %v2609, 64
    %v8960 = vpop.permute.xlu0 %8959
    %8961 = vrot.lane.b32.xlu0 %v2612, 64
    %v8962 = vpop.permute.xlu0 %8961
    %8963 = vrot.lane.b32.xlu0 %v2615, 64
    %v8964 = vpop.permute.xlu0 %8963
    %8965 = vrot.lane.b32.xlu0 %v2618, 64
    %v8966 = vpop.permute.xlu0 %8965
    %8967 = vrot.lane.b32.xlu0 %v2621, 64
    %v8968 = vpop.permute.xlu0 %8967
    %8969 = vrot.lane.b32.xlu0 %v2624, 64
    %v8970 = vpop.permute.xlu0 %8969
    %8971 = vrot.lane.b32.xlu0 %v2627, 64
    %v8972 = vpop.permute.xlu0 %8971
    %8973 = vrot.lane.b32.xlu0 %v2630, 64
    %v8974 = vpop.permute.xlu0 %8973
    %8975 = vrot.lane.b32.xlu0 %v2633, 64
    %v8976 = vpop.permute.xlu0 %8975
    %8977 = vrot.lane.b32.xlu0 %v2636, 64
    %v8978 = vpop.permute.xlu0 %8977
    %8979 = vrot.lane.b32.xlu0 %v2639, 64
    %v8980 = vpop.permute.xlu0 %8979
    %v8981 = vsel %vm3693, %v8918, 0
    %v8983 = vsel %vm3693, %v8920, 0
    %v8985 = vsel %vm3693, %v8922, 0
    %v8987 = vsel %vm3693, %v8924, 0
    %v8989 = vsel %vm3693, %v8926, 0
    %v8991 = vsel %vm3693, %v8928, 0
    %v8993 = vsel %vm3693, %v8930, 0
    %v8995 = vsel %vm3693, %v8932, 0
    %v8997 = vsel %vm3693, %v8934, 0
    %v8999 = vsel %vm3693, %v8936, 0
    %v9001 = vsel %vm3693, %v8938, 0
    %v9003 = vsel %vm3693, %v8940, 0
    %v9005 = vsel %vm3693, %v8942, 0
    %v9007 = vsel %vm3693, %v8944, 0
    %v9009 = vsel %vm3693, %v8946, 0
    %v9011 = vsel %vm3693, %v8948, 0
    %v9013 = vsel %vm3693, %v8950, 0
    %v9015 = vsel %vm3693, %v8952, 0
    %v9017 = vsel %vm3693, %v8954, 0
    %v9019 = vsel %vm3693, %v8956, 0
    %v9021 = vsel %vm3693, %v8958, 0
    %v9023 = vsel %vm3693, %v8960, 0
    %v9025 = vsel %vm3693, %v8962, 0
    %v9027 = vsel %vm3693, %v8964, 0
    %v9029 = vsel %vm3693, %v8966, 0
    %v9031 = vsel %vm3693, %v8968, 0
    %v9033 = vsel %vm3693, %v8970, 0
    %v9035 = vsel %vm3693, %v8972, 0
    %v9037 = vsel %vm3693, %v8974, 0
    %v9039 = vsel %vm3693, %v8976, 0
    %v9041 = vsel %vm3693, %v8978, 0
    %v9043 = vsel %vm3693, %v8980, 0
    %9045 = vmatpush.xpose.msra.mxu0 %v9043
    %9046 = vmatpush.xpose.msra.mxu0 %v9041
    %9047 = vmatpush.xpose.msra.mxu0 %v9039
    %9048 = vmatpush.xpose.msra.mxu0 %v9037
    %9049 = vmatpush.xpose.msra.mxu0 %v9035
    %9050 = vmatpush.xpose.msra.mxu0 %v9033
    %9051 = vmatpush.xpose.msra.mxu0 %v9031
    %9052 = vmatpush.xpose.msra.mxu0 %v9029
    %9053 = vmatpush.xpose.msra.mxu0 %v9027
    %9054 = vmatpush.xpose.msra.mxu0 %v9025
    %9055 = vmatpush.xpose.msra.mxu0 %v9023
    %9056 = vmatpush.xpose.msra.mxu0 %v9021
    %9057 = vmatpush.xpose.msra.mxu0 %v9019
    %9058 = vmatpush.xpose.msra.mxu0 %v9017
    %9059 = vmatpush.xpose.msra.mxu0 %v9015
    %9060 = vmatpush.xpose.msra.mxu0 %v9013
    %9061 = vmatmul.f32.gmra.mxu0 %v8981
    %v9062 = vpop.f32.mrf.mxu0
    %v9063 = vadd.f32 0.0, %v9062
    %9064 = vmatmul.f32.gmra.mxu0 %v8983
    %v9065 = vpop.f32.mrf.mxu0
    %v9066 = vadd.f32 0.0, %v9065
    %9067 = vmatmul.f32.gmra.mxu0 %v8985
    %v9068 = vpop.f32.mrf.mxu0
    %v9069 = vadd.f32 0.0, %v9068
    %9070 = vmatmul.f32.gmra.mxu0 %v8987
    %v9071 = vpop.f32.mrf.mxu0
    %v9072 = vadd.f32 0.0, %v9071
    %9073 = vmatmul.f32.gmra.mxu0 %v8989
    %v9074 = vpop.f32.mrf.mxu0
    %v9075 = vadd.f32 0.0, %v9074
    %9076 = vmatmul.f32.gmra.mxu0 %v8991
    %v9077 = vpop.f32.mrf.mxu0
    %v9078 = vadd.f32 0.0, %v9077
    %9079 = vmatmul.f32.gmra.mxu0 %v8993
    %v9080 = vpop.f32.mrf.mxu0
    %v9081 = vadd.f32 0.0, %v9080
    %9082 = vmatmul.f32.gmra.mxu0 %v8995
    %v9083 = vpop.f32.mrf.mxu0
    %v9084 = vadd.f32 0.0, %v9083
    %9085 = vmatmul.f32.gmra.mxu0 %v8997
    %v9086 = vpop.f32.mrf.mxu0
    %v9087 = vadd.f32 0.0, %v9086
    %9088 = vmatmul.f32.gmra.mxu0 %v8999
    %v9089 = vpop.f32.mrf.mxu0
    %v9090 = vadd.f32 0.0, %v9089
    %9091 = vmatmul.f32.gmra.mxu0 %v9001
    %v9092 = vpop.f32.mrf.mxu0
    %v9093 = vadd.f32 0.0, %v9092
    %9094 = vmatmul.f32.gmra.mxu0 %v9003
    %v9095 = vpop.f32.mrf.mxu0
    %v9096 = vadd.f32 0.0, %v9095
    %9097 = vmatmul.f32.gmra.mxu0 %v9005
    %v9098 = vpop.f32.mrf.mxu0
    %v9099 = vadd.f32 0.0, %v9098
    %9100 = vmatmul.f32.gmra.mxu0 %v9007
    %v9101 = vpop.f32.mrf.mxu0
    %v9102 = vadd.f32 0.0, %v9101
    %9103 = vmatmul.f32.gmra.mxu0 %v9009
    %v9104 = vpop.f32.mrf.mxu0
    %v9105 = vadd.f32 0.0, %v9104
    %9106 = vmatmul.f32.gmra.mxu0 %v9011
    %v9107 = vpop.f32.mrf.mxu0
    %v9108 = vadd.f32 0.0, %v9107
    %9109 = vdwg.mxu0
    %v9110 = vsel %vm3677, %v9063, -inf
    %v9111 = vsel %vm3678, %v9066, -inf
    %v9112 = vsel %vm3679, %v9069, -inf
    %v9113 = vsel %vm3680, %v9072, -inf
    %v9114 = vsel %vm3681, %v9075, -inf
    %v9115 = vsel %vm3682, %v9078, -inf
    %v9116 = vsel %vm3683, %v9081, -inf
    %v9117 = vsel %vm3684, %v9084, -inf
    %v9118 = vsel %vm3685, %v9087, -inf
    %v9119 = vsel %vm3686, %v9090, -inf
    %v9120 = vsel %vm3687, %v9093, -inf
    %v9121 = vsel %vm3688, %v9096, -inf
    %v9122 = vsel %vm3689, %v9099, -inf
    %v9123 = vsel %vm3690, %v9102, -inf
    %v9124 = vsel %vm3691, %v9105, -inf
    %v9125 = vsel %vm3692, %v9108, -inf
    %9126 = vmax.xlane.f32.xlu0 %v9110
    %v9127 = vpop.xlane.xlu0 %9126
    %9128 = vmax.xlane.f32.xlu0 %v9111
    %v9129 = vpop.xlane.xlu0 %9128
    %9130 = vmax.xlane.f32.xlu0 %v9112
    %v9131 = vpop.xlane.xlu0 %9130
    %9132 = vmax.xlane.f32.xlu0 %v9113
    %v9133 = vpop.xlane.xlu0 %9132
    %9134 = vmax.xlane.f32.xlu0 %v9114
    %v9135 = vpop.xlane.xlu0 %9134
    %9136 = vmax.xlane.f32.xlu0 %v9115
    %v9137 = vpop.xlane.xlu0 %9136
    %9138 = vmax.xlane.f32.xlu0 %v9116
    %v9139 = vpop.xlane.xlu0 %9138
    %9140 = vmax.xlane.f32.xlu0 %v9117
    %v9141 = vpop.xlane.xlu0 %9140
    %9142 = vmax.xlane.f32.xlu0 %v9118
    %v9143 = vpop.xlane.xlu0 %9142
    %9144 = vmax.xlane.f32.xlu0 %v9119
    %v9145 = vpop.xlane.xlu0 %9144
    %9146 = vmax.xlane.f32.xlu0 %v9120
    %v9147 = vpop.xlane.xlu0 %9146
    %9148 = vmax.xlane.f32.xlu0 %v9121
    %v9149 = vpop.xlane.xlu0 %9148
    %9150 = vmax.xlane.f32.xlu0 %v9122
    %v9151 = vpop.xlane.xlu0 %9150
    %9152 = vmax.xlane.f32.xlu0 %v9123
    %v9153 = vpop.xlane.xlu0 %9152
    %9154 = vmax.xlane.f32.xlu0 %v9124
    %v9155 = vpop.xlane.xlu0 %9154
    %9156 = vmax.xlane.f32.xlu0 %v9125
    %v9157 = vpop.xlane.xlu0 %9156
    %v9158 = vsub.f32 %v9110, %v9127
    %v9159 = vsub.f32 %v9111, %v9129
    %v9160 = vsub.f32 %v9112, %v9131
    %v9161 = vsub.f32 %v9113, %v9133
    %v9162 = vsub.f32 %v9114, %v9135
    %v9163 = vsub.f32 %v9115, %v9137
    %v9164 = vsub.f32 %v9116, %v9139
    %v9165 = vsub.f32 %v9117, %v9141
    %v9166 = vsub.f32 %v9118, %v9143
    %v9167 = vsub.f32 %v9119, %v9145
    %v9168 = vsub.f32 %v9120, %v9147
    %v9169 = vsub.f32 %v9121, %v9149
    %v9170 = vsub.f32 %v9122, %v9151
    %v9171 = vsub.f32 %v9123, %v9153
    %v9172 = vsub.f32 %v9124, %v9155
    %v9173 = vsub.f32 %v9125, %v9157
    %v9174 = vmul.f32 %v9158, 1.442695
    %v9175 = vpow.pop %v9174
    %v9176 = vmul.f32 %v9159, 1.442695
    %v9177 = vpow.pop %v9176
    %v9178 = vmul.f32 %v9160, 1.442695
    %v9179 = vpow.pop %v9178
    %v9180 = vmul.f32 %v9161, 1.442695
    %v9181 = vpow.pop %v9180
    %v9182 = vmul.f32 %v9162, 1.442695
    %v9183 = vpow.pop %v9182
    %v9184 = vmul.f32 %v9163, 1.442695
    %v9185 = vpow.pop %v9184
    %v9186 = vmul.f32 %v9164, 1.442695
    %v9187 = vpow.pop %v9186
    %v9188 = vmul.f32 %v9165, 1.442695
    %v9189 = vpow.pop %v9188
    %v9190 = vmul.f32 %v9166, 1.442695
    %v9191 = vpow.pop %v9190
    %v9192 = vmul.f32 %v9167, 1.442695
    %v9193 = vpow.pop %v9192
    %v9194 = vmul.f32 %v9168, 1.442695
    %v9195 = vpow.pop %v9194
    %v9196 = vmul.f32 %v9169, 1.442695
    %v9197 = vpow.pop %v9196
    %v9198 = vmul.f32 %v9170, 1.442695
    %v9199 = vpow.pop %v9198
    %v9200 = vmul.f32 %v9171, 1.442695
    %v9201 = vpow.pop %v9200
    %v9202 = vmul.f32 %v9172, 1.442695
    %v9203 = vpow.pop %v9202
    %v9204 = vmul.f32 %v9173, 1.442695
    %v9205 = vpow.pop %v9204
    %9206 = vadd.xlane.f32.xlu0 %v9175
    %v9207 = vpop.xlane.xlu0 %9206
    %9208 = vadd.xlane.f32.xlu0 %v9177
    %v9209 = vpop.xlane.xlu0 %9208
    %9210 = vadd.xlane.f32.xlu0 %v9179
    %v9211 = vpop.xlane.xlu0 %9210
    %9212 = vadd.xlane.f32.xlu0 %v9181
    %v9213 = vpop.xlane.xlu0 %9212
    %9214 = vadd.xlane.f32.xlu0 %v9183
    %v9215 = vpop.xlane.xlu0 %9214
    %9216 = vadd.xlane.f32.xlu0 %v9185
    %v9217 = vpop.xlane.xlu0 %9216
    %9218 = vadd.xlane.f32.xlu0 %v9187
    %v9219 = vpop.xlane.xlu0 %9218
    %9220 = vadd.xlane.f32.xlu0 %v9189
    %v9221 = vpop.xlane.xlu0 %9220
    %9222 = vadd.xlane.f32.xlu0 %v9191
    %v9223 = vpop.xlane.xlu0 %9222
    %9224 = vadd.xlane.f32.xlu0 %v9193
    %v9225 = vpop.xlane.xlu0 %9224
    %9226 = vadd.xlane.f32.xlu0 %v9195
    %v9227 = vpop.xlane.xlu0 %9226
    %9228 = vadd.xlane.f32.xlu0 %v9197
    %v9229 = vpop.xlane.xlu0 %9228
    %9230 = vadd.xlane.f32.xlu0 %v9199
    %v9231 = vpop.xlane.xlu0 %9230
    %9232 = vadd.xlane.f32.xlu0 %v9201
    %v9233 = vpop.xlane.xlu0 %9232
    %9234 = vadd.xlane.f32.xlu0 %v9203
    %v9235 = vpop.xlane.xlu0 %9234
    %9236 = vadd.xlane.f32.xlu0 %v9205
    %v9237 = vpop.xlane.xlu0 %9236
    %9254 = vrot.lane.b32.xlu0 %v3611, 64
    %v9255 = vpop.permute.xlu0 %9254
    %9256 = vrot.lane.b32.xlu0 %v3614, 64
    %v9257 = vpop.permute.xlu0 %9256
    %9258 = vrot.lane.b32.xlu0 %v3617, 64
    %v9259 = vpop.permute.xlu0 %9258
    %9260 = vrot.lane.b32.xlu0 %v3620, 64
    %v9261 = vpop.permute.xlu0 %9260
    %9262 = vrot.lane.b32.xlu0 %v3623, 64
    %v9263 = vpop.permute.xlu0 %9262
    %9264 = vrot.lane.b32.xlu0 %v3626, 64
    %v9265 = vpop.permute.xlu0 %9264
    %9266 = vrot.lane.b32.xlu0 %v3629, 64
    %v9267 = vpop.permute.xlu0 %9266
    %9268 = vrot.lane.b32.xlu0 %v3632, 64
    %v9269 = vpop.permute.xlu0 %9268
    %9270 = vrot.lane.b32.xlu0 %v3635, 64
    %v9271 = vpop.permute.xlu0 %9270
    %9272 = vrot.lane.b32.xlu0 %v3638, 64
    %v9273 = vpop.permute.xlu0 %9272
    %9274 = vrot.lane.b32.xlu0 %v3641, 64
    %v9275 = vpop.permute.xlu0 %9274
    %9276 = vrot.lane.b32.xlu0 %v3644, 64
    %v9277 = vpop.permute.xlu0 %9276
    %9278 = vrot.lane.b32.xlu0 %v3647, 64
    %v9279 = vpop.permute.xlu0 %9278
    %9280 = vrot.lane.b32.xlu0 %v3650, 64
    %v9281 = vpop.permute.xlu0 %9280
    %9282 = vrot.lane.b32.xlu0 %v3653, 64
    %v9283 = vpop.permute.xlu0 %9282
    %9284 = vrot.lane.b32.xlu0 %v3656, 64
    %v9285 = vpop.permute.xlu0 %9284
    %9302 = vmatpush.msra.mxu0 %v9285
    %9303 = vmatpush.msra.mxu0 %v9283
    %9304 = vmatpush.msra.mxu0 %v9281
    %9305 = vmatpush.msra.mxu0 %v9279
    %9306 = vmatpush.msra.mxu0 %v9277
    %9307 = vmatpush.msra.mxu0 %v9275
    %9308 = vmatpush.msra.mxu0 %v9273
    %9309 = vmatpush.msra.mxu0 %v9271
    %9310 = vmatpush.msra.mxu0 %v9269
    %9311 = vmatpush.msra.mxu0 %v9267
    %9312 = vmatpush.msra.mxu0 %v9265
    %9313 = vmatpush.msra.mxu0 %v9263
    %9314 = vmatpush.msra.mxu0 %v9261
    %9315 = vmatpush.msra.mxu0 %v9259
    %9316 = vmatpush.msra.mxu0 %v9257
    %9317 = vmatpush.msra.mxu0 %v9255
    %9318 = vmatmul.f32.gmra.mxu0 %v9175
    %v9319 = vpop.f32.mrf.mxu0
    %v9320 = vadd.f32 0.0, %v9319
    %9321 = vmatmul.f32.gmra.mxu0 %v9177
    %v9322 = vpop.f32.mrf.mxu0
    %v9323 = vadd.f32 0.0, %v9322
    %9324 = vmatmul.f32.gmra.mxu0 %v9179
    %v9325 = vpop.f32.mrf.mxu0
    %v9326 = vadd.f32 0.0, %v9325
    %9327 = vmatmul.f32.gmra.mxu0 %v9181
    %v9328 = vpop.f32.mrf.mxu0
    %v9329 = vadd.f32 0.0, %v9328
    %9330 = vmatmul.f32.gmra.mxu0 %v9183
    %v9331 = vpop.f32.mrf.mxu0
    %v9332 = vadd.f32 0.0, %v9331
    %9333 = vmatmul.f32.gmra.mxu0 %v9185
    %v9334 = vpop.f32.mrf.mxu0
    %v9335 = vadd.f32 0.0, %v9334
    %9336 = vmatmul.f32.gmra.mxu0 %v9187
    %v9337 = vpop.f32.mrf.mxu0
    %v9338 = vadd.f32 0.0, %v9337
    %9339 = vmatmul.f32.gmra.mxu0 %v9189
    %v9340 = vpop.f32.mrf.mxu0
    %v9341 = vadd.f32 0.0, %v9340
    %9342 = vmatmul.f32.gmra.mxu0 %v9191
    %v9343 = vpop.f32.mrf.mxu0
    %v9344 = vadd.f32 0.0, %v9343
    %9345 = vmatmul.f32.gmra.mxu0 %v9193
    %v9346 = vpop.f32.mrf.mxu0
    %v9347 = vadd.f32 0.0, %v9346
    %9348 = vmatmul.f32.gmra.mxu0 %v9195
    %v9349 = vpop.f32.mrf.mxu0
    %v9350 = vadd.f32 0.0, %v9349
    %9351 = vmatmul.f32.gmra.mxu0 %v9197
    %v9352 = vpop.f32.mrf.mxu0
    %v9353 = vadd.f32 0.0, %v9352
    %9354 = vmatmul.f32.gmra.mxu0 %v9199
    %v9355 = vpop.f32.mrf.mxu0
    %v9356 = vadd.f32 0.0, %v9355
    %9357 = vmatmul.f32.gmra.mxu0 %v9201
    %v9358 = vpop.f32.mrf.mxu0
    %v9359 = vadd.f32 0.0, %v9358
    %9360 = vmatmul.f32.gmra.mxu0 %v9203
    %v9361 = vpop.f32.mrf.mxu0
    %v9362 = vadd.f32 0.0, %v9361
    %9363 = vmatmul.f32.gmra.mxu0 %v9205
    %v9364 = vpop.f32.mrf.mxu0
    %v9365 = vadd.f32 0.0, %v9364
    %9366 = vdwg.mxu0
    %v9367 = vrcp.pop %v9207
    %v9368 = vrcp.pop %v9209
    %v9369 = vrcp.pop %v9211
    %v9370 = vrcp.pop %v9213
    %v9371 = vrcp.pop %v9215
    %v9372 = vrcp.pop %v9217
    %v9373 = vrcp.pop %v9219
    %v9374 = vrcp.pop %v9221
    %v9375 = vrcp.pop %v9223
    %v9376 = vrcp.pop %v9225
    %v9377 = vrcp.pop %v9227
    %v9378 = vrcp.pop %v9229
    %v9379 = vrcp.pop %v9231
    %v9380 = vrcp.pop %v9233
    %v9381 = vrcp.pop %v9235
    %v9382 = vrcp.pop %v9237
    %v9383 = vmul.f32 %v9320, %v9367
    %v9384 = vmul.f32 %v9323, %v9368
    %v9385 = vmul.f32 %v9326, %v9369
    %v9386 = vmul.f32 %v9329, %v9370
    %v9387 = vmul.f32 %v9332, %v9371
    %v9388 = vmul.f32 %v9335, %v9372
    %v9389 = vmul.f32 %v9338, %v9373
    %v9390 = vmul.f32 %v9341, %v9374
    %v9391 = vmul.f32 %v9344, %v9375
    %v9392 = vmul.f32 %v9347, %v9376
    %v9393 = vmul.f32 %v9350, %v9377
    %v9394 = vmul.f32 %v9353, %v9378
    %v9395 = vmul.f32 %v9356, %v9379
    %v9396 = vmul.f32 %v9359, %v9380
    %v9397 = vmul.f32 %v9362, %v9381
    %v9398 = vmul.f32 %v9365, %v9382
    %9415 = vrot.lane.b32.xlu0 %v9383, 64
    %v9416 = vpop.permute.xlu0 %9415
    %9417 = vrot.lane.b32.xlu0 %v9384, 64
    %v9418 = vpop.permute.xlu0 %9417
    %9419 = vrot.lane.b32.xlu0 %v9385, 64
    %v9420 = vpop.permute.xlu0 %9419
    %9421 = vrot.lane.b32.xlu0 %v9386, 64
    %v9422 = vpop.permute.xlu0 %9421
    %9423 = vrot.lane.b32.xlu0 %v9387, 64
    %v9424 = vpop.permute.xlu0 %9423
    %9425 = vrot.lane.b32.xlu0 %v9388, 64
    %v9426 = vpop.permute.xlu0 %9425
    %9427 = vrot.lane.b32.xlu0 %v9389, 64
    %v9428 = vpop.permute.xlu0 %9427
    %9429 = vrot.lane.b32.xlu0 %v9390, 64
    %v9430 = vpop.permute.xlu0 %9429
    %9431 = vrot.lane.b32.xlu0 %v9391, 64
    %v9432 = vpop.permute.xlu0 %9431
    %9433 = vrot.lane.b32.xlu0 %v9392, 64
    %v9434 = vpop.permute.xlu0 %9433
    %9435 = vrot.lane.b32.xlu0 %v9393, 64
    %v9436 = vpop.permute.xlu0 %9435
    %9437 = vrot.lane.b32.xlu0 %v9394, 64
    %v9438 = vpop.permute.xlu0 %9437
    %9439 = vrot.lane.b32.xlu0 %v9395, 64
    %v9440 = vpop.permute.xlu0 %9439
    %9441 = vrot.lane.b32.xlu0 %v9396, 64
    %v9442 = vpop.permute.xlu0 %9441
    %9443 = vrot.lane.b32.xlu0 %v9397, 64
    %v9444 = vpop.permute.xlu0 %9443
    %9445 = vrot.lane.b32.xlu0 %v9398, 64
    %v9446 = vpop.permute.xlu0 %9445
    %9463 = vst.msk [vmem:[#allocation2 + $0x190] sm:$0xff] %vm4642, %v9416
    %9464 = vst.msk [vmem:[#allocation2 + $0x1a8] sm:$0xff] %vm4642, %v9418
    %9465 = vst.msk [vmem:[#allocation2 + $0x1c0] sm:$0xff] %vm4642, %v9420
    %9466 = vst.msk [vmem:[#allocation2 + $0x1d8] sm:$0xff] %vm4642, %v9422
    %9467 = vst.msk [vmem:[#allocation2 + $0x1f0] sm:$0xff] %vm4642, %v9424
    %9468 = vst.msk [vmem:[#allocation2 + $0x208] sm:$0xff] %vm4642, %v9426
    %9469 = vst.msk [vmem:[#allocation2 + $0x220] sm:$0xff] %vm4642, %v9428
    %9470 = vst.msk [vmem:[#allocation2 + $0x238] sm:$0xff] %vm4642, %v9430
    %9471 = vst.msk [vmem:[#allocation2 + $0x250] sm:$0xff] %vm4642, %v9432
    %9472 = vst.msk [vmem:[#allocation2 + $0x268] sm:$0xff] %vm4642, %v9434
    %9473 = vst.msk [vmem:[#allocation2 + $0x280] sm:$0xff] %vm4642, %v9436
    %9474 = vst.msk [vmem:[#allocation2 + $0x298] sm:$0xff] %vm4642, %v9438
    %9475 = vst.msk [vmem:[#allocation2 + $0x2b0] sm:$0xff] %vm4642, %v9440
    %9476 = vst.msk [vmem:[#allocation2 + $0x2c8] sm:$0xff] %vm4642, %v9442
    %9477 = vst.msk [vmem:[#allocation2 + $0x2e0] sm:$0xff] %vm4642, %v9444
    %9478 = vst.msk [vmem:[#allocation2 + $0x2f8] sm:$0xff] %vm4642, %v9446
    %v9479 = vld [vmem:[#allocation2] sm:$0xff]
    %v9480 = vld [vmem:[#allocation2 + $0x8] sm:$0xff]
    %v9481 = vld [vmem:[#allocation2 + $0x10] sm:$0xff]
    %v9482 = vld [vmem:[#allocation2 + $0x18] sm:$0xff]
    %v9483 = vld [vmem:[#allocation2 + $0x20] sm:$0xff]
    %v9484 = vld [vmem:[#allocation2 + $0x28] sm:$0xff]
    %v9485 = vld [vmem:[#allocation2 + $0x30] sm:$0xff]
    %v9486 = vld [vmem:[#allocation2 + $0x38] sm:$0xff]
    %v9487 = vld [vmem:[#allocation2 + $0x40] sm:$0xff]
    %v9488 = vld [vmem:[#allocation2 + $0x48] sm:$0xff]
    %v9489 = vld [vmem:[#allocation2 + $0x50] sm:$0xff]
    %v9490 = vld [vmem:[#allocation2 + $0x58] sm:$0xff]
    %v9491 = vld [vmem:[#allocation2 + $0x60] sm:$0xff]
    %v9492 = vld [vmem:[#allocation2 + $0x68] sm:$0xff]
    %v9493 = vld [vmem:[#allocation2 + $0x70] sm:$0xff]
    %v9494 = vld [vmem:[#allocation2 + $0x78] sm:$0xff]
    %v9495 = vld [vmem:[#allocation2 + $0x80] sm:$0xff]
    %v9496 = vld [vmem:[#allocation2 + $0x88] sm:$0xff]
    %v9497 = vld [vmem:[#allocation2 + $0x90] sm:$0xff]
    %v9498 = vld [vmem:[#allocation2 + $0x98] sm:$0xff]
    %v9499 = vld [vmem:[#allocation2 + $0xa0] sm:$0xff]
    %v9500 = vld [vmem:[#allocation2 + $0xa8] sm:$0xff]
    %v9501 = vld [vmem:[#allocation2 + $0xb0] sm:$0xff]
    %v9502 = vld [vmem:[#allocation2 + $0xb8] sm:$0xff]
    %v9503 = vld [vmem:[#allocation2 + $0xc0] sm:$0xff]
    %v9504 = vld [vmem:[#allocation2 + $0xc8] sm:$0xff]
    %v9505 = vld [vmem:[#allocation2 + $0xd0] sm:$0xff]
    %v9506 = vld [vmem:[#allocation2 + $0xd8] sm:$0xff]
    %v9507 = vld [vmem:[#allocation2 + $0xe0] sm:$0xff]
    %v9508 = vld [vmem:[#allocation2 + $0xe8] sm:$0xff]
    %v9509 = vld [vmem:[#allocation2 + $0xf0] sm:$0xff]
    %v9510 = vld [vmem:[#allocation2 + $0xf8] sm:$0xff]
    %v9511 = vld [vmem:[#allocation2 + $0x100] sm:$0xff]
    %v9512 = vld [vmem:[#allocation2 + $0x108] sm:$0xff]
    %v9513 = vld [vmem:[#allocation2 + $0x110] sm:$0xff]
    %v9514 = vld [vmem:[#allocation2 + $0x118] sm:$0xff]
    %v9515 = vld [vmem:[#allocation2 + $0x120] sm:$0xff]
    %v9516 = vld [vmem:[#allocation2 + $0x128] sm:$0xff]
    %v9517 = vld [vmem:[#allocation2 + $0x130] sm:$0xff]
    %v9518 = vld [vmem:[#allocation2 + $0x138] sm:$0xff]
    %v9519 = vld [vmem:[#allocation2 + $0x140] sm:$0xff]
    %v9520 = vld [vmem:[#allocation2 + $0x148] sm:$0xff]
    %v9521 = vld [vmem:[#allocation2 + $0x150] sm:$0xff]
    %v9522 = vld [vmem:[#allocation2 + $0x158] sm:$0xff]
    %v9523 = vld [vmem:[#allocation2 + $0x160] sm:$0xff]
    %v9524 = vld [vmem:[#allocation2 + $0x168] sm:$0xff]
    %v9525 = vld [vmem:[#allocation2 + $0x170] sm:$0xff]
    %v9526 = vld [vmem:[#allocation2 + $0x178] sm:$0xff]
    %v9527 = vld [vmem:[#allocation2 + $0x180] sm:$0xff]
    %v9528 = vld [vmem:[#allocation2 + $0x188] sm:$0xff]
    %v9529 = vld [vmem:[#allocation2 + $0x190] sm:$0xff]
    %v9530 = vld [vmem:[#allocation2 + $0x198] sm:$0xff]
    %v9531 = vld [vmem:[#allocation2 + $0x1a0] sm:$0xff]
    %v9532 = vld [vmem:[#allocation2 + $0x1a8] sm:$0xff]
    %v9533 = vld [vmem:[#allocation2 + $0x1b0] sm:$0xff]
    %v9534 = vld [vmem:[#allocation2 + $0x1b8] sm:$0xff]
    %v9535 = vld [vmem:[#allocation2 + $0x1c0] sm:$0xff]
    %v9536 = vld [vmem:[#allocation2 + $0x1c8] sm:$0xff]
    %v9537 = vld [vmem:[#allocation2 + $0x1d0] sm:$0xff]
    %v9538 = vld [vmem:[#allocation2 + $0x1d8] sm:$0xff]
    %v9539 = vld [vmem:[#allocation2 + $0x1e0] sm:$0xff]
    %v9540 = vld [vmem:[#allocation2 + $0x1e8] sm:$0xff]
    %v9541 = vld [vmem:[#allocation2 + $0x1f0] sm:$0xff]
    %v9542 = vld [vmem:[#allocation2 + $0x1f8] sm:$0xff]
    %v9543 = vld [vmem:[#allocation2 + $0x200] sm:$0xff]
    %v9544 = vld [vmem:[#allocation2 + $0x208] sm:$0xff]
    %v9545 = vld [vmem:[#allocation2 + $0x210] sm:$0xff]
    %v9546 = vld [vmem:[#allocation2 + $0x218] sm:$0xff]
    %v9547 = vld [vmem:[#allocation2 + $0x220] sm:$0xff]
    %v9548 = vld [vmem:[#allocation2 + $0x228] sm:$0xff]
    %v9549 = vld [vmem:[#allocation2 + $0x230] sm:$0xff]
    %v9550 = vld [vmem:[#allocation2 + $0x238] sm:$0xff]
    %v9551 = vld [vmem:[#allocation2 + $0x240] sm:$0xff]
    %v9552 = vld [vmem:[#allocation2 + $0x248] sm:$0xff]
    %v9553 = vld [vmem:[#allocation2 + $0x250] sm:$0xff]
    %v9554 = vld [vmem:[#allocation2 + $0x258] sm:$0xff]
    %v9555 = vld [vmem:[#allocation2 + $0x260] sm:$0xff]
    %v9556 = vld [vmem:[#allocation2 + $0x268] sm:$0xff]
    %v9557 = vld [vmem:[#allocation2 + $0x270] sm:$0xff]
    %v9558 = vld [vmem:[#allocation2 + $0x278] sm:$0xff]
    %v9559 = vld [vmem:[#allocation2 + $0x280] sm:$0xff]
    %v9560 = vld [vmem:[#allocation2 + $0x288] sm:$0xff]
    %v9561 = vld [vmem:[#allocation2 + $0x290] sm:$0xff]
    %v9562 = vld [vmem:[#allocation2 + $0x298] sm:$0xff]
    %v9563 = vld [vmem:[#allocation2 + $0x2a0] sm:$0xff]
    %v9564 = vld [vmem:[#allocation2 + $0x2a8] sm:$0xff]
    %v9565 = vld [vmem:[#allocation2 + $0x2b0] sm:$0xff]
    %v9566 = vld [vmem:[#allocation2 + $0x2b8] sm:$0xff]
    %v9567 = vld [vmem:[#allocation2 + $0x2c0] sm:$0xff]
    %v9568 = vld [vmem:[#allocation2 + $0x2c8] sm:$0xff]
    %v9569 = vld [vmem:[#allocation2 + $0x2d0] sm:$0xff]
    %v9570 = vld [vmem:[#allocation2 + $0x2d8] sm:$0xff]
    %v9571 = vld [vmem:[#allocation2 + $0x2e0] sm:$0xff]
    %v9572 = vld [vmem:[#allocation2 + $0x2e8] sm:$0xff]
    %v9573 = vld [vmem:[#allocation2 + $0x2f0] sm:$0xff]
    %v9574 = vld [vmem:[#allocation2 + $0x2f8] sm:$0xff]
    %v9575 = vld [vmem:[#allocation8] sm:$0xff]
    %v9576 = vld [vmem:[#allocation8 + $0x8] sm:$0xff]
    %v9577 = vld [vmem:[#allocation8 + $0x10] sm:$0xff]
    %v9578 = vld [vmem:[#allocation8 + $0x18] sm:$0xff]
    %v9579 = vld [vmem:[#allocation8 + $0x20] sm:$0xff]
    %v9580 = vld [vmem:[#allocation8 + $0x28] sm:$0xff]
    %v9581 = vld [vmem:[#allocation8 + $0x30] sm:$0xff]
    %v9582 = vld [vmem:[#allocation8 + $0x38] sm:$0xff]
    %v9583 = vld [vmem:[#allocation8 + $0x40] sm:$0xff]
    %v9584 = vld [vmem:[#allocation8 + $0x48] sm:$0xff]
    %v9585 = vld [vmem:[#allocation8 + $0x50] sm:$0xff]
    %v9586 = vld [vmem:[#allocation8 + $0x58] sm:$0xff]
    %v9587 = vld [vmem:[#allocation8 + $0x60] sm:$0xff]
    %v9588 = vld [vmem:[#allocation8 + $0x68] sm:$0xff]
    %v9589 = vld [vmem:[#allocation8 + $0x70] sm:$0xff]
    %v9590 = vld [vmem:[#allocation8 + $0x78] sm:$0xff]
    %v9591 = vld [vmem:[#allocation8 + $0x80] sm:$0xff]
    %v9592 = vld [vmem:[#allocation8 + $0x88] sm:$0xff]
    %v9593 = vld [vmem:[#allocation8 + $0x90] sm:$0xff]
    %v9594 = vld [vmem:[#allocation8 + $0x98] sm:$0xff]
    %v9595 = vld [vmem:[#allocation8 + $0xa0] sm:$0xff]
    %v9596 = vld [vmem:[#allocation8 + $0xa8] sm:$0xff]
    %v9597 = vld [vmem:[#allocation8 + $0xb0] sm:$0xff]
    %v9598 = vld [vmem:[#allocation8 + $0xb8] sm:$0xff]
    %v9599 = vld [vmem:[#allocation8 + $0xc0] sm:$0xff]
    %v9600 = vld [vmem:[#allocation8 + $0xc8] sm:$0xff]
    %v9601 = vld [vmem:[#allocation8 + $0xd0] sm:$0xff]
    %v9602 = vld [vmem:[#allocation8 + $0xd8] sm:$0xff]
    %v9603 = vld [vmem:[#allocation8 + $0xe0] sm:$0xff]
    %v9604 = vld [vmem:[#allocation8 + $0xe8] sm:$0xff]
    %v9605 = vld [vmem:[#allocation8 + $0xf0] sm:$0xff]
    %v9606 = vld [vmem:[#allocation8 + $0xf8] sm:$0xff]
    %v9607 = vld [vmem:[#allocation8 + $0x100] sm:$0xff]
    %v9608 = vld [vmem:[#allocation8 + $0x108] sm:$0xff]
    %v9609 = vld [vmem:[#allocation8 + $0x110] sm:$0xff]
    %v9610 = vld [vmem:[#allocation8 + $0x118] sm:$0xff]
    %v9611 = vld [vmem:[#allocation8 + $0x120] sm:$0xff]
    %v9612 = vld [vmem:[#allocation8 + $0x128] sm:$0xff]
    %v9613 = vld [vmem:[#allocation8 + $0x130] sm:$0xff]
    %v9614 = vld [vmem:[#allocation8 + $0x138] sm:$0xff]
    %v9615 = vld [vmem:[#allocation8 + $0x140] sm:$0xff]
    %v9616 = vld [vmem:[#allocation8 + $0x148] sm:$0xff]
    %v9617 = vld [vmem:[#allocation8 + $0x150] sm:$0xff]
    %v9618 = vld [vmem:[#allocation8 + $0x158] sm:$0xff]
    %v9619 = vld [vmem:[#allocation8 + $0x160] sm:$0xff]
    %v9620 = vld [vmem:[#allocation8 + $0x168] sm:$0xff]
    %v9621 = vld [vmem:[#allocation8 + $0x170] sm:$0xff]
    %v9622 = vld [vmem:[#allocation8 + $0x178] sm:$0xff]
    %v9623 = vld [vmem:[#allocation8 + $0x180] sm:$0xff]
    %v9624 = vld [vmem:[#allocation8 + $0x188] sm:$0xff]
    %v9625 = vld [vmem:[#allocation8 + $0x190] sm:$0xff]
    %v9626 = vld [vmem:[#allocation8 + $0x198] sm:$0xff]
    %v9627 = vld [vmem:[#allocation8 + $0x1a0] sm:$0xff]
    %v9628 = vld [vmem:[#allocation8 + $0x1a8] sm:$0xff]
    %v9629 = vld [vmem:[#allocation8 + $0x1b0] sm:$0xff]
    %v9630 = vld [vmem:[#allocation8 + $0x1b8] sm:$0xff]
    %v9631 = vld [vmem:[#allocation8 + $0x1c0] sm:$0xff]
    %v9632 = vld [vmem:[#allocation8 + $0x1c8] sm:$0xff]
    %v9633 = vld [vmem:[#allocation8 + $0x1d0] sm:$0xff]
    %v9634 = vld [vmem:[#allocation8 + $0x1d8] sm:$0xff]
    %v9635 = vld [vmem:[#allocation8 + $0x1e0] sm:$0xff]
    %v9636 = vld [vmem:[#allocation8 + $0x1e8] sm:$0xff]
    %v9637 = vld [vmem:[#allocation8 + $0x1f0] sm:$0xff]
    %v9638 = vld [vmem:[#allocation8 + $0x1f8] sm:$0xff]
    %v9639 = vld [vmem:[#allocation8 + $0x200] sm:$0xff]
    %v9640 = vld [vmem:[#allocation8 + $0x208] sm:$0xff]
    %v9641 = vld [vmem:[#allocation8 + $0x210] sm:$0xff]
    %v9642 = vld [vmem:[#allocation8 + $0x218] sm:$0xff]
    %v9643 = vld [vmem:[#allocation8 + $0x220] sm:$0xff]
    %v9644 = vld [vmem:[#allocation8 + $0x228] sm:$0xff]
    %v9645 = vld [vmem:[#allocation8 + $0x230] sm:$0xff]
    %v9646 = vld [vmem:[#allocation8 + $0x238] sm:$0xff]
    %v9647 = vld [vmem:[#allocation8 + $0x240] sm:$0xff]
    %v9648 = vld [vmem:[#allocation8 + $0x248] sm:$0xff]
    %v9649 = vld [vmem:[#allocation8 + $0x250] sm:$0xff]
    %v9650 = vld [vmem:[#allocation8 + $0x258] sm:$0xff]
    %v9651 = vld [vmem:[#allocation8 + $0x260] sm:$0xff]
    %v9652 = vld [vmem:[#allocation8 + $0x268] sm:$0xff]
    %v9653 = vld [vmem:[#allocation8 + $0x270] sm:$0xff]
    %v9654 = vld [vmem:[#allocation8 + $0x278] sm:$0xff]
    %v9655 = vld [vmem:[#allocation8 + $0x280] sm:$0xff]
    %v9656 = vld [vmem:[#allocation8 + $0x288] sm:$0xff]
    %v9657 = vld [vmem:[#allocation8 + $0x290] sm:$0xff]
    %v9658 = vld [vmem:[#allocation8 + $0x298] sm:$0xff]
    %v9659 = vld [vmem:[#allocation8 + $0x2a0] sm:$0xff]
    %v9660 = vld [vmem:[#allocation8 + $0x2a8] sm:$0xff]
    %v9661 = vld [vmem:[#allocation8 + $0x2b0] sm:$0xff]
    %v9662 = vld [vmem:[#allocation8 + $0x2b8] sm:$0xff]
    %v9663 = vld [vmem:[#allocation8 + $0x2c0] sm:$0xff]
    %v9664 = vld [vmem:[#allocation8 + $0x2c8] sm:$0xff]
    %v9665 = vld [vmem:[#allocation8 + $0x2d0] sm:$0xff]
    %v9666 = vld [vmem:[#allocation8 + $0x2d8] sm:$0xff]
    %v9667 = vld [vmem:[#allocation8 + $0x2e0] sm:$0xff]
    %v9668 = vld [vmem:[#allocation8 + $0x2e8] sm:$0xff]
    %v9669 = vld [vmem:[#allocation8 + $0x2f0] sm:$0xff]
    %v9670 = vld [vmem:[#allocation8 + $0x2f8] sm:$0xff]
    %v9671 = vld [vmem:[#allocation8 + $0x300] sm:$0xff]
    %v9672 = vld [vmem:[#allocation8 + $0x308] sm:$0xff]
    %v9673 = vld [vmem:[#allocation8 + $0x310] sm:$0xff]
    %v9674 = vld [vmem:[#allocation8 + $0x318] sm:$0xff]
    %v9675 = vld [vmem:[#allocation8 + $0x320] sm:$0xff]
    %v9676 = vld [vmem:[#allocation8 + $0x328] sm:$0xff]
    %v9677 = vld [vmem:[#allocation8 + $0x330] sm:$0xff]
    %v9678 = vld [vmem:[#allocation8 + $0x338] sm:$0xff]
    %v9679 = vld [vmem:[#allocation8 + $0x340] sm:$0xff]
    %v9680 = vld [vmem:[#allocation8 + $0x348] sm:$0xff]
    %v9681 = vld [vmem:[#allocation8 + $0x350] sm:$0xff]
    %v9682 = vld [vmem:[#allocation8 + $0x358] sm:$0xff]
    %v9683 = vld [vmem:[#allocation8 + $0x360] sm:$0xff]
    %v9684 = vld [vmem:[#allocation8 + $0x368] sm:$0xff]
    %v9685 = vld [vmem:[#allocation8 + $0x370] sm:$0xff]
    %v9686 = vld [vmem:[#allocation8 + $0x378] sm:$0xff]
    %v9687 = vld [vmem:[#allocation8 + $0x380] sm:$0xff]
    %v9688 = vld [vmem:[#allocation8 + $0x388] sm:$0xff]
    %v9689 = vld [vmem:[#allocation8 + $0x390] sm:$0xff]
    %v9690 = vld [vmem:[#allocation8 + $0x398] sm:$0xff]
    %v9691 = vld [vmem:[#allocation8 + $0x3a0] sm:$0xff]
    %v9692 = vld [vmem:[#allocation8 + $0x3a8] sm:$0xff]
    %v9693 = vld [vmem:[#allocation8 + $0x3b0] sm:$0xff]
    %v9694 = vld [vmem:[#allocation8 + $0x3b8] sm:$0xff]
    %v9695 = vld [vmem:[#allocation8 + $0x3c0] sm:$0xff]
    %v9696 = vld [vmem:[#allocation8 + $0x3c8] sm:$0xff]
    %v9697 = vld [vmem:[#allocation8 + $0x3d0] sm:$0xff]
    %v9698 = vld [vmem:[#allocation8 + $0x3d8] sm:$0xff]
    %v9699 = vld [vmem:[#allocation8 + $0x3e0] sm:$0xff]
    %v9700 = vld [vmem:[#allocation8 + $0x3e8] sm:$0xff]
    %v9701 = vld [vmem:[#allocation8 + $0x3f0] sm:$0xff]
    %v9702 = vld [vmem:[#allocation8 + $0x3f8] sm:$0xff]
    %v9703 = vld [vmem:[#allocation8 + $0x400] sm:$0xff]
    %v9704 = vld [vmem:[#allocation8 + $0x408] sm:$0xff]
    %v9705 = vld [vmem:[#allocation8 + $0x410] sm:$0xff]
    %v9706 = vld [vmem:[#allocation8 + $0x418] sm:$0xff]
    %v9707 = vld [vmem:[#allocation8 + $0x420] sm:$0xff]
    %v9708 = vld [vmem:[#allocation8 + $0x428] sm:$0xff]
    %v9709 = vld [vmem:[#allocation8 + $0x430] sm:$0xff]
    %v9710 = vld [vmem:[#allocation8 + $0x438] sm:$0xff]
    %v9711 = vld [vmem:[#allocation8 + $0x440] sm:$0xff]
    %v9712 = vld [vmem:[#allocation8 + $0x448] sm:$0xff]
    %v9713 = vld [vmem:[#allocation8 + $0x450] sm:$0xff]
    %v9714 = vld [vmem:[#allocation8 + $0x458] sm:$0xff]
    %v9715 = vld [vmem:[#allocation8 + $0x460] sm:$0xff]
    %v9716 = vld [vmem:[#allocation8 + $0x468] sm:$0xff]
    %v9717 = vld [vmem:[#allocation8 + $0x470] sm:$0xff]
    %v9718 = vld [vmem:[#allocation8 + $0x478] sm:$0xff]
    %v9719 = vld [vmem:[#allocation9] sm:$0x7]
    %v9721 = vperm.slane %v9719, 0
    %v9722 = vperm.slane %v9719, 1
    %v9723 = vperm.slane %v9719, 2
    %9727 = vmatpush.msra.mxu0 %v9620
    %9728 = vmatpush.msra.mxu0 %v9617
    %9729 = vmatpush.msra.mxu0 %v9614
    %9730 = vmatpush.msra.mxu0 %v9611
    %9731 = vmatpush.msra.mxu0 %v9608
    %9732 = vmatpush.msra.mxu0 %v9605
    %9733 = vmatpush.msra.mxu0 %v9602
    %9734 = vmatpush.msra.mxu0 %v9599
    %9735 = vmatpush.msra.mxu0 %v9596
    %9736 = vmatpush.msra.mxu0 %v9593
    %9737 = vmatpush.msra.mxu0 %v9590
    %9738 = vmatpush.msra.mxu0 %v9587
    %9739 = vmatpush.msra.mxu0 %v9584
    %9740 = vmatpush.msra.mxu0 %v9581
    %9741 = vmatpush.msra.mxu0 %v9578
    %9742 = vmatpush.msra.mxu0 %v9575
    %9743 = vmatmul.f32.gmra.mxu0 %v9479
    %v9744 = vpop.f32.mrf.mxu0
    %v9745 = vadd.f32 %v9721, %v9744
    %9746 = vmatmul.f32.gmra.mxu0 %v9482
    %v9747 = vpop.f32.mrf.mxu0
    %v9748 = vadd.f32 %v9721, %v9747
    %9749 = vmatmul.f32.gmra.mxu0 %v9485
    %v9750 = vpop.f32.mrf.mxu0
    %v9751 = vadd.f32 %v9721, %v9750
    %9752 = vmatmul.f32.gmra.mxu0 %v9488
    %v9753 = vpop.f32.mrf.mxu0
    %v9754 = vadd.f32 %v9721, %v9753
    %9755 = vmatmul.f32.gmra.mxu0 %v9491
    %v9756 = vpop.f32.mrf.mxu0
    %v9757 = vadd.f32 %v9721, %v9756
    %9758 = vmatmul.f32.gmra.mxu0 %v9494
    %v9759 = vpop.f32.mrf.mxu0
    %v9760 = vadd.f32 %v9721, %v9759
    %9761 = vmatmul.f32.gmra.mxu0 %v9497
    %v9762 = vpop.f32.mrf.mxu0
    %v9763 = vadd.f32 %v9721, %v9762
    %9764 = vmatmul.f32.gmra.mxu0 %v9500
    %v9765 = vpop.f32.mrf.mxu0
    %v9766 = vadd.f32 %v9721, %v9765
    %9767 = vmatmul.f32.gmra.mxu0 %v9503
    %v9768 = vpop.f32.mrf.mxu0
    %v9769 = vadd.f32 %v9721, %v9768
    %9770 = vmatmul.f32.gmra.mxu0 %v9506
    %v9771 = vpop.f32.mrf.mxu0
    %v9772 = vadd.f32 %v9721, %v9771
    %9773 = vmatmul.f32.gmra.mxu0 %v9509
    %v9774 = vpop.f32.mrf.mxu0
    %v9775 = vadd.f32 %v9721, %v9774
    %9776 = vmatmul.f32.gmra.mxu0 %v9512
    %v9777 = vpop.f32.mrf.mxu0
    %v9778 = vadd.f32 %v9721, %v9777
    %9779 = vmatmul.f32.gmra.mxu0 %v9515
    %v9780 = vpop.f32.mrf.mxu0
    %v9781 = vadd.f32 %v9721, %v9780
    %9782 = vmatmul.f32.gmra.mxu0 %v9518
    %v9783 = vpop.f32.mrf.mxu0
    %v9784 = vadd.f32 %v9721, %v9783
    %9785 = vmatmul.f32.gmra.mxu0 %v9521
    %v9786 = vpop.f32.mrf.mxu0
    %v9787 = vadd.f32 %v9721, %v9786
    %9788 = vmatmul.f32.gmra.mxu0 %v9524
    %v9789 = vpop.f32.mrf.mxu0
    %v9790 = vadd.f32 %v9721, %v9789
    %9791 = vmatmul.f32.gmra.mxu0 %v9527
    %v9792 = vpop.f32.mrf.mxu0
    %v9793 = vadd.f32 %v9721, %v9792
    %9794 = vmatmul.f32.gmra.mxu0 %v9530
    %v9795 = vpop.f32.mrf.mxu0
    %v9796 = vadd.f32 %v9721, %v9795
    %9797 = vmatmul.f32.gmra.mxu0 %v9533
    %v9798 = vpop.f32.mrf.mxu0
    %v9799 = vadd.f32 %v9721, %v9798
    %9800 = vmatmul.f32.gmra.mxu0 %v9536
    %v9801 = vpop.f32.mrf.mxu0
    %v9802 = vadd.f32 %v9721, %v9801
    %9803 = vmatmul.f32.gmra.mxu0 %v9539
    %v9804 = vpop.f32.mrf.mxu0
    %v9805 = vadd.f32 %v9721, %v9804
    %9806 = vmatmul.f32.gmra.mxu0 %v9542
    %v9807 = vpop.f32.mrf.mxu0
    %v9808 = vadd.f32 %v9721, %v9807
    %9809 = vmatmul.f32.gmra.mxu0 %v9545
    %v9810 = vpop.f32.mrf.mxu0
    %v9811 = vadd.f32 %v9721, %v9810
    %9812 = vmatmul.f32.gmra.mxu0 %v9548
    %v9813 = vpop.f32.mrf.mxu0
    %v9814 = vadd.f32 %v9721, %v9813
    %9815 = vmatmul.f32.gmra.mxu0 %v9551
    %v9816 = vpop.f32.mrf.mxu0
    %v9817 = vadd.f32 %v9721, %v9816
    %9818 = vmatmul.f32.gmra.mxu0 %v9554
    %v9819 = vpop.f32.mrf.mxu0
    %v9820 = vadd.f32 %v9721, %v9819
    %9821 = vmatmul.f32.gmra.mxu0 %v9557
    %v9822 = vpop.f32.mrf.mxu0
    %v9823 = vadd.f32 %v9721, %v9822
    %9824 = vmatmul.f32.gmra.mxu0 %v9560
    %v9825 = vpop.f32.mrf.mxu0
    %v9826 = vadd.f32 %v9721, %v9825
    %9827 = vmatmul.f32.gmra.mxu0 %v9563
    %v9828 = vpop.f32.mrf.mxu0
    %v9829 = vadd.f32 %v9721, %v9828
    %9830 = vmatmul.f32.gmra.mxu0 %v9566
    %v9831 = vpop.f32.mrf.mxu0
    %v9832 = vadd.f32 %v9721, %v9831
    %9833 = vmatmul.f32.gmra.mxu0 %v9569
    %v9834 = vpop.f32.mrf.mxu0
    %v9835 = vadd.f32 %v9721, %v9834
    %9836 = vmatmul.f32.gmra.mxu0 %v9572
    %v9837 = vpop.f32.mrf.mxu0
    %v9838 = vadd.f32 %v9721, %v9837
    %9839 = vdwg.mxu0
    %9840 = vmatpush.msra.mxu0 %v9668
    %9841 = vmatpush.msra.mxu0 %v9665
    %9842 = vmatpush.msra.mxu0 %v9662
    %9843 = vmatpush.msra.mxu0 %v9659
    %9844 = vmatpush.msra.mxu0 %v9656
    %9845 = vmatpush.msra.mxu0 %v9653
    %9846 = vmatpush.msra.mxu0 %v9650
    %9847 = vmatpush.msra.mxu0 %v9647
    %9848 = vmatpush.msra.mxu0 %v9644
    %9849 = vmatpush.msra.mxu0 %v9641
    %9850 = vmatpush.msra.mxu0 %v9638
    %9851 = vmatpush.msra.mxu0 %v9635
    %9852 = vmatpush.msra.mxu0 %v9632
    %9853 = vmatpush.msra.mxu0 %v9629
    %9854 = vmatpush.msra.mxu0 %v9626
    %9855 = vmatpush.msra.mxu0 %v9623
    %9856 = vmatmul.f32.gmra.mxu0 %v9480
    %v9857 = vpop.f32.mrf.mxu0
    %v9858 = vadd.f32 %v9745, %v9857
    %9859 = vmatmul.f32.gmra.mxu0 %v9483
    %v9860 = vpop.f32.mrf.mxu0
    %v9861 = vadd.f32 %v9748, %v9860
    %9862 = vmatmul.f32.gmra.mxu0 %v9486
    %v9863 = vpop.f32.mrf.mxu0
    %v9864 = vadd.f32 %v9751, %v9863
    %9865 = vmatmul.f32.gmra.mxu0 %v9489
    %v9866 = vpop.f32.mrf.mxu0
    %v9867 = vadd.f32 %v9754, %v9866
    %9868 = vmatmul.f32.gmra.mxu0 %v9492
    %v9869 = vpop.f32.mrf.mxu0
    %v9870 = vadd.f32 %v9757, %v9869
    %9871 = vmatmul.f32.gmra.mxu0 %v9495
    %v9872 = vpop.f32.mrf.mxu0
    %v9873 = vadd.f32 %v9760, %v9872
    %9874 = vmatmul.f32.gmra.mxu0 %v9498
    %v9875 = vpop.f32.mrf.mxu0
    %v9876 = vadd.f32 %v9763, %v9875
    %9877 = vmatmul.f32.gmra.mxu0 %v9501
    %v9878 = vpop.f32.mrf.mxu0
    %v9879 = vadd.f32 %v9766, %v9878
    %9880 = vmatmul.f32.gmra.mxu0 %v9504
    %v9881 = vpop.f32.mrf.mxu0
    %v9882 = vadd.f32 %v9769, %v9881
    %9883 = vmatmul.f32.gmra.mxu0 %v9507
    %v9884 = vpop.f32.mrf.mxu0
    %v9885 = vadd.f32 %v9772, %v9884
    %9886 = vmatmul.f32.gmra.mxu0 %v9510
    %v9887 = vpop.f32.mrf.mxu0
    %v9888 = vadd.f32 %v9775, %v9887
    %9889 = vmatmul.f32.gmra.mxu0 %v9513
    %v9890 = vpop.f32.mrf.mxu0
    %v9891 = vadd.f32 %v9778, %v9890
    %9892 = vmatmul.f32.gmra.mxu0 %v9516
    %v9893 = vpop.f32.mrf.mxu0
    %v9894 = vadd.f32 %v9781, %v9893
    %9895 = vmatmul.f32.gmra.mxu0 %v9519
    %v9896 = vpop.f32.mrf.mxu0
    %v9897 = vadd.f32 %v9784, %v9896
    %9898 = vmatmul.f32.gmra.mxu0 %v9522
    %v9899 = vpop.f32.mrf.mxu0
    %v9900 = vadd.f32 %v9787, %v9899
    %9901 = vmatmul.f32.gmra.mxu0 %v9525
    %v9902 = vpop.f32.mrf.mxu0
    %v9903 = vadd.f32 %v9790, %v9902
    %9904 = vmatmul.f32.gmra.mxu0 %v9528
    %v9905 = vpop.f32.mrf.mxu0
    %v9906 = vadd.f32 %v9793, %v9905
    %9907 = vmatmul.f32.gmra.mxu0 %v9531
    %v9908 = vpop.f32.mrf.mxu0
    %v9909 = vadd.f32 %v9796, %v9908
    %9910 = vmatmul.f32.gmra.mxu0 %v9534
    %v9911 = vpop.f32.mrf.mxu0
    %v9912 = vadd.f32 %v9799, %v9911
    %9913 = vmatmul.f32.gmra.mxu0 %v9537
    %v9914 = vpop.f32.mrf.mxu0
    %v9915 = vadd.f32 %v9802, %v9914
    %9916 = vmatmul.f32.gmra.mxu0 %v9540
    %v9917 = vpop.f32.mrf.mxu0
    %v9918 = vadd.f32 %v9805, %v9917
    %9919 = vmatmul.f32.gmra.mxu0 %v9543
    %v9920 = vpop.f32.mrf.mxu0
    %v9921 = vadd.f32 %v9808, %v9920
    %9922 = vmatmul.f32.gmra.mxu0 %v9546
    %v9923 = vpop.f32.mrf.mxu0
    %v9924 = vadd.f32 %v9811, %v9923
    %9925 = vmatmul.f32.gmra.mxu0 %v9549
    %v9926 = vpop.f32.mrf.mxu0
    %v9927 = vadd.f32 %v9814, %v9926
    %9928 = vmatmul.f32.gmra.mxu0 %v9552
    %v9929 = vpop.f32.mrf.mxu0
    %v9930 = vadd.f32 %v9817, %v9929
    %9931 = vmatmul.f32.gmra.mxu0 %v9555
    %v9932 = vpop.f32.mrf.mxu0
    %v9933 = vadd.f32 %v9820, %v9932
    %9934 = vmatmul.f32.gmra.mxu0 %v9558
    %v9935 = vpop.f32.mrf.mxu0
    %v9936 = vadd.f32 %v9823, %v9935
    %9937 = vmatmul.f32.gmra.mxu0 %v9561
    %v9938 = vpop.f32.mrf.mxu0
    %v9939 = vadd.f32 %v9826, %v9938
    %9940 = vmatmul.f32.gmra.mxu0 %v9564
    %v9941 = vpop.f32.mrf.mxu0
    %v9942 = vadd.f32 %v9829, %v9941
    %9943 = vmatmul.f32.gmra.mxu0 %v9567
    %v9944 = vpop.f32.mrf.mxu0
    %v9945 = vadd.f32 %v9832, %v9944
    %9946 = vmatmul.f32.gmra.mxu0 %v9570
    %v9947 = vpop.f32.mrf.mxu0
    %v9948 = vadd.f32 %v9835, %v9947
    %9949 = vmatmul.f32.gmra.mxu0 %v9573
    %v9950 = vpop.f32.mrf.mxu0
    %v9951 = vadd.f32 %v9838, %v9950
    %9952 = vdwg.mxu0
    %9953 = vmatpush.msra.mxu0 %v9716
    %9954 = vmatpush.msra.mxu0 %v9713
    %9955 = vmatpush.msra.mxu0 %v9710
    %9956 = vmatpush.msra.mxu0 %v9707
    %9957 = vmatpush.msra.mxu0 %v9704
    %9958 = vmatpush.msra.mxu0 %v9701
    %9959 = vmatpush.msra.mxu0 %v9698
    %9960 = vmatpush.msra.mxu0 %v9695
    %9961 = vmatpush.msra.mxu0 %v9692
    %9962 = vmatpush.msra.mxu0 %v9689
    %9963 = vmatpush.msra.mxu0 %v9686
    %9964 = vmatpush.msra.mxu0 %v9683
    %9965 = vmatpush.msra.mxu0 %v9680
    %9966 = vmatpush.msra.mxu0 %v9677
    %9967 = vmatpush.msra.mxu0 %v9674
    %9968 = vmatpush.msra.mxu0 %v9671
    %9969 = vmatmul.f32.gmra.mxu0 %v9481
    %v9970 = vpop.f32.mrf.mxu0
    %v9971 = vadd.f32 %v9858, %v9970
    %9972 = vmatmul.f32.gmra.mxu0 %v9484
    %v9973 = vpop.f32.mrf.mxu0
    %v9974 = vadd.f32 %v9861, %v9973
    %9975 = vmatmul.f32.gmra.mxu0 %v9487
    %v9976 = vpop.f32.mrf.mxu0
    %v9977 = vadd.f32 %v9864, %v9976
    %9978 = vmatmul.f32.gmra.mxu0 %v9490
    %v9979 = vpop.f32.mrf.mxu0
    %v9980 = vadd.f32 %v9867, %v9979
    %9981 = vmatmul.f32.gmra.mxu0 %v9493
    %v9982 = vpop.f32.mrf.mxu0
    %v9983 = vadd.f32 %v9870, %v9982
    %9984 = vmatmul.f32.gmra.mxu0 %v9496
    %v9985 = vpop.f32.mrf.mxu0
    %v9986 = vadd.f32 %v9873, %v9985
    %9987 = vmatmul.f32.gmra.mxu0 %v9499
    %v9988 = vpop.f32.mrf.mxu0
    %v9989 = vadd.f32 %v9876, %v9988
    %9990 = vmatmul.f32.gmra.mxu0 %v9502
    %v9991 = vpop.f32.mrf.mxu0
    %v9992 = vadd.f32 %v9879, %v9991
    %9993 = vmatmul.f32.gmra.mxu0 %v9505
    %v9994 = vpop.f32.mrf.mxu0
    %v9995 = vadd.f32 %v9882, %v9994
    %9996 = vmatmul.f32.gmra.mxu0 %v9508
    %v9997 = vpop.f32.mrf.mxu0
    %v9998 = vadd.f32 %v9885, %v9997
    %9999 = vmatmul.f32.gmra.mxu0 %v9511
    %v10000 = vpop.f32.mrf.mxu0
    %v10001 = vadd.f32 %v9888, %v10000
    %10002 = vmatmul.f32.gmra.mxu0 %v9514
    %v10003 = vpop.f32.mrf.mxu0
    %v10004 = vadd.f32 %v9891, %v10003
    %10005 = vmatmul.f32.gmra.mxu0 %v9517
    %v10006 = vpop.f32.mrf.mxu0
    %v10007 = vadd.f32 %v9894, %v10006
    %10008 = vmatmul.f32.gmra.mxu0 %v9520
    %v10009 = vpop.f32.mrf.mxu0
    %v10010 = vadd.f32 %v9897, %v10009
    %10011 = vmatmul.f32.gmra.mxu0 %v9523
    %v10012 = vpop.f32.mrf.mxu0
    %v10013 = vadd.f32 %v9900, %v10012
    %10014 = vmatmul.f32.gmra.mxu0 %v9526
    %v10015 = vpop.f32.mrf.mxu0
    %v10016 = vadd.f32 %v9903, %v10015
    %10017 = vmatmul.f32.gmra.mxu0 %v9529
    %v10018 = vpop.f32.mrf.mxu0
    %v10019 = vadd.f32 %v9906, %v10018
    %10020 = vmatmul.f32.gmra.mxu0 %v9532
    %v10021 = vpop.f32.mrf.mxu0
    %v10022 = vadd.f32 %v9909, %v10021
    %10023 = vmatmul.f32.gmra.mxu0 %v9535
    %v10024 = vpop.f32.mrf.mxu0
    %v10025 = vadd.f32 %v9912, %v10024
    %10026 = vmatmul.f32.gmra.mxu0 %v9538
    %v10027 = vpop.f32.mrf.mxu0
    %v10028 = vadd.f32 %v9915, %v10027
    %10029 = vmatmul.f32.gmra.mxu0 %v9541
    %v10030 = vpop.f32.mrf.mxu0
    %v10031 = vadd.f32 %v9918, %v10030
    %10032 = vmatmul.f32.gmra.mxu0 %v9544
    %v10033 = vpop.f32.mrf.mxu0
    %v10034 = vadd.f32 %v9921, %v10033
    %10035 = vmatmul.f32.gmra.mxu0 %v9547
    %v10036 = vpop.f32.mrf.mxu0
    %v10037 = vadd.f32 %v9924, %v10036
    %10038 = vmatmul.f32.gmra.mxu0 %v9550
    %v10039 = vpop.f32.mrf.mxu0
    %v10040 = vadd.f32 %v9927, %v10039
    %10041 = vmatmul.f32.gmra.mxu0 %v9553
    %v10042 = vpop.f32.mrf.mxu0
    %v10043 = vadd.f32 %v9930, %v10042
    %10044 = vmatmul.f32.gmra.mxu0 %v9556
    %v10045 = vpop.f32.mrf.mxu0
    %v10046 = vadd.f32 %v9933, %v10045
    %10047 = vmatmul.f32.gmra.mxu0 %v9559
    %v10048 = vpop.f32.mrf.mxu0
    %v10049 = vadd.f32 %v9936, %v10048
    %10050 = vmatmul.f32.gmra.mxu0 %v9562
    %v10051 = vpop.f32.mrf.mxu0
    %v10052 = vadd.f32 %v9939, %v10051
    %10053 = vmatmul.f32.gmra.mxu0 %v9565
    %v10054 = vpop.f32.mrf.mxu0
    %v10055 = vadd.f32 %v9942, %v10054
    %10056 = vmatmul.f32.gmra.mxu0 %v9568
    %v10057 = vpop.f32.mrf.mxu0
    %v10058 = vadd.f32 %v9945, %v10057
    %10059 = vmatmul.f32.gmra.mxu0 %v9571
    %v10060 = vpop.f32.mrf.mxu0
    %v10061 = vadd.f32 %v9948, %v10060
    %10062 = vmatmul.f32.gmra.mxu0 %v9574
    %v10063 = vpop.f32.mrf.mxu0
    %v10064 = vadd.f32 %v9951, %v10063
    %10065 = vdwg.mxu0
    %10066 = vmatpush.msra.mxu0 %v9621
    %10067 = vmatpush.msra.mxu0 %v9618
    %10068 = vmatpush.msra.mxu0 %v9615
    %10069 = vmatpush.msra.mxu0 %v9612
    %10070 = vmatpush.msra.mxu0 %v9609
    %10071 = vmatpush.msra.mxu0 %v9606
    %10072 = vmatpush.msra.mxu0 %v9603
    %10073 = vmatpush.msra.mxu0 %v9600
    %10074 = vmatpush.msra.mxu0 %v9597
    %10075 = vmatpush.msra.mxu0 %v9594
    %10076 = vmatpush.msra.mxu0 %v9591
    %10077 = vmatpush.msra.mxu0 %v9588
    %10078 = vmatpush.msra.mxu0 %v9585
    %10079 = vmatpush.msra.mxu0 %v9582
    %10080 = vmatpush.msra.mxu0 %v9579
    %10081 = vmatpush.msra.mxu0 %v9576
    %10082 = vmatmul.f32.gmra.mxu0 %v9479
    %v10083 = vpop.f32.mrf.mxu0
    %v10084 = vadd.f32 %v9722, %v10083
    %10085 = vmatmul.f32.gmra.mxu0 %v9482
    %v10086 = vpop.f32.mrf.mxu0
    %v10087 = vadd.f32 %v9722, %v10086
    %10088 = vmatmul.f32.gmra.mxu0 %v9485
    %v10089 = vpop.f32.mrf.mxu0
    %v10090 = vadd.f32 %v9722, %v10089
    %10091 = vmatmul.f32.gmra.mxu0 %v9488
    %v10092 = vpop.f32.mrf.mxu0
    %v10093 = vadd.f32 %v9722, %v10092
    %10094 = vmatmul.f32.gmra.mxu0 %v9491
    %v10095 = vpop.f32.mrf.mxu0
    %v10096 = vadd.f32 %v9722, %v10095
    %10097 = vmatmul.f32.gmra.mxu0 %v9494
    %v10098 = vpop.f32.mrf.mxu0
    %v10099 = vadd.f32 %v9722, %v10098
    %10100 = vmatmul.f32.gmra.mxu0 %v9497
    %v10101 = vpop.f32.mrf.mxu0
    %v10102 = vadd.f32 %v9722, %v10101
    %10103 = vmatmul.f32.gmra.mxu0 %v9500
    %v10104 = vpop.f32.mrf.mxu0
    %v10105 = vadd.f32 %v9722, %v10104
    %10106 = vmatmul.f32.gmra.mxu0 %v9503
    %v10107 = vpop.f32.mrf.mxu0
    %v10108 = vadd.f32 %v9722, %v10107
    %10109 = vmatmul.f32.gmra.mxu0 %v9506
    %v10110 = vpop.f32.mrf.mxu0
    %v10111 = vadd.f32 %v9722, %v10110
    %10112 = vmatmul.f32.gmra.mxu0 %v9509
    %v10113 = vpop.f32.mrf.mxu0
    %v10114 = vadd.f32 %v9722, %v10113
    %10115 = vmatmul.f32.gmra.mxu0 %v9512
    %v10116 = vpop.f32.mrf.mxu0
    %v10117 = vadd.f32 %v9722, %v10116
    %10118 = vmatmul.f32.gmra.mxu0 %v9515
    %v10119 = vpop.f32.mrf.mxu0
    %v10120 = vadd.f32 %v9722, %v10119
    %10121 = vmatmul.f32.gmra.mxu0 %v9518
    %v10122 = vpop.f32.mrf.mxu0
    %v10123 = vadd.f32 %v9722, %v10122
    %10124 = vmatmul.f32.gmra.mxu0 %v9521
    %v10125 = vpop.f32.mrf.mxu0
    %v10126 = vadd.f32 %v9722, %v10125
    %10127 = vmatmul.f32.gmra.mxu0 %v9524
    %v10128 = vpop.f32.mrf.mxu0
    %v10129 = vadd.f32 %v9722, %v10128
    %10130 = vmatmul.f32.gmra.mxu0 %v9527
    %v10131 = vpop.f32.mrf.mxu0
    %v10132 = vadd.f32 %v9722, %v10131
    %10133 = vmatmul.f32.gmra.mxu0 %v9530
    %v10134 = vpop.f32.mrf.mxu0
    %v10135 = vadd.f32 %v9722, %v10134
    %10136 = vmatmul.f32.gmra.mxu0 %v9533
    %v10137 = vpop.f32.mrf.mxu0
    %v10138 = vadd.f32 %v9722, %v10137
    %10139 = vmatmul.f32.gmra.mxu0 %v9536
    %v10140 = vpop.f32.mrf.mxu0
    %v10141 = vadd.f32 %v9722, %v10140
    %10142 = vmatmul.f32.gmra.mxu0 %v9539
    %v10143 = vpop.f32.mrf.mxu0
    %v10144 = vadd.f32 %v9722, %v10143
    %10145 = vmatmul.f32.gmra.mxu0 %v9542
    %v10146 = vpop.f32.mrf.mxu0
    %v10147 = vadd.f32 %v9722, %v10146
    %10148 = vmatmul.f32.gmra.mxu0 %v9545
    %v10149 = vpop.f32.mrf.mxu0
    %v10150 = vadd.f32 %v9722, %v10149
    %10151 = vmatmul.f32.gmra.mxu0 %v9548
    %v10152 = vpop.f32.mrf.mxu0
    %v10153 = vadd.f32 %v9722, %v10152
    %10154 = vmatmul.f32.gmra.mxu0 %v9551
    %v10155 = vpop.f32.mrf.mxu0
    %v10156 = vadd.f32 %v9722, %v10155
    %10157 = vmatmul.f32.gmra.mxu0 %v9554
    %v10158 = vpop.f32.mrf.mxu0
    %v10159 = vadd.f32 %v9722, %v10158
    %10160 = vmatmul.f32.gmra.mxu0 %v9557
    %v10161 = vpop.f32.mrf.mxu0
    %v10162 = vadd.f32 %v9722, %v10161
    %10163 = vmatmul.f32.gmra.mxu0 %v9560
    %v10164 = vpop.f32.mrf.mxu0
    %v10165 = vadd.f32 %v9722, %v10164
    %10166 = vmatmul.f32.gmra.mxu0 %v9563
    %v10167 = vpop.f32.mrf.mxu0
    %v10168 = vadd.f32 %v9722, %v10167
    %10169 = vmatmul.f32.gmra.mxu0 %v9566
    %v10170 = vpop.f32.mrf.mxu0
    %v10171 = vadd.f32 %v9722, %v10170
    %10172 = vmatmul.f32.gmra.mxu0 %v9569
    %v10173 = vpop.f32.mrf.mxu0
    %v10174 = vadd.f32 %v9722, %v10173
    %10175 = vmatmul.f32.gmra.mxu0 %v9572
    %v10176 = vpop.f32.mrf.mxu0
    %v10177 = vadd.f32 %v9722, %v10176
    %10178 = vdwg.mxu0
    %10179 = vmatpush.msra.mxu0 %v9669
    %10180 = vmatpush.msra.mxu0 %v9666
    %10181 = vmatpush.msra.mxu0 %v9663
    %10182 = vmatpush.msra.mxu0 %v9660
    %10183 = vmatpush.msra.mxu0 %v9657
    %10184 = vmatpush.msra.mxu0 %v9654
    %10185 = vmatpush.msra.mxu0 %v9651
    %10186 = vmatpush.msra.mxu0 %v9648
    %10187 = vmatpush.msra.mxu0 %v9645
    %10188 = vmatpush.msra.mxu0 %v9642
    %10189 = vmatpush.msra.mxu0 %v9639
    %10190 = vmatpush.msra.mxu0 %v9636
    %10191 = vmatpush.msra.mxu0 %v9633
    %10192 = vmatpush.msra.mxu0 %v9630
    %10193 = vmatpush.msra.mxu0 %v9627
    %10194 = vmatpush.msra.mxu0 %v9624
    %10195 = vmatmul.f32.gmra.mxu0 %v9480
    %v10196 = vpop.f32.mrf.mxu0
    %v10197 = vadd.f32 %v10084, %v10196
    %10198 = vmatmul.f32.gmra.mxu0 %v9483
    %v10199 = vpop.f32.mrf.mxu0
    %v10200 = vadd.f32 %v10087, %v10199
    %10201 = vmatmul.f32.gmra.mxu0 %v9486
    %v10202 = vpop.f32.mrf.mxu0
    %v10203 = vadd.f32 %v10090, %v10202
    %10204 = vmatmul.f32.gmra.mxu0 %v9489
    %v10205 = vpop.f32.mrf.mxu0
    %v10206 = vadd.f32 %v10093, %v10205
    %10207 = vmatmul.f32.gmra.mxu0 %v9492
    %v10208 = vpop.f32.mrf.mxu0
    %v10209 = vadd.f32 %v10096, %v10208
    %10210 = vmatmul.f32.gmra.mxu0 %v9495
    %v10211 = vpop.f32.mrf.mxu0
    %v10212 = vadd.f32 %v10099, %v10211
    %10213 = vmatmul.f32.gmra.mxu0 %v9498
    %v10214 = vpop.f32.mrf.mxu0
    %v10215 = vadd.f32 %v10102, %v10214
    %10216 = vmatmul.f32.gmra.mxu0 %v9501
    %v10217 = vpop.f32.mrf.mxu0
    %v10218 = vadd.f32 %v10105, %v10217
    %10219 = vmatmul.f32.gmra.mxu0 %v9504
    %v10220 = vpop.f32.mrf.mxu0
    %v10221 = vadd.f32 %v10108, %v10220
    %10222 = vmatmul.f32.gmra.mxu0 %v9507
    %v10223 = vpop.f32.mrf.mxu0
    %v10224 = vadd.f32 %v10111, %v10223
    %10225 = vmatmul.f32.gmra.mxu0 %v9510
    %v10226 = vpop.f32.mrf.mxu0
    %v10227 = vadd.f32 %v10114, %v10226
    %10228 = vmatmul.f32.gmra.mxu0 %v9513
    %v10229 = vpop.f32.mrf.mxu0
    %v10230 = vadd.f32 %v10117, %v10229
    %10231 = vmatmul.f32.gmra.mxu0 %v9516
    %v10232 = vpop.f32.mrf.mxu0
    %v10233 = vadd.f32 %v10120, %v10232
    %10234 = vmatmul.f32.gmra.mxu0 %v9519
    %v10235 = vpop.f32.mrf.mxu0
    %v10236 = vadd.f32 %v10123, %v10235
    %10237 = vmatmul.f32.gmra.mxu0 %v9522
    %v10238 = vpop.f32.mrf.mxu0
    %v10239 = vadd.f32 %v10126, %v10238
    %10240 = vmatmul.f32.gmra.mxu0 %v9525
    %v10241 = vpop.f32.mrf.mxu0
    %v10242 = vadd.f32 %v10129, %v10241
    %10243 = vmatmul.f32.gmra.mxu0 %v9528
    %v10244 = vpop.f32.mrf.mxu0
    %v10245 = vadd.f32 %v10132, %v10244
    %10246 = vmatmul.f32.gmra.mxu0 %v9531
    %v10247 = vpop.f32.mrf.mxu0
    %v10248 = vadd.f32 %v10135, %v10247
    %10249 = vmatmul.f32.gmra.mxu0 %v9534
    %v10250 = vpop.f32.mrf.mxu0
    %v10251 = vadd.f32 %v10138, %v10250
    %10252 = vmatmul.f32.gmra.mxu0 %v9537
    %v10253 = vpop.f32.mrf.mxu0
    %v10254 = vadd.f32 %v10141, %v10253
    %10255 = vmatmul.f32.gmra.mxu0 %v9540
    %v10256 = vpop.f32.mrf.mxu0
    %v10257 = vadd.f32 %v10144, %v10256
    %10258 = vmatmul.f32.gmra.mxu0 %v9543
    %v10259 = vpop.f32.mrf.mxu0
    %v10260 = vadd.f32 %v10147, %v10259
    %10261 = vmatmul.f32.gmra.mxu0 %v9546
    %v10262 = vpop.f32.mrf.mxu0
    %v10263 = vadd.f32 %v10150, %v10262
    %10264 = vmatmul.f32.gmra.mxu0 %v9549
    %v10265 = vpop.f32.mrf.mxu0
    %v10266 = vadd.f32 %v10153, %v10265
    %10267 = vmatmul.f32.gmra.mxu0 %v9552
    %v10268 = vpop.f32.mrf.mxu0
    %v10269 = vadd.f32 %v10156, %v10268
    %10270 = vmatmul.f32.gmra.mxu0 %v9555
    %v10271 = vpop.f32.mrf.mxu0
    %v10272 = vadd.f32 %v10159, %v10271
    %10273 = vmatmul.f32.gmra.mxu0 %v9558
    %v10274 = vpop.f32.mrf.mxu0
    %v10275 = vadd.f32 %v10162, %v10274
    %10276 = vmatmul.f32.gmra.mxu0 %v9561
    %v10277 = vpop.f32.mrf.mxu0
    %v10278 = vadd.f32 %v10165, %v10277
    %10279 = vmatmul.f32.gmra.mxu0 %v9564
    %v10280 = vpop.f32.mrf.mxu0
    %v10281 = vadd.f32 %v10168, %v10280
    %10282 = vmatmul.f32.gmra.mxu0 %v9567
    %v10283 = vpop.f32.mrf.mxu0
    %v10284 = vadd.f32 %v10171, %v10283
    %10285 = vmatmul.f32.gmra.mxu0 %v9570
    %v10286 = vpop.f32.mrf.mxu0
    %v10287 = vadd.f32 %v10174, %v10286
    %10288 = vmatmul.f32.gmra.mxu0 %v9573
    %v10289 = vpop.f32.mrf.mxu0
    %v10290 = vadd.f32 %v10177, %v10289
    %10291 = vdwg.mxu0
    %10292 = vmatpush.msra.mxu0 %v9717
    %10293 = vmatpush.msra.mxu0 %v9714
    %10294 = vmatpush.msra.mxu0 %v9711
    %10295 = vmatpush.msra.mxu0 %v9708
    %10296 = vmatpush.msra.mxu0 %v9705
    %10297 = vmatpush.msra.mxu0 %v9702
    %10298 = vmatpush.msra.mxu0 %v9699
    %10299 = vmatpush.msra.mxu0 %v9696
    %10300 = vmatpush.msra.mxu0 %v9693
    %10301 = vmatpush.msra.mxu0 %v9690
    %10302 = vmatpush.msra.mxu0 %v9687
    %10303 = vmatpush.msra.mxu0 %v9684
    %10304 = vmatpush.msra.mxu0 %v9681
    %10305 = vmatpush.msra.mxu0 %v9678
    %10306 = vmatpush.msra.mxu0 %v9675
    %10307 = vmatpush.msra.mxu0 %v9672
    %10308 = vmatmul.f32.gmra.mxu0 %v9481
    %v10309 = vpop.f32.mrf.mxu0
    %v10310 = vadd.f32 %v10197, %v10309
    %10311 = vmatmul.f32.gmra.mxu0 %v9484
    %v10312 = vpop.f32.mrf.mxu0
    %v10313 = vadd.f32 %v10200, %v10312
    %10314 = vmatmul.f32.gmra.mxu0 %v9487
    %v10315 = vpop.f32.mrf.mxu0
    %v10316 = vadd.f32 %v10203, %v10315
    %10317 = vmatmul.f32.gmra.mxu0 %v9490
    %v10318 = vpop.f32.mrf.mxu0
    %v10319 = vadd.f32 %v10206, %v10318
    %10320 = vmatmul.f32.gmra.mxu0 %v9493
    %v10321 = vpop.f32.mrf.mxu0
    %v10322 = vadd.f32 %v10209, %v10321
    %10323 = vmatmul.f32.gmra.mxu0 %v9496
    %v10324 = vpop.f32.mrf.mxu0
    %v10325 = vadd.f32 %v10212, %v10324
    %10326 = vmatmul.f32.gmra.mxu0 %v9499
    %v10327 = vpop.f32.mrf.mxu0
    %v10328 = vadd.f32 %v10215, %v10327
    %10329 = vmatmul.f32.gmra.mxu0 %v9502
    %v10330 = vpop.f32.mrf.mxu0
    %v10331 = vadd.f32 %v10218, %v10330
    %10332 = vmatmul.f32.gmra.mxu0 %v9505
    %v10333 = vpop.f32.mrf.mxu0
    %v10334 = vadd.f32 %v10221, %v10333
    %10335 = vmatmul.f32.gmra.mxu0 %v9508
    %v10336 = vpop.f32.mrf.mxu0
    %v10337 = vadd.f32 %v10224, %v10336
    %10338 = vmatmul.f32.gmra.mxu0 %v9511
    %v10339 = vpop.f32.mrf.mxu0
    %v10340 = vadd.f32 %v10227, %v10339
    %10341 = vmatmul.f32.gmra.mxu0 %v9514
    %v10342 = vpop.f32.mrf.mxu0
    %v10343 = vadd.f32 %v10230, %v10342
    %10344 = vmatmul.f32.gmra.mxu0 %v9517
    %v10345 = vpop.f32.mrf.mxu0
    %v10346 = vadd.f32 %v10233, %v10345
    %10347 = vmatmul.f32.gmra.mxu0 %v9520
    %v10348 = vpop.f32.mrf.mxu0
    %v10349 = vadd.f32 %v10236, %v10348
    %10350 = vmatmul.f32.gmra.mxu0 %v9523
    %v10351 = vpop.f32.mrf.mxu0
    %v10352 = vadd.f32 %v10239, %v10351
    %10353 = vmatmul.f32.gmra.mxu0 %v9526
    %v10354 = vpop.f32.mrf.mxu0
    %v10355 = vadd.f32 %v10242, %v10354
    %10356 = vmatmul.f32.gmra.mxu0 %v9529
    %v10357 = vpop.f32.mrf.mxu0
    %v10358 = vadd.f32 %v10245, %v10357
    %10359 = vmatmul.f32.gmra.mxu0 %v9532
    %v10360 = vpop.f32.mrf.mxu0
    %v10361 = vadd.f32 %v10248, %v10360
    %10362 = vmatmul.f32.gmra.mxu0 %v9535
    %v10363 = vpop.f32.mrf.mxu0
    %v10364 = vadd.f32 %v10251, %v10363
    %10365 = vmatmul.f32.gmra.mxu0 %v9538
    %v10366 = vpop.f32.mrf.mxu0
    %v10367 = vadd.f32 %v10254, %v10366
    %10368 = vmatmul.f32.gmra.mxu0 %v9541
    %v10369 = vpop.f32.mrf.mxu0
    %v10370 = vadd.f32 %v10257, %v10369
    %10371 = vmatmul.f32.gmra.mxu0 %v9544
    %v10372 = vpop.f32.mrf.mxu0
    %v10373 = vadd.f32 %v10260, %v10372
    %10374 = vmatmul.f32.gmra.mxu0 %v9547
    %v10375 = vpop.f32.mrf.mxu0
    %v10376 = vadd.f32 %v10263, %v10375
    %10377 = vmatmul.f32.gmra.mxu0 %v9550
    %v10378 = vpop.f32.mrf.mxu0
    %v10379 = vadd.f32 %v10266, %v10378
    %10380 = vmatmul.f32.gmra.mxu0 %v9553
    %v10381 = vpop.f32.mrf.mxu0
    %v10382 = vadd.f32 %v10269, %v10381
    %10383 = vmatmul.f32.gmra.mxu0 %v9556
    %v10384 = vpop.f32.mrf.mxu0
    %v10385 = vadd.f32 %v10272, %v10384
    %10386 = vmatmul.f32.gmra.mxu0 %v9559
    %v10387 = vpop.f32.mrf.mxu0
    %v10388 = vadd.f32 %v10275, %v10387
    %10389 = vmatmul.f32.gmra.mxu0 %v9562
    %v10390 = vpop.f32.mrf.mxu0
    %v10391 = vadd.f32 %v10278, %v10390
    %10392 = vmatmul.f32.gmra.mxu0 %v9565
    %v10393 = vpop.f32.mrf.mxu0
    %v10394 = vadd.f32 %v10281, %v10393
    %10395 = vmatmul.f32.gmra.mxu0 %v9568
    %v10396 = vpop.f32.mrf.mxu0
    %v10397 = vadd.f32 %v10284, %v10396
    %10398 = vmatmul.f32.gmra.mxu0 %v9571
    %v10399 = vpop.f32.mrf.mxu0
    %v10400 = vadd.f32 %v10287, %v10399
    %10401 = vmatmul.f32.gmra.mxu0 %v9574
    %v10402 = vpop.f32.mrf.mxu0
    %v10403 = vadd.f32 %v10290, %v10402
    %10404 = vdwg.mxu0
    %10405 = vmatpush.msra.mxu0 %v9622
    %10406 = vmatpush.msra.mxu0 %v9619
    %10407 = vmatpush.msra.mxu0 %v9616
    %10408 = vmatpush.msra.mxu0 %v9613
    %10409 = vmatpush.msra.mxu0 %v9610
    %10410 = vmatpush.msra.mxu0 %v9607
    %10411 = vmatpush.msra.mxu0 %v9604
    %10412 = vmatpush.msra.mxu0 %v9601
    %10413 = vmatpush.msra.mxu0 %v9598
    %10414 = vmatpush.msra.mxu0 %v9595
    %10415 = vmatpush.msra.mxu0 %v9592
    %10416 = vmatpush.msra.mxu0 %v9589
    %10417 = vmatpush.msra.mxu0 %v9586
    %10418 = vmatpush.msra.mxu0 %v9583
    %10419 = vmatpush.msra.mxu0 %v9580
    %10420 = vmatpush.msra.mxu0 %v9577
    %10421 = vmatmul.f32.gmra.mxu0 %v9479
    %v10422 = vpop.f32.mrf.mxu0
    %v10423 = vadd.f32 %v9723, %v10422
    %10424 = vmatmul.f32.gmra.mxu0 %v9482
    %v10425 = vpop.f32.mrf.mxu0
    %v10426 = vadd.f32 %v9723, %v10425
    %10427 = vmatmul.f32.gmra.mxu0 %v9485
    %v10428 = vpop.f32.mrf.mxu0
    %v10429 = vadd.f32 %v9723, %v10428
    %10430 = vmatmul.f32.gmra.mxu0 %v9488
    %v10431 = vpop.f32.mrf.mxu0
    %v10432 = vadd.f32 %v9723, %v10431
    %10433 = vmatmul.f32.gmra.mxu0 %v9491
    %v10434 = vpop.f32.mrf.mxu0
    %v10435 = vadd.f32 %v9723, %v10434
    %10436 = vmatmul.f32.gmra.mxu0 %v9494
    %v10437 = vpop.f32.mrf.mxu0
    %v10438 = vadd.f32 %v9723, %v10437
    %10439 = vmatmul.f32.gmra.mxu0 %v9497
    %v10440 = vpop.f32.mrf.mxu0
    %v10441 = vadd.f32 %v9723, %v10440
    %10442 = vmatmul.f32.gmra.mxu0 %v9500
    %v10443 = vpop.f32.mrf.mxu0
    %v10444 = vadd.f32 %v9723, %v10443
    %10445 = vmatmul.f32.gmra.mxu0 %v9503
    %v10446 = vpop.f32.mrf.mxu0
    %v10447 = vadd.f32 %v9723, %v10446
    %10448 = vmatmul.f32.gmra.mxu0 %v9506
    %v10449 = vpop.f32.mrf.mxu0
    %v10450 = vadd.f32 %v9723, %v10449
    %10451 = vmatmul.f32.gmra.mxu0 %v9509
    %v10452 = vpop.f32.mrf.mxu0
    %v10453 = vadd.f32 %v9723, %v10452
    %10454 = vmatmul.f32.gmra.mxu0 %v9512
    %v10455 = vpop.f32.mrf.mxu0
    %v10456 = vadd.f32 %v9723, %v10455
    %10457 = vmatmul.f32.gmra.mxu0 %v9515
    %v10458 = vpop.f32.mrf.mxu0
    %v10459 = vadd.f32 %v9723, %v10458
    %10460 = vmatmul.f32.gmra.mxu0 %v9518
    %v10461 = vpop.f32.mrf.mxu0
    %v10462 = vadd.f32 %v9723, %v10461
    %10463 = vmatmul.f32.gmra.mxu0 %v9521
    %v10464 = vpop.f32.mrf.mxu0
    %v10465 = vadd.f32 %v9723, %v10464
    %10466 = vmatmul.f32.gmra.mxu0 %v9524
    %v10467 = vpop.f32.mrf.mxu0
    %v10468 = vadd.f32 %v9723, %v10467
    %10469 = vmatmul.f32.gmra.mxu0 %v9527
    %v10470 = vpop.f32.mrf.mxu0
    %v10471 = vadd.f32 %v9723, %v10470
    %10472 = vmatmul.f32.gmra.mxu0 %v9530
    %v10473 = vpop.f32.mrf.mxu0
    %v10474 = vadd.f32 %v9723, %v10473
    %10475 = vmatmul.f32.gmra.mxu0 %v9533
    %v10476 = vpop.f32.mrf.mxu0
    %v10477 = vadd.f32 %v9723, %v10476
    %10478 = vmatmul.f32.gmra.mxu0 %v9536
    %v10479 = vpop.f32.mrf.mxu0
    %v10480 = vadd.f32 %v9723, %v10479
    %10481 = vmatmul.f32.gmra.mxu0 %v9539
    %v10482 = vpop.f32.mrf.mxu0
    %v10483 = vadd.f32 %v9723, %v10482
    %10484 = vmatmul.f32.gmra.mxu0 %v9542
    %v10485 = vpop.f32.mrf.mxu0
    %v10486 = vadd.f32 %v9723, %v10485
    %10487 = vmatmul.f32.gmra.mxu0 %v9545
    %v10488 = vpop.f32.mrf.mxu0
    %v10489 = vadd.f32 %v9723, %v10488
    %10490 = vmatmul.f32.gmra.mxu0 %v9548
    %v10491 = vpop.f32.mrf.mxu0
    %v10492 = vadd.f32 %v9723, %v10491
    %10493 = vmatmul.f32.gmra.mxu0 %v9551
    %v10494 = vpop.f32.mrf.mxu0
    %v10495 = vadd.f32 %v9723, %v10494
    %10496 = vmatmul.f32.gmra.mxu0 %v9554
    %v10497 = vpop.f32.mrf.mxu0
    %v10498 = vadd.f32 %v9723, %v10497
    %10499 = vmatmul.f32.gmra.mxu0 %v9557
    %v10500 = vpop.f32.mrf.mxu0
    %v10501 = vadd.f32 %v9723, %v10500
    %10502 = vmatmul.f32.gmra.mxu0 %v9560
    %v10503 = vpop.f32.mrf.mxu0
    %v10504 = vadd.f32 %v9723, %v10503
    %10505 = vmatmul.f32.gmra.mxu0 %v9563
    %v10506 = vpop.f32.mrf.mxu0
    %v10507 = vadd.f32 %v9723, %v10506
    %10508 = vmatmul.f32.gmra.mxu0 %v9566
    %v10509 = vpop.f32.mrf.mxu0
    %v10510 = vadd.f32 %v9723, %v10509
    %10511 = vmatmul.f32.gmra.mxu0 %v9569
    %v10512 = vpop.f32.mrf.mxu0
    %v10513 = vadd.f32 %v9723, %v10512
    %10514 = vmatmul.f32.gmra.mxu0 %v9572
    %v10515 = vpop.f32.mrf.mxu0
    %v10516 = vadd.f32 %v9723, %v10515
    %10517 = vdwg.mxu0
    %10518 = vmatpush.msra.mxu0 %v9670
    %10519 = vmatpush.msra.mxu0 %v9667
    %10520 = vmatpush.msra.mxu0 %v9664
    %10521 = vmatpush.msra.mxu0 %v9661
    %10522 = vmatpush.msra.mxu0 %v9658
    %10523 = vmatpush.msra.mxu0 %v9655
    %10524 = vmatpush.msra.mxu0 %v9652
    %10525 = vmatpush.msra.mxu0 %v9649
    %10526 = vmatpush.msra.mxu0 %v9646
    %10527 = vmatpush.msra.mxu0 %v9643
    %10528 = vmatpush.msra.mxu0 %v9640
    %10529 = vmatpush.msra.mxu0 %v9637
    %10530 = vmatpush.msra.mxu0 %v9634
    %10531 = vmatpush.msra.mxu0 %v9631
    %10532 = vmatpush.msra.mxu0 %v9628
    %10533 = vmatpush.msra.mxu0 %v9625
    %10534 = vmatmul.f32.gmra.mxu0 %v9480
    %v10535 = vpop.f32.mrf.mxu0
    %v10536 = vadd.f32 %v10423, %v10535
    %10537 = vmatmul.f32.gmra.mxu0 %v9483
    %v10538 = vpop.f32.mrf.mxu0
    %v10539 = vadd.f32 %v10426, %v10538
    %10540 = vmatmul.f32.gmra.mxu0 %v9486
    %v10541 = vpop.f32.mrf.mxu0
    %v10542 = vadd.f32 %v10429, %v10541
    %10543 = vmatmul.f32.gmra.mxu0 %v9489
    %v10544 = vpop.f32.mrf.mxu0
    %v10545 = vadd.f32 %v10432, %v10544
    %10546 = vmatmul.f32.gmra.mxu0 %v9492
    %v10547 = vpop.f32.mrf.mxu0
    %v10548 = vadd.f32 %v10435, %v10547
    %10549 = vmatmul.f32.gmra.mxu0 %v9495
    %v10550 = vpop.f32.mrf.mxu0
    %v10551 = vadd.f32 %v10438, %v10550
    %10552 = vmatmul.f32.gmra.mxu0 %v9498
    %v10553 = vpop.f32.mrf.mxu0
    %v10554 = vadd.f32 %v10441, %v10553
    %10555 = vmatmul.f32.gmra.mxu0 %v9501
    %v10556 = vpop.f32.mrf.mxu0
    %v10557 = vadd.f32 %v10444, %v10556
    %10558 = vmatmul.f32.gmra.mxu0 %v9504
    %v10559 = vpop.f32.mrf.mxu0
    %v10560 = vadd.f32 %v10447, %v10559
    %10561 = vmatmul.f32.gmra.mxu0 %v9507
    %v10562 = vpop.f32.mrf.mxu0
    %v10563 = vadd.f32 %v10450, %v10562
    %10564 = vmatmul.f32.gmra.mxu0 %v9510
    %v10565 = vpop.f32.mrf.mxu0
    %v10566 = vadd.f32 %v10453, %v10565
    %10567 = vmatmul.f32.gmra.mxu0 %v9513
    %v10568 = vpop.f32.mrf.mxu0
    %v10569 = vadd.f32 %v10456, %v10568
    %10570 = vmatmul.f32.gmra.mxu0 %v9516
    %v10571 = vpop.f32.mrf.mxu0
    %v10572 = vadd.f32 %v10459, %v10571
    %10573 = vmatmul.f32.gmra.mxu0 %v9519
    %v10574 = vpop.f32.mrf.mxu0
    %v10575 = vadd.f32 %v10462, %v10574
    %10576 = vmatmul.f32.gmra.mxu0 %v9522
    %v10577 = vpop.f32.mrf.mxu0
    %v10578 = vadd.f32 %v10465, %v10577
    %10579 = vmatmul.f32.gmra.mxu0 %v9525
    %v10580 = vpop.f32.mrf.mxu0
    %v10581 = vadd.f32 %v10468, %v10580
    %10582 = vmatmul.f32.gmra.mxu0 %v9528
    %v10583 = vpop.f32.mrf.mxu0
    %v10584 = vadd.f32 %v10471, %v10583
    %10585 = vmatmul.f32.gmra.mxu0 %v9531
    %v10586 = vpop.f32.mrf.mxu0
    %v10587 = vadd.f32 %v10474, %v10586
    %10588 = vmatmul.f32.gmra.mxu0 %v9534
    %v10589 = vpop.f32.mrf.mxu0
    %v10590 = vadd.f32 %v10477, %v10589
    %10591 = vmatmul.f32.gmra.mxu0 %v9537
    %v10592 = vpop.f32.mrf.mxu0
    %v10593 = vadd.f32 %v10480, %v10592
    %10594 = vmatmul.f32.gmra.mxu0 %v9540
    %v10595 = vpop.f32.mrf.mxu0
    %v10596 = vadd.f32 %v10483, %v10595
    %10597 = vmatmul.f32.gmra.mxu0 %v9543
    %v10598 = vpop.f32.mrf.mxu0
    %v10599 = vadd.f32 %v10486, %v10598
    %10600 = vmatmul.f32.gmra.mxu0 %v9546
    %v10601 = vpop.f32.mrf.mxu0
    %v10602 = vadd.f32 %v10489, %v10601
    %10603 = vmatmul.f32.gmra.mxu0 %v9549
    %v10604 = vpop.f32.mrf.mxu0
    %v10605 = vadd.f32 %v10492, %v10604
    %10606 = vmatmul.f32.gmra.mxu0 %v9552
    %v10607 = vpop.f32.mrf.mxu0
    %v10608 = vadd.f32 %v10495, %v10607
    %10609 = vmatmul.f32.gmra.mxu0 %v9555
    %v10610 = vpop.f32.mrf.mxu0
    %v10611 = vadd.f32 %v10498, %v10610
    %10612 = vmatmul.f32.gmra.mxu0 %v9558
    %v10613 = vpop.f32.mrf.mxu0
    %v10614 = vadd.f32 %v10501, %v10613
    %10615 = vmatmul.f32.gmra.mxu0 %v9561
    %v10616 = vpop.f32.mrf.mxu0
    %v10617 = vadd.f32 %v10504, %v10616
    %10618 = vmatmul.f32.gmra.mxu0 %v9564
    %v10619 = vpop.f32.mrf.mxu0
    %v10620 = vadd.f32 %v10507, %v10619
    %10621 = vmatmul.f32.gmra.mxu0 %v9567
    %v10622 = vpop.f32.mrf.mxu0
    %v10623 = vadd.f32 %v10510, %v10622
    %10624 = vmatmul.f32.gmra.mxu0 %v9570
    %v10625 = vpop.f32.mrf.mxu0
    %v10626 = vadd.f32 %v10513, %v10625
    %10627 = vmatmul.f32.gmra.mxu0 %v9573
    %v10628 = vpop.f32.mrf.mxu0
    %v10629 = vadd.f32 %v10516, %v10628
    %10630 = vdwg.mxu0
    %10631 = vmatpush.msra.mxu0 %v9718
    %10632 = vmatpush.msra.mxu0 %v9715
    %10633 = vmatpush.msra.mxu0 %v9712
    %10634 = vmatpush.msra.mxu0 %v9709
    %10635 = vmatpush.msra.mxu0 %v9706
    %10636 = vmatpush.msra.mxu0 %v9703
    %10637 = vmatpush.msra.mxu0 %v9700
    %10638 = vmatpush.msra.mxu0 %v9697
    %10639 = vmatpush.msra.mxu0 %v9694
    %10640 = vmatpush.msra.mxu0 %v9691
    %10641 = vmatpush.msra.mxu0 %v9688
    %10642 = vmatpush.msra.mxu0 %v9685
    %10643 = vmatpush.msra.mxu0 %v9682
    %10644 = vmatpush.msra.mxu0 %v9679
    %10645 = vmatpush.msra.mxu0 %v9676
    %10646 = vmatpush.msra.mxu0 %v9673
    %10647 = vmatmul.f32.gmra.mxu0 %v9481
    %v10648 = vpop.f32.mrf.mxu0
    %v10649 = vadd.f32 %v10536, %v10648
    %10650 = vmatmul.f32.gmra.mxu0 %v9484
    %v10651 = vpop.f32.mrf.mxu0
    %v10652 = vadd.f32 %v10539, %v10651
    %10653 = vmatmul.f32.gmra.mxu0 %v9487
    %v10654 = vpop.f32.mrf.mxu0
    %v10655 = vadd.f32 %v10542, %v10654
    %10656 = vmatmul.f32.gmra.mxu0 %v9490
    %v10657 = vpop.f32.mrf.mxu0
    %v10658 = vadd.f32 %v10545, %v10657
    %10659 = vmatmul.f32.gmra.mxu0 %v9493
    %v10660 = vpop.f32.mrf.mxu0
    %v10661 = vadd.f32 %v10548, %v10660
    %10662 = vmatmul.f32.gmra.mxu0 %v9496
    %v10663 = vpop.f32.mrf.mxu0
    %v10664 = vadd.f32 %v10551, %v10663
    %10665 = vmatmul.f32.gmra.mxu0 %v9499
    %v10666 = vpop.f32.mrf.mxu0
    %v10667 = vadd.f32 %v10554, %v10666
    %10668 = vmatmul.f32.gmra.mxu0 %v9502
    %v10669 = vpop.f32.mrf.mxu0
    %v10670 = vadd.f32 %v10557, %v10669
    %10671 = vmatmul.f32.gmra.mxu0 %v9505
    %v10672 = vpop.f32.mrf.mxu0
    %v10673 = vadd.f32 %v10560, %v10672
    %10674 = vmatmul.f32.gmra.mxu0 %v9508
    %v10675 = vpop.f32.mrf.mxu0
    %v10676 = vadd.f32 %v10563, %v10675
    %10677 = vmatmul.f32.gmra.mxu0 %v9511
    %v10678 = vpop.f32.mrf.mxu0
    %v10679 = vadd.f32 %v10566, %v10678
    %10680 = vmatmul.f32.gmra.mxu0 %v9514
    %v10681 = vpop.f32.mrf.mxu0
    %v10682 = vadd.f32 %v10569, %v10681
    %10683 = vmatmul.f32.gmra.mxu0 %v9517
    %v10684 = vpop.f32.mrf.mxu0
    %v10685 = vadd.f32 %v10572, %v10684
    %10686 = vmatmul.f32.gmra.mxu0 %v9520
    %v10687 = vpop.f32.mrf.mxu0
    %v10688 = vadd.f32 %v10575, %v10687
    %10689 = vmatmul.f32.gmra.mxu0 %v9523
    %v10690 = vpop.f32.mrf.mxu0
    %v10691 = vadd.f32 %v10578, %v10690
    %10692 = vmatmul.f32.gmra.mxu0 %v9526
    %v10693 = vpop.f32.mrf.mxu0
    %v10694 = vadd.f32 %v10581, %v10693
    %10695 = vmatmul.f32.gmra.mxu0 %v9529
    %v10696 = vpop.f32.mrf.mxu0
    %v10697 = vadd.f32 %v10584, %v10696
    %10698 = vmatmul.f32.gmra.mxu0 %v9532
    %v10699 = vpop.f32.mrf.mxu0
    %v10700 = vadd.f32 %v10587, %v10699
    %10701 = vmatmul.f32.gmra.mxu0 %v9535
    %v10702 = vpop.f32.mrf.mxu0
    %v10703 = vadd.f32 %v10590, %v10702
    %10704 = vmatmul.f32.gmra.mxu0 %v9538
    %v10705 = vpop.f32.mrf.mxu0
    %v10706 = vadd.f32 %v10593, %v10705
    %10707 = vmatmul.f32.gmra.mxu0 %v9541
    %v10708 = vpop.f32.mrf.mxu0
    %v10709 = vadd.f32 %v10596, %v10708
    %10710 = vmatmul.f32.gmra.mxu0 %v9544
    %v10711 = vpop.f32.mrf.mxu0
    %v10712 = vadd.f32 %v10599, %v10711
    %10713 = vmatmul.f32.gmra.mxu0 %v9547
    %v10714 = vpop.f32.mrf.mxu0
    %v10715 = vadd.f32 %v10602, %v10714
    %10716 = vmatmul.f32.gmra.mxu0 %v9550
    %v10717 = vpop.f32.mrf.mxu0
    %v10718 = vadd.f32 %v10605, %v10717
    %10719 = vmatmul.f32.gmra.mxu0 %v9553
    %v10720 = vpop.f32.mrf.mxu0
    %v10721 = vadd.f32 %v10608, %v10720
    %10722 = vmatmul.f32.gmra.mxu0 %v9556
    %v10723 = vpop.f32.mrf.mxu0
    %v10724 = vadd.f32 %v10611, %v10723
    %10725 = vmatmul.f32.gmra.mxu0 %v9559
    %v10726 = vpop.f32.mrf.mxu0
    %v10727 = vadd.f32 %v10614, %v10726
    %10728 = vmatmul.f32.gmra.mxu0 %v9562
    %v10729 = vpop.f32.mrf.mxu0
    %v10730 = vadd.f32 %v10617, %v10729
    %10731 = vmatmul.f32.gmra.mxu0 %v9565
    %v10732 = vpop.f32.mrf.mxu0
    %v10733 = vadd.f32 %v10620, %v10732
    %10734 = vmatmul.f32.gmra.mxu0 %v9568
    %v10735 = vpop.f32.mrf.mxu0
    %v10736 = vadd.f32 %v10623, %v10735
    %10737 = vmatmul.f32.gmra.mxu0 %v9571
    %v10738 = vpop.f32.mrf.mxu0
    %v10739 = vadd.f32 %v10626, %v10738
    %10740 = vmatmul.f32.gmra.mxu0 %v9574
    %v10741 = vpop.f32.mrf.mxu0
    %v10742 = vadd.f32 %v10629, %v10741
    %10743 = vdwg.mxu0
    %10744 = vst [vmem:[#allocation11] sm:$0xff] %v9971
    %10745 = vst [vmem:[#allocation11 + $0x8] sm:$0xff] %v10310
    %10746 = vst [vmem:[#allocation11 + $0x10] sm:$0xff] %v10649
    %10747 = vst [vmem:[#allocation11 + $0x18] sm:$0xff] %v9974
    %10748 = vst [vmem:[#allocation11 + $0x20] sm:$0xff] %v10313
    %10749 = vst [vmem:[#allocation11 + $0x28] sm:$0xff] %v10652
    %10750 = vst [vmem:[#allocation11 + $0x30] sm:$0xff] %v9977
    %10751 = vst [vmem:[#allocation11 + $0x38] sm:$0xff] %v10316
    %10752 = vst [vmem:[#allocation11 + $0x40] sm:$0xff] %v10655
    %10753 = vst [vmem:[#allocation11 + $0x48] sm:$0xff] %v9980
    %10754 = vst [vmem:[#allocation11 + $0x50] sm:$0xff] %v10319
    %10755 = vst [vmem:[#allocation11 + $0x58] sm:$0xff] %v10658
    %10756 = vst [vmem:[#allocation11 + $0x60] sm:$0xff] %v9983
    %10757 = vst [vmem:[#allocation11 + $0x68] sm:$0xff] %v10322
    %10758 = vst [vmem:[#allocation11 + $0x70] sm:$0xff] %v10661
    %10759 = vst [vmem:[#allocation11 + $0x78] sm:$0xff] %v9986
    %10760 = vst [vmem:[#allocation11 + $0x80] sm:$0xff] %v10325
    %10761 = vst [vmem:[#allocation11 + $0x88] sm:$0xff] %v10664
    %10762 = vst [vmem:[#allocation11 + $0x90] sm:$0xff] %v9989
    %10763 = vst [vmem:[#allocation11 + $0x98] sm:$0xff] %v10328
    %10764 = vst [vmem:[#allocation11 + $0xa0] sm:$0xff] %v10667
    %10765 = vst [vmem:[#allocation11 + $0xa8] sm:$0xff] %v9992
    %10766 = vst [vmem:[#allocation11 + $0xb0] sm:$0xff] %v10331
    %10767 = vst [vmem:[#allocation11 + $0xb8] sm:$0xff] %v10670
    %10768 = vst [vmem:[#allocation11 + $0xc0] sm:$0xff] %v9995
    %10769 = vst [vmem:[#allocation11 + $0xc8] sm:$0xff] %v10334
    %10770 = vst [vmem:[#allocation11 + $0xd0] sm:$0xff] %v10673
    %10771 = vst [vmem:[#allocation11 + $0xd8] sm:$0xff] %v9998
    %10772 = vst [vmem:[#allocation11 + $0xe0] sm:$0xff] %v10337
    %10773 = vst [vmem:[#allocation11 + $0xe8] sm:$0xff] %v10676
    %10774 = vst [vmem:[#allocation11 + $0xf0] sm:$0xff] %v10001
    %10775 = vst [vmem:[#allocation11 + $0xf8] sm:$0xff] %v10340
    %10776 = vst [vmem:[#allocation11 + $0x100] sm:$0xff] %v10679
    %10777 = vst [vmem:[#allocation11 + $0x108] sm:$0xff] %v10004
    %10778 = vst [vmem:[#allocation11 + $0x110] sm:$0xff] %v10343
    %10779 = vst [vmem:[#allocation11 + $0x118] sm:$0xff] %v10682
    %10780 = vst [vmem:[#allocation11 + $0x120] sm:$0xff] %v10007
    %10781 = vst [vmem:[#allocation11 + $0x128] sm:$0xff] %v10346
    %10782 = vst [vmem:[#allocation11 + $0x130] sm:$0xff] %v10685
    %10783 = vst [vmem:[#allocation11 + $0x138] sm:$0xff] %v10010
    %10784 = vst [vmem:[#allocation11 + $0x140] sm:$0xff] %v10349
    %10785 = vst [vmem:[#allocation11 + $0x148] sm:$0xff] %v10688
    %10786 = vst [vmem:[#allocation11 + $0x150] sm:$0xff] %v10013
    %10787 = vst [vmem:[#allocation11 + $0x158] sm:$0xff] %v10352
    %10788 = vst [vmem:[#allocation11 + $0x160] sm:$0xff] %v10691
    %10789 = vst [vmem:[#allocation11 + $0x168] sm:$0xff] %v10016
    %10790 = vst [vmem:[#allocation11 + $0x170] sm:$0xff] %v10355
    %10791 = vst [vmem:[#allocation11 + $0x178] sm:$0xff] %v10694
    %10792 = vst [vmem:[#allocation11 + $0x180] sm:$0xff] %v10019
    %10793 = vst [vmem:[#allocation11 + $0x188] sm:$0xff] %v10358
    %10794 = vst [vmem:[#allocation11 + $0x190] sm:$0xff] %v10697
    %10795 = vst [vmem:[#allocation11 + $0x198] sm:$0xff] %v10022
    %10796 = vst [vmem:[#allocation11 + $0x1a0] sm:$0xff] %v10361
    %10797 = vst [vmem:[#allocation11 + $0x1a8] sm:$0xff] %v10700
    %10798 = vst [vmem:[#allocation11 + $0x1b0] sm:$0xff] %v10025
    %10799 = vst [vmem:[#allocation11 + $0x1b8] sm:$0xff] %v10364
    %10800 = vst [vmem:[#allocation11 + $0x1c0] sm:$0xff] %v10703
    %10801 = vst [vmem:[#allocation11 + $0x1c8] sm:$0xff] %v10028
    %10802 = vst [vmem:[#allocation11 + $0x1d0] sm:$0xff] %v10367
    %10803 = vst [vmem:[#allocation11 + $0x1d8] sm:$0xff] %v10706
    %10804 = vst [vmem:[#allocation11 + $0x1e0] sm:$0xff] %v10031
    %10805 = vst [vmem:[#allocation11 + $0x1e8] sm:$0xff] %v10370
    %10806 = vst [vmem:[#allocation11 + $0x1f0] sm:$0xff] %v10709
    %10807 = vst [vmem:[#allocation11 + $0x1f8] sm:$0xff] %v10034
    %10808 = vst [vmem:[#allocation11 + $0x200] sm:$0xff] %v10373
    %10809 = vst [vmem:[#allocation11 + $0x208] sm:$0xff] %v10712
    %10810 = vst [vmem:[#allocation11 + $0x210] sm:$0xff] %v10037
    %10811 = vst [vmem:[#allocation11 + $0x218] sm:$0xff] %v10376
    %10812 = vst [vmem:[#allocation11 + $0x220] sm:$0xff] %v10715
    %10813 = vst [vmem:[#allocation11 + $0x228] sm:$0xff] %v10040
    %10814 = vst [vmem:[#allocation11 + $0x230] sm:$0xff] %v10379
    %10815 = vst [vmem:[#allocation11 + $0x238] sm:$0xff] %v10718
    %10816 = vst [vmem:[#allocation11 + $0x240] sm:$0xff] %v10043
    %10817 = vst [vmem:[#allocation11 + $0x248] sm:$0xff] %v10382
    %10818 = vst [vmem:[#allocation11 + $0x250] sm:$0xff] %v10721
    %10819 = vst [vmem:[#allocation11 + $0x258] sm:$0xff] %v10046
    %10820 = vst [vmem:[#allocation11 + $0x260] sm:$0xff] %v10385
    %10821 = vst [vmem:[#allocation11 + $0x268] sm:$0xff] %v10724
    %10822 = vst [vmem:[#allocation11 + $0x270] sm:$0xff] %v10049
    %10823 = vst [vmem:[#allocation11 + $0x278] sm:$0xff] %v10388
    %10824 = vst [vmem:[#allocation11 + $0x280] sm:$0xff] %v10727
    %10825 = vst [vmem:[#allocation11 + $0x288] sm:$0xff] %v10052
    %10826 = vst [vmem:[#allocation11 + $0x290] sm:$0xff] %v10391
    %10827 = vst [vmem:[#allocation11 + $0x298] sm:$0xff] %v10730
    %10828 = vst [vmem:[#allocation11 + $0x2a0] sm:$0xff] %v10055
    %10829 = vst [vmem:[#allocation11 + $0x2a8] sm:$0xff] %v10394
    %10830 = vst [vmem:[#allocation11 + $0x2b0] sm:$0xff] %v10733
    %10831 = vst [vmem:[#allocation11 + $0x2b8] sm:$0xff] %v10058
    %10832 = vst [vmem:[#allocation11 + $0x2c0] sm:$0xff] %v10397
    %10833 = vst [vmem:[#allocation11 + $0x2c8] sm:$0xff] %v10736
    %10834 = vst [vmem:[#allocation11 + $0x2d0] sm:$0xff] %v10061
    %10835 = vst [vmem:[#allocation11 + $0x2d8] sm:$0xff] %v10400
    %10836 = vst [vmem:[#allocation11 + $0x2e0] sm:$0xff] %v10739
    %10837 = vst [vmem:[#allocation11 + $0x2e8] sm:$0xff] %v10064
    %10838 = vst [vmem:[#allocation11 + $0x2f0] sm:$0xff] %v10403
    %10839 = vst [vmem:[#allocation11 + $0x2f8] sm:$0xff] %v10742
    // Predicated region
    $region34: #{tpu_custom_call.1} parent=1 // pred_check
      _
    $region35: #{tpu_custom_call.1} parent=1 // pred_check_branch
      %10841 = sbr.rel (0) target = $region37
    $region36: #{tpu_custom_call.1} parent=1 // pred_region
      %10843 = vsyncadd [#allocation5], 0
      %s10844 = sshll.u32 [#allocation11], 4
      %s10845 = int_to_ptr.vmem [resolvable:$true] %s10844
      %s10846 = sshll.u32 %s4, 4
      %s10847 = int_to_ptr.hbm [resolvable:$true] %s10846
      %10852 = dma.vmem_to_hbm [thread:$0]  %s10845, 12288, %s10847, [#allocation5], 384, 384, 24
    $region37: #{tpu_custom_call.1} parent=1 // pred_fallthru
      _
    // Predicated region
    $region38: #{tpu_custom_call.1} parent=1 // pred_check
      _
    $region39: #{tpu_custom_call.1} parent=1 // pred_check_branch
      %10854 = sbr.rel (0) target = $region41
    $region40: #{tpu_custom_call.1} parent=1 // pred_region
      %10856 = dma.done [#allocation5], 12288
    $region41: #{tpu_custom_call.1} parent=1 // pred_fallthru
      _
    %10857 = vsyncpa [#allocation4], 1
    %10858 = vsyncpa [#allocation7], 1
    %10859 = vsyncpa [#allocation10], 1
    %10860 = vsyncpa [#allocation5], 1

</llo_original>
